<compile_context>
chip_gen: v7x
topology: tpu7x:2x2x1
jax: 0.10.0
libtpu: 0.0.40
codegen_flags: <defaults>
</compile_context>

<pallas_src>
import math

import jax
import jax.numpy as jnp
from jax import lax
from jax.experimental import pallas as pl
from jax.experimental.pallas import tpu as pltpu

EPS = 1e-5        # PyTorch BatchNorm2d default
_PAD = 128        # lane padding around the image interior (>= W+1, 128-aligned)


# ---------------------------------------------------------------------------
# Wrapper-side constant builders (hoisted out of the kernels)
# ---------------------------------------------------------------------------
def make_tap_masks(H, W, B):
    """(9, B*H*W) validity masks for the 3x3 'SAME' conv taps (dy, dx).

    In the batch-folded (C, B*H*W) layout the same mask also kills cross-image
    bleed, because any read crossing an image boundary is, spatially, an
    out-of-range (i+dy, j+dx) read."""
    p = jnp.arange(H * W)
    i, j = p // W, p % W
    rows = []
    for dy in (-1, 0, 1):
        for dx in (-1, 0, 1):
            valid = (i + dy >= 0) & (i + dy < H) & (j + dx >= 0) & (j + dx < W)
            rows.append(valid.astype(jnp.float32))
    m = jnp.stack(rows, axis=0)                       # (9, H*W)
    return jnp.tile(m, (1, B))                        # (9, B*H*W)


def make_pool_matrix(H, W):
    """(H*W, Ho*Wo) bf16 matrix implementing 2x2/stride-2 average pooling."""
    Ho, Wo = H // 2, W // 2
    p = jnp.arange(H * W)
    i, j = p // W, p % W
    q = (i // 2) * Wo + (j // 2)
    m = jnp.zeros((H * W, Ho * Wo), jnp.float32).at[p, q].set(0.25)
    return m.astype(jnp.bfloat16)                     # 0 / 0.25 exact in bf16


def make_global_pool_matrix(HW, B):
    """(B*HW, B) bf16 0/1 matrix: column b sums batch b's pixels.

    The 1/HW scale is applied in f32 in-kernel (exact for any HW)."""
    p = jnp.arange(B * HW)
    m = jnp.zeros((B * HW, B), jnp.float32).at[p, p // HW].set(1.0)
    return m.astype(jnp.bfloat16)


def _fullspec(shape):
    nd = len(shape)
    return pl.BlockSpec(tuple(shape), lambda i, _nd=nd: (0,) * _nd)


def _nbytes(x):
    return math.prod(x.shape) * x.dtype.itemsize


def _compiler_params(est_vmem_bytes):
    # Explicit VMEM budget (v7x has only 64 MiB physical); clamp to a window
    # that is safe on v5e/v6e/v7x.
    lim = int(max(16 << 20, min(est_vmem_bytes, 48 << 20)))
    return pltpu.CompilerParams(dimension_semantics=("arbitrary",),
                                vmem_limit_bytes=lim)


# ---------------------------------------------------------------------------
# In-kernel building blocks
# ---------------------------------------------------------------------------
def _bn_scale_bias(s_sum, s_sq, gamma, beta, inv_n):
    """Fused train-mode BN affine from cached one-pass statistics.

    s_sum / s_sq / gamma / beta: (C, 1).  Returns (scale, bias), both (C, 1):
    BN(x) = x*scale + bias with biased batch variance."""
    mean = s_sum * inv_n
    var = s_sq * inv_n - mean * mean
    scale = gamma * lax.rsqrt(var + EPS)
    return scale, beta - mean * scale


def _run_dense_block(feat_ref, act_ref, ssum_ref, ssq_ref, masks, layer_refs,
                     C0, G, W, P):
    """DenseNet block computed fully in VMEM on a (C, B*H*W) slab.

    feat_ref : (C0 + L*G, P) resident f32 feature map; [:C0, :] already holds
               the block input; each layer appends its G channels (torch.cat).
    act_ref  : (Cmax, P + 2*_PAD) bf16 activation buffer; pad lanes are zero.
    ssum_ref / ssq_ref : (C0 + L*G, 1) f32 cached per-channel sum / sum(x^2).
    masks    : list of 9 (1, P) f32 tap-validity masks (hoisted loads).
    """
    inv_n = 1.0 / float(P)
    shifts = [dy * W + dx for dy in (-1, 0, 1) for dx in (-1, 0, 1)]

    x0 = feat_ref[0:C0, :]
    ssum_ref[0:C0, :] = jnp.sum(x0, axis=1, keepdims=True)
    ssq_ref[0:C0, :] = jnp.sum(x0 * x0, axis=1, keepdims=True)

    cin = C0
    for g_ref, b_ref, w_ref in layer_refs:
        # BN (cached batch stats) + ReLU as one fused affine, stored bf16.
        scale, bias = _bn_scale_bias(ssum_ref[0:cin, :], ssq_ref[0:cin, :],
                                     g_ref[...], b_ref[...], inv_n)
        a = jnp.maximum(feat_ref[0:cin, :] * scale + bias, 0.0)
        act_ref[0:cin, _PAD:_PAD + P] = a.astype(jnp.bfloat16)

        # 3x3 conv = 9 accumulating per-tap bf16 matmuls with result-side
        # masking (mask is constant along K so it distributes over the
        # contraction); no im2col buffer is materialized.
        acc = jnp.zeros((G, P), jnp.float32)
        for t in range(9):
            win = act_ref[0:cin, _PAD + shifts[t]:_PAD + shifts[t] + P]
            acc = acc + jnp.dot(w_ref[t], win,
                                preferred_element_type=jnp.float32) * masks[t]

        # torch.cat: append the G new channels.
        # NOTE: channel slots are not padded to 8 sublanes (G can be small),
        # so this store may be a masked partial store; acceptable here.
        feat_ref[cin:cin + G, :] = acc

        # Cache stats of the new channels (their data never changes again).
        ssum_ref[cin:cin + G, :] = jnp.sum(acc, axis=1, keepdims=True)
        ssq_ref[cin:cin + G, :] = jnp.sum(acc * acc, axis=1, keepdims=True)
        cin += G


# ---------------------------------------------------------------------------
# Stage kernels (dense block + transition, dense block + head)
# ---------------------------------------------------------------------------
def make_dense_trans_stage(B, H, W, C0, G, nlayers, Cout):
    HW = H * W
    P = B * HW
    Ho, Wo = H // 2, W // 2
    HoWo = Ho * Wo
    Cfin = C0 + nlayers * G
    Cmax = C0 + (nlayers - 1) * G
    n_in = 2 + 3 * nlayers + 4
    inv_n = 1.0 / float(P)

    def kernel(*refs):
        x_ref, mask_ref = refs[0], refs[1]
        layer_refs = [(refs[2 + 3 * l], refs[3 + 3 * l], refs[4 + 3 * l])
                      for l in range(nlayers)]
        tg_ref, tb_ref, tw_ref, pool_ref = refs[n_in - 4:n_in]
        out_ref = refs[n_in]
        feat_ref, act_ref, ssum_ref, ssq_ref = refs[n_in + 1:n_in + 5]

        # Zero only the pad lanes of the activation buffer.
        zpad = jnp.zeros((Cmax, _PAD), jnp.bfloat16)
        act_ref[:, 0:_PAD] = zpad
        act_ref[:, _PAD + P:_PAD + P + _PAD] = zpad

        feat_ref[0:C0, :] = x_ref[...]
        masks = [mask_ref[t:t + 1, :] for t in range(9)]       # hoisted loads

        _run_dense_block(feat_ref, act_ref, ssum_ref, ssq_ref, masks,
                         layer_refs, C0, G, W, P)

        # Transition: BN+ReLU -> 1x1 conv (one wide matmul) -> 2x2 avg pool.
        scale, bias = _bn_scale_bias(ssum_ref[...], ssq_ref[...],
                                     tg_ref[...], tb_ref[...], inv_n)
        a = jnp.maximum(feat_ref[...] * scale + bias, 0.0).astype(jnp.bfloat16)
        y = jnp.dot(tw_ref[...], a, preferred_element_type=jnp.float32)  # (Cout,P)

        pool = pool_ref[...]                                   # (HW, HoWo) bf16
        for b in range(B):
            out_ref[:, b * HoWo:(b + 1) * HoWo] = jnp.dot(
                y[:, b * HW:(b + 1) * HW].astype(jnp.bfloat16), pool,
                preferred_element_type=jnp.float32)

    def call(x, masks, layers, tgamma, tbeta, tw, pool):
        args = [x, masks]
        for g, bt, w in layers:
            args += [g, bt, w]
        args += [tgamma, tbeta, tw, pool]
        out_shape = jax.ShapeDtypeStruct((Cout, B * HoWo), jnp.float32)
        est = (2 * sum(_nbytes(a) for a in args) + 2 * _nbytes(out_shape)
               + Cfin * P * 4 + Cmax * (P + 2 * _PAD) * 2 + 8192 + (4 << 20))
        return pl.pallas_call(
            kernel,
            out_shape=out_shape,
            grid=(1,),
            in_specs=[_fullspec(a.shape) for a in args],
            out_specs=_fullspec((Cout, B * HoWo)),
            scratch_shapes=[
                pltpu.VMEM((Cfin, P), jnp.float32),
                pltpu.VMEM((Cmax, P + 2 * _PAD), jnp.bfloat16),
                pltpu.VMEM((Cfin, 1), jnp.float32),
                pltpu.VMEM((Cfin, 1), jnp.float32),
            ],
            compiler_params=_compiler_params(est),
        )(*args)

    return call


def make_dense_head_stage(B, H, W, C0, G, nlayers, nClasses):
    HW = H * W
    P = B * HW
    Cfin = C0 + nlayers * G
    Cmax = C0 + (nlayers - 1) * G
    n_in = 2 + 3 * nlayers + 5
    inv_n = 1.0 / float(P)

    def kernel(*refs):
        x_ref, mask_ref = refs[0], refs[1]
        layer_refs = [(refs[2 + 3 * l], refs[3 + 3 * l], refs[4 + 3 * l])
                      for l in range(nlayers)]
        hg_ref, hb_ref, wfct_ref, bfc_ref, gpool_ref = refs[n_in - 5:n_in]
        x3_ref, logits_ref = refs[n_in], refs[n_in + 1]
        act_ref, ssum_ref, ssq_ref = refs[n_in + 2:n_in + 5]

        zpad = jnp.zeros((Cmax, _PAD), jnp.bfloat16)
        act_ref[:, 0:_PAD] = zpad
        act_ref[:, _PAD + P:_PAD + P + _PAD] = zpad

        # x3 output ref doubles as the resident dense-block buffer.
        x3_ref[0:C0, :] = x_ref[...]
        masks = [mask_ref[t:t + 1, :] for t in range(9)]

        _run_dense_block(x3_ref, act_ref, ssum_ref, ssq_ref, masks,
                         layer_refs, C0, G, W, P)

        # Head: BN+ReLU -> global average pool (matmul) -> fully connected.
        scale, bias = _bn_scale_bias(ssum_ref[...], ssq_ref[...],
                                     hg_ref[...], hb_ref[...], inv_n)
        a = jnp.maximum(x3_ref[...] * scale + bias, 0.0)            # (Cfin, P)
        v = jnp.dot(a.astype(jnp.bfloat16), gpool_ref[...],
                    preferred_element_type=jnp.float32) * (1.0 / HW)  # (Cfin, B)
        logits_ref[...] = (jnp.dot(wfct_ref[...], v.astype(jnp.bfloat16),
                                   preferred_element_type=jnp.float32)
                           + bfc_ref[...])                          # (nCls, B)

    def call(x, masks, layers, hgamma, hbeta, wfct, bfc, gpool):
        args = [x, masks]
        for g, bt, w in layers:
            args += [g, bt, w]
        args += [hgamma, hbeta, wfct, bfc, gpool]
        out_shapes = (jax.ShapeDtypeStruct((Cfin, P), jnp.float32),
                      jax.ShapeDtypeStruct((nClasses, B), jnp.float32))
        est = (2 * sum(_nbytes(a) for a in args)
               + 2 * sum(_nbytes(s) for s in out_shapes)
               + Cmax * (P + 2 * _PAD) * 2 + 8192 + (4 << 20))
        return pl.pallas_call(
            kernel,
            out_shape=out_shapes,
            grid=(1,),
            in_specs=[_fullspec(a.shape) for a in args],
            out_specs=(_fullspec((Cfin, P)), _fullspec((nClasses, B))),
            scratch_shapes=[
                pltpu.VMEM((Cmax, P + 2 * _PAD), jnp.bfloat16),
                pltpu.VMEM((Cfin, 1), jnp.float32),
                pltpu.VMEM((Cfin, 1), jnp.float32),
            ],
            compiler_params=_compiler_params(est),
        )(*args)

    return call


# ---------------------------------------------------------------------------
# Parameters (canonical formats) and forward passes
# ---------------------------------------------------------------------------
def init_params(key, growthRate, depth, reduction, nClasses, nChannels):
    nDenseBlocks = (depth - 4) // 3      # bottleneck=False path
    params = {}
    ch = nChannels

    def dense_layers(key, ch):
        layers = []
        for _ in range(nDenseBlocks):
            key, k = jax.random.split(key)
            std = math.sqrt(2.0 / (3 * 3 * growthRate))
            w = jax.random.normal(k, (3, 3, ch, growthRate), jnp.float32) * std  # HWIO
            layers.append(dict(gamma=jnp.ones((ch,), jnp.float32),
                               beta=jnp.zeros((ch,), jnp.float32), w=w))
            ch += growthRate
        return key, layers, ch

    def trans(key, ch):
        cout = int(math.floor(ch * reduction))
        key, k = jax.random.split(key)
        std = math.sqrt(2.0 / (1 * 1 * cout))
        w = jax.random.normal(k, (ch, cout), jnp.float32) * std
        return key, dict(gamma=jnp.ones((ch,), jnp.float32),
                         beta=jnp.zeros((ch,), jnp.float32), w=w), cout

    key, params['dense1'], ch = dense_layers(key, ch)
    key, params['trans1'], ch = trans(key, ch)
    key, params['dense2'], ch = dense_layers(key, ch)
    key, params['trans2'], ch = trans(key, ch)
    key, params['dense3'], ch = dense_layers(key, ch)

    key, k = jax.random.split(key)
    lim = 1.0 / math.sqrt(ch)
    params['head'] = dict(gamma=jnp.ones((ch,), jnp.float32),
                          beta=jnp.zeros((ch,), jnp.float32),
                          wfc=jax.random.uniform(k, (ch, nClasses), jnp.float32,
                                                 -lim, lim),
                          bfc=jnp.zeros((1, nClasses), jnp.float32))
    return params


def _kernel_layer_params(layers):
    """Per-layer params in kernel format: gamma/beta (C,1) f32, w (9, G, C) bf16."""
    out = []
    for lyr in layers:
        w = lyr['w']                                 # (3,3,Cin,G) HWIO
        Cin, G = w.shape[2], w.shape[3]
        w_r = jnp.transpose(w, (0, 1, 3, 2)).reshape(9, G, Cin).astype(jnp.bfloat16)
        out.append((lyr['gamma'].reshape(-1, 1),
                    lyr['beta'].reshape(-1, 1),
                    w_r))
    return out


def forward_pallas(x_nchw, params, growthRate, nClasses):
    B, C0, H0, W0 = x_nchw.shape
    G = growthRate
    nlayers = len(params['dense1'])

    # Batch-folded lane layout: (C, B*H*W) with pixel index = b*H*W + i*W + j.
    x = jnp.transpose(x_nchw, (1, 0, 2, 3)).reshape(
        C0, B * H0 * W0).astype(jnp.float32)

    # stage 1: dense block 1 + transition 1
    C1o = params['trans1']['w'].shape[1]
    stage1 = make_dense_trans_stage(B, H0, W0, C0, G, nlayers, C1o)
    x1 = stage1(x, make_tap_masks(H0, W0, B),
                _kernel_layer_params(params['dense1']),
                params['trans1']['gamma'].reshape(-1, 1),
                params['trans1']['beta'].reshape(-1, 1),
                jnp.transpose(params['trans1']['w']).astype(jnp.bfloat16),
                make_pool_matrix(H0, W0))
    H1, W1 = H0 // 2, W0 // 2

    # stage 2: dense block 2 + transition 2
    C2o = params['trans2']['w'].shape[1]
    stage2 = make_dense_trans_stage(B, H1, W1, C1o, G, nlayers, C2o)
    x2 = stage2(x1, make_tap_masks(H1, W1, B),
                _kernel_layer_params(params['dense2']),
                params['trans2']['gamma'].reshape(-1, 1),
                params['trans2']['beta'].reshape(-1, 1),
                jnp.transpose(params['trans2']['w']).astype(jnp.bfloat16),
                make_pool_matrix(H1, W1))
    H2, W2 = H1 // 2, W1 // 2

    # stage 3: dense block 3 + head
    stage3 = make_dense_head_stage(B, H2, W2, C2o, G, nlayers, nClasses)
    x3, logits_t = stage3(x2, make_tap_masks(H2, W2, B),
                          _kernel_layer_params(params['dense3']),
                          params['head']['gamma'].reshape(-1, 1),
                          params['head']['beta'].reshape(-1, 1),
                          jnp.transpose(params['head']['wfc']).astype(jnp.bfloat16),
                          params['head']['bfc'].reshape(-1, 1),
                          make_global_pool_matrix(H2 * W2, B))
    logits = jnp.transpose(logits_t)                       # (B, nClasses)

    # (C, B*H*W) -> NCHW for the returned feature maps (single XLA transpose
    # per feature, outside the Pallas path; all kernel stores stay lane-dense).
    def to_nchw(t, H, W):
        C = t.shape[0]
        return jnp.transpose(t.reshape(C, B, H, W), (1, 0, 2, 3))

    feats = [to_nchw(x1, H1, W1), to_nchw(x2, H2, W2), to_nchw(x3, H2, W2)]
    return logits, feats


# ---------------------------------------------------------------------------
# Pure-JAX reference (same math, NHWC, full f32) for the correctness check
# ---------------------------------------------------------------------------
def _bn_affine(x_nhwc, gamma, beta):
    mean = jnp.mean(x_nhwc, axis=(0, 1, 2))
    var = jnp.mean((x_nhwc - mean) ** 2, axis=(0, 1, 2))   # biased (train mode)
    scale = gamma / jnp.sqrt(var + EPS)
    bias = beta - mean * scale
    return scale, bias


def forward_reference(x_nchw, params):
    x = jnp.transpose(x_nchw, (0, 2, 3, 1)).astype(jnp.float32)

    def dense_block(x, layers):
        for lyr in layers:
            scale, bias = _bn_affine(x, lyr['gamma'], lyr['beta'])
            a = jnp.maximum(x * scale + bias, 0.0)
            new = lax.conv_general_dilated(
                a, lyr['w'], (1, 1), 'SAME',
                dimension_numbers=('NHWC', 'HWIO', 'NHWC'))
            x = jnp.concatenate([x, new], axis=-1)
        return x

    def transition(x, p):
        scale, bias = _bn_affine(x, p['gamma'], p['beta'])
        a = jnp.maximum(x * scale + bias, 0.0)
        y = jnp.einsum('bhwc,cd->bhwd', a, p['w'])
        B, H, W, C = y.shape
        return y.reshape(B, H // 2, 2, W // 2, 2, C).mean(axis=(2, 4))

    x1 = transition(dense_block(x, params['dense1']), params['trans1'])
    x2 = transition(dense_block(x1, params['dense2']), params['trans2'])
    x3 = dense_block(x2, params['dense3'])

    p = params['head']
    scale, bias = _bn_affine(x3, p['gamma'], p['beta'])
    a = jnp.maximum(x3 * scale + bias, 0.0)
    out = a.mean(axis=(1, 2)) @ p['wfc'] + p['bfc']

    to_nchw = lambda t: jnp.transpose(t, (0, 3, 1, 2))
    return out, [to_nchw(x1), to_nchw(x2), to_nchw(x3)]


# ---------------------------------------------------------------------------
if __name__ == "__main__":
    key = jax.random.PRNGKey(0)
    kx, kp = jax.random.split(key)

    # Small config: growthRate=4, depth=10 (-> 2 layers per dense block),
    # reduction=0.5, nClasses=10, bottleneck=False, nChannels=4.
    # Spatial must be 32 so the module's avg_pool2d(..., 8) sees an 8x8 map.
    growthRate, depth, reduction, nClasses, nChannels = 4, 10, 0.5, 10, 4
    x = jax.random.normal(kx, (2, nChannels, 32, 32), jnp.float32)   # NCHW

    params = init_params(kp, growthRate, depth, reduction, nClasses, nChannels)

    out, feats = forward_pallas(x, params, growthRate, nClasses)
    jax.block_until_ready(out)
    for f in feats:
        jax.block_until_ready(f)

    ref_out, ref_feats = forward_reference(x, params)

    # bf16 MXU operands (with f32 accumulation) shift numerics slightly vs.
    # the f32 reference, so validate with a relative-L2 check per tensor.
    def rel_err(a, b):
        return float(jnp.linalg.norm(a - b) / (jnp.linalg.norm(b) + 1e-6))

    assert out.shape == (2, nClasses)
    e = rel_err(out, ref_out)
    assert e < 2e-2, ("logits mismatch", e)
    for a, b in zip(feats, ref_feats):
        assert a.shape == b.shape, (a.shape, b.shape)
        e = rel_err(a, b)
        assert e < 2e-2, ("feature map mismatch", a.shape, e)

    print("KERNEL_OK")
</pallas_src>

<mosaic_0001>
module attributes {stable_mosaic.version = 11 : i64} {
  func.func @kernel(%arg0: i32, %arg1: memref<4x2048xf32, #tpu.memory_space<vmem>>, %arg2: memref<9x2048xf32, #tpu.memory_space<vmem>>, %arg3: memref<4x1xf32, #tpu.memory_space<vmem>>, %arg4: memref<4x1xf32, #tpu.memory_space<vmem>>, %arg5: memref<9x4x4xbf16, #tpu.memory_space<vmem>>, %arg6: memref<8x1xf32, #tpu.memory_space<vmem>>, %arg7: memref<8x1xf32, #tpu.memory_space<vmem>>, %arg8: memref<9x4x8xbf16, #tpu.memory_space<vmem>>, %arg9: memref<12x1xf32, #tpu.memory_space<vmem>>, %arg10: memref<12x1xf32, #tpu.memory_space<vmem>>, %arg11: memref<6x12xbf16, #tpu.memory_space<vmem>>, %arg12: memref<1024x256xbf16, #tpu.memory_space<vmem>>, %arg13: memref<6x512xf32, #tpu.memory_space<vmem>>, %arg14: memref<12x2048xf32, #tpu.memory_space<vmem>>, %arg15: memref<8x2304xbf16, #tpu.memory_space<vmem>>, %arg16: memref<12x1xf32, #tpu.memory_space<vmem>>, %arg17: memref<12x1xf32, #tpu.memory_space<vmem>>) attributes {dimension_semantics = [#tpu.dimension_semantics<arbitrary>], iteration_bounds = array<i64: 1>, scalar_prefetch = 0 : i64, scratch_operands = 4 : i64, tpu.core_type = #tpu.core_type<tc>, window_params = [{pipeline_mode = #tpu.pipeline_mode<synchronous>, transform_indices = @transform_0, window_bounds = array<i64: 4, 2048>}, {pipeline_mode = #tpu.pipeline_mode<synchronous>, transform_indices = @transform_1, window_bounds = array<i64: 9, 2048>}, {pipeline_mode = #tpu.pipeline_mode<synchronous>, transform_indices = @transform_2, window_bounds = array<i64: 4, 1>}, {pipeline_mode = #tpu.pipeline_mode<synchronous>, transform_indices = @transform_3, window_bounds = array<i64: 4, 1>}, {pipeline_mode = #tpu.pipeline_mode<synchronous>, transform_indices = @transform_4, window_bounds = array<i64: 9, 4, 4>}, {pipeline_mode = #tpu.pipeline_mode<synchronous>, transform_indices = @transform_5, window_bounds = array<i64: 8, 1>}, {pipeline_mode = #tpu.pipeline_mode<synchronous>, transform_indices = @transform_6, window_bounds = array<i64: 8, 1>}, {pipeline_mode = #tpu.pipeline_mode<synchronous>, transform_indices = @transform_7, window_bounds = array<i64: 9, 4, 8>}, {pipeline_mode = #tpu.pipeline_mode<synchronous>, transform_indices = @transform_8, window_bounds = array<i64: 12, 1>}, {pipeline_mode = #tpu.pipeline_mode<synchronous>, transform_indices = @transform_9, window_bounds = array<i64: 12, 1>}, {pipeline_mode = #tpu.pipeline_mode<synchronous>, transform_indices = @transform_10, window_bounds = array<i64: 6, 12>}, {pipeline_mode = #tpu.pipeline_mode<synchronous>, transform_indices = @transform_11, window_bounds = array<i64: 1024, 256>}, {pipeline_mode = #tpu.pipeline_mode<synchronous>, transform_indices = @transform_12, window_bounds = array<i64: 6, 512>}]} {
    %cst = arith.constant 0.000000e+00 : bf16
    %0 = vector.broadcast %cst : bf16 to vector<8x128xbf16>
    %c0 = arith.constant 0 : index
    %c0_0 = arith.constant 0 : index
    %1 = vector.load %arg15[%c0, %c0_0] : memref<8x2304xbf16, #tpu.memory_space<vmem>>, vector<8x128xbf16>
    tpu.vector_store %arg15[%c0, %c0_0], %0 {strides = array<i32>} : memref<8x2304xbf16, #tpu.memory_space<vmem>>, vector<8x128xbf16>,
    %c0_1 = arith.constant 0 : index
    %c2176 = arith.constant 2176 : index
    %2 = vector.load %arg15[%c0_1, %c2176] : memref<8x2304xbf16, #tpu.memory_space<vmem>>, vector<8x128xbf16>
    tpu.vector_store %arg15[%c0_1, %c2176], %0 {strides = array<i32>} : memref<8x2304xbf16, #tpu.memory_space<vmem>>, vector<8x128xbf16>,
    %c0_2 = arith.constant 0 : index
    %c0_3 = arith.constant 0 : index
    %3 = vector.load %arg1[%c0_2, %c0_3] : memref<4x2048xf32, #tpu.memory_space<vmem>>, vector<4x2048xf32>
    %c0_4 = arith.constant 0 : index
    %c0_5 = arith.constant 0 : index
    %4 = vector.load %arg14[%c0_4, %c0_5] : memref<12x2048xf32, #tpu.memory_space<vmem>>, vector<4x2048xf32>
    tpu.vector_store %arg14[%c0_4, %c0_5], %3 {strides = array<i32>} : memref<12x2048xf32, #tpu.memory_space<vmem>>, vector<4x2048xf32>,
    %c0_6 = arith.constant 0 : index
    %c0_7 = arith.constant 0 : index
    %5 = vector.load %arg2[%c0_6, %c0_7] : memref<9x2048xf32, #tpu.memory_space<vmem>>, vector<1x2048xf32>
    %c1 = arith.constant 1 : index
    %c0_8 = arith.constant 0 : index
    %6 = vector.load %arg2[%c1, %c0_8] : memref<9x2048xf32, #tpu.memory_space<vmem>>, vector<1x2048xf32>
    %c2 = arith.constant 2 : index
    %c0_9 = arith.constant 0 : index
    %7 = vector.load %arg2[%c2, %c0_9] : memref<9x2048xf32, #tpu.memory_space<vmem>>, vector<1x2048xf32>
    %c3 = arith.constant 3 : index
    %c0_10 = arith.constant 0 : index
    %8 = vector.load %arg2[%c3, %c0_10] : memref<9x2048xf32, #tpu.memory_space<vmem>>, vector<1x2048xf32>
    %c4 = arith.constant 4 : index
    %c0_11 = arith.constant 0 : index
    %9 = vector.load %arg2[%c4, %c0_11] : memref<9x2048xf32, #tpu.memory_space<vmem>>, vector<1x2048xf32>
    %c5 = arith.constant 5 : index
    %c0_12 = arith.constant 0 : index
    %10 = vector.load %arg2[%c5, %c0_12] : memref<9x2048xf32, #tpu.memory_space<vmem>>, vector<1x2048xf32>
    %c6 = arith.constant 6 : index
    %c0_13 = arith.constant 0 : index
    %11 = vector.load %arg2[%c6, %c0_13] : memref<9x2048xf32, #tpu.memory_space<vmem>>, vector<1x2048xf32>
    %c7 = arith.constant 7 : index
    %c0_14 = arith.constant 0 : index
    %12 = vector.load %arg2[%c7, %c0_14] : memref<9x2048xf32, #tpu.memory_space<vmem>>, vector<1x2048xf32>
    %c8 = arith.constant 8 : index
    %c0_15 = arith.constant 0 : index
    %13 = vector.load %arg2[%c8, %c0_15] : memref<9x2048xf32, #tpu.memory_space<vmem>>, vector<1x2048xf32>
    %c0_16 = arith.constant 0 : index
    %c0_17 = arith.constant 0 : index
    %14 = vector.load %arg14[%c0_16, %c0_17] : memref<12x2048xf32, #tpu.memory_space<vmem>>, vector<4x2048xf32>
    %cst_18 = arith.constant dense<0.000000e+00> : vector<4xf32>
    %15 = vector.multi_reduction <add>, %14, %cst_18 [1] : vector<4x2048xf32> to vector<4xf32>
    %16 = vector.shape_cast %15 : vector<4xf32> to vector<4x1xf32>
    %c0_19 = arith.constant 0 : index
    %c0_20 = arith.constant 0 : index
    %17 = vector.load %arg16[%c0_19, %c0_20] : memref<12x1xf32, #tpu.memory_space<vmem>>, vector<4x1xf32>
    tpu.vector_store %arg16[%c0_19, %c0_20], %16 {strides = array<i32>} : memref<12x1xf32, #tpu.memory_space<vmem>>, vector<4x1xf32>,
    %18 = arith.mulf %14, %14 : vector<4x2048xf32>
    %cst_21 = arith.constant dense<0.000000e+00> : vector<4xf32>
    %19 = vector.multi_reduction <add>, %18, %cst_21 [1] : vector<4x2048xf32> to vector<4xf32>
    %20 = vector.shape_cast %19 : vector<4xf32> to vector<4x1xf32>
    %c0_22 = arith.constant 0 : index
    %c0_23 = arith.constant 0 : index
    %21 = vector.load %arg17[%c0_22, %c0_23] : memref<12x1xf32, #tpu.memory_space<vmem>>, vector<4x1xf32>
    tpu.vector_store %arg17[%c0_22, %c0_23], %20 {strides = array<i32>} : memref<12x1xf32, #tpu.memory_space<vmem>>, vector<4x1xf32>,
    %c0_24 = arith.constant 0 : index
    %c0_25 = arith.constant 0 : index
    %22 = vector.load %arg16[%c0_24, %c0_25] : memref<12x1xf32, #tpu.memory_space<vmem>>, vector<4x1xf32>
    %c0_26 = arith.constant 0 : index
    %c0_27 = arith.constant 0 : index
    %23 = vector.load %arg17[%c0_26, %c0_27] : memref<12x1xf32, #tpu.memory_space<vmem>>, vector<4x1xf32>
    %c0_28 = arith.constant 0 : index
    %c0_29 = arith.constant 0 : index
    %24 = vector.load %arg3[%c0_28, %c0_29] : memref<4x1xf32, #tpu.memory_space<vmem>>, vector<4x1xf32>
    %c0_30 = arith.constant 0 : index
    %c0_31 = arith.constant 0 : index
    %25 = vector.load %arg4[%c0_30, %c0_31] : memref<4x1xf32, #tpu.memory_space<vmem>>, vector<4x1xf32>
    %cst_32 = arith.constant 4.8828125E-4 : f32
    %26 = vector.broadcast %cst_32 : f32 to vector<4x1xf32>
    %27 = arith.mulf %22, %26 : vector<4x1xf32>
    %cst_33 = arith.constant 4.8828125E-4 : f32
    %28 = vector.broadcast %cst_33 : f32 to vector<4x1xf32>
    %29 = arith.mulf %23, %28 : vector<4x1xf32>
    %30 = arith.mulf %27, %27 : vector<4x1xf32>
    %31 = arith.subf %29, %30 : vector<4x1xf32>
    %cst_34 = arith.constant 9.99999974E-6 : f32
    %32 = vector.broadcast %cst_34 : f32 to vector<4x1xf32>
    %33 = arith.addf %31, %32 : vector<4x1xf32>
    %34 = math.rsqrt %33 : vector<4x1xf32>
    %35 = arith.mulf %24, %34 : vector<4x1xf32>
    %36 = arith.mulf %27, %35 : vector<4x1xf32>
    %37 = arith.subf %25, %36 : vector<4x1xf32>
    %c0_35 = arith.constant 0 : index
    %c0_36 = arith.constant 0 : index
    %38 = vector.load %arg14[%c0_35, %c0_36] : memref<12x2048xf32, #tpu.memory_space<vmem>>, vector<4x2048xf32>
    %39 = vector.broadcast %35 : vector<4x1xf32> to vector<4x2048xf32>
    %40 = arith.mulf %38, %39 : vector<4x2048xf32>
    %41 = vector.broadcast %37 : vector<4x1xf32> to vector<4x2048xf32>
    %42 = arith.addf %40, %41 : vector<4x2048xf32>
    %cst_37 = arith.constant 0.000000e+00 : f32
    %43 = vector.broadcast %cst_37 : f32 to vector<4x2048xf32>
    %44 = arith.maximumf %42, %43 : vector<4x2048xf32>
    %45 = arith.truncf %44 : vector<4x2048xf32> to vector<4x2048xbf16>
    %c0_38 = arith.constant 0 : index
    %c128 = arith.constant 128 : index
    %46 = vector.load %arg15[%c0_38, %c128] : memref<8x2304xbf16, #tpu.memory_space<vmem>>, vector<4x2048xbf16>
    tpu.vector_store %arg15[%c0_38, %c128], %45 {strides = array<i32>} : memref<8x2304xbf16, #tpu.memory_space<vmem>>, vector<4x2048xbf16>,
    %cst_39 = arith.constant 0.000000e+00 : f32
    %47 = vector.broadcast %cst_39 : f32 to vector<4x2048xf32>
    %c0_40 = arith.constant 0 : index
    %c95 = arith.constant 95 : index
    %48 = vector.load %arg15[%c0_40, %c95] : memref<8x2304xbf16, #tpu.memory_space<vmem>>, vector<4x2048xbf16>
    %c0_41 = arith.constant 0 : index
    %c0_42 = arith.constant 0 : index
    %c0_43 = arith.constant 0 : index
    %49 = vector.load %arg5[%c0_41, %c0_42, %c0_43] : memref<9x4x4xbf16, #tpu.memory_space<vmem>>, vector<1x4x4xbf16>
    %50 = vector.shape_cast %49 : vector<1x4x4xbf16> to vector<4x4xbf16>
    %cst_44 = arith.constant dense<0.000000e+00> : vector<4x2048xf32>
    %51 = tpu.matmul %50, %48, %cst_44 {dimension_numbers = #tpu.dot_dimension_numbers<[1], [0], [0], [1], [0, 0, 1, 1], [], []>} : vector<4x4xbf16>, vector<4x2048xbf16>, vector<4x2048xf32> -> vector<4x2048xf32>
    %52 = vector.broadcast %5 : vector<1x2048xf32> to vector<4x2048xf32>
    %53 = arith.mulf %51, %52 : vector<4x2048xf32>
    %54 = arith.addf %47, %53 : vector<4x2048xf32>
    %c0_45 = arith.constant 0 : index
    %c96 = arith.constant 96 : index
    %55 = vector.load %arg15[%c0_45, %c96] : memref<8x2304xbf16, #tpu.memory_space<vmem>>, vector<4x2048xbf16>
    %c1_46 = arith.constant 1 : index
    %c0_47 = arith.constant 0 : index
    %c0_48 = arith.constant 0 : index
    %56 = vector.load %arg5[%c1_46, %c0_47, %c0_48] : memref<9x4x4xbf16, #tpu.memory_space<vmem>>, vector<1x4x4xbf16>
    %57 = vector.shape_cast %56 : vector<1x4x4xbf16> to vector<4x4xbf16>
    %cst_49 = arith.constant dense<0.000000e+00> : vector<4x2048xf32>
    %58 = tpu.matmul %57, %55, %cst_49 {dimension_numbers = #tpu.dot_dimension_numbers<[1], [0], [0], [1], [0, 0, 1, 1], [], []>} : vector<4x4xbf16>, vector<4x2048xbf16>, vector<4x2048xf32> -> vector<4x2048xf32>
    %59 = vector.broadcast %6 : vector<1x2048xf32> to vector<4x2048xf32>
    %60 = arith.mulf %58, %59 : vector<4x2048xf32>
    %61 = arith.addf %54, %60 : vector<4x2048xf32>
    %c0_50 = arith.constant 0 : index
    %c97 = arith.constant 97 : index
    %62 = vector.load %arg15[%c0_50, %c97] : memref<8x2304xbf16, #tpu.memory_space<vmem>>, vector<4x2048xbf16>
    %c2_51 = arith.constant 2 : index
    %c0_52 = arith.constant 0 : index
    %c0_53 = arith.constant 0 : index
    %63 = vector.load %arg5[%c2_51, %c0_52, %c0_53] : memref<9x4x4xbf16, #tpu.memory_space<vmem>>, vector<1x4x4xbf16>
    %64 = vector.shape_cast %63 : vector<1x4x4xbf16> to vector<4x4xbf16>
    %cst_54 = arith.constant dense<0.000000e+00> : vector<4x2048xf32>
    %65 = tpu.matmul %64, %62, %cst_54 {dimension_numbers = #tpu.dot_dimension_numbers<[1], [0], [0], [1], [0, 0, 1, 1], [], []>} : vector<4x4xbf16>, vector<4x2048xbf16>, vector<4x2048xf32> -> vector<4x2048xf32>
    %66 = vector.broadcast %7 : vector<1x2048xf32> to vector<4x2048xf32>
    %67 = arith.mulf %65, %66 : vector<4x2048xf32>
    %68 = arith.addf %61, %67 : vector<4x2048xf32>
    %c0_55 = arith.constant 0 : index
    %c127 = arith.constant 127 : index
    %69 = vector.load %arg15[%c0_55, %c127] : memref<8x2304xbf16, #tpu.memory_space<vmem>>, vector<4x2048xbf16>
    %c3_56 = arith.constant 3 : index
    %c0_57 = arith.constant 0 : index
    %c0_58 = arith.constant 0 : index
    %70 = vector.load %arg5[%c3_56, %c0_57, %c0_58] : memref<9x4x4xbf16, #tpu.memory_space<vmem>>, vector<1x4x4xbf16>
    %71 = vector.shape_cast %70 : vector<1x4x4xbf16> to vector<4x4xbf16>
    %cst_59 = arith.constant dense<0.000000e+00> : vector<4x2048xf32>
    %72 = tpu.matmul %71, %69, %cst_59 {dimension_numbers = #tpu.dot_dimension_numbers<[1], [0], [0], [1], [0, 0, 1, 1], [], []>} : vector<4x4xbf16>, vector<4x2048xbf16>, vector<4x2048xf32> -> vector<4x2048xf32>
    %73 = vector.broadcast %8 : vector<1x2048xf32> to vector<4x2048xf32>
    %74 = arith.mulf %72, %73 : vector<4x2048xf32>
    %75 = arith.addf %68, %74 : vector<4x2048xf32>
    %c0_60 = arith.constant 0 : index
    %c128_61 = arith.constant 128 : index
    %76 = vector.load %arg15[%c0_60, %c128_61] : memref<8x2304xbf16, #tpu.memory_space<vmem>>, vector<4x2048xbf16>
    %c4_62 = arith.constant 4 : index
    %c0_63 = arith.constant 0 : index
    %c0_64 = arith.constant 0 : index
    %77 = vector.load %arg5[%c4_62, %c0_63, %c0_64] : memref<9x4x4xbf16, #tpu.memory_space<vmem>>, vector<1x4x4xbf16>
    %78 = vector.shape_cast %77 : vector<1x4x4xbf16> to vector<4x4xbf16>
    %cst_65 = arith.constant dense<0.000000e+00> : vector<4x2048xf32>
    %79 = tpu.matmul %78, %76, %cst_65 {dimension_numbers = #tpu.dot_dimension_numbers<[1], [0], [0], [1], [0, 0, 1, 1], [], []>} : vector<4x4xbf16>, vector<4x2048xbf16>, vector<4x2048xf32> -> vector<4x2048xf32>
    %80 = vector.broadcast %9 : vector<1x2048xf32> to vector<4x2048xf32>
    %81 = arith.mulf %79, %80 : vector<4x2048xf32>
    %82 = arith.addf %75, %81 : vector<4x2048xf32>
    %c0_66 = arith.constant 0 : index
    %c129 = arith.constant 129 : index
    %83 = vector.load %arg15[%c0_66, %c129] : memref<8x2304xbf16, #tpu.memory_space<vmem>>, vector<4x2048xbf16>
    %c5_67 = arith.constant 5 : index
    %c0_68 = arith.constant 0 : index
    %c0_69 = arith.constant 0 : index
    %84 = vector.load %arg5[%c5_67, %c0_68, %c0_69] : memref<9x4x4xbf16, #tpu.memory_space<vmem>>, vector<1x4x4xbf16>
    %85 = vector.shape_cast %84 : vector<1x4x4xbf16> to vector<4x4xbf16>
    %cst_70 = arith.constant dense<0.000000e+00> : vector<4x2048xf32>
    %86 = tpu.matmul %85, %83, %cst_70 {dimension_numbers = #tpu.dot_dimension_numbers<[1], [0], [0], [1], [0, 0, 1, 1], [], []>} : vector<4x4xbf16>, vector<4x2048xbf16>, vector<4x2048xf32> -> vector<4x2048xf32>
    %87 = vector.broadcast %10 : vector<1x2048xf32> to vector<4x2048xf32>
    %88 = arith.mulf %86, %87 : vector<4x2048xf32>
    %89 = arith.addf %82, %88 : vector<4x2048xf32>
    %c0_71 = arith.constant 0 : index
    %c159 = arith.constant 159 : index
    %90 = vector.load %arg15[%c0_71, %c159] : memref<8x2304xbf16, #tpu.memory_space<vmem>>, vector<4x2048xbf16>
    %c6_72 = arith.constant 6 : index
    %c0_73 = arith.constant 0 : index
    %c0_74 = arith.constant 0 : index
    %91 = vector.load %arg5[%c6_72, %c0_73, %c0_74] : memref<9x4x4xbf16, #tpu.memory_space<vmem>>, vector<1x4x4xbf16>
    %92 = vector.shape_cast %91 : vector<1x4x4xbf16> to vector<4x4xbf16>
    %cst_75 = arith.constant dense<0.000000e+00> : vector<4x2048xf32>
    %93 = tpu.matmul %92, %90, %cst_75 {dimension_numbers = #tpu.dot_dimension_numbers<[1], [0], [0], [1], [0, 0, 1, 1], [], []>} : vector<4x4xbf16>, vector<4x2048xbf16>, vector<4x2048xf32> -> vector<4x2048xf32>
    %94 = vector.broadcast %11 : vector<1x2048xf32> to vector<4x2048xf32>
    %95 = arith.mulf %93, %94 : vector<4x2048xf32>
    %96 = arith.addf %89, %95 : vector<4x2048xf32>
    %c0_76 = arith.constant 0 : index
    %c160 = arith.constant 160 : index
    %97 = vector.load %arg15[%c0_76, %c160] : memref<8x2304xbf16, #tpu.memory_space<vmem>>, vector<4x2048xbf16>
    %c7_77 = arith.constant 7 : index
    %c0_78 = arith.constant 0 : index
    %c0_79 = arith.constant 0 : index
    %98 = vector.load %arg5[%c7_77, %c0_78, %c0_79] : memref<9x4x4xbf16, #tpu.memory_space<vmem>>, vector<1x4x4xbf16>
    %99 = vector.shape_cast %98 : vector<1x4x4xbf16> to vector<4x4xbf16>
    %cst_80 = arith.constant dense<0.000000e+00> : vector<4x2048xf32>
    %100 = tpu.matmul %99, %97, %cst_80 {dimension_numbers = #tpu.dot_dimension_numbers<[1], [0], [0], [1], [0, 0, 1, 1], [], []>} : vector<4x4xbf16>, vector<4x2048xbf16>, vector<4x2048xf32> -> vector<4x2048xf32>
    %101 = vector.broadcast %12 : vector<1x2048xf32> to vector<4x2048xf32>
    %102 = arith.mulf %100, %101 : vector<4x2048xf32>
    %103 = arith.addf %96, %102 : vector<4x2048xf32>
    %c0_81 = arith.constant 0 : index
    %c161 = arith.constant 161 : index
    %104 = vector.load %arg15[%c0_81, %c161] : memref<8x2304xbf16, #tpu.memory_space<vmem>>, vector<4x2048xbf16>
    %c8_82 = arith.constant 8 : index
    %c0_83 = arith.constant 0 : index
    %c0_84 = arith.constant 0 : index
    %105 = vector.load %arg5[%c8_82, %c0_83, %c0_84] : memref<9x4x4xbf16, #tpu.memory_space<vmem>>, vector<1x4x4xbf16>
    %106 = vector.shape_cast %105 : vector<1x4x4xbf16> to vector<4x4xbf16>
    %cst_85 = arith.constant dense<0.000000e+00> : vector<4x2048xf32>
    %107 = tpu.matmul %106, %104, %cst_85 {dimension_numbers = #tpu.dot_dimension_numbers<[1], [0], [0], [1], [0, 0, 1, 1], [], []>} : vector<4x4xbf16>, vector<4x2048xbf16>, vector<4x2048xf32> -> vector<4x2048xf32>
    %108 = vector.broadcast %13 : vector<1x2048xf32> to vector<4x2048xf32>
    %109 = arith.mulf %107, %108 : vector<4x2048xf32>
    %110 = arith.addf %103, %109 : vector<4x2048xf32>
    %c4_86 = arith.constant 4 : index
    %c0_87 = arith.constant 0 : index
    %111 = vector.load %arg14[%c4_86, %c0_87] : memref<12x2048xf32, #tpu.memory_space<vmem>>, vector<4x2048xf32>
    tpu.vector_store %arg14[%c4_86, %c0_87], %110 {strides = array<i32>} : memref<12x2048xf32, #tpu.memory_space<vmem>>, vector<4x2048xf32>,
    %cst_88 = arith.constant dense<0.000000e+00> : vector<4xf32>
    %112 = vector.multi_reduction <add>, %110, %cst_88 [1] : vector<4x2048xf32> to vector<4xf32>
    %113 = vector.shape_cast %112 : vector<4xf32> to vector<4x1xf32>
    %c4_89 = arith.constant 4 : index
    %c0_90 = arith.constant 0 : index
    %114 = vector.load %arg16[%c4_89, %c0_90] : memref<12x1xf32, #tpu.memory_space<vmem>>, vector<4x1xf32>
    tpu.vector_store %arg16[%c4_89, %c0_90], %113 {strides = array<i32>} : memref<12x1xf32, #tpu.memory_space<vmem>>, vector<4x1xf32>,
    %115 = arith.mulf %110, %110 : vector<4x2048xf32>
    %cst_91 = arith.constant dense<0.000000e+00> : vector<4xf32>
    %116 = vector.multi_reduction <add>, %115, %cst_91 [1] : vector<4x2048xf32> to vector<4xf32>
    %117 = vector.shape_cast %116 : vector<4xf32> to vector<4x1xf32>
    %c4_92 = arith.constant 4 : index
    %c0_93 = arith.constant 0 : index
    %118 = vector.load %arg17[%c4_92, %c0_93] : memref<12x1xf32, #tpu.memory_space<vmem>>, vector<4x1xf32>
    tpu.vector_store %arg17[%c4_92, %c0_93], %117 {strides = array<i32>} : memref<12x1xf32, #tpu.memory_space<vmem>>, vector<4x1xf32>,
    %c0_94 = arith.constant 0 : index
    %c0_95 = arith.constant 0 : index
    %119 = vector.load %arg16[%c0_94, %c0_95] : memref<12x1xf32, #tpu.memory_space<vmem>>, vector<8x1xf32>
    %c0_96 = arith.constant 0 : index
    %c0_97 = arith.constant 0 : index
    %120 = vector.load %arg17[%c0_96, %c0_97] : memref<12x1xf32, #tpu.memory_space<vmem>>, vector<8x1xf32>
    %c0_98 = arith.constant 0 : index
    %c0_99 = arith.constant 0 : index
    %121 = vector.load %arg6[%c0_98, %c0_99] : memref<8x1xf32, #tpu.memory_space<vmem>>, vector<8x1xf32>
    %c0_100 = arith.constant 0 : index
    %c0_101 = arith.constant 0 : index
    %122 = vector.load %arg7[%c0_100, %c0_101] : memref<8x1xf32, #tpu.memory_space<vmem>>, vector<8x1xf32>
    %cst_102 = arith.constant 4.8828125E-4 : f32
    %123 = vector.broadcast %cst_102 : f32 to vector<8x1xf32>
    %124 = arith.mulf %119, %123 : vector<8x1xf32>
    %cst_103 = arith.constant 4.8828125E-4 : f32
    %125 = vector.broadcast %cst_103 : f32 to vector<8x1xf32>
    %126 = arith.mulf %120, %125 : vector<8x1xf32>
    %127 = arith.mulf %124, %124 : vector<8x1xf32>
    %128 = arith.subf %126, %127 : vector<8x1xf32>
    %cst_104 = arith.constant 9.99999974E-6 : f32
    %129 = vector.broadcast %cst_104 : f32 to vector<8x1xf32>
    %130 = arith.addf %128, %129 : vector<8x1xf32>
    %131 = math.rsqrt %130 : vector<8x1xf32>
    %132 = arith.mulf %121, %131 : vector<8x1xf32>
    %133 = arith.mulf %124, %132 : vector<8x1xf32>
    %134 = arith.subf %122, %133 : vector<8x1xf32>
    %c0_105 = arith.constant 0 : index
    %c0_106 = arith.constant 0 : index
    %135 = vector.load %arg14[%c0_105, %c0_106] : memref<12x2048xf32, #tpu.memory_space<vmem>>, vector<8x2048xf32>
    %136 = vector.broadcast %132 : vector<8x1xf32> to vector<8x2048xf32>
    %137 = arith.mulf %135, %136 : vector<8x2048xf32>
    %138 = vector.broadcast %134 : vector<8x1xf32> to vector<8x2048xf32>
    %139 = arith.addf %137, %138 : vector<8x2048xf32>
    %cst_107 = arith.constant 0.000000e+00 : f32
    %140 = vector.broadcast %cst_107 : f32 to vector<8x2048xf32>
    %141 = arith.maximumf %139, %140 : vector<8x2048xf32>
    %142 = arith.truncf %141 : vector<8x2048xf32> to vector<8x2048xbf16>
    %c0_108 = arith.constant 0 : index
    %c128_109 = arith.constant 128 : index
    %143 = vector.load %arg15[%c0_108, %c128_109] : memref<8x2304xbf16, #tpu.memory_space<vmem>>, vector<8x2048xbf16>
    tpu.vector_store %arg15[%c0_108, %c128_109], %142 {strides = array<i32>} : memref<8x2304xbf16, #tpu.memory_space<vmem>>, vector<8x2048xbf16>,
    %cst_110 = arith.constant 0.000000e+00 : f32
    %144 = vector.broadcast %cst_110 : f32 to vector<4x2048xf32>
    %c0_111 = arith.constant 0 : index
    %c95_112 = arith.constant 95 : index
    %145 = vector.load %arg15[%c0_111, %c95_112] : memref<8x2304xbf16, #tpu.memory_space<vmem>>, vector<8x2048xbf16>
    %c0_113 = arith.constant 0 : index
    %c0_114 = arith.constant 0 : index
    %c0_115 = arith.constant 0 : index
    %146 = vector.load %arg8[%c0_113, %c0_114, %c0_115] : memref<9x4x8xbf16, #tpu.memory_space<vmem>>, vector<1x4x8xbf16>
    %147 = vector.shape_cast %146 : vector<1x4x8xbf16> to vector<4x8xbf16>
    %cst_116 = arith.constant dense<0.000000e+00> : vector<4x2048xf32>
    %148 = tpu.matmul %147, %145, %cst_116 {dimension_numbers = #tpu.dot_dimension_numbers<[1], [0], [0], [1], [0, 0, 1, 1], [], []>} : vector<4x8xbf16>, vector<8x2048xbf16>, vector<4x2048xf32> -> vector<4x2048xf32>
    %149 = vector.broadcast %5 : vector<1x2048xf32> to vector<4x2048xf32>
    %150 = arith.mulf %148, %149 : vector<4x2048xf32>
    %151 = arith.addf %144, %150 : vector<4x2048xf32>
    %c0_117 = arith.constant 0 : index
    %c96_118 = arith.constant 96 : index
    %152 = vector.load %arg15[%c0_117, %c96_118] : memref<8x2304xbf16, #tpu.memory_space<vmem>>, vector<8x2048xbf16>
    %c1_119 = arith.constant 1 : index
    %c0_120 = arith.constant 0 : index
    %c0_121 = arith.constant 0 : index
    %153 = vector.load %arg8[%c1_119, %c0_120, %c0_121] : memref<9x4x8xbf16, #tpu.memory_space<vmem>>, vector<1x4x8xbf16>
    %154 = vector.shape_cast %153 : vector<1x4x8xbf16> to vector<4x8xbf16>
    %cst_122 = arith.constant dense<0.000000e+00> : vector<4x2048xf32>
    %155 = tpu.matmul %154, %152, %cst_122 {dimension_numbers = #tpu.dot_dimension_numbers<[1], [0], [0], [1], [0, 0, 1, 1], [], []>} : vector<4x8xbf16>, vector<8x2048xbf16>, vector<4x2048xf32> -> vector<4x2048xf32>
    %156 = vector.broadcast %6 : vector<1x2048xf32> to vector<4x2048xf32>
    %157 = arith.mulf %155, %156 : vector<4x2048xf32>
    %158 = arith.addf %151, %157 : vector<4x2048xf32>
    %c0_123 = arith.constant 0 : index
    %c97_124 = arith.constant 97 : index
    %159 = vector.load %arg15[%c0_123, %c97_124] : memref<8x2304xbf16, #tpu.memory_space<vmem>>, vector<8x2048xbf16>
    %c2_125 = arith.constant 2 : index
    %c0_126 = arith.constant 0 : index
    %c0_127 = arith.constant 0 : index
    %160 = vector.load %arg8[%c2_125, %c0_126, %c0_127] : memref<9x4x8xbf16, #tpu.memory_space<vmem>>, vector<1x4x8xbf16>
    %161 = vector.shape_cast %160 : vector<1x4x8xbf16> to vector<4x8xbf16>
    %cst_128 = arith.constant dense<0.000000e+00> : vector<4x2048xf32>
    %162 = tpu.matmul %161, %159, %cst_128 {dimension_numbers = #tpu.dot_dimension_numbers<[1], [0], [0], [1], [0, 0, 1, 1], [], []>} : vector<4x8xbf16>, vector<8x2048xbf16>, vector<4x2048xf32> -> vector<4x2048xf32>
    %163 = vector.broadcast %7 : vector<1x2048xf32> to vector<4x2048xf32>
    %164 = arith.mulf %162, %163 : vector<4x2048xf32>
    %165 = arith.addf %158, %164 : vector<4x2048xf32>
    %c0_129 = arith.constant 0 : index
    %c127_130 = arith.constant 127 : index
    %166 = vector.load %arg15[%c0_129, %c127_130] : memref<8x2304xbf16, #tpu.memory_space<vmem>>, vector<8x2048xbf16>
    %c3_131 = arith.constant 3 : index
    %c0_132 = arith.constant 0 : index
    %c0_133 = arith.constant 0 : index
    %167 = vector.load %arg8[%c3_131, %c0_132, %c0_133] : memref<9x4x8xbf16, #tpu.memory_space<vmem>>, vector<1x4x8xbf16>
    %168 = vector.shape_cast %167 : vector<1x4x8xbf16> to vector<4x8xbf16>
    %cst_134 = arith.constant dense<0.000000e+00> : vector<4x2048xf32>
    %169 = tpu.matmul %168, %166, %cst_134 {dimension_numbers = #tpu.dot_dimension_numbers<[1], [0], [0], [1], [0, 0, 1, 1], [], []>} : vector<4x8xbf16>, vector<8x2048xbf16>, vector<4x2048xf32> -> vector<4x2048xf32>
    %170 = vector.broadcast %8 : vector<1x2048xf32> to vector<4x2048xf32>
    %171 = arith.mulf %169, %170 : vector<4x2048xf32>
    %172 = arith.addf %165, %171 : vector<4x2048xf32>
    %c0_135 = arith.constant 0 : index
    %c128_136 = arith.constant 128 : index
    %173 = vector.load %arg15[%c0_135, %c128_136] : memref<8x2304xbf16, #tpu.memory_space<vmem>>, vector<8x2048xbf16>
    %c4_137 = arith.constant 4 : index
    %c0_138 = arith.constant 0 : index
    %c0_139 = arith.constant 0 : index
    %174 = vector.load %arg8[%c4_137, %c0_138, %c0_139] : memref<9x4x8xbf16, #tpu.memory_space<vmem>>, vector<1x4x8xbf16>
    %175 = vector.shape_cast %174 : vector<1x4x8xbf16> to vector<4x8xbf16>
    %cst_140 = arith.constant dense<0.000000e+00> : vector<4x2048xf32>
    %176 = tpu.matmul %175, %173, %cst_140 {dimension_numbers = #tpu.dot_dimension_numbers<[1], [0], [0], [1], [0, 0, 1, 1], [], []>} : vector<4x8xbf16>, vector<8x2048xbf16>, vector<4x2048xf32> -> vector<4x2048xf32>
    %177 = vector.broadcast %9 : vector<1x2048xf32> to vector<4x2048xf32>
    %178 = arith.mulf %176, %177 : vector<4x2048xf32>
    %179 = arith.addf %172, %178 : vector<4x2048xf32>
    %c0_141 = arith.constant 0 : index
    %c129_142 = arith.constant 129 : index
    %180 = vector.load %arg15[%c0_141, %c129_142] : memref<8x2304xbf16, #tpu.memory_space<vmem>>, vector<8x2048xbf16>
    %c5_143 = arith.constant 5 : index
    %c0_144 = arith.constant 0 : index
    %c0_145 = arith.constant 0 : index
    %181 = vector.load %arg8[%c5_143, %c0_144, %c0_145] : memref<9x4x8xbf16, #tpu.memory_space<vmem>>, vector<1x4x8xbf16>
    %182 = vector.shape_cast %181 : vector<1x4x8xbf16> to vector<4x8xbf16>
    %cst_146 = arith.constant dense<0.000000e+00> : vector<4x2048xf32>
    %183 = tpu.matmul %182, %180, %cst_146 {dimension_numbers = #tpu.dot_dimension_numbers<[1], [0], [0], [1], [0, 0, 1, 1], [], []>} : vector<4x8xbf16>, vector<8x2048xbf16>, vector<4x2048xf32> -> vector<4x2048xf32>
    %184 = vector.broadcast %10 : vector<1x2048xf32> to vector<4x2048xf32>
    %185 = arith.mulf %183, %184 : vector<4x2048xf32>
    %186 = arith.addf %179, %185 : vector<4x2048xf32>
    %c0_147 = arith.constant 0 : index
    %c159_148 = arith.constant 159 : index
    %187 = vector.load %arg15[%c0_147, %c159_148] : memref<8x2304xbf16, #tpu.memory_space<vmem>>, vector<8x2048xbf16>
    %c6_149 = arith.constant 6 : index
    %c0_150 = arith.constant 0 : index
    %c0_151 = arith.constant 0 : index
    %188 = vector.load %arg8[%c6_149, %c0_150, %c0_151] : memref<9x4x8xbf16, #tpu.memory_space<vmem>>, vector<1x4x8xbf16>
    %189 = vector.shape_cast %188 : vector<1x4x8xbf16> to vector<4x8xbf16>
    %cst_152 = arith.constant dense<0.000000e+00> : vector<4x2048xf32>
    %190 = tpu.matmul %189, %187, %cst_152 {dimension_numbers = #tpu.dot_dimension_numbers<[1], [0], [0], [1], [0, 0, 1, 1], [], []>} : vector<4x8xbf16>, vector<8x2048xbf16>, vector<4x2048xf32> -> vector<4x2048xf32>
    %191 = vector.broadcast %11 : vector<1x2048xf32> to vector<4x2048xf32>
    %192 = arith.mulf %190, %191 : vector<4x2048xf32>
    %193 = arith.addf %186, %192 : vector<4x2048xf32>
    %c0_153 = arith.constant 0 : index
    %c160_154 = arith.constant 160 : index
    %194 = vector.load %arg15[%c0_153, %c160_154] : memref<8x2304xbf16, #tpu.memory_space<vmem>>, vector<8x2048xbf16>
    %c7_155 = arith.constant 7 : index
    %c0_156 = arith.constant 0 : index
    %c0_157 = arith.constant 0 : index
    %195 = vector.load %arg8[%c7_155, %c0_156, %c0_157] : memref<9x4x8xbf16, #tpu.memory_space<vmem>>, vector<1x4x8xbf16>
    %196 = vector.shape_cast %195 : vector<1x4x8xbf16> to vector<4x8xbf16>
    %cst_158 = arith.constant dense<0.000000e+00> : vector<4x2048xf32>
    %197 = tpu.matmul %196, %194, %cst_158 {dimension_numbers = #tpu.dot_dimension_numbers<[1], [0], [0], [1], [0, 0, 1, 1], [], []>} : vector<4x8xbf16>, vector<8x2048xbf16>, vector<4x2048xf32> -> vector<4x2048xf32>
    %198 = vector.broadcast %12 : vector<1x2048xf32> to vector<4x2048xf32>
    %199 = arith.mulf %197, %198 : vector<4x2048xf32>
    %200 = arith.addf %193, %199 : vector<4x2048xf32>
    %c0_159 = arith.constant 0 : index
    %c161_160 = arith.constant 161 : index
    %201 = vector.load %arg15[%c0_159, %c161_160] : memref<8x2304xbf16, #tpu.memory_space<vmem>>, vector<8x2048xbf16>
    %c8_161 = arith.constant 8 : index
    %c0_162 = arith.constant 0 : index
    %c0_163 = arith.constant 0 : index
    %202 = vector.load %arg8[%c8_161, %c0_162, %c0_163] : memref<9x4x8xbf16, #tpu.memory_space<vmem>>, vector<1x4x8xbf16>
    %203 = vector.shape_cast %202 : vector<1x4x8xbf16> to vector<4x8xbf16>
    %cst_164 = arith.constant dense<0.000000e+00> : vector<4x2048xf32>
    %204 = tpu.matmul %203, %201, %cst_164 {dimension_numbers = #tpu.dot_dimension_numbers<[1], [0], [0], [1], [0, 0, 1, 1], [], []>} : vector<4x8xbf16>, vector<8x2048xbf16>, vector<4x2048xf32> -> vector<4x2048xf32>
    %205 = vector.broadcast %13 : vector<1x2048xf32> to vector<4x2048xf32>
    %206 = arith.mulf %204, %205 : vector<4x2048xf32>
    %207 = arith.addf %200, %206 : vector<4x2048xf32>
    %c8_165 = arith.constant 8 : index
    %c0_166 = arith.constant 0 : index
    %208 = vector.load %arg14[%c8_165, %c0_166] : memref<12x2048xf32, #tpu.memory_space<vmem>>, vector<4x2048xf32>
    tpu.vector_store %arg14[%c8_165, %c0_166], %207 {strides = array<i32>} : memref<12x2048xf32, #tpu.memory_space<vmem>>, vector<4x2048xf32>,
    %cst_167 = arith.constant dense<0.000000e+00> : vector<4xf32>
    %209 = vector.multi_reduction <add>, %207, %cst_167 [1] : vector<4x2048xf32> to vector<4xf32>
    %210 = vector.shape_cast %209 : vector<4xf32> to vector<4x1xf32>
    %c8_168 = arith.constant 8 : index
    %c0_169 = arith.constant 0 : index
    %211 = vector.load %arg16[%c8_168, %c0_169] : memref<12x1xf32, #tpu.memory_space<vmem>>, vector<4x1xf32>
    tpu.vector_store %arg16[%c8_168, %c0_169], %210 {strides = array<i32>} : memref<12x1xf32, #tpu.memory_space<vmem>>, vector<4x1xf32>,
    %212 = arith.mulf %207, %207 : vector<4x2048xf32>
    %cst_170 = arith.constant dense<0.000000e+00> : vector<4xf32>
    %213 = vector.multi_reduction <add>, %212, %cst_170 [1] : vector<4x2048xf32> to vector<4xf32>
    %214 = vector.shape_cast %213 : vector<4xf32> to vector<4x1xf32>
    %c8_171 = arith.constant 8 : index
    %c0_172 = arith.constant 0 : index
    %215 = vector.load %arg17[%c8_171, %c0_172] : memref<12x1xf32, #tpu.memory_space<vmem>>, vector<4x1xf32>
    tpu.vector_store %arg17[%c8_171, %c0_172], %214 {strides = array<i32>} : memref<12x1xf32, #tpu.memory_space<vmem>>, vector<4x1xf32>,
    %c0_173 = arith.constant 0 : index
    %c0_174 = arith.constant 0 : index
    %216 = vector.load %arg16[%c0_173, %c0_174] : memref<12x1xf32, #tpu.memory_space<vmem>>, vector<12x1xf32>
    %c0_175 = arith.constant 0 : index
    %c0_176 = arith.constant 0 : index
    %217 = vector.load %arg17[%c0_175, %c0_176] : memref<12x1xf32, #tpu.memory_space<vmem>>, vector<12x1xf32>
    %c0_177 = arith.constant 0 : index
    %c0_178 = arith.constant 0 : index
    %218 = vector.load %arg9[%c0_177, %c0_178] : memref<12x1xf32, #tpu.memory_space<vmem>>, vector<12x1xf32>
    %c0_179 = arith.constant 0 : index
    %c0_180 = arith.constant 0 : index
    %219 = vector.load %arg10[%c0_179, %c0_180] : memref<12x1xf32, #tpu.memory_space<vmem>>, vector<12x1xf32>
    %cst_181 = arith.constant 4.8828125E-4 : f32
    %220 = vector.broadcast %cst_181 : f32 to vector<12x1xf32>
    %221 = arith.mulf %216, %220 : vector<12x1xf32>
    %cst_182 = arith.constant 4.8828125E-4 : f32
    %222 = vector.broadcast %cst_182 : f32 to vector<12x1xf32>
    %223 = arith.mulf %217, %222 : vector<12x1xf32>
    %224 = arith.mulf %221, %221 : vector<12x1xf32>
    %225 = arith.subf %223, %224 : vector<12x1xf32>
    %cst_183 = arith.constant 9.99999974E-6 : f32
    %226 = vector.broadcast %cst_183 : f32 to vector<12x1xf32>
    %227 = arith.addf %225, %226 : vector<12x1xf32>
    %228 = math.rsqrt %227 : vector<12x1xf32>
    %229 = arith.mulf %218, %228 : vector<12x1xf32>
    %230 = arith.mulf %221, %229 : vector<12x1xf32>
    %231 = arith.subf %219, %230 : vector<12x1xf32>
    %c0_184 = arith.constant 0 : index
    %c0_185 = arith.constant 0 : index
    %232 = vector.load %arg14[%c0_184, %c0_185] : memref<12x2048xf32, #tpu.memory_space<vmem>>, vector<12x2048xf32>
    %233 = vector.broadcast %229 : vector<12x1xf32> to vector<12x2048xf32>
    %234 = arith.mulf %232, %233 : vector<12x2048xf32>
    %235 = vector.broadcast %231 : vector<12x1xf32> to vector<12x2048xf32>
    %236 = arith.addf %234, %235 : vector<12x2048xf32>
    %cst_186 = arith.constant 0.000000e+00 : f32
    %237 = vector.broadcast %cst_186 : f32 to vector<12x2048xf32>
    %238 = arith.maximumf %236, %237 : vector<12x2048xf32>
    %239 = arith.truncf %238 : vector<12x2048xf32> to vector<12x2048xbf16>
    %c0_187 = arith.constant 0 : index
    %c0_188 = arith.constant 0 : index
    %240 = vector.load %arg11[%c0_187, %c0_188] : memref<6x12xbf16, #tpu.memory_space<vmem>>, vector<6x12xbf16>
    %cst_189 = arith.constant dense<0.000000e+00> : vector<6x2048xf32>
    %241 = tpu.matmul %240, %239, %cst_189 {dimension_numbers = #tpu.dot_dimension_numbers<[1], [0], [0], [1], [0, 0, 1, 1], [], []>} : vector<6x12xbf16>, vector<12x2048xbf16>, vector<6x2048xf32> -> vector<6x2048xf32>
    %c0_190 = arith.constant 0 : index
    %c0_191 = arith.constant 0 : index
    %242 = vector.load %arg12[%c0_190, %c0_191] : memref<1024x256xbf16, #tpu.memory_space<vmem>>, vector<1024x256xbf16>
    %243 = vector.extract_strided_slice %241 {offsets = [0, 0], sizes = [6, 1024], strides = [1, 1]} : vector<6x2048xf32> to vector<6x1024xf32>
    %244 = arith.truncf %243 : vector<6x1024xf32> to vector<6x1024xbf16>
    %cst_192 = arith.constant dense<0.000000e+00> : vector<6x256xf32>
    %245 = tpu.matmul %244, %242, %cst_192 {dimension_numbers = #tpu.dot_dimension_numbers<[1], [0], [0], [1], [0, 0, 1, 1], [], []>} : vector<6x1024xbf16>, vector<1024x256xbf16>, vector<6x256xf32> -> vector<6x256xf32>
    %c0_193 = arith.constant 0 : index
    %c0_194 = arith.constant 0 : index
    %246 = vector.load %arg13[%c0_193, %c0_194] : memref<6x512xf32, #tpu.memory_space<vmem>>, vector<6x256xf32>
    tpu.vector_store %arg13[%c0_193, %c0_194], %245 {strides = array<i32>} : memref<6x512xf32, #tpu.memory_space<vmem>>, vector<6x256xf32>,
    %247 = vector.extract_strided_slice %241 {offsets = [0, 1024], sizes = [6, 1024], strides = [1, 1]} : vector<6x2048xf32> to vector<6x1024xf32>
    %248 = arith.truncf %247 : vector<6x1024xf32> to vector<6x1024xbf16>
    %cst_195 = arith.constant dense<0.000000e+00> : vector<6x256xf32>
    %249 = tpu.matmul %248, %242, %cst_195 {dimension_numbers = #tpu.dot_dimension_numbers<[1], [0], [0], [1], [0, 0, 1, 1], [], []>} : vector<6x1024xbf16>, vector<1024x256xbf16>, vector<6x256xf32> -> vector<6x256xf32>
    %c0_196 = arith.constant 0 : index
    %c256 = arith.constant 256 : index
    %250 = vector.load %arg13[%c0_196, %c256] : memref<6x512xf32, #tpu.memory_space<vmem>>, vector<6x256xf32>
    tpu.vector_store %arg13[%c0_196, %c256], %249 {strides = array<i32>} : memref<6x512xf32, #tpu.memory_space<vmem>>, vector<6x256xf32>,
    return
  }
  func.func @transform_0(%arg0: i32) -> (i32, i32) {
    %c0_i32 = arith.constant 0 : i32
    %c0_i32_0 = arith.constant 0 : i32
    %c0_i32_1 = arith.constant 0 : i32
    return %c0_i32, %c0_i32_0 : i32, i32
  }
  func.func @transform_1(%arg0: i32) -> (i32, i32) {
    %c0_i32 = arith.constant 0 : i32
    %c0_i32_0 = arith.constant 0 : i32
    %c0_i32_1 = arith.constant 0 : i32
    return %c0_i32, %c0_i32_0 : i32, i32
  }
  func.func @transform_2(%arg0: i32) -> (i32, i32) {
    %c0_i32 = arith.constant 0 : i32
    %c0_i32_0 = arith.constant 0 : i32
    %c0_i32_1 = arith.constant 0 : i32
    return %c0_i32, %c0_i32_0 : i32, i32
  }
  func.func @transform_3(%arg0: i32) -> (i32, i32) {
    %c0_i32 = arith.constant 0 : i32
    %c0_i32_0 = arith.constant 0 : i32
    %c0_i32_1 = arith.constant 0 : i32
    return %c0_i32, %c0_i32_0 : i32, i32
  }
  func.func @transform_4(%arg0: i32) -> (i32, i32, i32) {
    %c0_i32 = arith.constant 0 : i32
    %c0_i32_0 = arith.constant 0 : i32
    %c0_i32_1 = arith.constant 0 : i32
    %c0_i32_2 = arith.constant 0 : i32
    return %c0_i32, %c0_i32_0, %c0_i32_1 : i32, i32, i32
  }
  func.func @transform_5(%arg0: i32) -> (i32, i32) {
    %c0_i32 = arith.constant 0 : i32
    %c0_i32_0 = arith.constant 0 : i32
    %c0_i32_1 = arith.constant 0 : i32
    return %c0_i32, %c0_i32_0 : i32, i32
  }
  func.func @transform_6(%arg0: i32) -> (i32, i32) {
    %c0_i32 = arith.constant 0 : i32
    %c0_i32_0 = arith.constant 0 : i32
    %c0_i32_1 = arith.constant 0 : i32
    return %c0_i32, %c0_i32_0 : i32, i32
  }
  func.func @transform_7(%arg0: i32) -> (i32, i32, i32) {
    %c0_i32 = arith.constant 0 : i32
    %c0_i32_0 = arith.constant 0 : i32
    %c0_i32_1 = arith.constant 0 : i32
    %c0_i32_2 = arith.constant 0 : i32
    return %c0_i32, %c0_i32_0, %c0_i32_1 : i32, i32, i32
  }
  func.func @transform_8(%arg0: i32) -> (i32, i32) {
    %c0_i32 = arith.constant 0 : i32
    %c0_i32_0 = arith.constant 0 : i32
    %c0_i32_1 = arith.constant 0 : i32
    return %c0_i32, %c0_i32_0 : i32, i32
  }
  func.func @transform_9(%arg0: i32) -> (i32, i32) {
    %c0_i32 = arith.constant 0 : i32
    %c0_i32_0 = arith.constant 0 : i32
    %c0_i32_1 = arith.constant 0 : i32
    return %c0_i32, %c0_i32_0 : i32, i32
  }
  func.func @transform_10(%arg0: i32) -> (i32, i32) {
    %c0_i32 = arith.constant 0 : i32
    %c0_i32_0 = arith.constant 0 : i32
    %c0_i32_1 = arith.constant 0 : i32
    return %c0_i32, %c0_i32_0 : i32, i32
  }
  func.func @transform_11(%arg0: i32) -> (i32, i32) {
    %c0_i32 = arith.constant 0 : i32
    %c0_i32_0 = arith.constant 0 : i32
    %c0_i32_1 = arith.constant 0 : i32
    return %c0_i32, %c0_i32_0 : i32, i32
  }
  func.func @transform_12(%arg0: i32) -> (i32, i32) {
    %c0_i32 = arith.constant 0 : i32
    %c0_i32_0 = arith.constant 0 : i32
    %c0_i32_1 = arith.constant 0 : i32
    return %c0_i32, %c0_i32_0 : i32, i32
  }
}

</mosaic_0001>

<llo_original>
// kernel: tpu_custom_call.1
$region0: #{tpu_custom_call.1}
  #allocation0 [shape = 'u32[]', space=smem, size = 0x4, offset = 0x4, fixed_abs, tag = 'smem constant byte address 0x4 - core index']
  #allocation1 [shape = 'u32[144,128]{1,0:T(1,128)}', space=vmem, size = 0x12000, scoped, tag = 'internal scratch']
  #allocation2 [shape = 'f32[12,2048]{1,0:T(8,128)}', space=vmem, size = 0x20000, scoped, tag = 'scratch operand']
  #allocation3 [shape = 'bf16[8,2304]{1,0:T(8,128)(2,1)}', space=vmem, size = 0x9000, scoped, tag = 'scratch operand']
  #allocation4 [shape = 'f32[12,1]{1,0:T(8,128)}', space=vmem, size = 0x2000, scoped, tag = 'scratch operand']
  #allocation5 [shape = 'f32[12,1]{1,0:T(8,128)}', space=vmem, size = 0x2000, scoped, tag = 'scratch operand']
  %s0 = inlined_call_operand.vmem [shape: f32[4,2048], index: 0, kind: input, shape index: {}]
  %s1 = inlined_call_operand.hbm [shape: f32[9,2048], index: 1, kind: input, shape index: {}]
  %s2 = inlined_call_operand.vmem [shape: f32[4,1], index: 2, kind: input, shape index: {}]
  %s3 = inlined_call_operand.vmem [shape: f32[4,1], index: 3, kind: input, shape index: {}]
  %s4 = inlined_call_operand.vmem [shape: bf16[9,4,4], index: 4, kind: input, shape index: {}]
  %s5 = inlined_call_operand.vmem [shape: f32[8,1], index: 5, kind: input, shape index: {}]
  %s6 = inlined_call_operand.vmem [shape: f32[8,1], index: 6, kind: input, shape index: {}]
  %s7 = inlined_call_operand.vmem [shape: bf16[9,4,8], index: 7, kind: input, shape index: {}]
  %s8 = inlined_call_operand.vmem [shape: f32[12,1], index: 8, kind: input, shape index: {}]
  %s9 = inlined_call_operand.vmem [shape: f32[12,1], index: 9, kind: input, shape index: {}]
  %s10 = inlined_call_operand.vmem [shape: bf16[6,12], index: 10, kind: input, shape index: {}]
  %s11 = inlined_call_operand.hbm [shape: bf16[1024,256], index: 11, kind: input, shape index: {}]
  %s12 = inlined_call_operand.hbm [shape: f32[6,512], index: 12, kind: output, shape index: {}]
  %s13 = sld [smem:[#allocation0]]
  $region66: #{tpu_custom_call.1} parent=0
    _
  %s15 = ssub.s32 1, %s13
  %s16 = scalar_select 0, %s15, %s13
  $region1: #{tpu_custom_call.1} parent=0
    #allocation6 [shape = 'u8[131072]{0}', space=vmem, size = 0x20000, scoped, tag = 'input window, operand 1, single buffered']
    #allocation7 [shape = 's32[1]{0}', space=sflag, size = 0x4, scoped, tag = 'scoped memory for tpu_custom_call.1']
    #allocation8 [shape = 's32[1]{0}', space=sflag, size = 0x4, scoped, tag = 'scoped memory for tpu_custom_call.1']
    #allocation9 [shape = 'u8[524288]{0}', space=vmem, size = 0x80000, scoped, tag = 'input window, operand 11, single buffered']
    #allocation10 [shape = 's32[1]{0}', space=sflag, size = 0x4, scoped, tag = 'scoped memory for tpu_custom_call.1']
    #allocation11 [shape = 'u8[16384]{0}', space=vmem, size = 0x4000, scoped, tag = 'output window, operand 0, single buffered']
    %17 = vsyncpa [#allocation7], 0
    %18 = vsyncpa [#allocation10], 0
    %19 = vsyncpa [#allocation8], 0
    // Predicated region
    $region2: #{tpu_custom_call.1} parent=1 // pred_check
      _
    $region3: #{tpu_custom_call.1} parent=1 // pred_check_branch
      %21 = sbr.rel (0) target = $region5
    $region4: #{tpu_custom_call.1} parent=1 // pred_region
      _
    $region5: #{tpu_custom_call.1} parent=1 // pred_fallthru
      _
    // Predicated region
    $region6: #{tpu_custom_call.1} parent=1 // pred_check
      _
    $region7: #{tpu_custom_call.1} parent=1 // pred_check_branch
      %23 = sbr.rel (0) target = $region9
    $region8: #{tpu_custom_call.1} parent=1 // pred_region
      %s25 = ssub.s32 4096, 4096
      %26 = vsyncadd [#allocation7], %s25
      %s27 = sshll.u32 [#allocation6], 4
      %s28 = int_to_ptr.vmem [resolvable:$true] %s27
      %33 = dma.hbm_to_vmem [thread:$0]  %s1, 4096, %s28, [#allocation7], 2048, 2048, 128
    $region9: #{tpu_custom_call.1} parent=1 // pred_fallthru
      _
    // Predicated region
    $region10: #{tpu_custom_call.1} parent=1 // pred_check
      _
    $region11: #{tpu_custom_call.1} parent=1 // pred_check_branch
      %35 = sbr.rel (0) target = $region13
    $region12: #{tpu_custom_call.1} parent=1 // pred_region
      _
    $region13: #{tpu_custom_call.1} parent=1 // pred_fallthru
      _
    // Predicated region
    $region14: #{tpu_custom_call.1} parent=1 // pred_check
      _
    $region15: #{tpu_custom_call.1} parent=1 // pred_check_branch
      %37 = sbr.rel (0) target = $region17
    $region16: #{tpu_custom_call.1} parent=1 // pred_region
      _
    $region17: #{tpu_custom_call.1} parent=1 // pred_fallthru
      _
    // Predicated region
    $region18: #{tpu_custom_call.1} parent=1 // pred_check
      _
    $region19: #{tpu_custom_call.1} parent=1 // pred_check_branch
      %39 = sbr.rel (0) target = $region21
    $region20: #{tpu_custom_call.1} parent=1 // pred_region
      _
    $region21: #{tpu_custom_call.1} parent=1 // pred_fallthru
      _
    // Predicated region
    $region22: #{tpu_custom_call.1} parent=1 // pred_check
      _
    $region23: #{tpu_custom_call.1} parent=1 // pred_check_branch
      %41 = sbr.rel (0) target = $region25
    $region24: #{tpu_custom_call.1} parent=1 // pred_region
      _
    $region25: #{tpu_custom_call.1} parent=1 // pred_fallthru
      _
    // Predicated region
    $region26: #{tpu_custom_call.1} parent=1 // pred_check
      _
    $region27: #{tpu_custom_call.1} parent=1 // pred_check_branch
      %43 = sbr.rel (0) target = $region29
    $region28: #{tpu_custom_call.1} parent=1 // pred_region
      _
    $region29: #{tpu_custom_call.1} parent=1 // pred_fallthru
      _
    // Predicated region
    $region30: #{tpu_custom_call.1} parent=1 // pred_check
      _
    $region31: #{tpu_custom_call.1} parent=1 // pred_check_branch
      %45 = sbr.rel (0) target = $region33
    $region32: #{tpu_custom_call.1} parent=1 // pred_region
      _
    $region33: #{tpu_custom_call.1} parent=1 // pred_fallthru
      _
    // Predicated region
    $region34: #{tpu_custom_call.1} parent=1 // pred_check
      _
    $region35: #{tpu_custom_call.1} parent=1 // pred_check_branch
      %47 = sbr.rel (0) target = $region37
    $region36: #{tpu_custom_call.1} parent=1 // pred_region
      _
    $region37: #{tpu_custom_call.1} parent=1 // pred_fallthru
      _
    // Predicated region
    $region38: #{tpu_custom_call.1} parent=1 // pred_check
      _
    $region39: #{tpu_custom_call.1} parent=1 // pred_check_branch
      %49 = sbr.rel (0) target = $region41
    $region40: #{tpu_custom_call.1} parent=1 // pred_region
      _
    $region41: #{tpu_custom_call.1} parent=1 // pred_fallthru
      _
    // Predicated region
    $region42: #{tpu_custom_call.1} parent=1 // pred_check
      _
    $region43: #{tpu_custom_call.1} parent=1 // pred_check_branch
      %51 = sbr.rel (0) target = $region45
    $region44: #{tpu_custom_call.1} parent=1 // pred_region
      _
    $region45: #{tpu_custom_call.1} parent=1 // pred_fallthru
      _
    // Predicated region
    $region46: #{tpu_custom_call.1} parent=1 // pred_check
      _
    $region47: #{tpu_custom_call.1} parent=1 // pred_check_branch
      %53 = sbr.rel (0) target = $region49
    $region48: #{tpu_custom_call.1} parent=1 // pred_region
      %s55 = ssub.s32 16384, 16384
      %56 = vsyncadd [#allocation10], %s55
      %s57 = sshll.u32 [#allocation9], 4
      %s58 = int_to_ptr.vmem [resolvable:$true] %s57
      %63 = dma.hbm_to_vmem [thread:$0]  %s11, 16384, %s58, [#allocation10], 128, 128, 8
    $region49: #{tpu_custom_call.1} parent=1 // pred_fallthru
      _
    // Predicated region
    $region50: #{tpu_custom_call.1} parent=1 // pred_check
      _
    $region51: #{tpu_custom_call.1} parent=1 // pred_check_branch
      %65 = sbr.rel (0) target = $region53
    $region52: #{tpu_custom_call.1} parent=1 // pred_region
      %66 = dma.done [#allocation7], 4096
    $region53: #{tpu_custom_call.1} parent=1 // pred_fallthru
      _
    // Predicated region
    $region54: #{tpu_custom_call.1} parent=1 // pred_check
      _
    $region55: #{tpu_custom_call.1} parent=1 // pred_check_branch
      %68 = sbr.rel (0) target = $region57
    $region56: #{tpu_custom_call.1} parent=1 // pred_region
      %69 = dma.done [#allocation10], 16384
    $region57: #{tpu_custom_call.1} parent=1 // pred_fallthru
      _
    %71 = vst [vmem:[#allocation3] sm:$0xf] 0
    %72 = vst [vmem:[#allocation3 + $0x44] sm:$0xf] 0
    %v73 = vld [vmem:[%s0] sm:$0xff]
    %v74 = vld [vmem:[%s0 + $0x8] sm:$0xff]
    %v75 = vld [vmem:[%s0 + $0x10] sm:$0xff]
    %v76 = vld [vmem:[%s0 + $0x18] sm:$0xff]
    %v77 = vld [vmem:[%s0 + $0x20] sm:$0xff]
    %v78 = vld [vmem:[%s0 + $0x28] sm:$0xff]
    %v79 = vld [vmem:[%s0 + $0x30] sm:$0xff]
    %v80 = vld [vmem:[%s0 + $0x38] sm:$0xff]
    %v89 = vcombine.high %v73, %v73
    %v90 = vcombine.high %v74, %v74
    %v91 = vcombine.high %v75, %v75
    %v92 = vcombine.high %v76, %v76
    %v93 = vcombine.high %v77, %v77
    %v94 = vcombine.high %v78, %v78
    %v95 = vcombine.high %v79, %v79
    %v96 = vcombine.high %v80, %v80
    %105 = vst [vmem:[#allocation2] sm:$0xf] %v73
    %106 = vst [vmem:[#allocation2 + $0x8] sm:$0xf] %v89
    %107 = vst [vmem:[#allocation2 + $0x10] sm:$0xf] %v74
    %108 = vst [vmem:[#allocation2 + $0x18] sm:$0xf] %v90
    %109 = vst [vmem:[#allocation2 + $0x20] sm:$0xf] %v75
    %110 = vst [vmem:[#allocation2 + $0x28] sm:$0xf] %v91
    %111 = vst [vmem:[#allocation2 + $0x30] sm:$0xf] %v76
    %112 = vst [vmem:[#allocation2 + $0x38] sm:$0xf] %v92
    %113 = vst [vmem:[#allocation2 + $0x40] sm:$0xf] %v77
    %114 = vst [vmem:[#allocation2 + $0x48] sm:$0xf] %v93
    %115 = vst [vmem:[#allocation2 + $0x50] sm:$0xf] %v78
    %116 = vst [vmem:[#allocation2 + $0x58] sm:$0xf] %v94
    %117 = vst [vmem:[#allocation2 + $0x60] sm:$0xf] %v79
    %118 = vst [vmem:[#allocation2 + $0x68] sm:$0xf] %v95
    %119 = vst [vmem:[#allocation2 + $0x70] sm:$0xf] %v80
    %120 = vst [vmem:[#allocation2 + $0x78] sm:$0xf] %v96
    %v121 = vld [vmem:[#allocation6] ss:$8 sm:$0xf]
    %v122 = vld [vmem:[#allocation6] ss:$8 sm:$0xf0]
    %v123 = vor.u32 %v121, %v122
    %s124 = scalar_lea.vmem [#allocation6], 64
    %v125 = vld [vmem:[%s124] ss:$8 sm:$0xf]
    %v126 = vld [vmem:[%s124] ss:$8 sm:$0xf0]
    %v127 = vor.u32 %v125, %v126
    %s128 = scalar_lea.vmem [#allocation6], 1
    %v129 = vld [vmem:[%s128] ss:$8 sm:$0xf]
    %v130 = vld [vmem:[%s128] ss:$8 sm:$0xf0]
    %v131 = vor.u32 %v129, %v130
    %s132 = scalar_lea.vmem [#allocation6], 65
    %v133 = vld [vmem:[%s132] ss:$8 sm:$0xf]
    %v134 = vld [vmem:[%s132] ss:$8 sm:$0xf0]
    %v135 = vor.u32 %v133, %v134
    %s136 = scalar_lea.vmem [#allocation6], 2
    %v137 = vld [vmem:[%s136] ss:$8 sm:$0xf]
    %v138 = vld [vmem:[%s136] ss:$8 sm:$0xf0]
    %v139 = vor.u32 %v137, %v138
    %s140 = scalar_lea.vmem [#allocation6], 66
    %v141 = vld [vmem:[%s140] ss:$8 sm:$0xf]
    %v142 = vld [vmem:[%s140] ss:$8 sm:$0xf0]
    %v143 = vor.u32 %v141, %v142
    %s144 = scalar_lea.vmem [#allocation6], 3
    %v145 = vld [vmem:[%s144] ss:$8 sm:$0xf]
    %v146 = vld [vmem:[%s144] ss:$8 sm:$0xf0]
    %v147 = vor.u32 %v145, %v146
    %s148 = scalar_lea.vmem [#allocation6], 67
    %v149 = vld [vmem:[%s148] ss:$8 sm:$0xf]
    %v150 = vld [vmem:[%s148] ss:$8 sm:$0xf0]
    %v151 = vor.u32 %v149, %v150
    %s152 = scalar_lea.vmem [#allocation6], 4
    %v153 = vld [vmem:[%s152] ss:$8 sm:$0xf]
    %v154 = vld [vmem:[%s152] ss:$8 sm:$0xf0]
    %v155 = vor.u32 %v153, %v154
    %s156 = scalar_lea.vmem [#allocation6], 68
    %v157 = vld [vmem:[%s156] ss:$8 sm:$0xf]
    %v158 = vld [vmem:[%s156] ss:$8 sm:$0xf0]
    %v159 = vor.u32 %v157, %v158
    %s160 = scalar_lea.vmem [#allocation6], 5
    %v161 = vld [vmem:[%s160] ss:$8 sm:$0xf]
    %v162 = vld [vmem:[%s160] ss:$8 sm:$0xf0]
    %v163 = vor.u32 %v161, %v162
    %s164 = scalar_lea.vmem [#allocation6], 69
    %v165 = vld [vmem:[%s164] ss:$8 sm:$0xf]
    %v166 = vld [vmem:[%s164] ss:$8 sm:$0xf0]
    %v167 = vor.u32 %v165, %v166
    %s168 = scalar_lea.vmem [#allocation6], 6
    %v169 = vld [vmem:[%s168] ss:$8 sm:$0xf]
    %v170 = vld [vmem:[%s168] ss:$8 sm:$0xf0]
    %v171 = vor.u32 %v169, %v170
    %s172 = scalar_lea.vmem [#allocation6], 70
    %v173 = vld [vmem:[%s172] ss:$8 sm:$0xf]
    %v174 = vld [vmem:[%s172] ss:$8 sm:$0xf0]
    %v175 = vor.u32 %v173, %v174
    %s176 = scalar_lea.vmem [#allocation6], 7
    %v177 = vld [vmem:[%s176] ss:$8 sm:$0xf]
    %v178 = vld [vmem:[%s176] ss:$8 sm:$0xf0]
    %v179 = vor.u32 %v177, %v178
    %s180 = scalar_lea.vmem [#allocation6], 71
    %v181 = vld [vmem:[%s180] ss:$8 sm:$0xf]
    %v182 = vld [vmem:[%s180] ss:$8 sm:$0xf0]
    %v183 = vor.u32 %v181, %v182
    %s184 = scalar_lea.vmem [#allocation6], 128
    %v185 = vld [vmem:[%s184] ss:$8 sm:$0xf]
    %v186 = vld [vmem:[%s184] ss:$8 sm:$0xf0]
    %v187 = vor.u32 %v185, %v186
    %s188 = scalar_lea.vmem [#allocation6], 192
    %v189 = vld [vmem:[%s188] ss:$8 sm:$0xf]
    %v190 = vld [vmem:[%s188] ss:$8 sm:$0xf0]
    %v191 = vor.u32 %v189, %v190
    %v192 = vld [vmem:[#allocation2] sm:$0xf]
    %v193 = vld [vmem:[#allocation2 + $0x8] sm:$0xf]
    %v194 = vld [vmem:[#allocation2 + $0x10] sm:$0xf]
    %v195 = vld [vmem:[#allocation2 + $0x18] sm:$0xf]
    %v196 = vld [vmem:[#allocation2 + $0x20] sm:$0xf]
    %v197 = vld [vmem:[#allocation2 + $0x28] sm:$0xf]
    %v198 = vld [vmem:[#allocation2 + $0x30] sm:$0xf]
    %v199 = vld [vmem:[#allocation2 + $0x38] sm:$0xf]
    %v200 = vld [vmem:[#allocation2 + $0x40] sm:$0xf]
    %v201 = vld [vmem:[#allocation2 + $0x48] sm:$0xf]
    %v202 = vld [vmem:[#allocation2 + $0x50] sm:$0xf]
    %v203 = vld [vmem:[#allocation2 + $0x58] sm:$0xf]
    %v204 = vld [vmem:[#allocation2 + $0x60] sm:$0xf]
    %v205 = vld [vmem:[#allocation2 + $0x68] sm:$0xf]
    %v206 = vld [vmem:[#allocation2 + $0x70] sm:$0xf]
    %v207 = vld [vmem:[#allocation2 + $0x78] sm:$0xf]
    %vm208 = vcmask 1043456
    %v209 = vsel %vm208, %v192, 0.0
    %v210 = vsel %vm208, %v193, 0.0
    %v211 = vadd.f32 %v209, %v210
    %v212 = vsel %vm208, %v194, 0.0
    %v213 = vadd.f32 %v211, %v212
    %v214 = vsel %vm208, %v195, 0.0
    %v215 = vadd.f32 %v213, %v214
    %v216 = vsel %vm208, %v196, 0.0
    %v217 = vadd.f32 %v215, %v216
    %v218 = vsel %vm208, %v197, 0.0
    %v219 = vadd.f32 %v217, %v218
    %v220 = vsel %vm208, %v198, 0.0
    %v221 = vadd.f32 %v219, %v220
    %v222 = vsel %vm208, %v199, 0.0
    %v223 = vadd.f32 %v221, %v222
    %v224 = vsel %vm208, %v200, 0.0
    %v225 = vadd.f32 %v223, %v224
    %v226 = vsel %vm208, %v201, 0.0
    %v227 = vadd.f32 %v225, %v226
    %v228 = vsel %vm208, %v202, 0.0
    %v229 = vadd.f32 %v227, %v228
    %v230 = vsel %vm208, %v203, 0.0
    %v231 = vadd.f32 %v229, %v230
    %v232 = vsel %vm208, %v204, 0.0
    %v233 = vadd.f32 %v231, %v232
    %v234 = vsel %vm208, %v205, 0.0
    %v235 = vadd.f32 %v233, %v234
    %v236 = vsel %vm208, %v206, 0.0
    %v237 = vadd.f32 %v235, %v236
    %v238 = vsel %vm208, %v207, 0.0
    %v239 = vadd.f32 %v237, %v238
    %240 = vadd.xlane.f32.xlu0 %v239
    %v241 = vpop.xlane.xlu0 %240
    %vm242 = vcmask 3072
    %243 = vst.msk [vmem:[#allocation4] sm:$0xf] %vm242, %v241
    %v244 = vmul.f32 %v192, %v192
    %v245 = vmul.f32 %v193, %v193
    %v246 = vmul.f32 %v194, %v194
    %v247 = vmul.f32 %v195, %v195
    %v248 = vmul.f32 %v196, %v196
    %v249 = vmul.f32 %v197, %v197
    %v250 = vmul.f32 %v198, %v198
    %v251 = vmul.f32 %v199, %v199
    %v252 = vmul.f32 %v200, %v200
    %v253 = vmul.f32 %v201, %v201
    %v254 = vmul.f32 %v202, %v202
    %v255 = vmul.f32 %v203, %v203
    %v256 = vmul.f32 %v204, %v204
    %v257 = vmul.f32 %v205, %v205
    %v258 = vmul.f32 %v206, %v206
    %v259 = vmul.f32 %v207, %v207
    %v260 = vsel %vm208, %v244, 0.0
    %v261 = vsel %vm208, %v245, 0.0
    %v262 = vadd.f32 %v260, %v261
    %v263 = vsel %vm208, %v246, 0.0
    %v264 = vadd.f32 %v262, %v263
    %v265 = vsel %vm208, %v247, 0.0
    %v266 = vadd.f32 %v264, %v265
    %v267 = vsel %vm208, %v248, 0.0
    %v268 = vadd.f32 %v266, %v267
    %v269 = vsel %vm208, %v249, 0.0
    %v270 = vadd.f32 %v268, %v269
    %v271 = vsel %vm208, %v250, 0.0
    %v272 = vadd.f32 %v270, %v271
    %v273 = vsel %vm208, %v251, 0.0
    %v274 = vadd.f32 %v272, %v273
    %v275 = vsel %vm208, %v252, 0.0
    %v276 = vadd.f32 %v274, %v275
    %v277 = vsel %vm208, %v253, 0.0
    %v278 = vadd.f32 %v276, %v277
    %v279 = vsel %vm208, %v254, 0.0
    %v280 = vadd.f32 %v278, %v279
    %v281 = vsel %vm208, %v255, 0.0
    %v282 = vadd.f32 %v280, %v281
    %v283 = vsel %vm208, %v256, 0.0
    %v284 = vadd.f32 %v282, %v283
    %v285 = vsel %vm208, %v257, 0.0
    %v286 = vadd.f32 %v284, %v285
    %v287 = vsel %vm208, %v258, 0.0
    %v288 = vadd.f32 %v286, %v287
    %v289 = vsel %vm208, %v259, 0.0
    %v290 = vadd.f32 %v288, %v289
    %291 = vadd.xlane.f32.xlu0 %v290
    %v292 = vpop.xlane.xlu0 %291
    %293 = vst.msk [vmem:[#allocation5] sm:$0xf] %vm242, %v292
    %v294 = vld [vmem:[#allocation4] sm:$0xf]
    %v295 = vld [vmem:[#allocation5] sm:$0xf]
    %v296 = vld [vmem:[%s2] sm:$0xf]
    %v297 = vld [vmem:[%s3] sm:$0xf]
    %v298 = vmul.f32 %v294, 0.00048828125
    %v299 = vmul.f32 %v295, 0.00048828125
    %v300 = vmul.f32 %v298, %v298
    %v301 = vsub.f32 %v299, %v300
    %v302 = vadd.f32 %v301, 1e-05
    %v303 = vrsqrt.pop %v302
    %v304 = vmul.f32 %v296, %v303
    %v305 = vmul.f32 %v298, %v304
    %v306 = vsub.f32 %v297, %v305
    %v307 = vld [vmem:[#allocation2] sm:$0xf]
    %v308 = vld [vmem:[#allocation2 + $0x8] sm:$0xf]
    %v309 = vld [vmem:[#allocation2 + $0x10] sm:$0xf]
    %v310 = vld [vmem:[#allocation2 + $0x18] sm:$0xf]
    %v311 = vld [vmem:[#allocation2 + $0x20] sm:$0xf]
    %v312 = vld [vmem:[#allocation2 + $0x28] sm:$0xf]
    %v313 = vld [vmem:[#allocation2 + $0x30] sm:$0xf]
    %v314 = vld [vmem:[#allocation2 + $0x38] sm:$0xf]
    %v315 = vld [vmem:[#allocation2 + $0x40] sm:$0xf]
    %v316 = vld [vmem:[#allocation2 + $0x48] sm:$0xf]
    %v317 = vld [vmem:[#allocation2 + $0x50] sm:$0xf]
    %v318 = vld [vmem:[#allocation2 + $0x58] sm:$0xf]
    %v319 = vld [vmem:[#allocation2 + $0x60] sm:$0xf]
    %v320 = vld [vmem:[#allocation2 + $0x68] sm:$0xf]
    %v321 = vld [vmem:[#allocation2 + $0x70] sm:$0xf]
    %v322 = vld [vmem:[#allocation2 + $0x78] sm:$0xf]
    %324 = vset.pattern.permute.xlu0 0
    %325 = vperm.xlu0 %324, %v304
    %v326 = vpop.permute.xlu0 %325
    %v328 = vmul.f32 %v307, %v326
    %v329 = vmul.f32 %v308, %v326
    %v330 = vmul.f32 %v309, %v326
    %v331 = vmul.f32 %v310, %v326
    %v332 = vmul.f32 %v311, %v326
    %v333 = vmul.f32 %v312, %v326
    %v334 = vmul.f32 %v313, %v326
    %v335 = vmul.f32 %v314, %v326
    %v336 = vmul.f32 %v315, %v326
    %v337 = vmul.f32 %v316, %v326
    %v338 = vmul.f32 %v317, %v326
    %v339 = vmul.f32 %v318, %v326
    %v340 = vmul.f32 %v319, %v326
    %v341 = vmul.f32 %v320, %v326
    %v342 = vmul.f32 %v321, %v326
    %v343 = vmul.f32 %v322, %v326
    %345 = vset.pattern.permute.xlu0 0
    %346 = vperm.xlu0 %345, %v306
    %v347 = vpop.permute.xlu0 %346
    %v349 = vadd.f32 %v328, %v347
    %v350 = vadd.f32 %v329, %v347
    %v351 = vadd.f32 %v330, %v347
    %v352 = vadd.f32 %v331, %v347
    %v353 = vadd.f32 %v332, %v347
    %v354 = vadd.f32 %v333, %v347
    %v355 = vadd.f32 %v334, %v347
    %v356 = vadd.f32 %v335, %v347
    %v357 = vadd.f32 %v336, %v347
    %v358 = vadd.f32 %v337, %v347
    %v359 = vadd.f32 %v338, %v347
    %v360 = vadd.f32 %v339, %v347
    %v361 = vadd.f32 %v340, %v347
    %v362 = vadd.f32 %v341, %v347
    %v363 = vadd.f32 %v342, %v347
    %v364 = vadd.f32 %v343, %v347
    %v365 = vmax.f32 %v349, 0.0
    %v366 = vmax.f32 %v350, 0.0
    %v367 = vmax.f32 %v351, 0.0
    %v368 = vmax.f32 %v352, 0.0
    %v369 = vmax.f32 %v353, 0.0
    %v370 = vmax.f32 %v354, 0.0
    %v371 = vmax.f32 %v355, 0.0
    %v372 = vmax.f32 %v356, 0.0
    %v373 = vmax.f32 %v357, 0.0
    %v374 = vmax.f32 %v358, 0.0
    %v375 = vmax.f32 %v359, 0.0
    %v376 = vmax.f32 %v360, 0.0
    %v377 = vmax.f32 %v361, 0.0
    %v378 = vmax.f32 %v362, 0.0
    %v379 = vmax.f32 %v363, 0.0
    %v380 = vmax.f32 %v364, 0.0
    %v381 = vpack.c.bf16 %v365, %v365
    %v382 = vpack.c.bf16 %v366, %v366
    %v383 = vpack.c.bf16 %v367, %v367
    %v384 = vpack.c.bf16 %v368, %v368
    %v385 = vpack.c.bf16 %v369, %v369
    %v386 = vpack.c.bf16 %v370, %v370
    %v387 = vpack.c.bf16 %v371, %v371
    %v388 = vpack.c.bf16 %v372, %v372
    %v389 = vpack.c.bf16 %v373, %v373
    %v390 = vpack.c.bf16 %v374, %v374
    %v391 = vpack.c.bf16 %v375, %v375
    %v392 = vpack.c.bf16 %v376, %v376
    %v393 = vpack.c.bf16 %v377, %v377
    %v394 = vpack.c.bf16 %v378, %v378
    %v395 = vpack.c.bf16 %v379, %v379
    %v396 = vpack.c.bf16 %v380, %v380
    %v413 = vunpack.c.l.b16 %v381
    %v414 = vunpack.c.l.b16 %v382
    %v415 = vunpack.c.l.b16 %v383
    %v416 = vunpack.c.l.b16 %v384
    %v417 = vunpack.c.l.b16 %v385
    %v418 = vunpack.c.l.b16 %v386
    %v419 = vunpack.c.l.b16 %v387
    %v420 = vunpack.c.l.b16 %v388
    %v421 = vunpack.c.l.b16 %v389
    %v422 = vunpack.c.l.b16 %v390
    %v423 = vunpack.c.l.b16 %v391
    %v424 = vunpack.c.l.b16 %v392
    %v425 = vunpack.c.l.b16 %v393
    %v426 = vunpack.c.l.b16 %v394
    %v427 = vunpack.c.l.b16 %v395
    %v428 = vunpack.c.l.b16 %v396
    %v429 = vpack.c.b16 %v414, %v413
    %v430 = vpack.c.b16 %v416, %v415
    %v431 = vpack.c.b16 %v418, %v417
    %v432 = vpack.c.b16 %v420, %v419
    %v433 = vpack.c.b16 %v422, %v421
    %v434 = vpack.c.b16 %v424, %v423
    %v435 = vpack.c.b16 %v426, %v425
    %v436 = vpack.c.b16 %v428, %v427
    %445 = vst [vmem:[#allocation3 + $0x4] sm:$0x33] %v429
    %446 = vst [vmem:[#allocation3 + $0xc] sm:$0x33] %v430
    %447 = vst [vmem:[#allocation3 + $0x14] sm:$0x33] %v431
    %448 = vst [vmem:[#allocation3 + $0x1c] sm:$0x33] %v432
    %449 = vst [vmem:[#allocation3 + $0x24] sm:$0x33] %v433
    %450 = vst [vmem:[#allocation3 + $0x2c] sm:$0x33] %v434
    %451 = vst [vmem:[#allocation3 + $0x34] sm:$0x33] %v435
    %452 = vst [vmem:[#allocation3 + $0x3c] sm:$0x33] %v436
    %v453 = vld [vmem:[#allocation3] sm:$0x33]
    %v454 = vld [vmem:[#allocation3 + $0x8] sm:$0x33]
    %v455 = vld [vmem:[#allocation3 + $0x10] sm:$0x33]
    %v456 = vld [vmem:[#allocation3 + $0x18] sm:$0x33]
    %v457 = vld [vmem:[#allocation3 + $0x20] sm:$0x33]
    %v458 = vld [vmem:[#allocation3 + $0x28] sm:$0x33]
    %v459 = vld [vmem:[#allocation3 + $0x30] sm:$0x33]
    %v460 = vld [vmem:[#allocation3 + $0x38] sm:$0x33]
    %v461 = vld [vmem:[#allocation3 + $0x40] sm:$0x3]
    %v462 = vld [vmem:[%s4] sm:$0x3]
    %v472 = vunpack.c.l.b16 %v453
    %v473 = vunpack.c.h.b16 %v453
    %v474 = vunpack.c.l.b16 %v454
    %v475 = vunpack.c.h.b16 %v454
    %v476 = vunpack.c.l.b16 %v455
    %v477 = vunpack.c.h.b16 %v455
    %v478 = vunpack.c.l.b16 %v456
    %v479 = vunpack.c.h.b16 %v456
    %v480 = vunpack.c.l.b16 %v457
    %v481 = vunpack.c.h.b16 %v457
    %v482 = vunpack.c.l.b16 %v458
    %v483 = vunpack.c.h.b16 %v458
    %v484 = vunpack.c.l.b16 %v459
    %v485 = vunpack.c.h.b16 %v459
    %v486 = vunpack.c.l.b16 %v460
    %v487 = vunpack.c.h.b16 %v460
    %v488 = vunpack.c.l.b16 %v461
    %v489 = vpack.c.b16 %v472, %v472
    %v490 = vpack.c.b16 %v473, %v473
    %v491 = vpack.c.b16 %v474, %v474
    %v492 = vpack.c.b16 %v475, %v475
    %v493 = vpack.c.b16 %v476, %v476
    %v494 = vpack.c.b16 %v477, %v477
    %v495 = vpack.c.b16 %v478, %v478
    %v496 = vpack.c.b16 %v479, %v479
    %v497 = vpack.c.b16 %v480, %v480
    %v498 = vpack.c.b16 %v481, %v481
    %v499 = vpack.c.b16 %v482, %v482
    %v500 = vpack.c.b16 %v483, %v483
    %v501 = vpack.c.b16 %v484, %v484
    %v502 = vpack.c.b16 %v485, %v485
    %v503 = vpack.c.b16 %v486, %v486
    %v504 = vpack.c.b16 %v487, %v487
    %v505 = vpack.c.b16 %v488, %v488
    %506 = vrot.lane.b32.xlu0 %v489, 33
    %v507 = vpop.permute.xlu0 %506
    %508 = vrot.lane.b32.xlu0 %v490, 33
    %v509 = vpop.permute.xlu0 %508
    %510 = vrot.lane.b32.xlu0 %v491, 33
    %v511 = vpop.permute.xlu0 %510
    %512 = vrot.lane.b32.xlu0 %v492, 33
    %v513 = vpop.permute.xlu0 %512
    %514 = vrot.lane.b32.xlu0 %v493, 33
    %v515 = vpop.permute.xlu0 %514
    %516 = vrot.lane.b32.xlu0 %v494, 33
    %v517 = vpop.permute.xlu0 %516
    %518 = vrot.lane.b32.xlu0 %v495, 33
    %v519 = vpop.permute.xlu0 %518
    %520 = vrot.lane.b32.xlu0 %v496, 33
    %v521 = vpop.permute.xlu0 %520
    %522 = vrot.lane.b32.xlu0 %v497, 33
    %v523 = vpop.permute.xlu0 %522
    %524 = vrot.lane.b32.xlu0 %v498, 33
    %v525 = vpop.permute.xlu0 %524
    %526 = vrot.lane.b32.xlu0 %v499, 33
    %v527 = vpop.permute.xlu0 %526
    %528 = vrot.lane.b32.xlu0 %v500, 33
    %v529 = vpop.permute.xlu0 %528
    %530 = vrot.lane.b32.xlu0 %v501, 33
    %v531 = vpop.permute.xlu0 %530
    %532 = vrot.lane.b32.xlu0 %v502, 33
    %v533 = vpop.permute.xlu0 %532
    %534 = vrot.lane.b32.xlu0 %v503, 33
    %v535 = vpop.permute.xlu0 %534
    %536 = vrot.lane.b32.xlu0 %v504, 33
    %v537 = vpop.permute.xlu0 %536
    %538 = vrot.lane.b32.xlu0 %v505, 33
    %v539 = vpop.permute.xlu0 %538
    %vm540 = vcmask 269312
    %v541 = vsel %vm540, %v507, %v509
    %v542 = vsel %vm540, %v509, %v511
    %v543 = vsel %vm540, %v511, %v513
    %v544 = vsel %vm540, %v513, %v515
    %v545 = vsel %vm540, %v515, %v517
    %v546 = vsel %vm540, %v517, %v519
    %v547 = vsel %vm540, %v519, %v521
    %v548 = vsel %vm540, %v521, %v523
    %v549 = vsel %vm540, %v523, %v525
    %v550 = vsel %vm540, %v525, %v527
    %v551 = vsel %vm540, %v527, %v529
    %v552 = vsel %vm540, %v529, %v531
    %v553 = vsel %vm540, %v531, %v533
    %v554 = vsel %vm540, %v533, %v535
    %v555 = vsel %vm540, %v535, %v537
    %v556 = vsel %vm540, %v537, %v539
    %vm557 = vcmask 31744
    %v559 = vsel %vm557, %v462, 0
    %vm561 = vcmask 1041408
    %v563 = vsel %vm561, %v541, 0
    %v566 = vsel %vm561, %v542, 0
    %v569 = vsel %vm561, %v543, 0
    %v572 = vsel %vm561, %v544, 0
    %v575 = vsel %vm561, %v545, 0
    %v578 = vsel %vm561, %v546, 0
    %v581 = vsel %vm561, %v547, 0
    %v584 = vsel %vm561, %v548, 0
    %v587 = vsel %vm561, %v549, 0
    %v590 = vsel %vm561, %v550, 0
    %v593 = vsel %vm561, %v551, 0
    %v596 = vsel %vm561, %v552, 0
    %v599 = vsel %vm561, %v553, 0
    %v602 = vsel %vm561, %v554, 0
    %v605 = vsel %vm561, %v555, 0
    %v608 = vsel %vm561, %v556, 0
    %610 = vmatprep.subr.bf16.mxu0 %v566
    %611 = vmatpush1.bf16.msra.mxu0 %v563
    %612 = vmatprep.subr.bf16.mxu0 0
    %613 = vmatpush1.bf16.msra.mxu0 0
    %614 = vmatprep.subr.bf16.mxu0 0
    %615 = vmatpush1.bf16.msra.mxu0 0
    %616 = vmatprep.subr.bf16.mxu0 0
    %617 = vmatpush1.bf16.msra.mxu0 0
    %618 = vmatprep.subr.bf16.mxu0 0
    %619 = vmatpush1.bf16.msra.mxu0 0
    %620 = vmatprep.subr.bf16.mxu0 0
    %621 = vmatpush1.bf16.msra.mxu0 0
    %622 = vmatprep.subr.bf16.mxu0 0
    %623 = vmatpush1.bf16.msra.mxu0 0
    %624 = vmatprep.subr.bf16.mxu0 0
    %625 = vmatpush1.bf16.msra.mxu0 0
    %626 = vmatprep.subr.bf16.mxu0 0
    %627 = vmatpush1.bf16.msra.mxu0 0
    %628 = vmatprep.subr.bf16.mxu0 0
    %629 = vmatpush1.bf16.msra.mxu0 0
    %630 = vmatprep.subr.bf16.mxu0 0
    %631 = vmatpush1.bf16.msra.mxu0 0
    %632 = vmatprep.subr.bf16.mxu0 0
    %633 = vmatpush1.bf16.msra.mxu0 0
    %634 = vmatprep.subr.bf16.mxu0 0
    %635 = vmatpush1.bf16.msra.mxu0 0
    %636 = vmatprep.subr.bf16.mxu0 0
    %637 = vmatpush1.bf16.msra.mxu0 0
    %638 = vmatprep.subr.bf16.mxu0 0
    %639 = vmatpush1.bf16.msra.mxu0 0
    %640 = vmatprep.subr.bf16.mxu0 0
    %641 = vmatpush1.bf16.msra.mxu0 0
    %642 = vmatprep.mubr.bf16.mxu0 0
    %643 = vmatmul.mubr.bf16.gmra.mrb[0].mxu0 %v559
    %v644 = vpop.f32.mrb[0].mxu0
    %v645 = vadd.f32 0.0, %v644
    %v646 = vpop.f32.mrb[0].mxu0
    %v647 = vadd.f32 0.0, %v646
    %v648 = vpop.f32.mrb[0].mxu0
    %v649 = vpop.f32.mrb[0].mxu0
    %650 = vdwg.mxu0
    %651 = vmatprep.subr.bf16.mxu0 %v572
    %652 = vmatpush1.bf16.msra.mxu0 %v569
    %653 = vmatprep.subr.bf16.mxu0 0
    %654 = vmatpush1.bf16.msra.mxu0 0
    %655 = vmatprep.subr.bf16.mxu0 0
    %656 = vmatpush1.bf16.msra.mxu0 0
    %657 = vmatprep.subr.bf16.mxu0 0
    %658 = vmatpush1.bf16.msra.mxu0 0
    %659 = vmatprep.subr.bf16.mxu0 0
    %660 = vmatpush1.bf16.msra.mxu0 0
    %661 = vmatprep.subr.bf16.mxu0 0
    %662 = vmatpush1.bf16.msra.mxu0 0
    %663 = vmatprep.subr.bf16.mxu0 0
    %664 = vmatpush1.bf16.msra.mxu0 0
    %665 = vmatprep.subr.bf16.mxu0 0
    %666 = vmatpush1.bf16.msra.mxu0 0
    %667 = vmatprep.subr.bf16.mxu0 0
    %668 = vmatpush1.bf16.msra.mxu0 0
    %669 = vmatprep.subr.bf16.mxu0 0
    %670 = vmatpush1.bf16.msra.mxu0 0
    %671 = vmatprep.subr.bf16.mxu0 0
    %672 = vmatpush1.bf16.msra.mxu0 0
    %673 = vmatprep.subr.bf16.mxu0 0
    %674 = vmatpush1.bf16.msra.mxu0 0
    %675 = vmatprep.subr.bf16.mxu0 0
    %676 = vmatpush1.bf16.msra.mxu0 0
    %677 = vmatprep.subr.bf16.mxu0 0
    %678 = vmatpush1.bf16.msra.mxu0 0
    %679 = vmatprep.subr.bf16.mxu0 0
    %680 = vmatpush1.bf16.msra.mxu0 0
    %681 = vmatprep.subr.bf16.mxu0 0
    %682 = vmatpush1.bf16.msra.mxu0 0
    %683 = vmatprep.mubr.bf16.mxu0 0
    %684 = vmatmul.mubr.bf16.gmra.mrb[0].mxu0 %v559
    %v685 = vpop.f32.mrb[0].mxu0
    %v686 = vadd.f32 0.0, %v685
    %v687 = vpop.f32.mrb[0].mxu0
    %v688 = vadd.f32 0.0, %v687
    %v689 = vpop.f32.mrb[0].mxu0
    %v690 = vpop.f32.mrb[0].mxu0
    %691 = vdwg.mxu0
    %692 = vmatprep.subr.bf16.mxu0 %v578
    %693 = vmatpush1.bf16.msra.mxu0 %v575
    %694 = vmatprep.subr.bf16.mxu0 0
    %695 = vmatpush1.bf16.msra.mxu0 0
    %696 = vmatprep.subr.bf16.mxu0 0
    %697 = vmatpush1.bf16.msra.mxu0 0
    %698 = vmatprep.subr.bf16.mxu0 0
    %699 = vmatpush1.bf16.msra.mxu0 0
    %700 = vmatprep.subr.bf16.mxu0 0
    %701 = vmatpush1.bf16.msra.mxu0 0
    %702 = vmatprep.subr.bf16.mxu0 0
    %703 = vmatpush1.bf16.msra.mxu0 0
    %704 = vmatprep.subr.bf16.mxu0 0
    %705 = vmatpush1.bf16.msra.mxu0 0
    %706 = vmatprep.subr.bf16.mxu0 0
    %707 = vmatpush1.bf16.msra.mxu0 0
    %708 = vmatprep.subr.bf16.mxu0 0
    %709 = vmatpush1.bf16.msra.mxu0 0
    %710 = vmatprep.subr.bf16.mxu0 0
    %711 = vmatpush1.bf16.msra.mxu0 0
    %712 = vmatprep.subr.bf16.mxu0 0
    %713 = vmatpush1.bf16.msra.mxu0 0
    %714 = vmatprep.subr.bf16.mxu0 0
    %715 = vmatpush1.bf16.msra.mxu0 0
    %716 = vmatprep.subr.bf16.mxu0 0
    %717 = vmatpush1.bf16.msra.mxu0 0
    %718 = vmatprep.subr.bf16.mxu0 0
    %719 = vmatpush1.bf16.msra.mxu0 0
    %720 = vmatprep.subr.bf16.mxu0 0
    %721 = vmatpush1.bf16.msra.mxu0 0
    %722 = vmatprep.subr.bf16.mxu0 0
    %723 = vmatpush1.bf16.msra.mxu0 0
    %724 = vmatprep.mubr.bf16.mxu0 0
    %725 = vmatmul.mubr.bf16.gmra.mrb[0].mxu0 %v559
    %v726 = vpop.f32.mrb[0].mxu0
    %v727 = vadd.f32 0.0, %v726
    %v728 = vpop.f32.mrb[0].mxu0
    %v729 = vadd.f32 0.0, %v728
    %v730 = vpop.f32.mrb[0].mxu0
    %v731 = vpop.f32.mrb[0].mxu0
    %732 = vdwg.mxu0
    %733 = vmatprep.subr.bf16.mxu0 %v584
    %734 = vmatpush1.bf16.msra.mxu0 %v581
    %735 = vmatprep.subr.bf16.mxu0 0
    %736 = vmatpush1.bf16.msra.mxu0 0
    %737 = vmatprep.subr.bf16.mxu0 0
    %738 = vmatpush1.bf16.msra.mxu0 0
    %739 = vmatprep.subr.bf16.mxu0 0
    %740 = vmatpush1.bf16.msra.mxu0 0
    %741 = vmatprep.subr.bf16.mxu0 0
    %742 = vmatpush1.bf16.msra.mxu0 0
    %743 = vmatprep.subr.bf16.mxu0 0
    %744 = vmatpush1.bf16.msra.mxu0 0
    %745 = vmatprep.subr.bf16.mxu0 0
    %746 = vmatpush1.bf16.msra.mxu0 0
    %747 = vmatprep.subr.bf16.mxu0 0
    %748 = vmatpush1.bf16.msra.mxu0 0
    %749 = vmatprep.subr.bf16.mxu0 0
    %750 = vmatpush1.bf16.msra.mxu0 0
    %751 = vmatprep.subr.bf16.mxu0 0
    %752 = vmatpush1.bf16.msra.mxu0 0
    %753 = vmatprep.subr.bf16.mxu0 0
    %754 = vmatpush1.bf16.msra.mxu0 0
    %755 = vmatprep.subr.bf16.mxu0 0
    %756 = vmatpush1.bf16.msra.mxu0 0
    %757 = vmatprep.subr.bf16.mxu0 0
    %758 = vmatpush1.bf16.msra.mxu0 0
    %759 = vmatprep.subr.bf16.mxu0 0
    %760 = vmatpush1.bf16.msra.mxu0 0
    %761 = vmatprep.subr.bf16.mxu0 0
    %762 = vmatpush1.bf16.msra.mxu0 0
    %763 = vmatprep.subr.bf16.mxu0 0
    %764 = vmatpush1.bf16.msra.mxu0 0
    %765 = vmatprep.mubr.bf16.mxu0 0
    %766 = vmatmul.mubr.bf16.gmra.mrb[0].mxu0 %v559
    %v767 = vpop.f32.mrb[0].mxu0
    %v768 = vadd.f32 0.0, %v767
    %v769 = vpop.f32.mrb[0].mxu0
    %v770 = vadd.f32 0.0, %v769
    %v771 = vpop.f32.mrb[0].mxu0
    %v772 = vpop.f32.mrb[0].mxu0
    %773 = vdwg.mxu0
    %774 = vmatprep.subr.bf16.mxu0 %v590
    %775 = vmatpush1.bf16.msra.mxu0 %v587
    %776 = vmatprep.subr.bf16.mxu0 0
    %777 = vmatpush1.bf16.msra.mxu0 0
    %778 = vmatprep.subr.bf16.mxu0 0
    %779 = vmatpush1.bf16.msra.mxu0 0
    %780 = vmatprep.subr.bf16.mxu0 0
    %781 = vmatpush1.bf16.msra.mxu0 0
    %782 = vmatprep.subr.bf16.mxu0 0
    %783 = vmatpush1.bf16.msra.mxu0 0
    %784 = vmatprep.subr.bf16.mxu0 0
    %785 = vmatpush1.bf16.msra.mxu0 0
    %786 = vmatprep.subr.bf16.mxu0 0
    %787 = vmatpush1.bf16.msra.mxu0 0
    %788 = vmatprep.subr.bf16.mxu0 0
    %789 = vmatpush1.bf16.msra.mxu0 0
    %790 = vmatprep.subr.bf16.mxu0 0
    %791 = vmatpush1.bf16.msra.mxu0 0
    %792 = vmatprep.subr.bf16.mxu0 0
    %793 = vmatpush1.bf16.msra.mxu0 0
    %794 = vmatprep.subr.bf16.mxu0 0
    %795 = vmatpush1.bf16.msra.mxu0 0
    %796 = vmatprep.subr.bf16.mxu0 0
    %797 = vmatpush1.bf16.msra.mxu0 0
    %798 = vmatprep.subr.bf16.mxu0 0
    %799 = vmatpush1.bf16.msra.mxu0 0
    %800 = vmatprep.subr.bf16.mxu0 0
    %801 = vmatpush1.bf16.msra.mxu0 0
    %802 = vmatprep.subr.bf16.mxu0 0
    %803 = vmatpush1.bf16.msra.mxu0 0
    %804 = vmatprep.subr.bf16.mxu0 0
    %805 = vmatpush1.bf16.msra.mxu0 0
    %806 = vmatprep.mubr.bf16.mxu0 0
    %807 = vmatmul.mubr.bf16.gmra.mrb[0].mxu0 %v559
    %v808 = vpop.f32.mrb[0].mxu0
    %v809 = vadd.f32 0.0, %v808
    %v810 = vpop.f32.mrb[0].mxu0
    %v811 = vadd.f32 0.0, %v810
    %v812 = vpop.f32.mrb[0].mxu0
    %v813 = vpop.f32.mrb[0].mxu0
    %814 = vdwg.mxu0
    %815 = vmatprep.subr.bf16.mxu0 %v596
    %816 = vmatpush1.bf16.msra.mxu0 %v593
    %817 = vmatprep.subr.bf16.mxu0 0
    %818 = vmatpush1.bf16.msra.mxu0 0
    %819 = vmatprep.subr.bf16.mxu0 0
    %820 = vmatpush1.bf16.msra.mxu0 0
    %821 = vmatprep.subr.bf16.mxu0 0
    %822 = vmatpush1.bf16.msra.mxu0 0
    %823 = vmatprep.subr.bf16.mxu0 0
    %824 = vmatpush1.bf16.msra.mxu0 0
    %825 = vmatprep.subr.bf16.mxu0 0
    %826 = vmatpush1.bf16.msra.mxu0 0
    %827 = vmatprep.subr.bf16.mxu0 0
    %828 = vmatpush1.bf16.msra.mxu0 0
    %829 = vmatprep.subr.bf16.mxu0 0
    %830 = vmatpush1.bf16.msra.mxu0 0
    %831 = vmatprep.subr.bf16.mxu0 0
    %832 = vmatpush1.bf16.msra.mxu0 0
    %833 = vmatprep.subr.bf16.mxu0 0
    %834 = vmatpush1.bf16.msra.mxu0 0
    %835 = vmatprep.subr.bf16.mxu0 0
    %836 = vmatpush1.bf16.msra.mxu0 0
    %837 = vmatprep.subr.bf16.mxu0 0
    %838 = vmatpush1.bf16.msra.mxu0 0
    %839 = vmatprep.subr.bf16.mxu0 0
    %840 = vmatpush1.bf16.msra.mxu0 0
    %841 = vmatprep.subr.bf16.mxu0 0
    %842 = vmatpush1.bf16.msra.mxu0 0
    %843 = vmatprep.subr.bf16.mxu0 0
    %844 = vmatpush1.bf16.msra.mxu0 0
    %845 = vmatprep.subr.bf16.mxu0 0
    %846 = vmatpush1.bf16.msra.mxu0 0
    %847 = vmatprep.mubr.bf16.mxu0 0
    %848 = vmatmul.mubr.bf16.gmra.mrb[0].mxu0 %v559
    %v849 = vpop.f32.mrb[0].mxu0
    %v850 = vadd.f32 0.0, %v849
    %v851 = vpop.f32.mrb[0].mxu0
    %v852 = vadd.f32 0.0, %v851
    %v853 = vpop.f32.mrb[0].mxu0
    %v854 = vpop.f32.mrb[0].mxu0
    %855 = vdwg.mxu0
    %856 = vmatprep.subr.bf16.mxu0 %v602
    %857 = vmatpush1.bf16.msra.mxu0 %v599
    %858 = vmatprep.subr.bf16.mxu0 0
    %859 = vmatpush1.bf16.msra.mxu0 0
    %860 = vmatprep.subr.bf16.mxu0 0
    %861 = vmatpush1.bf16.msra.mxu0 0
    %862 = vmatprep.subr.bf16.mxu0 0
    %863 = vmatpush1.bf16.msra.mxu0 0
    %864 = vmatprep.subr.bf16.mxu0 0
    %865 = vmatpush1.bf16.msra.mxu0 0
    %866 = vmatprep.subr.bf16.mxu0 0
    %867 = vmatpush1.bf16.msra.mxu0 0
    %868 = vmatprep.subr.bf16.mxu0 0
    %869 = vmatpush1.bf16.msra.mxu0 0
    %870 = vmatprep.subr.bf16.mxu0 0
    %871 = vmatpush1.bf16.msra.mxu0 0
    %872 = vmatprep.subr.bf16.mxu0 0
    %873 = vmatpush1.bf16.msra.mxu0 0
    %874 = vmatprep.subr.bf16.mxu0 0
    %875 = vmatpush1.bf16.msra.mxu0 0
    %876 = vmatprep.subr.bf16.mxu0 0
    %877 = vmatpush1.bf16.msra.mxu0 0
    %878 = vmatprep.subr.bf16.mxu0 0
    %879 = vmatpush1.bf16.msra.mxu0 0
    %880 = vmatprep.subr.bf16.mxu0 0
    %881 = vmatpush1.bf16.msra.mxu0 0
    %882 = vmatprep.subr.bf16.mxu0 0
    %883 = vmatpush1.bf16.msra.mxu0 0
    %884 = vmatprep.subr.bf16.mxu0 0
    %885 = vmatpush1.bf16.msra.mxu0 0
    %886 = vmatprep.subr.bf16.mxu0 0
    %887 = vmatpush1.bf16.msra.mxu0 0
    %888 = vmatprep.mubr.bf16.mxu0 0
    %889 = vmatmul.mubr.bf16.gmra.mrb[0].mxu0 %v559
    %v890 = vpop.f32.mrb[0].mxu0
    %v891 = vadd.f32 0.0, %v890
    %v892 = vpop.f32.mrb[0].mxu0
    %v893 = vadd.f32 0.0, %v892
    %v894 = vpop.f32.mrb[0].mxu0
    %v895 = vpop.f32.mrb[0].mxu0
    %896 = vdwg.mxu0
    %897 = vmatprep.subr.bf16.mxu0 %v608
    %898 = vmatpush1.bf16.msra.mxu0 %v605
    %899 = vmatprep.subr.bf16.mxu0 0
    %900 = vmatpush1.bf16.msra.mxu0 0
    %901 = vmatprep.subr.bf16.mxu0 0
    %902 = vmatpush1.bf16.msra.mxu0 0
    %903 = vmatprep.subr.bf16.mxu0 0
    %904 = vmatpush1.bf16.msra.mxu0 0
    %905 = vmatprep.subr.bf16.mxu0 0
    %906 = vmatpush1.bf16.msra.mxu0 0
    %907 = vmatprep.subr.bf16.mxu0 0
    %908 = vmatpush1.bf16.msra.mxu0 0
    %909 = vmatprep.subr.bf16.mxu0 0
    %910 = vmatpush1.bf16.msra.mxu0 0
    %911 = vmatprep.subr.bf16.mxu0 0
    %912 = vmatpush1.bf16.msra.mxu0 0
    %913 = vmatprep.subr.bf16.mxu0 0
    %914 = vmatpush1.bf16.msra.mxu0 0
    %915 = vmatprep.subr.bf16.mxu0 0
    %916 = vmatpush1.bf16.msra.mxu0 0
    %917 = vmatprep.subr.bf16.mxu0 0
    %918 = vmatpush1.bf16.msra.mxu0 0
    %919 = vmatprep.subr.bf16.mxu0 0
    %920 = vmatpush1.bf16.msra.mxu0 0
    %921 = vmatprep.subr.bf16.mxu0 0
    %922 = vmatpush1.bf16.msra.mxu0 0
    %923 = vmatprep.subr.bf16.mxu0 0
    %924 = vmatpush1.bf16.msra.mxu0 0
    %925 = vmatprep.subr.bf16.mxu0 0
    %926 = vmatpush1.bf16.msra.mxu0 0
    %927 = vmatprep.subr.bf16.mxu0 0
    %928 = vmatpush1.bf16.msra.mxu0 0
    %929 = vmatprep.mubr.bf16.mxu0 0
    %930 = vmatmul.mubr.bf16.gmra.mrb[0].mxu0 %v559
    %v931 = vpop.f32.mrb[0].mxu0
    %v932 = vadd.f32 0.0, %v931
    %v933 = vpop.f32.mrb[0].mxu0
    %v934 = vadd.f32 0.0, %v933
    %v935 = vpop.f32.mrb[0].mxu0
    %v936 = vpop.f32.mrb[0].mxu0
    %937 = vdwg.mxu0
    %v940 = vlaneseq
    %v941 = vshrl.u32 %v940, 7
    %v942 = vsub.s32 0, %v941
    %v943 = vrot.slane %v123, %v942
    %v944 = vlaneseq
    %v945 = vshrl.u32 %v944, 7
    %v946 = vsub.s32 1, %v945
    %v947 = vrot.slane %v123, %v946
    %v948 = vlaneseq
    %v949 = vshrl.u32 %v948, 7
    %v950 = vsub.s32 2, %v949
    %v951 = vrot.slane %v123, %v950
    %v952 = vlaneseq
    %v953 = vshrl.u32 %v952, 7
    %v954 = vsub.s32 3, %v953
    %v955 = vrot.slane %v123, %v954
    %v956 = vlaneseq
    %v957 = vshrl.u32 %v956, 7
    %v958 = vsub.s32 4, %v957
    %v959 = vrot.slane %v123, %v958
    %v960 = vlaneseq
    %v961 = vshrl.u32 %v960, 7
    %v962 = vsub.s32 5, %v961
    %v963 = vrot.slane %v123, %v962
    %v964 = vlaneseq
    %v965 = vshrl.u32 %v964, 7
    %v966 = vsub.s32 6, %v965
    %v967 = vrot.slane %v123, %v966
    %v968 = vlaneseq
    %v969 = vshrl.u32 %v968, 7
    %v970 = vsub.s32 7, %v969
    %v971 = vrot.slane %v123, %v970
    %v972 = vlaneseq
    %v973 = vshrl.u32 %v972, 7
    %v974 = vsub.s32 0, %v973
    %v975 = vrot.slane %v127, %v974
    %v976 = vlaneseq
    %v977 = vshrl.u32 %v976, 7
    %v978 = vsub.s32 1, %v977
    %v979 = vrot.slane %v127, %v978
    %v980 = vlaneseq
    %v981 = vshrl.u32 %v980, 7
    %v982 = vsub.s32 2, %v981
    %v983 = vrot.slane %v127, %v982
    %v984 = vlaneseq
    %v985 = vshrl.u32 %v984, 7
    %v986 = vsub.s32 3, %v985
    %v987 = vrot.slane %v127, %v986
    %v988 = vlaneseq
    %v989 = vshrl.u32 %v988, 7
    %v990 = vsub.s32 4, %v989
    %v991 = vrot.slane %v127, %v990
    %v992 = vlaneseq
    %v993 = vshrl.u32 %v992, 7
    %v994 = vsub.s32 5, %v993
    %v995 = vrot.slane %v127, %v994
    %v996 = vlaneseq
    %v997 = vshrl.u32 %v996, 7
    %v998 = vsub.s32 6, %v997
    %v999 = vrot.slane %v127, %v998
    %v1000 = vlaneseq
    %v1001 = vshrl.u32 %v1000, 7
    %v1002 = vsub.s32 7, %v1001
    %v1003 = vrot.slane %v127, %v1002
    %v1020 = vmul.f32 %v645, %v943
    %v1021 = vmul.f32 %v647, %v947
    %v1022 = vmul.f32 %v686, %v951
    %v1023 = vmul.f32 %v688, %v955
    %v1024 = vmul.f32 %v727, %v959
    %v1025 = vmul.f32 %v729, %v963
    %v1026 = vmul.f32 %v768, %v967
    %v1027 = vmul.f32 %v770, %v971
    %v1028 = vmul.f32 %v809, %v975
    %v1029 = vmul.f32 %v811, %v979
    %v1030 = vmul.f32 %v850, %v983
    %v1031 = vmul.f32 %v852, %v987
    %v1032 = vmul.f32 %v891, %v991
    %v1033 = vmul.f32 %v893, %v995
    %v1034 = vmul.f32 %v932, %v999
    %v1035 = vmul.f32 %v934, %v1003
    %v1036 = vadd.f32 %v1020, 0.0
    %v1037 = vadd.f32 %v1021, 0.0
    %v1038 = vadd.f32 %v1022, 0.0
    %v1039 = vadd.f32 %v1023, 0.0
    %v1040 = vadd.f32 %v1024, 0.0
    %v1041 = vadd.f32 %v1025, 0.0
    %v1042 = vadd.f32 %v1026, 0.0
    %v1043 = vadd.f32 %v1027, 0.0
    %v1044 = vadd.f32 %v1028, 0.0
    %v1045 = vadd.f32 %v1029, 0.0
    %v1046 = vadd.f32 %v1030, 0.0
    %v1047 = vadd.f32 %v1031, 0.0
    %v1048 = vadd.f32 %v1032, 0.0
    %v1049 = vadd.f32 %v1033, 0.0
    %v1050 = vadd.f32 %v1034, 0.0
    %v1051 = vadd.f32 %v1035, 0.0
    %s1052 = scalar_lea.vmem %s4, 2
    %v1053 = vld [vmem:[%s1052] sm:$0x3]
    %1054 = vrot.lane.b32.xlu0 %v489, 32
    %v1055 = vpop.permute.xlu0 %1054
    %1056 = vrot.lane.b32.xlu0 %v490, 32
    %v1057 = vpop.permute.xlu0 %1056
    %1058 = vrot.lane.b32.xlu0 %v491, 32
    %v1059 = vpop.permute.xlu0 %1058
    %1060 = vrot.lane.b32.xlu0 %v492, 32
    %v1061 = vpop.permute.xlu0 %1060
    %1062 = vrot.lane.b32.xlu0 %v493, 32
    %v1063 = vpop.permute.xlu0 %1062
    %1064 = vrot.lane.b32.xlu0 %v494, 32
    %v1065 = vpop.permute.xlu0 %1064
    %1066 = vrot.lane.b32.xlu0 %v495, 32
    %v1067 = vpop.permute.xlu0 %1066
    %1068 = vrot.lane.b32.xlu0 %v496, 32
    %v1069 = vpop.permute.xlu0 %1068
    %1070 = vrot.lane.b32.xlu0 %v497, 32
    %v1071 = vpop.permute.xlu0 %1070
    %1072 = vrot.lane.b32.xlu0 %v498, 32
    %v1073 = vpop.permute.xlu0 %1072
    %1074 = vrot.lane.b32.xlu0 %v499, 32
    %v1075 = vpop.permute.xlu0 %1074
    %1076 = vrot.lane.b32.xlu0 %v500, 32
    %v1077 = vpop.permute.xlu0 %1076
    %1078 = vrot.lane.b32.xlu0 %v501, 32
    %v1079 = vpop.permute.xlu0 %1078
    %1080 = vrot.lane.b32.xlu0 %v502, 32
    %v1081 = vpop.permute.xlu0 %1080
    %1082 = vrot.lane.b32.xlu0 %v503, 32
    %v1083 = vpop.permute.xlu0 %1082
    %1084 = vrot.lane.b32.xlu0 %v504, 32
    %v1085 = vpop.permute.xlu0 %1084
    %1086 = vrot.lane.b32.xlu0 %v505, 32
    %v1087 = vpop.permute.xlu0 %1086
    %vm1088 = vcmask 261120
    %v1089 = vsel %vm1088, %v1055, %v1057
    %v1090 = vsel %vm1088, %v1057, %v1059
    %v1091 = vsel %vm1088, %v1059, %v1061
    %v1092 = vsel %vm1088, %v1061, %v1063
    %v1093 = vsel %vm1088, %v1063, %v1065
    %v1094 = vsel %vm1088, %v1065, %v1067
    %v1095 = vsel %vm1088, %v1067, %v1069
    %v1096 = vsel %vm1088, %v1069, %v1071
    %v1097 = vsel %vm1088, %v1071, %v1073
    %v1098 = vsel %vm1088, %v1073, %v1075
    %v1099 = vsel %vm1088, %v1075, %v1077
    %v1100 = vsel %vm1088, %v1077, %v1079
    %v1101 = vsel %vm1088, %v1079, %v1081
    %v1102 = vsel %vm1088, %v1081, %v1083
    %v1103 = vsel %vm1088, %v1083, %v1085
    %v1104 = vsel %vm1088, %v1085, %v1087
    %v1106 = vsel %vm557, %v1053, 0
    %v1109 = vsel %vm561, %v1089, 0
    %v1112 = vsel %vm561, %v1090, 0
    %v1115 = vsel %vm561, %v1091, 0
    %v1118 = vsel %vm561, %v1092, 0
    %v1121 = vsel %vm561, %v1093, 0
    %v1124 = vsel %vm561, %v1094, 0
    %v1127 = vsel %vm561, %v1095, 0
    %v1130 = vsel %vm561, %v1096, 0
    %v1133 = vsel %vm561, %v1097, 0
    %v1136 = vsel %vm561, %v1098, 0
    %v1139 = vsel %vm561, %v1099, 0
    %v1142 = vsel %vm561, %v1100, 0
    %v1145 = vsel %vm561, %v1101, 0
    %v1148 = vsel %vm561, %v1102, 0
    %v1151 = vsel %vm561, %v1103, 0
    %v1154 = vsel %vm561, %v1104, 0
    %1156 = vmatprep.subr.bf16.mxu0 %v1112
    %1157 = vmatpush1.bf16.msra.mxu0 %v1109
    %1158 = vmatprep.subr.bf16.mxu0 0
    %1159 = vmatpush1.bf16.msra.mxu0 0
    %1160 = vmatprep.subr.bf16.mxu0 0
    %1161 = vmatpush1.bf16.msra.mxu0 0
    %1162 = vmatprep.subr.bf16.mxu0 0
    %1163 = vmatpush1.bf16.msra.mxu0 0
    %1164 = vmatprep.subr.bf16.mxu0 0
    %1165 = vmatpush1.bf16.msra.mxu0 0
    %1166 = vmatprep.subr.bf16.mxu0 0
    %1167 = vmatpush1.bf16.msra.mxu0 0
    %1168 = vmatprep.subr.bf16.mxu0 0
    %1169 = vmatpush1.bf16.msra.mxu0 0
    %1170 = vmatprep.subr.bf16.mxu0 0
    %1171 = vmatpush1.bf16.msra.mxu0 0
    %1172 = vmatprep.subr.bf16.mxu0 0
    %1173 = vmatpush1.bf16.msra.mxu0 0
    %1174 = vmatprep.subr.bf16.mxu0 0
    %1175 = vmatpush1.bf16.msra.mxu0 0
    %1176 = vmatprep.subr.bf16.mxu0 0
    %1177 = vmatpush1.bf16.msra.mxu0 0
    %1178 = vmatprep.subr.bf16.mxu0 0
    %1179 = vmatpush1.bf16.msra.mxu0 0
    %1180 = vmatprep.subr.bf16.mxu0 0
    %1181 = vmatpush1.bf16.msra.mxu0 0
    %1182 = vmatprep.subr.bf16.mxu0 0
    %1183 = vmatpush1.bf16.msra.mxu0 0
    %1184 = vmatprep.subr.bf16.mxu0 0
    %1185 = vmatpush1.bf16.msra.mxu0 0
    %1186 = vmatprep.subr.bf16.mxu0 0
    %1187 = vmatpush1.bf16.msra.mxu0 0
    %1188 = vmatprep.mubr.bf16.mxu0 0
    %1189 = vmatmul.mubr.bf16.gmra.mrb[0].mxu0 %v1106
    %v1190 = vpop.f32.mrb[0].mxu0
    %v1191 = vadd.f32 0.0, %v1190
    %v1192 = vpop.f32.mrb[0].mxu0
    %v1193 = vadd.f32 0.0, %v1192
    %v1194 = vpop.f32.mrb[0].mxu0
    %v1195 = vpop.f32.mrb[0].mxu0
    %1196 = vdwg.mxu0
    %1197 = vmatprep.subr.bf16.mxu0 %v1118
    %1198 = vmatpush1.bf16.msra.mxu0 %v1115
    %1199 = vmatprep.subr.bf16.mxu0 0
    %1200 = vmatpush1.bf16.msra.mxu0 0
    %1201 = vmatprep.subr.bf16.mxu0 0
    %1202 = vmatpush1.bf16.msra.mxu0 0
    %1203 = vmatprep.subr.bf16.mxu0 0
    %1204 = vmatpush1.bf16.msra.mxu0 0
    %1205 = vmatprep.subr.bf16.mxu0 0
    %1206 = vmatpush1.bf16.msra.mxu0 0
    %1207 = vmatprep.subr.bf16.mxu0 0
    %1208 = vmatpush1.bf16.msra.mxu0 0
    %1209 = vmatprep.subr.bf16.mxu0 0
    %1210 = vmatpush1.bf16.msra.mxu0 0
    %1211 = vmatprep.subr.bf16.mxu0 0
    %1212 = vmatpush1.bf16.msra.mxu0 0
    %1213 = vmatprep.subr.bf16.mxu0 0
    %1214 = vmatpush1.bf16.msra.mxu0 0
    %1215 = vmatprep.subr.bf16.mxu0 0
    %1216 = vmatpush1.bf16.msra.mxu0 0
    %1217 = vmatprep.subr.bf16.mxu0 0
    %1218 = vmatpush1.bf16.msra.mxu0 0
    %1219 = vmatprep.subr.bf16.mxu0 0
    %1220 = vmatpush1.bf16.msra.mxu0 0
    %1221 = vmatprep.subr.bf16.mxu0 0
    %1222 = vmatpush1.bf16.msra.mxu0 0
    %1223 = vmatprep.subr.bf16.mxu0 0
    %1224 = vmatpush1.bf16.msra.mxu0 0
    %1225 = vmatprep.subr.bf16.mxu0 0
    %1226 = vmatpush1.bf16.msra.mxu0 0
    %1227 = vmatprep.subr.bf16.mxu0 0
    %1228 = vmatpush1.bf16.msra.mxu0 0
    %1229 = vmatprep.mubr.bf16.mxu0 0
    %1230 = vmatmul.mubr.bf16.gmra.mrb[0].mxu0 %v1106
    %v1231 = vpop.f32.mrb[0].mxu0
    %v1232 = vadd.f32 0.0, %v1231
    %v1233 = vpop.f32.mrb[0].mxu0
    %v1234 = vadd.f32 0.0, %v1233
    %v1235 = vpop.f32.mrb[0].mxu0
    %v1236 = vpop.f32.mrb[0].mxu0
    %1237 = vdwg.mxu0
    %1238 = vmatprep.subr.bf16.mxu0 %v1124
    %1239 = vmatpush1.bf16.msra.mxu0 %v1121
    %1240 = vmatprep.subr.bf16.mxu0 0
    %1241 = vmatpush1.bf16.msra.mxu0 0
    %1242 = vmatprep.subr.bf16.mxu0 0
    %1243 = vmatpush1.bf16.msra.mxu0 0
    %1244 = vmatprep.subr.bf16.mxu0 0
    %1245 = vmatpush1.bf16.msra.mxu0 0
    %1246 = vmatprep.subr.bf16.mxu0 0
    %1247 = vmatpush1.bf16.msra.mxu0 0
    %1248 = vmatprep.subr.bf16.mxu0 0
    %1249 = vmatpush1.bf16.msra.mxu0 0
    %1250 = vmatprep.subr.bf16.mxu0 0
    %1251 = vmatpush1.bf16.msra.mxu0 0
    %1252 = vmatprep.subr.bf16.mxu0 0
    %1253 = vmatpush1.bf16.msra.mxu0 0
    %1254 = vmatprep.subr.bf16.mxu0 0
    %1255 = vmatpush1.bf16.msra.mxu0 0
    %1256 = vmatprep.subr.bf16.mxu0 0
    %1257 = vmatpush1.bf16.msra.mxu0 0
    %1258 = vmatprep.subr.bf16.mxu0 0
    %1259 = vmatpush1.bf16.msra.mxu0 0
    %1260 = vmatprep.subr.bf16.mxu0 0
    %1261 = vmatpush1.bf16.msra.mxu0 0
    %1262 = vmatprep.subr.bf16.mxu0 0
    %1263 = vmatpush1.bf16.msra.mxu0 0
    %1264 = vmatprep.subr.bf16.mxu0 0
    %1265 = vmatpush1.bf16.msra.mxu0 0
    %1266 = vmatprep.subr.bf16.mxu0 0
    %1267 = vmatpush1.bf16.msra.mxu0 0
    %1268 = vmatprep.subr.bf16.mxu0 0
    %1269 = vmatpush1.bf16.msra.mxu0 0
    %1270 = vmatprep.mubr.bf16.mxu0 0
    %1271 = vmatmul.mubr.bf16.gmra.mrb[0].mxu0 %v1106
    %v1272 = vpop.f32.mrb[0].mxu0
    %v1273 = vadd.f32 0.0, %v1272
    %v1274 = vpop.f32.mrb[0].mxu0
    %v1275 = vadd.f32 0.0, %v1274
    %v1276 = vpop.f32.mrb[0].mxu0
    %v1277 = vpop.f32.mrb[0].mxu0
    %1278 = vdwg.mxu0
    %1279 = vmatprep.subr.bf16.mxu0 %v1130
    %1280 = vmatpush1.bf16.msra.mxu0 %v1127
    %1281 = vmatprep.subr.bf16.mxu0 0
    %1282 = vmatpush1.bf16.msra.mxu0 0
    %1283 = vmatprep.subr.bf16.mxu0 0
    %1284 = vmatpush1.bf16.msra.mxu0 0
    %1285 = vmatprep.subr.bf16.mxu0 0
    %1286 = vmatpush1.bf16.msra.mxu0 0
    %1287 = vmatprep.subr.bf16.mxu0 0
    %1288 = vmatpush1.bf16.msra.mxu0 0
    %1289 = vmatprep.subr.bf16.mxu0 0
    %1290 = vmatpush1.bf16.msra.mxu0 0
    %1291 = vmatprep.subr.bf16.mxu0 0
    %1292 = vmatpush1.bf16.msra.mxu0 0
    %1293 = vmatprep.subr.bf16.mxu0 0
    %1294 = vmatpush1.bf16.msra.mxu0 0
    %1295 = vmatprep.subr.bf16.mxu0 0
    %1296 = vmatpush1.bf16.msra.mxu0 0
    %1297 = vmatprep.subr.bf16.mxu0 0
    %1298 = vmatpush1.bf16.msra.mxu0 0
    %1299 = vmatprep.subr.bf16.mxu0 0
    %1300 = vmatpush1.bf16.msra.mxu0 0
    %1301 = vmatprep.subr.bf16.mxu0 0
    %1302 = vmatpush1.bf16.msra.mxu0 0
    %1303 = vmatprep.subr.bf16.mxu0 0
    %1304 = vmatpush1.bf16.msra.mxu0 0
    %1305 = vmatprep.subr.bf16.mxu0 0
    %1306 = vmatpush1.bf16.msra.mxu0 0
    %1307 = vmatprep.subr.bf16.mxu0 0
    %1308 = vmatpush1.bf16.msra.mxu0 0
    %1309 = vmatprep.subr.bf16.mxu0 0
    %1310 = vmatpush1.bf16.msra.mxu0 0
    %1311 = vmatprep.mubr.bf16.mxu0 0
    %1312 = vmatmul.mubr.bf16.gmra.mrb[0].mxu0 %v1106
    %v1313 = vpop.f32.mrb[0].mxu0
    %v1314 = vadd.f32 0.0, %v1313
    %v1315 = vpop.f32.mrb[0].mxu0
    %v1316 = vadd.f32 0.0, %v1315
    %v1317 = vpop.f32.mrb[0].mxu0
    %v1318 = vpop.f32.mrb[0].mxu0
    %1319 = vdwg.mxu0
    %1320 = vmatprep.subr.bf16.mxu0 %v1136
    %1321 = vmatpush1.bf16.msra.mxu0 %v1133
    %1322 = vmatprep.subr.bf16.mxu0 0
    %1323 = vmatpush1.bf16.msra.mxu0 0
    %1324 = vmatprep.subr.bf16.mxu0 0
    %1325 = vmatpush1.bf16.msra.mxu0 0
    %1326 = vmatprep.subr.bf16.mxu0 0
    %1327 = vmatpush1.bf16.msra.mxu0 0
    %1328 = vmatprep.subr.bf16.mxu0 0
    %1329 = vmatpush1.bf16.msra.mxu0 0
    %1330 = vmatprep.subr.bf16.mxu0 0
    %1331 = vmatpush1.bf16.msra.mxu0 0
    %1332 = vmatprep.subr.bf16.mxu0 0
    %1333 = vmatpush1.bf16.msra.mxu0 0
    %1334 = vmatprep.subr.bf16.mxu0 0
    %1335 = vmatpush1.bf16.msra.mxu0 0
    %1336 = vmatprep.subr.bf16.mxu0 0
    %1337 = vmatpush1.bf16.msra.mxu0 0
    %1338 = vmatprep.subr.bf16.mxu0 0
    %1339 = vmatpush1.bf16.msra.mxu0 0
    %1340 = vmatprep.subr.bf16.mxu0 0
    %1341 = vmatpush1.bf16.msra.mxu0 0
    %1342 = vmatprep.subr.bf16.mxu0 0
    %1343 = vmatpush1.bf16.msra.mxu0 0
    %1344 = vmatprep.subr.bf16.mxu0 0
    %1345 = vmatpush1.bf16.msra.mxu0 0
    %1346 = vmatprep.subr.bf16.mxu0 0
    %1347 = vmatpush1.bf16.msra.mxu0 0
    %1348 = vmatprep.subr.bf16.mxu0 0
    %1349 = vmatpush1.bf16.msra.mxu0 0
    %1350 = vmatprep.subr.bf16.mxu0 0
    %1351 = vmatpush1.bf16.msra.mxu0 0
    %1352 = vmatprep.mubr.bf16.mxu0 0
    %1353 = vmatmul.mubr.bf16.gmra.mrb[0].mxu0 %v1106
    %v1354 = vpop.f32.mrb[0].mxu0
    %v1355 = vadd.f32 0.0, %v1354
    %v1356 = vpop.f32.mrb[0].mxu0
    %v1357 = vadd.f32 0.0, %v1356
    %v1358 = vpop.f32.mrb[0].mxu0
    %v1359 = vpop.f32.mrb[0].mxu0
    %1360 = vdwg.mxu0
    %1361 = vmatprep.subr.bf16.mxu0 %v1142
    %1362 = vmatpush1.bf16.msra.mxu0 %v1139
    %1363 = vmatprep.subr.bf16.mxu0 0
    %1364 = vmatpush1.bf16.msra.mxu0 0
    %1365 = vmatprep.subr.bf16.mxu0 0
    %1366 = vmatpush1.bf16.msra.mxu0 0
    %1367 = vmatprep.subr.bf16.mxu0 0
    %1368 = vmatpush1.bf16.msra.mxu0 0
    %1369 = vmatprep.subr.bf16.mxu0 0
    %1370 = vmatpush1.bf16.msra.mxu0 0
    %1371 = vmatprep.subr.bf16.mxu0 0
    %1372 = vmatpush1.bf16.msra.mxu0 0
    %1373 = vmatprep.subr.bf16.mxu0 0
    %1374 = vmatpush1.bf16.msra.mxu0 0
    %1375 = vmatprep.subr.bf16.mxu0 0
    %1376 = vmatpush1.bf16.msra.mxu0 0
    %1377 = vmatprep.subr.bf16.mxu0 0
    %1378 = vmatpush1.bf16.msra.mxu0 0
    %1379 = vmatprep.subr.bf16.mxu0 0
    %1380 = vmatpush1.bf16.msra.mxu0 0
    %1381 = vmatprep.subr.bf16.mxu0 0
    %1382 = vmatpush1.bf16.msra.mxu0 0
    %1383 = vmatprep.subr.bf16.mxu0 0
    %1384 = vmatpush1.bf16.msra.mxu0 0
    %1385 = vmatprep.subr.bf16.mxu0 0
    %1386 = vmatpush1.bf16.msra.mxu0 0
    %1387 = vmatprep.subr.bf16.mxu0 0
    %1388 = vmatpush1.bf16.msra.mxu0 0
    %1389 = vmatprep.subr.bf16.mxu0 0
    %1390 = vmatpush1.bf16.msra.mxu0 0
    %1391 = vmatprep.subr.bf16.mxu0 0
    %1392 = vmatpush1.bf16.msra.mxu0 0
    %1393 = vmatprep.mubr.bf16.mxu0 0
    %1394 = vmatmul.mubr.bf16.gmra.mrb[0].mxu0 %v1106
    %v1395 = vpop.f32.mrb[0].mxu0
    %v1396 = vadd.f32 0.0, %v1395
    %v1397 = vpop.f32.mrb[0].mxu0
    %v1398 = vadd.f32 0.0, %v1397
    %v1399 = vpop.f32.mrb[0].mxu0
    %v1400 = vpop.f32.mrb[0].mxu0
    %1401 = vdwg.mxu0
    %1402 = vmatprep.subr.bf16.mxu0 %v1148
    %1403 = vmatpush1.bf16.msra.mxu0 %v1145
    %1404 = vmatprep.subr.bf16.mxu0 0
    %1405 = vmatpush1.bf16.msra.mxu0 0
    %1406 = vmatprep.subr.bf16.mxu0 0
    %1407 = vmatpush1.bf16.msra.mxu0 0
    %1408 = vmatprep.subr.bf16.mxu0 0
    %1409 = vmatpush1.bf16.msra.mxu0 0
    %1410 = vmatprep.subr.bf16.mxu0 0
    %1411 = vmatpush1.bf16.msra.mxu0 0
    %1412 = vmatprep.subr.bf16.mxu0 0
    %1413 = vmatpush1.bf16.msra.mxu0 0
    %1414 = vmatprep.subr.bf16.mxu0 0
    %1415 = vmatpush1.bf16.msra.mxu0 0
    %1416 = vmatprep.subr.bf16.mxu0 0
    %1417 = vmatpush1.bf16.msra.mxu0 0
    %1418 = vmatprep.subr.bf16.mxu0 0
    %1419 = vmatpush1.bf16.msra.mxu0 0
    %1420 = vmatprep.subr.bf16.mxu0 0
    %1421 = vmatpush1.bf16.msra.mxu0 0
    %1422 = vmatprep.subr.bf16.mxu0 0
    %1423 = vmatpush1.bf16.msra.mxu0 0
    %1424 = vmatprep.subr.bf16.mxu0 0
    %1425 = vmatpush1.bf16.msra.mxu0 0
    %1426 = vmatprep.subr.bf16.mxu0 0
    %1427 = vmatpush1.bf16.msra.mxu0 0
    %1428 = vmatprep.subr.bf16.mxu0 0
    %1429 = vmatpush1.bf16.msra.mxu0 0
    %1430 = vmatprep.subr.bf16.mxu0 0
    %1431 = vmatpush1.bf16.msra.mxu0 0
    %1432 = vmatprep.subr.bf16.mxu0 0
    %1433 = vmatpush1.bf16.msra.mxu0 0
    %1434 = vmatprep.mubr.bf16.mxu0 0
    %1435 = vmatmul.mubr.bf16.gmra.mrb[0].mxu0 %v1106
    %v1436 = vpop.f32.mrb[0].mxu0
    %v1437 = vadd.f32 0.0, %v1436
    %v1438 = vpop.f32.mrb[0].mxu0
    %v1439 = vadd.f32 0.0, %v1438
    %v1440 = vpop.f32.mrb[0].mxu0
    %v1441 = vpop.f32.mrb[0].mxu0
    %1442 = vdwg.mxu0
    %1443 = vmatprep.subr.bf16.mxu0 %v1154
    %1444 = vmatpush1.bf16.msra.mxu0 %v1151
    %1445 = vmatprep.subr.bf16.mxu0 0
    %1446 = vmatpush1.bf16.msra.mxu0 0
    %1447 = vmatprep.subr.bf16.mxu0 0
    %1448 = vmatpush1.bf16.msra.mxu0 0
    %1449 = vmatprep.subr.bf16.mxu0 0
    %1450 = vmatpush1.bf16.msra.mxu0 0
    %1451 = vmatprep.subr.bf16.mxu0 0
    %1452 = vmatpush1.bf16.msra.mxu0 0
    %1453 = vmatprep.subr.bf16.mxu0 0
    %1454 = vmatpush1.bf16.msra.mxu0 0
    %1455 = vmatprep.subr.bf16.mxu0 0
    %1456 = vmatpush1.bf16.msra.mxu0 0
    %1457 = vmatprep.subr.bf16.mxu0 0
    %1458 = vmatpush1.bf16.msra.mxu0 0
    %1459 = vmatprep.subr.bf16.mxu0 0
    %1460 = vmatpush1.bf16.msra.mxu0 0
    %1461 = vmatprep.subr.bf16.mxu0 0
    %1462 = vmatpush1.bf16.msra.mxu0 0
    %1463 = vmatprep.subr.bf16.mxu0 0
    %1464 = vmatpush1.bf16.msra.mxu0 0
    %1465 = vmatprep.subr.bf16.mxu0 0
    %1466 = vmatpush1.bf16.msra.mxu0 0
    %1467 = vmatprep.subr.bf16.mxu0 0
    %1468 = vmatpush1.bf16.msra.mxu0 0
    %1469 = vmatprep.subr.bf16.mxu0 0
    %1470 = vmatpush1.bf16.msra.mxu0 0
    %1471 = vmatprep.subr.bf16.mxu0 0
    %1472 = vmatpush1.bf16.msra.mxu0 0
    %1473 = vmatprep.subr.bf16.mxu0 0
    %1474 = vmatpush1.bf16.msra.mxu0 0
    %1475 = vmatprep.mubr.bf16.mxu0 0
    %1476 = vmatmul.mubr.bf16.gmra.mrb[0].mxu0 %v1106
    %v1477 = vpop.f32.mrb[0].mxu0
    %v1478 = vadd.f32 0.0, %v1477
    %v1479 = vpop.f32.mrb[0].mxu0
    %v1480 = vadd.f32 0.0, %v1479
    %v1481 = vpop.f32.mrb[0].mxu0
    %v1482 = vpop.f32.mrb[0].mxu0
    %1483 = vdwg.mxu0
    %v1486 = vlaneseq
    %v1487 = vshrl.u32 %v1486, 7
    %v1488 = vsub.s32 0, %v1487
    %v1489 = vrot.slane %v131, %v1488
    %v1490 = vlaneseq
    %v1491 = vshrl.u32 %v1490, 7
    %v1492 = vsub.s32 1, %v1491
    %v1493 = vrot.slane %v131, %v1492
    %v1494 = vlaneseq
    %v1495 = vshrl.u32 %v1494, 7
    %v1496 = vsub.s32 2, %v1495
    %v1497 = vrot.slane %v131, %v1496
    %v1498 = vlaneseq
    %v1499 = vshrl.u32 %v1498, 7
    %v1500 = vsub.s32 3, %v1499
    %v1501 = vrot.slane %v131, %v1500
    %v1502 = vlaneseq
    %v1503 = vshrl.u32 %v1502, 7
    %v1504 = vsub.s32 4, %v1503
    %v1505 = vrot.slane %v131, %v1504
    %v1506 = vlaneseq
    %v1507 = vshrl.u32 %v1506, 7
    %v1508 = vsub.s32 5, %v1507
    %v1509 = vrot.slane %v131, %v1508
    %v1510 = vlaneseq
    %v1511 = vshrl.u32 %v1510, 7
    %v1512 = vsub.s32 6, %v1511
    %v1513 = vrot.slane %v131, %v1512
    %v1514 = vlaneseq
    %v1515 = vshrl.u32 %v1514, 7
    %v1516 = vsub.s32 7, %v1515
    %v1517 = vrot.slane %v131, %v1516
    %v1518 = vlaneseq
    %v1519 = vshrl.u32 %v1518, 7
    %v1520 = vsub.s32 0, %v1519
    %v1521 = vrot.slane %v135, %v1520
    %v1522 = vlaneseq
    %v1523 = vshrl.u32 %v1522, 7
    %v1524 = vsub.s32 1, %v1523
    %v1525 = vrot.slane %v135, %v1524
    %v1526 = vlaneseq
    %v1527 = vshrl.u32 %v1526, 7
    %v1528 = vsub.s32 2, %v1527
    %v1529 = vrot.slane %v135, %v1528
    %v1530 = vlaneseq
    %v1531 = vshrl.u32 %v1530, 7
    %v1532 = vsub.s32 3, %v1531
    %v1533 = vrot.slane %v135, %v1532
    %v1534 = vlaneseq
    %v1535 = vshrl.u32 %v1534, 7
    %v1536 = vsub.s32 4, %v1535
    %v1537 = vrot.slane %v135, %v1536
    %v1538 = vlaneseq
    %v1539 = vshrl.u32 %v1538, 7
    %v1540 = vsub.s32 5, %v1539
    %v1541 = vrot.slane %v135, %v1540
    %v1542 = vlaneseq
    %v1543 = vshrl.u32 %v1542, 7
    %v1544 = vsub.s32 6, %v1543
    %v1545 = vrot.slane %v135, %v1544
    %v1546 = vlaneseq
    %v1547 = vshrl.u32 %v1546, 7
    %v1548 = vsub.s32 7, %v1547
    %v1549 = vrot.slane %v135, %v1548
    %v1566 = vmul.f32 %v1191, %v1489
    %v1567 = vmul.f32 %v1193, %v1493
    %v1568 = vmul.f32 %v1232, %v1497
    %v1569 = vmul.f32 %v1234, %v1501
    %v1570 = vmul.f32 %v1273, %v1505
    %v1571 = vmul.f32 %v1275, %v1509
    %v1572 = vmul.f32 %v1314, %v1513
    %v1573 = vmul.f32 %v1316, %v1517
    %v1574 = vmul.f32 %v1355, %v1521
    %v1575 = vmul.f32 %v1357, %v1525
    %v1576 = vmul.f32 %v1396, %v1529
    %v1577 = vmul.f32 %v1398, %v1533
    %v1578 = vmul.f32 %v1437, %v1537
    %v1579 = vmul.f32 %v1439, %v1541
    %v1580 = vmul.f32 %v1478, %v1545
    %v1581 = vmul.f32 %v1480, %v1549
    %v1582 = vadd.f32 %v1036, %v1566
    %v1583 = vadd.f32 %v1037, %v1567
    %v1584 = vadd.f32 %v1038, %v1568
    %v1585 = vadd.f32 %v1039, %v1569
    %v1586 = vadd.f32 %v1040, %v1570
    %v1587 = vadd.f32 %v1041, %v1571
    %v1588 = vadd.f32 %v1042, %v1572
    %v1589 = vadd.f32 %v1043, %v1573
    %v1590 = vadd.f32 %v1044, %v1574
    %v1591 = vadd.f32 %v1045, %v1575
    %v1592 = vadd.f32 %v1046, %v1576
    %v1593 = vadd.f32 %v1047, %v1577
    %v1594 = vadd.f32 %v1048, %v1578
    %v1595 = vadd.f32 %v1049, %v1579
    %v1596 = vadd.f32 %v1050, %v1580
    %v1597 = vadd.f32 %v1051, %v1581
    %s1598 = scalar_lea.vmem %s4, 4
    %v1599 = vld [vmem:[%s1598] sm:$0x3]
    %1600 = vrot.lane.b32.xlu0 %v489, 31
    %v1601 = vpop.permute.xlu0 %1600
    %1602 = vrot.lane.b32.xlu0 %v490, 31
    %v1603 = vpop.permute.xlu0 %1602
    %1604 = vrot.lane.b32.xlu0 %v491, 31
    %v1605 = vpop.permute.xlu0 %1604
    %1606 = vrot.lane.b32.xlu0 %v492, 31
    %v1607 = vpop.permute.xlu0 %1606
    %1608 = vrot.lane.b32.xlu0 %v493, 31
    %v1609 = vpop.permute.xlu0 %1608
    %1610 = vrot.lane.b32.xlu0 %v494, 31
    %v1611 = vpop.permute.xlu0 %1610
    %1612 = vrot.lane.b32.xlu0 %v495, 31
    %v1613 = vpop.permute.xlu0 %1612
    %1614 = vrot.lane.b32.xlu0 %v496, 31
    %v1615 = vpop.permute.xlu0 %1614
    %1616 = vrot.lane.b32.xlu0 %v497, 31
    %v1617 = vpop.permute.xlu0 %1616
    %1618 = vrot.lane.b32.xlu0 %v498, 31
    %v1619 = vpop.permute.xlu0 %1618
    %1620 = vrot.lane.b32.xlu0 %v499, 31
    %v1621 = vpop.permute.xlu0 %1620
    %1622 = vrot.lane.b32.xlu0 %v500, 31
    %v1623 = vpop.permute.xlu0 %1622
    %1624 = vrot.lane.b32.xlu0 %v501, 31
    %v1625 = vpop.permute.xlu0 %1624
    %1626 = vrot.lane.b32.xlu0 %v502, 31
    %v1627 = vpop.permute.xlu0 %1626
    %1628 = vrot.lane.b32.xlu0 %v503, 31
    %v1629 = vpop.permute.xlu0 %1628
    %1630 = vrot.lane.b32.xlu0 %v504, 31
    %v1631 = vpop.permute.xlu0 %1630
    %1632 = vrot.lane.b32.xlu0 %v505, 31
    %v1633 = vpop.permute.xlu0 %1632
    %vm1634 = vcmask 252928
    %v1635 = vsel %vm1634, %v1601, %v1603
    %v1636 = vsel %vm1634, %v1603, %v1605
    %v1637 = vsel %vm1634, %v1605, %v1607
    %v1638 = vsel %vm1634, %v1607, %v1609
    %v1639 = vsel %vm1634, %v1609, %v1611
    %v1640 = vsel %vm1634, %v1611, %v1613
    %v1641 = vsel %vm1634, %v1613, %v1615
    %v1642 = vsel %vm1634, %v1615, %v1617
    %v1643 = vsel %vm1634, %v1617, %v1619
    %v1644 = vsel %vm1634, %v1619, %v1621
    %v1645 = vsel %vm1634, %v1621, %v1623
    %v1646 = vsel %vm1634, %v1623, %v1625
    %v1647 = vsel %vm1634, %v1625, %v1627
    %v1648 = vsel %vm1634, %v1627, %v1629
    %v1649 = vsel %vm1634, %v1629, %v1631
    %v1650 = vsel %vm1634, %v1631, %v1633
    %v1652 = vsel %vm557, %v1599, 0
    %v1655 = vsel %vm561, %v1635, 0
    %v1658 = vsel %vm561, %v1636, 0
    %v1661 = vsel %vm561, %v1637, 0
    %v1664 = vsel %vm561, %v1638, 0
    %v1667 = vsel %vm561, %v1639, 0
    %v1670 = vsel %vm561, %v1640, 0
    %v1673 = vsel %vm561, %v1641, 0
    %v1676 = vsel %vm561, %v1642, 0
    %v1679 = vsel %vm561, %v1643, 0
    %v1682 = vsel %vm561, %v1644, 0
    %v1685 = vsel %vm561, %v1645, 0
    %v1688 = vsel %vm561, %v1646, 0
    %v1691 = vsel %vm561, %v1647, 0
    %v1694 = vsel %vm561, %v1648, 0
    %v1697 = vsel %vm561, %v1649, 0
    %v1700 = vsel %vm561, %v1650, 0
    %1702 = vmatprep.subr.bf16.mxu0 %v1658
    %1703 = vmatpush1.bf16.msra.mxu0 %v1655
    %1704 = vmatprep.subr.bf16.mxu0 0
    %1705 = vmatpush1.bf16.msra.mxu0 0
    %1706 = vmatprep.subr.bf16.mxu0 0
    %1707 = vmatpush1.bf16.msra.mxu0 0
    %1708 = vmatprep.subr.bf16.mxu0 0
    %1709 = vmatpush1.bf16.msra.mxu0 0
    %1710 = vmatprep.subr.bf16.mxu0 0
    %1711 = vmatpush1.bf16.msra.mxu0 0
    %1712 = vmatprep.subr.bf16.mxu0 0
    %1713 = vmatpush1.bf16.msra.mxu0 0
    %1714 = vmatprep.subr.bf16.mxu0 0
    %1715 = vmatpush1.bf16.msra.mxu0 0
    %1716 = vmatprep.subr.bf16.mxu0 0
    %1717 = vmatpush1.bf16.msra.mxu0 0
    %1718 = vmatprep.subr.bf16.mxu0 0
    %1719 = vmatpush1.bf16.msra.mxu0 0
    %1720 = vmatprep.subr.bf16.mxu0 0
    %1721 = vmatpush1.bf16.msra.mxu0 0
    %1722 = vmatprep.subr.bf16.mxu0 0
    %1723 = vmatpush1.bf16.msra.mxu0 0
    %1724 = vmatprep.subr.bf16.mxu0 0
    %1725 = vmatpush1.bf16.msra.mxu0 0
    %1726 = vmatprep.subr.bf16.mxu0 0
    %1727 = vmatpush1.bf16.msra.mxu0 0
    %1728 = vmatprep.subr.bf16.mxu0 0
    %1729 = vmatpush1.bf16.msra.mxu0 0
    %1730 = vmatprep.subr.bf16.mxu0 0
    %1731 = vmatpush1.bf16.msra.mxu0 0
    %1732 = vmatprep.subr.bf16.mxu0 0
    %1733 = vmatpush1.bf16.msra.mxu0 0
    %1734 = vmatprep.mubr.bf16.mxu0 0
    %1735 = vmatmul.mubr.bf16.gmra.mrb[0].mxu0 %v1652
    %v1736 = vpop.f32.mrb[0].mxu0
    %v1737 = vadd.f32 0.0, %v1736
    %v1738 = vpop.f32.mrb[0].mxu0
    %v1739 = vadd.f32 0.0, %v1738
    %v1740 = vpop.f32.mrb[0].mxu0
    %v1741 = vpop.f32.mrb[0].mxu0
    %1742 = vdwg.mxu0
    %1743 = vmatprep.subr.bf16.mxu0 %v1664
    %1744 = vmatpush1.bf16.msra.mxu0 %v1661
    %1745 = vmatprep.subr.bf16.mxu0 0
    %1746 = vmatpush1.bf16.msra.mxu0 0
    %1747 = vmatprep.subr.bf16.mxu0 0
    %1748 = vmatpush1.bf16.msra.mxu0 0
    %1749 = vmatprep.subr.bf16.mxu0 0
    %1750 = vmatpush1.bf16.msra.mxu0 0
    %1751 = vmatprep.subr.bf16.mxu0 0
    %1752 = vmatpush1.bf16.msra.mxu0 0
    %1753 = vmatprep.subr.bf16.mxu0 0
    %1754 = vmatpush1.bf16.msra.mxu0 0
    %1755 = vmatprep.subr.bf16.mxu0 0
    %1756 = vmatpush1.bf16.msra.mxu0 0
    %1757 = vmatprep.subr.bf16.mxu0 0
    %1758 = vmatpush1.bf16.msra.mxu0 0
    %1759 = vmatprep.subr.bf16.mxu0 0
    %1760 = vmatpush1.bf16.msra.mxu0 0
    %1761 = vmatprep.subr.bf16.mxu0 0
    %1762 = vmatpush1.bf16.msra.mxu0 0
    %1763 = vmatprep.subr.bf16.mxu0 0
    %1764 = vmatpush1.bf16.msra.mxu0 0
    %1765 = vmatprep.subr.bf16.mxu0 0
    %1766 = vmatpush1.bf16.msra.mxu0 0
    %1767 = vmatprep.subr.bf16.mxu0 0
    %1768 = vmatpush1.bf16.msra.mxu0 0
    %1769 = vmatprep.subr.bf16.mxu0 0
    %1770 = vmatpush1.bf16.msra.mxu0 0
    %1771 = vmatprep.subr.bf16.mxu0 0
    %1772 = vmatpush1.bf16.msra.mxu0 0
    %1773 = vmatprep.subr.bf16.mxu0 0
    %1774 = vmatpush1.bf16.msra.mxu0 0
    %1775 = vmatprep.mubr.bf16.mxu0 0
    %1776 = vmatmul.mubr.bf16.gmra.mrb[0].mxu0 %v1652
    %v1777 = vpop.f32.mrb[0].mxu0
    %v1778 = vadd.f32 0.0, %v1777
    %v1779 = vpop.f32.mrb[0].mxu0
    %v1780 = vadd.f32 0.0, %v1779
    %v1781 = vpop.f32.mrb[0].mxu0
    %v1782 = vpop.f32.mrb[0].mxu0
    %1783 = vdwg.mxu0
    %1784 = vmatprep.subr.bf16.mxu0 %v1670
    %1785 = vmatpush1.bf16.msra.mxu0 %v1667
    %1786 = vmatprep.subr.bf16.mxu0 0
    %1787 = vmatpush1.bf16.msra.mxu0 0
    %1788 = vmatprep.subr.bf16.mxu0 0
    %1789 = vmatpush1.bf16.msra.mxu0 0
    %1790 = vmatprep.subr.bf16.mxu0 0
    %1791 = vmatpush1.bf16.msra.mxu0 0
    %1792 = vmatprep.subr.bf16.mxu0 0
    %1793 = vmatpush1.bf16.msra.mxu0 0
    %1794 = vmatprep.subr.bf16.mxu0 0
    %1795 = vmatpush1.bf16.msra.mxu0 0
    %1796 = vmatprep.subr.bf16.mxu0 0
    %1797 = vmatpush1.bf16.msra.mxu0 0
    %1798 = vmatprep.subr.bf16.mxu0 0
    %1799 = vmatpush1.bf16.msra.mxu0 0
    %1800 = vmatprep.subr.bf16.mxu0 0
    %1801 = vmatpush1.bf16.msra.mxu0 0
    %1802 = vmatprep.subr.bf16.mxu0 0
    %1803 = vmatpush1.bf16.msra.mxu0 0
    %1804 = vmatprep.subr.bf16.mxu0 0
    %1805 = vmatpush1.bf16.msra.mxu0 0
    %1806 = vmatprep.subr.bf16.mxu0 0
    %1807 = vmatpush1.bf16.msra.mxu0 0
    %1808 = vmatprep.subr.bf16.mxu0 0
    %1809 = vmatpush1.bf16.msra.mxu0 0
    %1810 = vmatprep.subr.bf16.mxu0 0
    %1811 = vmatpush1.bf16.msra.mxu0 0
    %1812 = vmatprep.subr.bf16.mxu0 0
    %1813 = vmatpush1.bf16.msra.mxu0 0
    %1814 = vmatprep.subr.bf16.mxu0 0
    %1815 = vmatpush1.bf16.msra.mxu0 0
    %1816 = vmatprep.mubr.bf16.mxu0 0
    %1817 = vmatmul.mubr.bf16.gmra.mrb[0].mxu0 %v1652
    %v1818 = vpop.f32.mrb[0].mxu0
    %v1819 = vadd.f32 0.0, %v1818
    %v1820 = vpop.f32.mrb[0].mxu0
    %v1821 = vadd.f32 0.0, %v1820
    %v1822 = vpop.f32.mrb[0].mxu0
    %v1823 = vpop.f32.mrb[0].mxu0
    %1824 = vdwg.mxu0
    %1825 = vmatprep.subr.bf16.mxu0 %v1676
    %1826 = vmatpush1.bf16.msra.mxu0 %v1673
    %1827 = vmatprep.subr.bf16.mxu0 0
    %1828 = vmatpush1.bf16.msra.mxu0 0
    %1829 = vmatprep.subr.bf16.mxu0 0
    %1830 = vmatpush1.bf16.msra.mxu0 0
    %1831 = vmatprep.subr.bf16.mxu0 0
    %1832 = vmatpush1.bf16.msra.mxu0 0
    %1833 = vmatprep.subr.bf16.mxu0 0
    %1834 = vmatpush1.bf16.msra.mxu0 0
    %1835 = vmatprep.subr.bf16.mxu0 0
    %1836 = vmatpush1.bf16.msra.mxu0 0
    %1837 = vmatprep.subr.bf16.mxu0 0
    %1838 = vmatpush1.bf16.msra.mxu0 0
    %1839 = vmatprep.subr.bf16.mxu0 0
    %1840 = vmatpush1.bf16.msra.mxu0 0
    %1841 = vmatprep.subr.bf16.mxu0 0
    %1842 = vmatpush1.bf16.msra.mxu0 0
    %1843 = vmatprep.subr.bf16.mxu0 0
    %1844 = vmatpush1.bf16.msra.mxu0 0
    %1845 = vmatprep.subr.bf16.mxu0 0
    %1846 = vmatpush1.bf16.msra.mxu0 0
    %1847 = vmatprep.subr.bf16.mxu0 0
    %1848 = vmatpush1.bf16.msra.mxu0 0
    %1849 = vmatprep.subr.bf16.mxu0 0
    %1850 = vmatpush1.bf16.msra.mxu0 0
    %1851 = vmatprep.subr.bf16.mxu0 0
    %1852 = vmatpush1.bf16.msra.mxu0 0
    %1853 = vmatprep.subr.bf16.mxu0 0
    %1854 = vmatpush1.bf16.msra.mxu0 0
    %1855 = vmatprep.subr.bf16.mxu0 0
    %1856 = vmatpush1.bf16.msra.mxu0 0
    %1857 = vmatprep.mubr.bf16.mxu0 0
    %1858 = vmatmul.mubr.bf16.gmra.mrb[0].mxu0 %v1652
    %v1859 = vpop.f32.mrb[0].mxu0
    %v1860 = vadd.f32 0.0, %v1859
    %v1861 = vpop.f32.mrb[0].mxu0
    %v1862 = vadd.f32 0.0, %v1861
    %v1863 = vpop.f32.mrb[0].mxu0
    %v1864 = vpop.f32.mrb[0].mxu0
    %1865 = vdwg.mxu0
    %1866 = vmatprep.subr.bf16.mxu0 %v1682
    %1867 = vmatpush1.bf16.msra.mxu0 %v1679
    %1868 = vmatprep.subr.bf16.mxu0 0
    %1869 = vmatpush1.bf16.msra.mxu0 0
    %1870 = vmatprep.subr.bf16.mxu0 0
    %1871 = vmatpush1.bf16.msra.mxu0 0
    %1872 = vmatprep.subr.bf16.mxu0 0
    %1873 = vmatpush1.bf16.msra.mxu0 0
    %1874 = vmatprep.subr.bf16.mxu0 0
    %1875 = vmatpush1.bf16.msra.mxu0 0
    %1876 = vmatprep.subr.bf16.mxu0 0
    %1877 = vmatpush1.bf16.msra.mxu0 0
    %1878 = vmatprep.subr.bf16.mxu0 0
    %1879 = vmatpush1.bf16.msra.mxu0 0
    %1880 = vmatprep.subr.bf16.mxu0 0
    %1881 = vmatpush1.bf16.msra.mxu0 0
    %1882 = vmatprep.subr.bf16.mxu0 0
    %1883 = vmatpush1.bf16.msra.mxu0 0
    %1884 = vmatprep.subr.bf16.mxu0 0
    %1885 = vmatpush1.bf16.msra.mxu0 0
    %1886 = vmatprep.subr.bf16.mxu0 0
    %1887 = vmatpush1.bf16.msra.mxu0 0
    %1888 = vmatprep.subr.bf16.mxu0 0
    %1889 = vmatpush1.bf16.msra.mxu0 0
    %1890 = vmatprep.subr.bf16.mxu0 0
    %1891 = vmatpush1.bf16.msra.mxu0 0
    %1892 = vmatprep.subr.bf16.mxu0 0
    %1893 = vmatpush1.bf16.msra.mxu0 0
    %1894 = vmatprep.subr.bf16.mxu0 0
    %1895 = vmatpush1.bf16.msra.mxu0 0
    %1896 = vmatprep.subr.bf16.mxu0 0
    %1897 = vmatpush1.bf16.msra.mxu0 0
    %1898 = vmatprep.mubr.bf16.mxu0 0
    %1899 = vmatmul.mubr.bf16.gmra.mrb[0].mxu0 %v1652
    %v1900 = vpop.f32.mrb[0].mxu0
    %v1901 = vadd.f32 0.0, %v1900
    %v1902 = vpop.f32.mrb[0].mxu0
    %v1903 = vadd.f32 0.0, %v1902
    %v1904 = vpop.f32.mrb[0].mxu0
    %v1905 = vpop.f32.mrb[0].mxu0
    %1906 = vdwg.mxu0
    %1907 = vmatprep.subr.bf16.mxu0 %v1688
    %1908 = vmatpush1.bf16.msra.mxu0 %v1685
    %1909 = vmatprep.subr.bf16.mxu0 0
    %1910 = vmatpush1.bf16.msra.mxu0 0
    %1911 = vmatprep.subr.bf16.mxu0 0
    %1912 = vmatpush1.bf16.msra.mxu0 0
    %1913 = vmatprep.subr.bf16.mxu0 0
    %1914 = vmatpush1.bf16.msra.mxu0 0
    %1915 = vmatprep.subr.bf16.mxu0 0
    %1916 = vmatpush1.bf16.msra.mxu0 0
    %1917 = vmatprep.subr.bf16.mxu0 0
    %1918 = vmatpush1.bf16.msra.mxu0 0
    %1919 = vmatprep.subr.bf16.mxu0 0
    %1920 = vmatpush1.bf16.msra.mxu0 0
    %1921 = vmatprep.subr.bf16.mxu0 0
    %1922 = vmatpush1.bf16.msra.mxu0 0
    %1923 = vmatprep.subr.bf16.mxu0 0
    %1924 = vmatpush1.bf16.msra.mxu0 0
    %1925 = vmatprep.subr.bf16.mxu0 0
    %1926 = vmatpush1.bf16.msra.mxu0 0
    %1927 = vmatprep.subr.bf16.mxu0 0
    %1928 = vmatpush1.bf16.msra.mxu0 0
    %1929 = vmatprep.subr.bf16.mxu0 0
    %1930 = vmatpush1.bf16.msra.mxu0 0
    %1931 = vmatprep.subr.bf16.mxu0 0
    %1932 = vmatpush1.bf16.msra.mxu0 0
    %1933 = vmatprep.subr.bf16.mxu0 0
    %1934 = vmatpush1.bf16.msra.mxu0 0
    %1935 = vmatprep.subr.bf16.mxu0 0
    %1936 = vmatpush1.bf16.msra.mxu0 0
    %1937 = vmatprep.subr.bf16.mxu0 0
    %1938 = vmatpush1.bf16.msra.mxu0 0
    %1939 = vmatprep.mubr.bf16.mxu0 0
    %1940 = vmatmul.mubr.bf16.gmra.mrb[0].mxu0 %v1652
    %v1941 = vpop.f32.mrb[0].mxu0
    %v1942 = vadd.f32 0.0, %v1941
    %v1943 = vpop.f32.mrb[0].mxu0
    %v1944 = vadd.f32 0.0, %v1943
    %v1945 = vpop.f32.mrb[0].mxu0
    %v1946 = vpop.f32.mrb[0].mxu0
    %1947 = vdwg.mxu0
    %1948 = vmatprep.subr.bf16.mxu0 %v1694
    %1949 = vmatpush1.bf16.msra.mxu0 %v1691
    %1950 = vmatprep.subr.bf16.mxu0 0
    %1951 = vmatpush1.bf16.msra.mxu0 0
    %1952 = vmatprep.subr.bf16.mxu0 0
    %1953 = vmatpush1.bf16.msra.mxu0 0
    %1954 = vmatprep.subr.bf16.mxu0 0
    %1955 = vmatpush1.bf16.msra.mxu0 0
    %1956 = vmatprep.subr.bf16.mxu0 0
    %1957 = vmatpush1.bf16.msra.mxu0 0
    %1958 = vmatprep.subr.bf16.mxu0 0
    %1959 = vmatpush1.bf16.msra.mxu0 0
    %1960 = vmatprep.subr.bf16.mxu0 0
    %1961 = vmatpush1.bf16.msra.mxu0 0
    %1962 = vmatprep.subr.bf16.mxu0 0
    %1963 = vmatpush1.bf16.msra.mxu0 0
    %1964 = vmatprep.subr.bf16.mxu0 0
    %1965 = vmatpush1.bf16.msra.mxu0 0
    %1966 = vmatprep.subr.bf16.mxu0 0
    %1967 = vmatpush1.bf16.msra.mxu0 0
    %1968 = vmatprep.subr.bf16.mxu0 0
    %1969 = vmatpush1.bf16.msra.mxu0 0
    %1970 = vmatprep.subr.bf16.mxu0 0
    %1971 = vmatpush1.bf16.msra.mxu0 0
    %1972 = vmatprep.subr.bf16.mxu0 0
    %1973 = vmatpush1.bf16.msra.mxu0 0
    %1974 = vmatprep.subr.bf16.mxu0 0
    %1975 = vmatpush1.bf16.msra.mxu0 0
    %1976 = vmatprep.subr.bf16.mxu0 0
    %1977 = vmatpush1.bf16.msra.mxu0 0
    %1978 = vmatprep.subr.bf16.mxu0 0
    %1979 = vmatpush1.bf16.msra.mxu0 0
    %1980 = vmatprep.mubr.bf16.mxu0 0
    %1981 = vmatmul.mubr.bf16.gmra.mrb[0].mxu0 %v1652
    %v1982 = vpop.f32.mrb[0].mxu0
    %v1983 = vadd.f32 0.0, %v1982
    %v1984 = vpop.f32.mrb[0].mxu0
    %v1985 = vadd.f32 0.0, %v1984
    %v1986 = vpop.f32.mrb[0].mxu0
    %v1987 = vpop.f32.mrb[0].mxu0
    %1988 = vdwg.mxu0
    %1989 = vmatprep.subr.bf16.mxu0 %v1700
    %1990 = vmatpush1.bf16.msra.mxu0 %v1697
    %1991 = vmatprep.subr.bf16.mxu0 0
    %1992 = vmatpush1.bf16.msra.mxu0 0
    %1993 = vmatprep.subr.bf16.mxu0 0
    %1994 = vmatpush1.bf16.msra.mxu0 0
    %1995 = vmatprep.subr.bf16.mxu0 0
    %1996 = vmatpush1.bf16.msra.mxu0 0
    %1997 = vmatprep.subr.bf16.mxu0 0
    %1998 = vmatpush1.bf16.msra.mxu0 0
    %1999 = vmatprep.subr.bf16.mxu0 0
    %2000 = vmatpush1.bf16.msra.mxu0 0
    %2001 = vmatprep.subr.bf16.mxu0 0
    %2002 = vmatpush1.bf16.msra.mxu0 0
    %2003 = vmatprep.subr.bf16.mxu0 0
    %2004 = vmatpush1.bf16.msra.mxu0 0
    %2005 = vmatprep.subr.bf16.mxu0 0
    %2006 = vmatpush1.bf16.msra.mxu0 0
    %2007 = vmatprep.subr.bf16.mxu0 0
    %2008 = vmatpush1.bf16.msra.mxu0 0
    %2009 = vmatprep.subr.bf16.mxu0 0
    %2010 = vmatpush1.bf16.msra.mxu0 0
    %2011 = vmatprep.subr.bf16.mxu0 0
    %2012 = vmatpush1.bf16.msra.mxu0 0
    %2013 = vmatprep.subr.bf16.mxu0 0
    %2014 = vmatpush1.bf16.msra.mxu0 0
    %2015 = vmatprep.subr.bf16.mxu0 0
    %2016 = vmatpush1.bf16.msra.mxu0 0
    %2017 = vmatprep.subr.bf16.mxu0 0
    %2018 = vmatpush1.bf16.msra.mxu0 0
    %2019 = vmatprep.subr.bf16.mxu0 0
    %2020 = vmatpush1.bf16.msra.mxu0 0
    %2021 = vmatprep.mubr.bf16.mxu0 0
    %2022 = vmatmul.mubr.bf16.gmra.mrb[0].mxu0 %v1652
    %v2023 = vpop.f32.mrb[0].mxu0
    %v2024 = vadd.f32 0.0, %v2023
    %v2025 = vpop.f32.mrb[0].mxu0
    %v2026 = vadd.f32 0.0, %v2025
    %v2027 = vpop.f32.mrb[0].mxu0
    %v2028 = vpop.f32.mrb[0].mxu0
    %2029 = vdwg.mxu0
    %v2032 = vlaneseq
    %v2033 = vshrl.u32 %v2032, 7
    %v2034 = vsub.s32 0, %v2033
    %v2035 = vrot.slane %v139, %v2034
    %v2036 = vlaneseq
    %v2037 = vshrl.u32 %v2036, 7
    %v2038 = vsub.s32 1, %v2037
    %v2039 = vrot.slane %v139, %v2038
    %v2040 = vlaneseq
    %v2041 = vshrl.u32 %v2040, 7
    %v2042 = vsub.s32 2, %v2041
    %v2043 = vrot.slane %v139, %v2042
    %v2044 = vlaneseq
    %v2045 = vshrl.u32 %v2044, 7
    %v2046 = vsub.s32 3, %v2045
    %v2047 = vrot.slane %v139, %v2046
    %v2048 = vlaneseq
    %v2049 = vshrl.u32 %v2048, 7
    %v2050 = vsub.s32 4, %v2049
    %v2051 = vrot.slane %v139, %v2050
    %v2052 = vlaneseq
    %v2053 = vshrl.u32 %v2052, 7
    %v2054 = vsub.s32 5, %v2053
    %v2055 = vrot.slane %v139, %v2054
    %v2056 = vlaneseq
    %v2057 = vshrl.u32 %v2056, 7
    %v2058 = vsub.s32 6, %v2057
    %v2059 = vrot.slane %v139, %v2058
    %v2060 = vlaneseq
    %v2061 = vshrl.u32 %v2060, 7
    %v2062 = vsub.s32 7, %v2061
    %v2063 = vrot.slane %v139, %v2062
    %v2064 = vlaneseq
    %v2065 = vshrl.u32 %v2064, 7
    %v2066 = vsub.s32 0, %v2065
    %v2067 = vrot.slane %v143, %v2066
    %v2068 = vlaneseq
    %v2069 = vshrl.u32 %v2068, 7
    %v2070 = vsub.s32 1, %v2069
    %v2071 = vrot.slane %v143, %v2070
    %v2072 = vlaneseq
    %v2073 = vshrl.u32 %v2072, 7
    %v2074 = vsub.s32 2, %v2073
    %v2075 = vrot.slane %v143, %v2074
    %v2076 = vlaneseq
    %v2077 = vshrl.u32 %v2076, 7
    %v2078 = vsub.s32 3, %v2077
    %v2079 = vrot.slane %v143, %v2078
    %v2080 = vlaneseq
    %v2081 = vshrl.u32 %v2080, 7
    %v2082 = vsub.s32 4, %v2081
    %v2083 = vrot.slane %v143, %v2082
    %v2084 = vlaneseq
    %v2085 = vshrl.u32 %v2084, 7
    %v2086 = vsub.s32 5, %v2085
    %v2087 = vrot.slane %v143, %v2086
    %v2088 = vlaneseq
    %v2089 = vshrl.u32 %v2088, 7
    %v2090 = vsub.s32 6, %v2089
    %v2091 = vrot.slane %v143, %v2090
    %v2092 = vlaneseq
    %v2093 = vshrl.u32 %v2092, 7
    %v2094 = vsub.s32 7, %v2093
    %v2095 = vrot.slane %v143, %v2094
    %v2112 = vmul.f32 %v1737, %v2035
    %v2113 = vmul.f32 %v1739, %v2039
    %v2114 = vmul.f32 %v1778, %v2043
    %v2115 = vmul.f32 %v1780, %v2047
    %v2116 = vmul.f32 %v1819, %v2051
    %v2117 = vmul.f32 %v1821, %v2055
    %v2118 = vmul.f32 %v1860, %v2059
    %v2119 = vmul.f32 %v1862, %v2063
    %v2120 = vmul.f32 %v1901, %v2067
    %v2121 = vmul.f32 %v1903, %v2071
    %v2122 = vmul.f32 %v1942, %v2075
    %v2123 = vmul.f32 %v1944, %v2079
    %v2124 = vmul.f32 %v1983, %v2083
    %v2125 = vmul.f32 %v1985, %v2087
    %v2126 = vmul.f32 %v2024, %v2091
    %v2127 = vmul.f32 %v2026, %v2095
    %v2128 = vadd.f32 %v1582, %v2112
    %v2129 = vadd.f32 %v1583, %v2113
    %v2130 = vadd.f32 %v1584, %v2114
    %v2131 = vadd.f32 %v1585, %v2115
    %v2132 = vadd.f32 %v1586, %v2116
    %v2133 = vadd.f32 %v1587, %v2117
    %v2134 = vadd.f32 %v1588, %v2118
    %v2135 = vadd.f32 %v1589, %v2119
    %v2136 = vadd.f32 %v1590, %v2120
    %v2137 = vadd.f32 %v1591, %v2121
    %v2138 = vadd.f32 %v1592, %v2122
    %v2139 = vadd.f32 %v1593, %v2123
    %v2140 = vadd.f32 %v1594, %v2124
    %v2141 = vadd.f32 %v1595, %v2125
    %v2142 = vadd.f32 %v1596, %v2126
    %v2143 = vadd.f32 %v1597, %v2127
    %s2144 = scalar_lea.vmem %s4, 6
    %v2145 = vld [vmem:[%s2144] sm:$0x3]
    %2146 = vrot.lane.b32.xlu0 %v489, 1
    %v2147 = vpop.permute.xlu0 %2146
    %2148 = vrot.lane.b32.xlu0 %v490, 1
    %v2149 = vpop.permute.xlu0 %2148
    %2150 = vrot.lane.b32.xlu0 %v491, 1
    %v2151 = vpop.permute.xlu0 %2150
    %2152 = vrot.lane.b32.xlu0 %v492, 1
    %v2153 = vpop.permute.xlu0 %2152
    %2154 = vrot.lane.b32.xlu0 %v493, 1
    %v2155 = vpop.permute.xlu0 %2154
    %2156 = vrot.lane.b32.xlu0 %v494, 1
    %v2157 = vpop.permute.xlu0 %2156
    %2158 = vrot.lane.b32.xlu0 %v495, 1
    %v2159 = vpop.permute.xlu0 %2158
    %2160 = vrot.lane.b32.xlu0 %v496, 1
    %v2161 = vpop.permute.xlu0 %2160
    %2162 = vrot.lane.b32.xlu0 %v497, 1
    %v2163 = vpop.permute.xlu0 %2162
    %2164 = vrot.lane.b32.xlu0 %v498, 1
    %v2165 = vpop.permute.xlu0 %2164
    %2166 = vrot.lane.b32.xlu0 %v499, 1
    %v2167 = vpop.permute.xlu0 %2166
    %2168 = vrot.lane.b32.xlu0 %v500, 1
    %v2169 = vpop.permute.xlu0 %2168
    %2170 = vrot.lane.b32.xlu0 %v501, 1
    %v2171 = vpop.permute.xlu0 %2170
    %2172 = vrot.lane.b32.xlu0 %v502, 1
    %v2173 = vpop.permute.xlu0 %2172
    %2174 = vrot.lane.b32.xlu0 %v503, 1
    %v2175 = vpop.permute.xlu0 %2174
    %2176 = vrot.lane.b32.xlu0 %v504, 1
    %v2177 = vpop.permute.xlu0 %2176
    %2178 = vrot.lane.b32.xlu0 %v505, 1
    %v2179 = vpop.permute.xlu0 %2178
    %vm2180 = vcmask 7168
    %v2181 = vsel %vm2180, %v2147, %v2149
    %v2182 = vsel %vm2180, %v2149, %v2151
    %v2183 = vsel %vm2180, %v2151, %v2153
    %v2184 = vsel %vm2180, %v2153, %v2155
    %v2185 = vsel %vm2180, %v2155, %v2157
    %v2186 = vsel %vm2180, %v2157, %v2159
    %v2187 = vsel %vm2180, %v2159, %v2161
    %v2188 = vsel %vm2180, %v2161, %v2163
    %v2189 = vsel %vm2180, %v2163, %v2165
    %v2190 = vsel %vm2180, %v2165, %v2167
    %v2191 = vsel %vm2180, %v2167, %v2169
    %v2192 = vsel %vm2180, %v2169, %v2171
    %v2193 = vsel %vm2180, %v2171, %v2173
    %v2194 = vsel %vm2180, %v2173, %v2175
    %v2195 = vsel %vm2180, %v2175, %v2177
    %v2196 = vsel %vm2180, %v2177, %v2179
    %v2198 = vsel %vm557, %v2145, 0
    %v2201 = vsel %vm561, %v2181, 0
    %v2204 = vsel %vm561, %v2182, 0
    %v2207 = vsel %vm561, %v2183, 0
    %v2210 = vsel %vm561, %v2184, 0
    %v2213 = vsel %vm561, %v2185, 0
    %v2216 = vsel %vm561, %v2186, 0
    %v2219 = vsel %vm561, %v2187, 0
    %v2222 = vsel %vm561, %v2188, 0
    %v2225 = vsel %vm561, %v2189, 0
    %v2228 = vsel %vm561, %v2190, 0
    %v2231 = vsel %vm561, %v2191, 0
    %v2234 = vsel %vm561, %v2192, 0
    %v2237 = vsel %vm561, %v2193, 0
    %v2240 = vsel %vm561, %v2194, 0
    %v2243 = vsel %vm561, %v2195, 0
    %v2246 = vsel %vm561, %v2196, 0
    %2248 = vmatprep.subr.bf16.mxu0 %v2204
    %2249 = vmatpush1.bf16.msra.mxu0 %v2201
    %2250 = vmatprep.subr.bf16.mxu0 0
    %2251 = vmatpush1.bf16.msra.mxu0 0
    %2252 = vmatprep.subr.bf16.mxu0 0
    %2253 = vmatpush1.bf16.msra.mxu0 0
    %2254 = vmatprep.subr.bf16.mxu0 0
    %2255 = vmatpush1.bf16.msra.mxu0 0
    %2256 = vmatprep.subr.bf16.mxu0 0
    %2257 = vmatpush1.bf16.msra.mxu0 0
    %2258 = vmatprep.subr.bf16.mxu0 0
    %2259 = vmatpush1.bf16.msra.mxu0 0
    %2260 = vmatprep.subr.bf16.mxu0 0
    %2261 = vmatpush1.bf16.msra.mxu0 0
    %2262 = vmatprep.subr.bf16.mxu0 0
    %2263 = vmatpush1.bf16.msra.mxu0 0
    %2264 = vmatprep.subr.bf16.mxu0 0
    %2265 = vmatpush1.bf16.msra.mxu0 0
    %2266 = vmatprep.subr.bf16.mxu0 0
    %2267 = vmatpush1.bf16.msra.mxu0 0
    %2268 = vmatprep.subr.bf16.mxu0 0
    %2269 = vmatpush1.bf16.msra.mxu0 0
    %2270 = vmatprep.subr.bf16.mxu0 0
    %2271 = vmatpush1.bf16.msra.mxu0 0
    %2272 = vmatprep.subr.bf16.mxu0 0
    %2273 = vmatpush1.bf16.msra.mxu0 0
    %2274 = vmatprep.subr.bf16.mxu0 0
    %2275 = vmatpush1.bf16.msra.mxu0 0
    %2276 = vmatprep.subr.bf16.mxu0 0
    %2277 = vmatpush1.bf16.msra.mxu0 0
    %2278 = vmatprep.subr.bf16.mxu0 0
    %2279 = vmatpush1.bf16.msra.mxu0 0
    %2280 = vmatprep.mubr.bf16.mxu0 0
    %2281 = vmatmul.mubr.bf16.gmra.mrb[0].mxu0 %v2198
    %v2282 = vpop.f32.mrb[0].mxu0
    %v2283 = vadd.f32 0.0, %v2282
    %v2284 = vpop.f32.mrb[0].mxu0
    %v2285 = vadd.f32 0.0, %v2284
    %v2286 = vpop.f32.mrb[0].mxu0
    %v2287 = vpop.f32.mrb[0].mxu0
    %2288 = vdwg.mxu0
    %2289 = vmatprep.subr.bf16.mxu0 %v2210
    %2290 = vmatpush1.bf16.msra.mxu0 %v2207
    %2291 = vmatprep.subr.bf16.mxu0 0
    %2292 = vmatpush1.bf16.msra.mxu0 0
    %2293 = vmatprep.subr.bf16.mxu0 0
    %2294 = vmatpush1.bf16.msra.mxu0 0
    %2295 = vmatprep.subr.bf16.mxu0 0
    %2296 = vmatpush1.bf16.msra.mxu0 0
    %2297 = vmatprep.subr.bf16.mxu0 0
    %2298 = vmatpush1.bf16.msra.mxu0 0
    %2299 = vmatprep.subr.bf16.mxu0 0
    %2300 = vmatpush1.bf16.msra.mxu0 0
    %2301 = vmatprep.subr.bf16.mxu0 0
    %2302 = vmatpush1.bf16.msra.mxu0 0
    %2303 = vmatprep.subr.bf16.mxu0 0
    %2304 = vmatpush1.bf16.msra.mxu0 0
    %2305 = vmatprep.subr.bf16.mxu0 0
    %2306 = vmatpush1.bf16.msra.mxu0 0
    %2307 = vmatprep.subr.bf16.mxu0 0
    %2308 = vmatpush1.bf16.msra.mxu0 0
    %2309 = vmatprep.subr.bf16.mxu0 0
    %2310 = vmatpush1.bf16.msra.mxu0 0
    %2311 = vmatprep.subr.bf16.mxu0 0
    %2312 = vmatpush1.bf16.msra.mxu0 0
    %2313 = vmatprep.subr.bf16.mxu0 0
    %2314 = vmatpush1.bf16.msra.mxu0 0
    %2315 = vmatprep.subr.bf16.mxu0 0
    %2316 = vmatpush1.bf16.msra.mxu0 0
    %2317 = vmatprep.subr.bf16.mxu0 0
    %2318 = vmatpush1.bf16.msra.mxu0 0
    %2319 = vmatprep.subr.bf16.mxu0 0
    %2320 = vmatpush1.bf16.msra.mxu0 0
    %2321 = vmatprep.mubr.bf16.mxu0 0
    %2322 = vmatmul.mubr.bf16.gmra.mrb[0].mxu0 %v2198
    %v2323 = vpop.f32.mrb[0].mxu0
    %v2324 = vadd.f32 0.0, %v2323
    %v2325 = vpop.f32.mrb[0].mxu0
    %v2326 = vadd.f32 0.0, %v2325
    %v2327 = vpop.f32.mrb[0].mxu0
    %v2328 = vpop.f32.mrb[0].mxu0
    %2329 = vdwg.mxu0
    %2330 = vmatprep.subr.bf16.mxu0 %v2216
    %2331 = vmatpush1.bf16.msra.mxu0 %v2213
    %2332 = vmatprep.subr.bf16.mxu0 0
    %2333 = vmatpush1.bf16.msra.mxu0 0
    %2334 = vmatprep.subr.bf16.mxu0 0
    %2335 = vmatpush1.bf16.msra.mxu0 0
    %2336 = vmatprep.subr.bf16.mxu0 0
    %2337 = vmatpush1.bf16.msra.mxu0 0
    %2338 = vmatprep.subr.bf16.mxu0 0
    %2339 = vmatpush1.bf16.msra.mxu0 0
    %2340 = vmatprep.subr.bf16.mxu0 0
    %2341 = vmatpush1.bf16.msra.mxu0 0
    %2342 = vmatprep.subr.bf16.mxu0 0
    %2343 = vmatpush1.bf16.msra.mxu0 0
    %2344 = vmatprep.subr.bf16.mxu0 0
    %2345 = vmatpush1.bf16.msra.mxu0 0
    %2346 = vmatprep.subr.bf16.mxu0 0
    %2347 = vmatpush1.bf16.msra.mxu0 0
    %2348 = vmatprep.subr.bf16.mxu0 0
    %2349 = vmatpush1.bf16.msra.mxu0 0
    %2350 = vmatprep.subr.bf16.mxu0 0
    %2351 = vmatpush1.bf16.msra.mxu0 0
    %2352 = vmatprep.subr.bf16.mxu0 0
    %2353 = vmatpush1.bf16.msra.mxu0 0
    %2354 = vmatprep.subr.bf16.mxu0 0
    %2355 = vmatpush1.bf16.msra.mxu0 0
    %2356 = vmatprep.subr.bf16.mxu0 0
    %2357 = vmatpush1.bf16.msra.mxu0 0
    %2358 = vmatprep.subr.bf16.mxu0 0
    %2359 = vmatpush1.bf16.msra.mxu0 0
    %2360 = vmatprep.subr.bf16.mxu0 0
    %2361 = vmatpush1.bf16.msra.mxu0 0
    %2362 = vmatprep.mubr.bf16.mxu0 0
    %2363 = vmatmul.mubr.bf16.gmra.mrb[0].mxu0 %v2198
    %v2364 = vpop.f32.mrb[0].mxu0
    %v2365 = vadd.f32 0.0, %v2364
    %v2366 = vpop.f32.mrb[0].mxu0
    %v2367 = vadd.f32 0.0, %v2366
    %v2368 = vpop.f32.mrb[0].mxu0
    %v2369 = vpop.f32.mrb[0].mxu0
    %2370 = vdwg.mxu0
    %2371 = vmatprep.subr.bf16.mxu0 %v2222
    %2372 = vmatpush1.bf16.msra.mxu0 %v2219
    %2373 = vmatprep.subr.bf16.mxu0 0
    %2374 = vmatpush1.bf16.msra.mxu0 0
    %2375 = vmatprep.subr.bf16.mxu0 0
    %2376 = vmatpush1.bf16.msra.mxu0 0
    %2377 = vmatprep.subr.bf16.mxu0 0
    %2378 = vmatpush1.bf16.msra.mxu0 0
    %2379 = vmatprep.subr.bf16.mxu0 0
    %2380 = vmatpush1.bf16.msra.mxu0 0
    %2381 = vmatprep.subr.bf16.mxu0 0
    %2382 = vmatpush1.bf16.msra.mxu0 0
    %2383 = vmatprep.subr.bf16.mxu0 0
    %2384 = vmatpush1.bf16.msra.mxu0 0
    %2385 = vmatprep.subr.bf16.mxu0 0
    %2386 = vmatpush1.bf16.msra.mxu0 0
    %2387 = vmatprep.subr.bf16.mxu0 0
    %2388 = vmatpush1.bf16.msra.mxu0 0
    %2389 = vmatprep.subr.bf16.mxu0 0
    %2390 = vmatpush1.bf16.msra.mxu0 0
    %2391 = vmatprep.subr.bf16.mxu0 0
    %2392 = vmatpush1.bf16.msra.mxu0 0
    %2393 = vmatprep.subr.bf16.mxu0 0
    %2394 = vmatpush1.bf16.msra.mxu0 0
    %2395 = vmatprep.subr.bf16.mxu0 0
    %2396 = vmatpush1.bf16.msra.mxu0 0
    %2397 = vmatprep.subr.bf16.mxu0 0
    %2398 = vmatpush1.bf16.msra.mxu0 0
    %2399 = vmatprep.subr.bf16.mxu0 0
    %2400 = vmatpush1.bf16.msra.mxu0 0
    %2401 = vmatprep.subr.bf16.mxu0 0
    %2402 = vmatpush1.bf16.msra.mxu0 0
    %2403 = vmatprep.mubr.bf16.mxu0 0
    %2404 = vmatmul.mubr.bf16.gmra.mrb[0].mxu0 %v2198
    %v2405 = vpop.f32.mrb[0].mxu0
    %v2406 = vadd.f32 0.0, %v2405
    %v2407 = vpop.f32.mrb[0].mxu0
    %v2408 = vadd.f32 0.0, %v2407
    %v2409 = vpop.f32.mrb[0].mxu0
    %v2410 = vpop.f32.mrb[0].mxu0
    %2411 = vdwg.mxu0
    %2412 = vmatprep.subr.bf16.mxu0 %v2228
    %2413 = vmatpush1.bf16.msra.mxu0 %v2225
    %2414 = vmatprep.subr.bf16.mxu0 0
    %2415 = vmatpush1.bf16.msra.mxu0 0
    %2416 = vmatprep.subr.bf16.mxu0 0
    %2417 = vmatpush1.bf16.msra.mxu0 0
    %2418 = vmatprep.subr.bf16.mxu0 0
    %2419 = vmatpush1.bf16.msra.mxu0 0
    %2420 = vmatprep.subr.bf16.mxu0 0
    %2421 = vmatpush1.bf16.msra.mxu0 0
    %2422 = vmatprep.subr.bf16.mxu0 0
    %2423 = vmatpush1.bf16.msra.mxu0 0
    %2424 = vmatprep.subr.bf16.mxu0 0
    %2425 = vmatpush1.bf16.msra.mxu0 0
    %2426 = vmatprep.subr.bf16.mxu0 0
    %2427 = vmatpush1.bf16.msra.mxu0 0
    %2428 = vmatprep.subr.bf16.mxu0 0
    %2429 = vmatpush1.bf16.msra.mxu0 0
    %2430 = vmatprep.subr.bf16.mxu0 0
    %2431 = vmatpush1.bf16.msra.mxu0 0
    %2432 = vmatprep.subr.bf16.mxu0 0
    %2433 = vmatpush1.bf16.msra.mxu0 0
    %2434 = vmatprep.subr.bf16.mxu0 0
    %2435 = vmatpush1.bf16.msra.mxu0 0
    %2436 = vmatprep.subr.bf16.mxu0 0
    %2437 = vmatpush1.bf16.msra.mxu0 0
    %2438 = vmatprep.subr.bf16.mxu0 0
    %2439 = vmatpush1.bf16.msra.mxu0 0
    %2440 = vmatprep.subr.bf16.mxu0 0
    %2441 = vmatpush1.bf16.msra.mxu0 0
    %2442 = vmatprep.subr.bf16.mxu0 0
    %2443 = vmatpush1.bf16.msra.mxu0 0
    %2444 = vmatprep.mubr.bf16.mxu0 0
    %2445 = vmatmul.mubr.bf16.gmra.mrb[0].mxu0 %v2198
    %v2446 = vpop.f32.mrb[0].mxu0
    %v2447 = vadd.f32 0.0, %v2446
    %v2448 = vpop.f32.mrb[0].mxu0
    %v2449 = vadd.f32 0.0, %v2448
    %v2450 = vpop.f32.mrb[0].mxu0
    %v2451 = vpop.f32.mrb[0].mxu0
    %2452 = vdwg.mxu0
    %2453 = vmatprep.subr.bf16.mxu0 %v2234
    %2454 = vmatpush1.bf16.msra.mxu0 %v2231
    %2455 = vmatprep.subr.bf16.mxu0 0
    %2456 = vmatpush1.bf16.msra.mxu0 0
    %2457 = vmatprep.subr.bf16.mxu0 0
    %2458 = vmatpush1.bf16.msra.mxu0 0
    %2459 = vmatprep.subr.bf16.mxu0 0
    %2460 = vmatpush1.bf16.msra.mxu0 0
    %2461 = vmatprep.subr.bf16.mxu0 0
    %2462 = vmatpush1.bf16.msra.mxu0 0
    %2463 = vmatprep.subr.bf16.mxu0 0
    %2464 = vmatpush1.bf16.msra.mxu0 0
    %2465 = vmatprep.subr.bf16.mxu0 0
    %2466 = vmatpush1.bf16.msra.mxu0 0
    %2467 = vmatprep.subr.bf16.mxu0 0
    %2468 = vmatpush1.bf16.msra.mxu0 0
    %2469 = vmatprep.subr.bf16.mxu0 0
    %2470 = vmatpush1.bf16.msra.mxu0 0
    %2471 = vmatprep.subr.bf16.mxu0 0
    %2472 = vmatpush1.bf16.msra.mxu0 0
    %2473 = vmatprep.subr.bf16.mxu0 0
    %2474 = vmatpush1.bf16.msra.mxu0 0
    %2475 = vmatprep.subr.bf16.mxu0 0
    %2476 = vmatpush1.bf16.msra.mxu0 0
    %2477 = vmatprep.subr.bf16.mxu0 0
    %2478 = vmatpush1.bf16.msra.mxu0 0
    %2479 = vmatprep.subr.bf16.mxu0 0
    %2480 = vmatpush1.bf16.msra.mxu0 0
    %2481 = vmatprep.subr.bf16.mxu0 0
    %2482 = vmatpush1.bf16.msra.mxu0 0
    %2483 = vmatprep.subr.bf16.mxu0 0
    %2484 = vmatpush1.bf16.msra.mxu0 0
    %2485 = vmatprep.mubr.bf16.mxu0 0
    %2486 = vmatmul.mubr.bf16.gmra.mrb[0].mxu0 %v2198
    %v2487 = vpop.f32.mrb[0].mxu0
    %v2488 = vadd.f32 0.0, %v2487
    %v2489 = vpop.f32.mrb[0].mxu0
    %v2490 = vadd.f32 0.0, %v2489
    %v2491 = vpop.f32.mrb[0].mxu0
    %v2492 = vpop.f32.mrb[0].mxu0
    %2493 = vdwg.mxu0
    %2494 = vmatprep.subr.bf16.mxu0 %v2240
    %2495 = vmatpush1.bf16.msra.mxu0 %v2237
    %2496 = vmatprep.subr.bf16.mxu0 0
    %2497 = vmatpush1.bf16.msra.mxu0 0
    %2498 = vmatprep.subr.bf16.mxu0 0
    %2499 = vmatpush1.bf16.msra.mxu0 0
    %2500 = vmatprep.subr.bf16.mxu0 0
    %2501 = vmatpush1.bf16.msra.mxu0 0
    %2502 = vmatprep.subr.bf16.mxu0 0
    %2503 = vmatpush1.bf16.msra.mxu0 0
    %2504 = vmatprep.subr.bf16.mxu0 0
    %2505 = vmatpush1.bf16.msra.mxu0 0
    %2506 = vmatprep.subr.bf16.mxu0 0
    %2507 = vmatpush1.bf16.msra.mxu0 0
    %2508 = vmatprep.subr.bf16.mxu0 0
    %2509 = vmatpush1.bf16.msra.mxu0 0
    %2510 = vmatprep.subr.bf16.mxu0 0
    %2511 = vmatpush1.bf16.msra.mxu0 0
    %2512 = vmatprep.subr.bf16.mxu0 0
    %2513 = vmatpush1.bf16.msra.mxu0 0
    %2514 = vmatprep.subr.bf16.mxu0 0
    %2515 = vmatpush1.bf16.msra.mxu0 0
    %2516 = vmatprep.subr.bf16.mxu0 0
    %2517 = vmatpush1.bf16.msra.mxu0 0
    %2518 = vmatprep.subr.bf16.mxu0 0
    %2519 = vmatpush1.bf16.msra.mxu0 0
    %2520 = vmatprep.subr.bf16.mxu0 0
    %2521 = vmatpush1.bf16.msra.mxu0 0
    %2522 = vmatprep.subr.bf16.mxu0 0
    %2523 = vmatpush1.bf16.msra.mxu0 0
    %2524 = vmatprep.subr.bf16.mxu0 0
    %2525 = vmatpush1.bf16.msra.mxu0 0
    %2526 = vmatprep.mubr.bf16.mxu0 0
    %2527 = vmatmul.mubr.bf16.gmra.mrb[0].mxu0 %v2198
    %v2528 = vpop.f32.mrb[0].mxu0
    %v2529 = vadd.f32 0.0, %v2528
    %v2530 = vpop.f32.mrb[0].mxu0
    %v2531 = vadd.f32 0.0, %v2530
    %v2532 = vpop.f32.mrb[0].mxu0
    %v2533 = vpop.f32.mrb[0].mxu0
    %2534 = vdwg.mxu0
    %2535 = vmatprep.subr.bf16.mxu0 %v2246
    %2536 = vmatpush1.bf16.msra.mxu0 %v2243
    %2537 = vmatprep.subr.bf16.mxu0 0
    %2538 = vmatpush1.bf16.msra.mxu0 0
    %2539 = vmatprep.subr.bf16.mxu0 0
    %2540 = vmatpush1.bf16.msra.mxu0 0
    %2541 = vmatprep.subr.bf16.mxu0 0
    %2542 = vmatpush1.bf16.msra.mxu0 0
    %2543 = vmatprep.subr.bf16.mxu0 0
    %2544 = vmatpush1.bf16.msra.mxu0 0
    %2545 = vmatprep.subr.bf16.mxu0 0
    %2546 = vmatpush1.bf16.msra.mxu0 0
    %2547 = vmatprep.subr.bf16.mxu0 0
    %2548 = vmatpush1.bf16.msra.mxu0 0
    %2549 = vmatprep.subr.bf16.mxu0 0
    %2550 = vmatpush1.bf16.msra.mxu0 0
    %2551 = vmatprep.subr.bf16.mxu0 0
    %2552 = vmatpush1.bf16.msra.mxu0 0
    %2553 = vmatprep.subr.bf16.mxu0 0
    %2554 = vmatpush1.bf16.msra.mxu0 0
    %2555 = vmatprep.subr.bf16.mxu0 0
    %2556 = vmatpush1.bf16.msra.mxu0 0
    %2557 = vmatprep.subr.bf16.mxu0 0
    %2558 = vmatpush1.bf16.msra.mxu0 0
    %2559 = vmatprep.subr.bf16.mxu0 0
    %2560 = vmatpush1.bf16.msra.mxu0 0
    %2561 = vmatprep.subr.bf16.mxu0 0
    %2562 = vmatpush1.bf16.msra.mxu0 0
    %2563 = vmatprep.subr.bf16.mxu0 0
    %2564 = vmatpush1.bf16.msra.mxu0 0
    %2565 = vmatprep.subr.bf16.mxu0 0
    %2566 = vmatpush1.bf16.msra.mxu0 0
    %2567 = vmatprep.mubr.bf16.mxu0 0
    %2568 = vmatmul.mubr.bf16.gmra.mrb[0].mxu0 %v2198
    %v2569 = vpop.f32.mrb[0].mxu0
    %v2570 = vadd.f32 0.0, %v2569
    %v2571 = vpop.f32.mrb[0].mxu0
    %v2572 = vadd.f32 0.0, %v2571
    %v2573 = vpop.f32.mrb[0].mxu0
    %v2574 = vpop.f32.mrb[0].mxu0
    %2575 = vdwg.mxu0
    %v2578 = vlaneseq
    %v2579 = vshrl.u32 %v2578, 7
    %v2580 = vsub.s32 0, %v2579
    %v2581 = vrot.slane %v147, %v2580
    %v2582 = vlaneseq
    %v2583 = vshrl.u32 %v2582, 7
    %v2584 = vsub.s32 1, %v2583
    %v2585 = vrot.slane %v147, %v2584
    %v2586 = vlaneseq
    %v2587 = vshrl.u32 %v2586, 7
    %v2588 = vsub.s32 2, %v2587
    %v2589 = vrot.slane %v147, %v2588
    %v2590 = vlaneseq
    %v2591 = vshrl.u32 %v2590, 7
    %v2592 = vsub.s32 3, %v2591
    %v2593 = vrot.slane %v147, %v2592
    %v2594 = vlaneseq
    %v2595 = vshrl.u32 %v2594, 7
    %v2596 = vsub.s32 4, %v2595
    %v2597 = vrot.slane %v147, %v2596
    %v2598 = vlaneseq
    %v2599 = vshrl.u32 %v2598, 7
    %v2600 = vsub.s32 5, %v2599
    %v2601 = vrot.slane %v147, %v2600
    %v2602 = vlaneseq
    %v2603 = vshrl.u32 %v2602, 7
    %v2604 = vsub.s32 6, %v2603
    %v2605 = vrot.slane %v147, %v2604
    %v2606 = vlaneseq
    %v2607 = vshrl.u32 %v2606, 7
    %v2608 = vsub.s32 7, %v2607
    %v2609 = vrot.slane %v147, %v2608
    %v2610 = vlaneseq
    %v2611 = vshrl.u32 %v2610, 7
    %v2612 = vsub.s32 0, %v2611
    %v2613 = vrot.slane %v151, %v2612
    %v2614 = vlaneseq
    %v2615 = vshrl.u32 %v2614, 7
    %v2616 = vsub.s32 1, %v2615
    %v2617 = vrot.slane %v151, %v2616
    %v2618 = vlaneseq
    %v2619 = vshrl.u32 %v2618, 7
    %v2620 = vsub.s32 2, %v2619
    %v2621 = vrot.slane %v151, %v2620
    %v2622 = vlaneseq
    %v2623 = vshrl.u32 %v2622, 7
    %v2624 = vsub.s32 3, %v2623
    %v2625 = vrot.slane %v151, %v2624
    %v2626 = vlaneseq
    %v2627 = vshrl.u32 %v2626, 7
    %v2628 = vsub.s32 4, %v2627
    %v2629 = vrot.slane %v151, %v2628
    %v2630 = vlaneseq
    %v2631 = vshrl.u32 %v2630, 7
    %v2632 = vsub.s32 5, %v2631
    %v2633 = vrot.slane %v151, %v2632
    %v2634 = vlaneseq
    %v2635 = vshrl.u32 %v2634, 7
    %v2636 = vsub.s32 6, %v2635
    %v2637 = vrot.slane %v151, %v2636
    %v2638 = vlaneseq
    %v2639 = vshrl.u32 %v2638, 7
    %v2640 = vsub.s32 7, %v2639
    %v2641 = vrot.slane %v151, %v2640
    %v2658 = vmul.f32 %v2283, %v2581
    %v2659 = vmul.f32 %v2285, %v2585
    %v2660 = vmul.f32 %v2324, %v2589
    %v2661 = vmul.f32 %v2326, %v2593
    %v2662 = vmul.f32 %v2365, %v2597
    %v2663 = vmul.f32 %v2367, %v2601
    %v2664 = vmul.f32 %v2406, %v2605
    %v2665 = vmul.f32 %v2408, %v2609
    %v2666 = vmul.f32 %v2447, %v2613
    %v2667 = vmul.f32 %v2449, %v2617
    %v2668 = vmul.f32 %v2488, %v2621
    %v2669 = vmul.f32 %v2490, %v2625
    %v2670 = vmul.f32 %v2529, %v2629
    %v2671 = vmul.f32 %v2531, %v2633
    %v2672 = vmul.f32 %v2570, %v2637
    %v2673 = vmul.f32 %v2572, %v2641
    %v2674 = vadd.f32 %v2128, %v2658
    %v2675 = vadd.f32 %v2129, %v2659
    %v2676 = vadd.f32 %v2130, %v2660
    %v2677 = vadd.f32 %v2131, %v2661
    %v2678 = vadd.f32 %v2132, %v2662
    %v2679 = vadd.f32 %v2133, %v2663
    %v2680 = vadd.f32 %v2134, %v2664
    %v2681 = vadd.f32 %v2135, %v2665
    %v2682 = vadd.f32 %v2136, %v2666
    %v2683 = vadd.f32 %v2137, %v2667
    %v2684 = vadd.f32 %v2138, %v2668
    %v2685 = vadd.f32 %v2139, %v2669
    %v2686 = vadd.f32 %v2140, %v2670
    %v2687 = vadd.f32 %v2141, %v2671
    %v2688 = vadd.f32 %v2142, %v2672
    %v2689 = vadd.f32 %v2143, %v2673
    %v2690 = vld [vmem:[#allocation3 + $0x4] sm:$0x33]
    %v2691 = vld [vmem:[#allocation3 + $0xc] sm:$0x33]
    %v2692 = vld [vmem:[#allocation3 + $0x14] sm:$0x33]
    %v2693 = vld [vmem:[#allocation3 + $0x1c] sm:$0x33]
    %v2694 = vld [vmem:[#allocation3 + $0x24] sm:$0x33]
    %v2695 = vld [vmem:[#allocation3 + $0x2c] sm:$0x33]
    %v2696 = vld [vmem:[#allocation3 + $0x34] sm:$0x33]
    %v2697 = vld [vmem:[#allocation3 + $0x3c] sm:$0x33]
    %s2698 = scalar_lea.vmem %s4, 8
    %v2699 = vld [vmem:[%s2698] sm:$0x3]
    %v2708 = vunpack.c.l.b16 %v2690
    %v2709 = vunpack.c.h.b16 %v2690
    %v2710 = vunpack.c.l.b16 %v2691
    %v2711 = vunpack.c.h.b16 %v2691
    %v2712 = vunpack.c.l.b16 %v2692
    %v2713 = vunpack.c.h.b16 %v2692
    %v2714 = vunpack.c.l.b16 %v2693
    %v2715 = vunpack.c.h.b16 %v2693
    %v2716 = vunpack.c.l.b16 %v2694
    %v2717 = vunpack.c.h.b16 %v2694
    %v2718 = vunpack.c.l.b16 %v2695
    %v2719 = vunpack.c.h.b16 %v2695
    %v2720 = vunpack.c.l.b16 %v2696
    %v2721 = vunpack.c.h.b16 %v2696
    %v2722 = vunpack.c.l.b16 %v2697
    %v2723 = vunpack.c.h.b16 %v2697
    %v2724 = vpack.c.b16 %v2708, %v2708
    %v2725 = vpack.c.b16 %v2709, %v2709
    %v2726 = vpack.c.b16 %v2710, %v2710
    %v2727 = vpack.c.b16 %v2711, %v2711
    %v2728 = vpack.c.b16 %v2712, %v2712
    %v2729 = vpack.c.b16 %v2713, %v2713
    %v2730 = vpack.c.b16 %v2714, %v2714
    %v2731 = vpack.c.b16 %v2715, %v2715
    %v2732 = vpack.c.b16 %v2716, %v2716
    %v2733 = vpack.c.b16 %v2717, %v2717
    %v2734 = vpack.c.b16 %v2718, %v2718
    %v2735 = vpack.c.b16 %v2719, %v2719
    %v2736 = vpack.c.b16 %v2720, %v2720
    %v2737 = vpack.c.b16 %v2721, %v2721
    %v2738 = vpack.c.b16 %v2722, %v2722
    %v2739 = vpack.c.b16 %v2723, %v2723
    %v2741 = vsel %vm557, %v2699, 0
    %v2744 = vsel %vm561, %v2724, 0
    %v2747 = vsel %vm561, %v2725, 0
    %v2750 = vsel %vm561, %v2726, 0
    %v2753 = vsel %vm561, %v2727, 0
    %v2756 = vsel %vm561, %v2728, 0
    %v2759 = vsel %vm561, %v2729, 0
    %v2762 = vsel %vm561, %v2730, 0
    %v2765 = vsel %vm561, %v2731, 0
    %v2768 = vsel %vm561, %v2732, 0
    %v2771 = vsel %vm561, %v2733, 0
    %v2774 = vsel %vm561, %v2734, 0
    %v2777 = vsel %vm561, %v2735, 0
    %v2780 = vsel %vm561, %v2736, 0
    %v2783 = vsel %vm561, %v2737, 0
    %v2786 = vsel %vm561, %v2738, 0
    %v2789 = vsel %vm561, %v2739, 0
    %2791 = vmatprep.subr.bf16.mxu0 %v2747
    %2792 = vmatpush1.bf16.msra.mxu0 %v2744
    %2793 = vmatprep.subr.bf16.mxu0 0
    %2794 = vmatpush1.bf16.msra.mxu0 0
    %2795 = vmatprep.subr.bf16.mxu0 0
    %2796 = vmatpush1.bf16.msra.mxu0 0
    %2797 = vmatprep.subr.bf16.mxu0 0
    %2798 = vmatpush1.bf16.msra.mxu0 0
    %2799 = vmatprep.subr.bf16.mxu0 0
    %2800 = vmatpush1.bf16.msra.mxu0 0
    %2801 = vmatprep.subr.bf16.mxu0 0
    %2802 = vmatpush1.bf16.msra.mxu0 0
    %2803 = vmatprep.subr.bf16.mxu0 0
    %2804 = vmatpush1.bf16.msra.mxu0 0
    %2805 = vmatprep.subr.bf16.mxu0 0
    %2806 = vmatpush1.bf16.msra.mxu0 0
    %2807 = vmatprep.subr.bf16.mxu0 0
    %2808 = vmatpush1.bf16.msra.mxu0 0
    %2809 = vmatprep.subr.bf16.mxu0 0
    %2810 = vmatpush1.bf16.msra.mxu0 0
    %2811 = vmatprep.subr.bf16.mxu0 0
    %2812 = vmatpush1.bf16.msra.mxu0 0
    %2813 = vmatprep.subr.bf16.mxu0 0
    %2814 = vmatpush1.bf16.msra.mxu0 0
    %2815 = vmatprep.subr.bf16.mxu0 0
    %2816 = vmatpush1.bf16.msra.mxu0 0
    %2817 = vmatprep.subr.bf16.mxu0 0
    %2818 = vmatpush1.bf16.msra.mxu0 0
    %2819 = vmatprep.subr.bf16.mxu0 0
    %2820 = vmatpush1.bf16.msra.mxu0 0
    %2821 = vmatprep.subr.bf16.mxu0 0
    %2822 = vmatpush1.bf16.msra.mxu0 0
    %2823 = vmatprep.mubr.bf16.mxu0 0
    %2824 = vmatmul.mubr.bf16.gmra.mrb[0].mxu0 %v2741
    %v2825 = vpop.f32.mrb[0].mxu0
    %v2826 = vadd.f32 0.0, %v2825
    %v2827 = vpop.f32.mrb[0].mxu0
    %v2828 = vadd.f32 0.0, %v2827
    %v2829 = vpop.f32.mrb[0].mxu0
    %v2830 = vpop.f32.mrb[0].mxu0
    %2831 = vdwg.mxu0
    %2832 = vmatprep.subr.bf16.mxu0 %v2753
    %2833 = vmatpush1.bf16.msra.mxu0 %v2750
    %2834 = vmatprep.subr.bf16.mxu0 0
    %2835 = vmatpush1.bf16.msra.mxu0 0
    %2836 = vmatprep.subr.bf16.mxu0 0
    %2837 = vmatpush1.bf16.msra.mxu0 0
    %2838 = vmatprep.subr.bf16.mxu0 0
    %2839 = vmatpush1.bf16.msra.mxu0 0
    %2840 = vmatprep.subr.bf16.mxu0 0
    %2841 = vmatpush1.bf16.msra.mxu0 0
    %2842 = vmatprep.subr.bf16.mxu0 0
    %2843 = vmatpush1.bf16.msra.mxu0 0
    %2844 = vmatprep.subr.bf16.mxu0 0
    %2845 = vmatpush1.bf16.msra.mxu0 0
    %2846 = vmatprep.subr.bf16.mxu0 0
    %2847 = vmatpush1.bf16.msra.mxu0 0
    %2848 = vmatprep.subr.bf16.mxu0 0
    %2849 = vmatpush1.bf16.msra.mxu0 0
    %2850 = vmatprep.subr.bf16.mxu0 0
    %2851 = vmatpush1.bf16.msra.mxu0 0
    %2852 = vmatprep.subr.bf16.mxu0 0
    %2853 = vmatpush1.bf16.msra.mxu0 0
    %2854 = vmatprep.subr.bf16.mxu0 0
    %2855 = vmatpush1.bf16.msra.mxu0 0
    %2856 = vmatprep.subr.bf16.mxu0 0
    %2857 = vmatpush1.bf16.msra.mxu0 0
    %2858 = vmatprep.subr.bf16.mxu0 0
    %2859 = vmatpush1.bf16.msra.mxu0 0
    %2860 = vmatprep.subr.bf16.mxu0 0
    %2861 = vmatpush1.bf16.msra.mxu0 0
    %2862 = vmatprep.subr.bf16.mxu0 0
    %2863 = vmatpush1.bf16.msra.mxu0 0
    %2864 = vmatprep.mubr.bf16.mxu0 0
    %2865 = vmatmul.mubr.bf16.gmra.mrb[0].mxu0 %v2741
    %v2866 = vpop.f32.mrb[0].mxu0
    %v2867 = vadd.f32 0.0, %v2866
    %v2868 = vpop.f32.mrb[0].mxu0
    %v2869 = vadd.f32 0.0, %v2868
    %v2870 = vpop.f32.mrb[0].mxu0
    %v2871 = vpop.f32.mrb[0].mxu0
    %2872 = vdwg.mxu0
    %2873 = vmatprep.subr.bf16.mxu0 %v2759
    %2874 = vmatpush1.bf16.msra.mxu0 %v2756
    %2875 = vmatprep.subr.bf16.mxu0 0
    %2876 = vmatpush1.bf16.msra.mxu0 0
    %2877 = vmatprep.subr.bf16.mxu0 0
    %2878 = vmatpush1.bf16.msra.mxu0 0
    %2879 = vmatprep.subr.bf16.mxu0 0
    %2880 = vmatpush1.bf16.msra.mxu0 0
    %2881 = vmatprep.subr.bf16.mxu0 0
    %2882 = vmatpush1.bf16.msra.mxu0 0
    %2883 = vmatprep.subr.bf16.mxu0 0
    %2884 = vmatpush1.bf16.msra.mxu0 0
    %2885 = vmatprep.subr.bf16.mxu0 0
    %2886 = vmatpush1.bf16.msra.mxu0 0
    %2887 = vmatprep.subr.bf16.mxu0 0
    %2888 = vmatpush1.bf16.msra.mxu0 0
    %2889 = vmatprep.subr.bf16.mxu0 0
    %2890 = vmatpush1.bf16.msra.mxu0 0
    %2891 = vmatprep.subr.bf16.mxu0 0
    %2892 = vmatpush1.bf16.msra.mxu0 0
    %2893 = vmatprep.subr.bf16.mxu0 0
    %2894 = vmatpush1.bf16.msra.mxu0 0
    %2895 = vmatprep.subr.bf16.mxu0 0
    %2896 = vmatpush1.bf16.msra.mxu0 0
    %2897 = vmatprep.subr.bf16.mxu0 0
    %2898 = vmatpush1.bf16.msra.mxu0 0
    %2899 = vmatprep.subr.bf16.mxu0 0
    %2900 = vmatpush1.bf16.msra.mxu0 0
    %2901 = vmatprep.subr.bf16.mxu0 0
    %2902 = vmatpush1.bf16.msra.mxu0 0
    %2903 = vmatprep.subr.bf16.mxu0 0
    %2904 = vmatpush1.bf16.msra.mxu0 0
    %2905 = vmatprep.mubr.bf16.mxu0 0
    %2906 = vmatmul.mubr.bf16.gmra.mrb[0].mxu0 %v2741
    %v2907 = vpop.f32.mrb[0].mxu0
    %v2908 = vadd.f32 0.0, %v2907
    %v2909 = vpop.f32.mrb[0].mxu0
    %v2910 = vadd.f32 0.0, %v2909
    %v2911 = vpop.f32.mrb[0].mxu0
    %v2912 = vpop.f32.mrb[0].mxu0
    %2913 = vdwg.mxu0
    %2914 = vmatprep.subr.bf16.mxu0 %v2765
    %2915 = vmatpush1.bf16.msra.mxu0 %v2762
    %2916 = vmatprep.subr.bf16.mxu0 0
    %2917 = vmatpush1.bf16.msra.mxu0 0
    %2918 = vmatprep.subr.bf16.mxu0 0
    %2919 = vmatpush1.bf16.msra.mxu0 0
    %2920 = vmatprep.subr.bf16.mxu0 0
    %2921 = vmatpush1.bf16.msra.mxu0 0
    %2922 = vmatprep.subr.bf16.mxu0 0
    %2923 = vmatpush1.bf16.msra.mxu0 0
    %2924 = vmatprep.subr.bf16.mxu0 0
    %2925 = vmatpush1.bf16.msra.mxu0 0
    %2926 = vmatprep.subr.bf16.mxu0 0
    %2927 = vmatpush1.bf16.msra.mxu0 0
    %2928 = vmatprep.subr.bf16.mxu0 0
    %2929 = vmatpush1.bf16.msra.mxu0 0
    %2930 = vmatprep.subr.bf16.mxu0 0
    %2931 = vmatpush1.bf16.msra.mxu0 0
    %2932 = vmatprep.subr.bf16.mxu0 0
    %2933 = vmatpush1.bf16.msra.mxu0 0
    %2934 = vmatprep.subr.bf16.mxu0 0
    %2935 = vmatpush1.bf16.msra.mxu0 0
    %2936 = vmatprep.subr.bf16.mxu0 0
    %2937 = vmatpush1.bf16.msra.mxu0 0
    %2938 = vmatprep.subr.bf16.mxu0 0
    %2939 = vmatpush1.bf16.msra.mxu0 0
    %2940 = vmatprep.subr.bf16.mxu0 0
    %2941 = vmatpush1.bf16.msra.mxu0 0
    %2942 = vmatprep.subr.bf16.mxu0 0
    %2943 = vmatpush1.bf16.msra.mxu0 0
    %2944 = vmatprep.subr.bf16.mxu0 0
    %2945 = vmatpush1.bf16.msra.mxu0 0
    %2946 = vmatprep.mubr.bf16.mxu0 0
    %2947 = vmatmul.mubr.bf16.gmra.mrb[0].mxu0 %v2741
    %v2948 = vpop.f32.mrb[0].mxu0
    %v2949 = vadd.f32 0.0, %v2948
    %v2950 = vpop.f32.mrb[0].mxu0
    %v2951 = vadd.f32 0.0, %v2950
    %v2952 = vpop.f32.mrb[0].mxu0
    %v2953 = vpop.f32.mrb[0].mxu0
    %2954 = vdwg.mxu0
    %2955 = vmatprep.subr.bf16.mxu0 %v2771
    %2956 = vmatpush1.bf16.msra.mxu0 %v2768
    %2957 = vmatprep.subr.bf16.mxu0 0
    %2958 = vmatpush1.bf16.msra.mxu0 0
    %2959 = vmatprep.subr.bf16.mxu0 0
    %2960 = vmatpush1.bf16.msra.mxu0 0
    %2961 = vmatprep.subr.bf16.mxu0 0
    %2962 = vmatpush1.bf16.msra.mxu0 0
    %2963 = vmatprep.subr.bf16.mxu0 0
    %2964 = vmatpush1.bf16.msra.mxu0 0
    %2965 = vmatprep.subr.bf16.mxu0 0
    %2966 = vmatpush1.bf16.msra.mxu0 0
    %2967 = vmatprep.subr.bf16.mxu0 0
    %2968 = vmatpush1.bf16.msra.mxu0 0
    %2969 = vmatprep.subr.bf16.mxu0 0
    %2970 = vmatpush1.bf16.msra.mxu0 0
    %2971 = vmatprep.subr.bf16.mxu0 0
    %2972 = vmatpush1.bf16.msra.mxu0 0
    %2973 = vmatprep.subr.bf16.mxu0 0
    %2974 = vmatpush1.bf16.msra.mxu0 0
    %2975 = vmatprep.subr.bf16.mxu0 0
    %2976 = vmatpush1.bf16.msra.mxu0 0
    %2977 = vmatprep.subr.bf16.mxu0 0
    %2978 = vmatpush1.bf16.msra.mxu0 0
    %2979 = vmatprep.subr.bf16.mxu0 0
    %2980 = vmatpush1.bf16.msra.mxu0 0
    %2981 = vmatprep.subr.bf16.mxu0 0
    %2982 = vmatpush1.bf16.msra.mxu0 0
    %2983 = vmatprep.subr.bf16.mxu0 0
    %2984 = vmatpush1.bf16.msra.mxu0 0
    %2985 = vmatprep.subr.bf16.mxu0 0
    %2986 = vmatpush1.bf16.msra.mxu0 0
    %2987 = vmatprep.mubr.bf16.mxu0 0
    %2988 = vmatmul.mubr.bf16.gmra.mrb[0].mxu0 %v2741
    %v2989 = vpop.f32.mrb[0].mxu0
    %v2990 = vadd.f32 0.0, %v2989
    %v2991 = vpop.f32.mrb[0].mxu0
    %v2992 = vadd.f32 0.0, %v2991
    %v2993 = vpop.f32.mrb[0].mxu0
    %v2994 = vpop.f32.mrb[0].mxu0
    %2995 = vdwg.mxu0
    %2996 = vmatprep.subr.bf16.mxu0 %v2777
    %2997 = vmatpush1.bf16.msra.mxu0 %v2774
    %2998 = vmatprep.subr.bf16.mxu0 0
    %2999 = vmatpush1.bf16.msra.mxu0 0
    %3000 = vmatprep.subr.bf16.mxu0 0
    %3001 = vmatpush1.bf16.msra.mxu0 0
    %3002 = vmatprep.subr.bf16.mxu0 0
    %3003 = vmatpush1.bf16.msra.mxu0 0
    %3004 = vmatprep.subr.bf16.mxu0 0
    %3005 = vmatpush1.bf16.msra.mxu0 0
    %3006 = vmatprep.subr.bf16.mxu0 0
    %3007 = vmatpush1.bf16.msra.mxu0 0
    %3008 = vmatprep.subr.bf16.mxu0 0
    %3009 = vmatpush1.bf16.msra.mxu0 0
    %3010 = vmatprep.subr.bf16.mxu0 0
    %3011 = vmatpush1.bf16.msra.mxu0 0
    %3012 = vmatprep.subr.bf16.mxu0 0
    %3013 = vmatpush1.bf16.msra.mxu0 0
    %3014 = vmatprep.subr.bf16.mxu0 0
    %3015 = vmatpush1.bf16.msra.mxu0 0
    %3016 = vmatprep.subr.bf16.mxu0 0
    %3017 = vmatpush1.bf16.msra.mxu0 0
    %3018 = vmatprep.subr.bf16.mxu0 0
    %3019 = vmatpush1.bf16.msra.mxu0 0
    %3020 = vmatprep.subr.bf16.mxu0 0
    %3021 = vmatpush1.bf16.msra.mxu0 0
    %3022 = vmatprep.subr.bf16.mxu0 0
    %3023 = vmatpush1.bf16.msra.mxu0 0
    %3024 = vmatprep.subr.bf16.mxu0 0
    %3025 = vmatpush1.bf16.msra.mxu0 0
    %3026 = vmatprep.subr.bf16.mxu0 0
    %3027 = vmatpush1.bf16.msra.mxu0 0
    %3028 = vmatprep.mubr.bf16.mxu0 0
    %3029 = vmatmul.mubr.bf16.gmra.mrb[0].mxu0 %v2741
    %v3030 = vpop.f32.mrb[0].mxu0
    %v3031 = vadd.f32 0.0, %v3030
    %v3032 = vpop.f32.mrb[0].mxu0
    %v3033 = vadd.f32 0.0, %v3032
    %v3034 = vpop.f32.mrb[0].mxu0
    %v3035 = vpop.f32.mrb[0].mxu0
    %3036 = vdwg.mxu0
    %3037 = vmatprep.subr.bf16.mxu0 %v2783
    %3038 = vmatpush1.bf16.msra.mxu0 %v2780
    %3039 = vmatprep.subr.bf16.mxu0 0
    %3040 = vmatpush1.bf16.msra.mxu0 0
    %3041 = vmatprep.subr.bf16.mxu0 0
    %3042 = vmatpush1.bf16.msra.mxu0 0
    %3043 = vmatprep.subr.bf16.mxu0 0
    %3044 = vmatpush1.bf16.msra.mxu0 0
    %3045 = vmatprep.subr.bf16.mxu0 0
    %3046 = vmatpush1.bf16.msra.mxu0 0
    %3047 = vmatprep.subr.bf16.mxu0 0
    %3048 = vmatpush1.bf16.msra.mxu0 0
    %3049 = vmatprep.subr.bf16.mxu0 0
    %3050 = vmatpush1.bf16.msra.mxu0 0
    %3051 = vmatprep.subr.bf16.mxu0 0
    %3052 = vmatpush1.bf16.msra.mxu0 0
    %3053 = vmatprep.subr.bf16.mxu0 0
    %3054 = vmatpush1.bf16.msra.mxu0 0
    %3055 = vmatprep.subr.bf16.mxu0 0
    %3056 = vmatpush1.bf16.msra.mxu0 0
    %3057 = vmatprep.subr.bf16.mxu0 0
    %3058 = vmatpush1.bf16.msra.mxu0 0
    %3059 = vmatprep.subr.bf16.mxu0 0
    %3060 = vmatpush1.bf16.msra.mxu0 0
    %3061 = vmatprep.subr.bf16.mxu0 0
    %3062 = vmatpush1.bf16.msra.mxu0 0
    %3063 = vmatprep.subr.bf16.mxu0 0
    %3064 = vmatpush1.bf16.msra.mxu0 0
    %3065 = vmatprep.subr.bf16.mxu0 0
    %3066 = vmatpush1.bf16.msra.mxu0 0
    %3067 = vmatprep.subr.bf16.mxu0 0
    %3068 = vmatpush1.bf16.msra.mxu0 0
    %3069 = vmatprep.mubr.bf16.mxu0 0
    %3070 = vmatmul.mubr.bf16.gmra.mrb[0].mxu0 %v2741
    %v3071 = vpop.f32.mrb[0].mxu0
    %v3072 = vadd.f32 0.0, %v3071
    %v3073 = vpop.f32.mrb[0].mxu0
    %v3074 = vadd.f32 0.0, %v3073
    %v3075 = vpop.f32.mrb[0].mxu0
    %v3076 = vpop.f32.mrb[0].mxu0
    %3077 = vdwg.mxu0
    %3078 = vmatprep.subr.bf16.mxu0 %v2789
    %3079 = vmatpush1.bf16.msra.mxu0 %v2786
    %3080 = vmatprep.subr.bf16.mxu0 0
    %3081 = vmatpush1.bf16.msra.mxu0 0
    %3082 = vmatprep.subr.bf16.mxu0 0
    %3083 = vmatpush1.bf16.msra.mxu0 0
    %3084 = vmatprep.subr.bf16.mxu0 0
    %3085 = vmatpush1.bf16.msra.mxu0 0
    %3086 = vmatprep.subr.bf16.mxu0 0
    %3087 = vmatpush1.bf16.msra.mxu0 0
    %3088 = vmatprep.subr.bf16.mxu0 0
    %3089 = vmatpush1.bf16.msra.mxu0 0
    %3090 = vmatprep.subr.bf16.mxu0 0
    %3091 = vmatpush1.bf16.msra.mxu0 0
    %3092 = vmatprep.subr.bf16.mxu0 0
    %3093 = vmatpush1.bf16.msra.mxu0 0
    %3094 = vmatprep.subr.bf16.mxu0 0
    %3095 = vmatpush1.bf16.msra.mxu0 0
    %3096 = vmatprep.subr.bf16.mxu0 0
    %3097 = vmatpush1.bf16.msra.mxu0 0
    %3098 = vmatprep.subr.bf16.mxu0 0
    %3099 = vmatpush1.bf16.msra.mxu0 0
    %3100 = vmatprep.subr.bf16.mxu0 0
    %3101 = vmatpush1.bf16.msra.mxu0 0
    %3102 = vmatprep.subr.bf16.mxu0 0
    %3103 = vmatpush1.bf16.msra.mxu0 0
    %3104 = vmatprep.subr.bf16.mxu0 0
    %3105 = vmatpush1.bf16.msra.mxu0 0
    %3106 = vmatprep.subr.bf16.mxu0 0
    %3107 = vmatpush1.bf16.msra.mxu0 0
    %3108 = vmatprep.subr.bf16.mxu0 0
    %3109 = vmatpush1.bf16.msra.mxu0 0
    %3110 = vmatprep.mubr.bf16.mxu0 0
    %3111 = vmatmul.mubr.bf16.gmra.mrb[0].mxu0 %v2741
    %v3112 = vpop.f32.mrb[0].mxu0
    %v3113 = vadd.f32 0.0, %v3112
    %v3114 = vpop.f32.mrb[0].mxu0
    %v3115 = vadd.f32 0.0, %v3114
    %v3116 = vpop.f32.mrb[0].mxu0
    %v3117 = vpop.f32.mrb[0].mxu0
    %3118 = vdwg.mxu0
    %v3121 = vlaneseq
    %v3122 = vshrl.u32 %v3121, 7
    %v3123 = vsub.s32 0, %v3122
    %v3124 = vrot.slane %v155, %v3123
    %v3125 = vlaneseq
    %v3126 = vshrl.u32 %v3125, 7
    %v3127 = vsub.s32 1, %v3126
    %v3128 = vrot.slane %v155, %v3127
    %v3129 = vlaneseq
    %v3130 = vshrl.u32 %v3129, 7
    %v3131 = vsub.s32 2, %v3130
    %v3132 = vrot.slane %v155, %v3131
    %v3133 = vlaneseq
    %v3134 = vshrl.u32 %v3133, 7
    %v3135 = vsub.s32 3, %v3134
    %v3136 = vrot.slane %v155, %v3135
    %v3137 = vlaneseq
    %v3138 = vshrl.u32 %v3137, 7
    %v3139 = vsub.s32 4, %v3138
    %v3140 = vrot.slane %v155, %v3139
    %v3141 = vlaneseq
    %v3142 = vshrl.u32 %v3141, 7
    %v3143 = vsub.s32 5, %v3142
    %v3144 = vrot.slane %v155, %v3143
    %v3145 = vlaneseq
    %v3146 = vshrl.u32 %v3145, 7
    %v3147 = vsub.s32 6, %v3146
    %v3148 = vrot.slane %v155, %v3147
    %v3149 = vlaneseq
    %v3150 = vshrl.u32 %v3149, 7
    %v3151 = vsub.s32 7, %v3150
    %v3152 = vrot.slane %v155, %v3151
    %v3153 = vlaneseq
    %v3154 = vshrl.u32 %v3153, 7
    %v3155 = vsub.s32 0, %v3154
    %v3156 = vrot.slane %v159, %v3155
    %v3157 = vlaneseq
    %v3158 = vshrl.u32 %v3157, 7
    %v3159 = vsub.s32 1, %v3158
    %v3160 = vrot.slane %v159, %v3159
    %v3161 = vlaneseq
    %v3162 = vshrl.u32 %v3161, 7
    %v3163 = vsub.s32 2, %v3162
    %v3164 = vrot.slane %v159, %v3163
    %v3165 = vlaneseq
    %v3166 = vshrl.u32 %v3165, 7
    %v3167 = vsub.s32 3, %v3166
    %v3168 = vrot.slane %v159, %v3167
    %v3169 = vlaneseq
    %v3170 = vshrl.u32 %v3169, 7
    %v3171 = vsub.s32 4, %v3170
    %v3172 = vrot.slane %v159, %v3171
    %v3173 = vlaneseq
    %v3174 = vshrl.u32 %v3173, 7
    %v3175 = vsub.s32 5, %v3174
    %v3176 = vrot.slane %v159, %v3175
    %v3177 = vlaneseq
    %v3178 = vshrl.u32 %v3177, 7
    %v3179 = vsub.s32 6, %v3178
    %v3180 = vrot.slane %v159, %v3179
    %v3181 = vlaneseq
    %v3182 = vshrl.u32 %v3181, 7
    %v3183 = vsub.s32 7, %v3182
    %v3184 = vrot.slane %v159, %v3183
    %v3201 = vmul.f32 %v2826, %v3124
    %v3202 = vmul.f32 %v2828, %v3128
    %v3203 = vmul.f32 %v2867, %v3132
    %v3204 = vmul.f32 %v2869, %v3136
    %v3205 = vmul.f32 %v2908, %v3140
    %v3206 = vmul.f32 %v2910, %v3144
    %v3207 = vmul.f32 %v2949, %v3148
    %v3208 = vmul.f32 %v2951, %v3152
    %v3209 = vmul.f32 %v2990, %v3156
    %v3210 = vmul.f32 %v2992, %v3160
    %v3211 = vmul.f32 %v3031, %v3164
    %v3212 = vmul.f32 %v3033, %v3168
    %v3213 = vmul.f32 %v3072, %v3172
    %v3214 = vmul.f32 %v3074, %v3176
    %v3215 = vmul.f32 %v3113, %v3180
    %v3216 = vmul.f32 %v3115, %v3184
    %v3217 = vadd.f32 %v2674, %v3201
    %v3218 = vadd.f32 %v2675, %v3202
    %v3219 = vadd.f32 %v2676, %v3203
    %v3220 = vadd.f32 %v2677, %v3204
    %v3221 = vadd.f32 %v2678, %v3205
    %v3222 = vadd.f32 %v2679, %v3206
    %v3223 = vadd.f32 %v2680, %v3207
    %v3224 = vadd.f32 %v2681, %v3208
    %v3225 = vadd.f32 %v2682, %v3209
    %v3226 = vadd.f32 %v2683, %v3210
    %v3227 = vadd.f32 %v2684, %v3211
    %v3228 = vadd.f32 %v2685, %v3212
    %v3229 = vadd.f32 %v2686, %v3213
    %v3230 = vadd.f32 %v2687, %v3214
    %v3231 = vadd.f32 %v2688, %v3215
    %v3232 = vadd.f32 %v2689, %v3216
    %v3233 = vld [vmem:[#allocation3 + $0x4] sm:$0x33]
    %v3234 = vld [vmem:[#allocation3 + $0xc] sm:$0x33]
    %v3235 = vld [vmem:[#allocation3 + $0x14] sm:$0x33]
    %v3236 = vld [vmem:[#allocation3 + $0x1c] sm:$0x33]
    %v3237 = vld [vmem:[#allocation3 + $0x24] sm:$0x33]
    %v3238 = vld [vmem:[#allocation3 + $0x2c] sm:$0x33]
    %v3239 = vld [vmem:[#allocation3 + $0x34] sm:$0x33]
    %v3240 = vld [vmem:[#allocation3 + $0x3c] sm:$0x33]
    %v3241 = vld [vmem:[#allocation3 + $0x44] sm:$0x3]
    %s3242 = scalar_lea.vmem %s4, 10
    %v3243 = vld [vmem:[%s3242] sm:$0x3]
    %v3253 = vunpack.c.l.b16 %v3233
    %v3254 = vunpack.c.h.b16 %v3233
    %v3255 = vunpack.c.l.b16 %v3234
    %v3256 = vunpack.c.h.b16 %v3234
    %v3257 = vunpack.c.l.b16 %v3235
    %v3258 = vunpack.c.h.b16 %v3235
    %v3259 = vunpack.c.l.b16 %v3236
    %v3260 = vunpack.c.h.b16 %v3236
    %v3261 = vunpack.c.l.b16 %v3237
    %v3262 = vunpack.c.h.b16 %v3237
    %v3263 = vunpack.c.l.b16 %v3238
    %v3264 = vunpack.c.h.b16 %v3238
    %v3265 = vunpack.c.l.b16 %v3239
    %v3266 = vunpack.c.h.b16 %v3239
    %v3267 = vunpack.c.l.b16 %v3240
    %v3268 = vunpack.c.h.b16 %v3240
    %v3269 = vunpack.c.l.b16 %v3241
    %v3270 = vpack.c.b16 %v3253, %v3253
    %v3271 = vpack.c.b16 %v3254, %v3254
    %v3272 = vpack.c.b16 %v3255, %v3255
    %v3273 = vpack.c.b16 %v3256, %v3256
    %v3274 = vpack.c.b16 %v3257, %v3257
    %v3275 = vpack.c.b16 %v3258, %v3258
    %v3276 = vpack.c.b16 %v3259, %v3259
    %v3277 = vpack.c.b16 %v3260, %v3260
    %v3278 = vpack.c.b16 %v3261, %v3261
    %v3279 = vpack.c.b16 %v3262, %v3262
    %v3280 = vpack.c.b16 %v3263, %v3263
    %v3281 = vpack.c.b16 %v3264, %v3264
    %v3282 = vpack.c.b16 %v3265, %v3265
    %v3283 = vpack.c.b16 %v3266, %v3266
    %v3284 = vpack.c.b16 %v3267, %v3267
    %v3285 = vpack.c.b16 %v3268, %v3268
    %v3286 = vpack.c.b16 %v3269, %v3269
    %3287 = vrot.lane.b32.xlu0 %v3270, 127
    %v3288 = vpop.permute.xlu0 %3287
    %3289 = vrot.lane.b32.xlu0 %v3271, 127
    %v3290 = vpop.permute.xlu0 %3289
    %3291 = vrot.lane.b32.xlu0 %v3272, 127
    %v3292 = vpop.permute.xlu0 %3291
    %3293 = vrot.lane.b32.xlu0 %v3273, 127
    %v3294 = vpop.permute.xlu0 %3293
    %3295 = vrot.lane.b32.xlu0 %v3274, 127
    %v3296 = vpop.permute.xlu0 %3295
    %3297 = vrot.lane.b32.xlu0 %v3275, 127
    %v3298 = vpop.permute.xlu0 %3297
    %3299 = vrot.lane.b32.xlu0 %v3276, 127
    %v3300 = vpop.permute.xlu0 %3299
    %3301 = vrot.lane.b32.xlu0 %v3277, 127
    %v3302 = vpop.permute.xlu0 %3301
    %3303 = vrot.lane.b32.xlu0 %v3278, 127
    %v3304 = vpop.permute.xlu0 %3303
    %3305 = vrot.lane.b32.xlu0 %v3279, 127
    %v3306 = vpop.permute.xlu0 %3305
    %3307 = vrot.lane.b32.xlu0 %v3280, 127
    %v3308 = vpop.permute.xlu0 %3307
    %3309 = vrot.lane.b32.xlu0 %v3281, 127
    %v3310 = vpop.permute.xlu0 %3309
    %3311 = vrot.lane.b32.xlu0 %v3282, 127
    %v3312 = vpop.permute.xlu0 %3311
    %3313 = vrot.lane.b32.xlu0 %v3283, 127
    %v3314 = vpop.permute.xlu0 %3313
    %3315 = vrot.lane.b32.xlu0 %v3284, 127
    %v3316 = vpop.permute.xlu0 %3315
    %3317 = vrot.lane.b32.xlu0 %v3285, 127
    %v3318 = vpop.permute.xlu0 %3317
    %3319 = vrot.lane.b32.xlu0 %v3286, 127
    %v3320 = vpop.permute.xlu0 %3319
    %vm3321 = vcmask 1039360
    %v3322 = vsel %vm3321, %v3288, %v3290
    %v3323 = vsel %vm3321, %v3290, %v3292
    %v3324 = vsel %vm3321, %v3292, %v3294
    %v3325 = vsel %vm3321, %v3294, %v3296
    %v3326 = vsel %vm3321, %v3296, %v3298
    %v3327 = vsel %vm3321, %v3298, %v3300
    %v3328 = vsel %vm3321, %v3300, %v3302
    %v3329 = vsel %vm3321, %v3302, %v3304
    %v3330 = vsel %vm3321, %v3304, %v3306
    %v3331 = vsel %vm3321, %v3306, %v3308
    %v3332 = vsel %vm3321, %v3308, %v3310
    %v3333 = vsel %vm3321, %v3310, %v3312
    %v3334 = vsel %vm3321, %v3312, %v3314
    %v3335 = vsel %vm3321, %v3314, %v3316
    %v3336 = vsel %vm3321, %v3316, %v3318
    %v3337 = vsel %vm3321, %v3318, %v3320
    %v3339 = vsel %vm557, %v3243, 0
    %v3342 = vsel %vm561, %v3322, 0
    %v3345 = vsel %vm561, %v3323, 0
    %v3348 = vsel %vm561, %v3324, 0
    %v3351 = vsel %vm561, %v3325, 0
    %v3354 = vsel %vm561, %v3326, 0
    %v3357 = vsel %vm561, %v3327, 0
    %v3360 = vsel %vm561, %v3328, 0
    %v3363 = vsel %vm561, %v3329, 0
    %v3366 = vsel %vm561, %v3330, 0
    %v3369 = vsel %vm561, %v3331, 0
    %v3372 = vsel %vm561, %v3332, 0
    %v3375 = vsel %vm561, %v3333, 0
    %v3378 = vsel %vm561, %v3334, 0
    %v3381 = vsel %vm561, %v3335, 0
    %v3384 = vsel %vm561, %v3336, 0
    %v3387 = vsel %vm561, %v3337, 0
    %3389 = vmatprep.subr.bf16.mxu0 %v3345
    %3390 = vmatpush1.bf16.msra.mxu0 %v3342
    %3391 = vmatprep.subr.bf16.mxu0 0
    %3392 = vmatpush1.bf16.msra.mxu0 0
    %3393 = vmatprep.subr.bf16.mxu0 0
    %3394 = vmatpush1.bf16.msra.mxu0 0
    %3395 = vmatprep.subr.bf16.mxu0 0
    %3396 = vmatpush1.bf16.msra.mxu0 0
    %3397 = vmatprep.subr.bf16.mxu0 0
    %3398 = vmatpush1.bf16.msra.mxu0 0
    %3399 = vmatprep.subr.bf16.mxu0 0
    %3400 = vmatpush1.bf16.msra.mxu0 0
    %3401 = vmatprep.subr.bf16.mxu0 0
    %3402 = vmatpush1.bf16.msra.mxu0 0
    %3403 = vmatprep.subr.bf16.mxu0 0
    %3404 = vmatpush1.bf16.msra.mxu0 0
    %3405 = vmatprep.subr.bf16.mxu0 0
    %3406 = vmatpush1.bf16.msra.mxu0 0
    %3407 = vmatprep.subr.bf16.mxu0 0
    %3408 = vmatpush1.bf16.msra.mxu0 0
    %3409 = vmatprep.subr.bf16.mxu0 0
    %3410 = vmatpush1.bf16.msra.mxu0 0
    %3411 = vmatprep.subr.bf16.mxu0 0
    %3412 = vmatpush1.bf16.msra.mxu0 0
    %3413 = vmatprep.subr.bf16.mxu0 0
    %3414 = vmatpush1.bf16.msra.mxu0 0
    %3415 = vmatprep.subr.bf16.mxu0 0
    %3416 = vmatpush1.bf16.msra.mxu0 0
    %3417 = vmatprep.subr.bf16.mxu0 0
    %3418 = vmatpush1.bf16.msra.mxu0 0
    %3419 = vmatprep.subr.bf16.mxu0 0
    %3420 = vmatpush1.bf16.msra.mxu0 0
    %3421 = vmatprep.mubr.bf16.mxu0 0
    %3422 = vmatmul.mubr.bf16.gmra.mrb[0].mxu0 %v3339
    %v3423 = vpop.f32.mrb[0].mxu0
    %v3424 = vadd.f32 0.0, %v3423
    %v3425 = vpop.f32.mrb[0].mxu0
    %v3426 = vadd.f32 0.0, %v3425
    %v3427 = vpop.f32.mrb[0].mxu0
    %v3428 = vpop.f32.mrb[0].mxu0
    %3429 = vdwg.mxu0
    %3430 = vmatprep.subr.bf16.mxu0 %v3351
    %3431 = vmatpush1.bf16.msra.mxu0 %v3348
    %3432 = vmatprep.subr.bf16.mxu0 0
    %3433 = vmatpush1.bf16.msra.mxu0 0
    %3434 = vmatprep.subr.bf16.mxu0 0
    %3435 = vmatpush1.bf16.msra.mxu0 0
    %3436 = vmatprep.subr.bf16.mxu0 0
    %3437 = vmatpush1.bf16.msra.mxu0 0
    %3438 = vmatprep.subr.bf16.mxu0 0
    %3439 = vmatpush1.bf16.msra.mxu0 0
    %3440 = vmatprep.subr.bf16.mxu0 0
    %3441 = vmatpush1.bf16.msra.mxu0 0
    %3442 = vmatprep.subr.bf16.mxu0 0
    %3443 = vmatpush1.bf16.msra.mxu0 0
    %3444 = vmatprep.subr.bf16.mxu0 0
    %3445 = vmatpush1.bf16.msra.mxu0 0
    %3446 = vmatprep.subr.bf16.mxu0 0
    %3447 = vmatpush1.bf16.msra.mxu0 0
    %3448 = vmatprep.subr.bf16.mxu0 0
    %3449 = vmatpush1.bf16.msra.mxu0 0
    %3450 = vmatprep.subr.bf16.mxu0 0
    %3451 = vmatpush1.bf16.msra.mxu0 0
    %3452 = vmatprep.subr.bf16.mxu0 0
    %3453 = vmatpush1.bf16.msra.mxu0 0
    %3454 = vmatprep.subr.bf16.mxu0 0
    %3455 = vmatpush1.bf16.msra.mxu0 0
    %3456 = vmatprep.subr.bf16.mxu0 0
    %3457 = vmatpush1.bf16.msra.mxu0 0
    %3458 = vmatprep.subr.bf16.mxu0 0
    %3459 = vmatpush1.bf16.msra.mxu0 0
    %3460 = vmatprep.subr.bf16.mxu0 0
    %3461 = vmatpush1.bf16.msra.mxu0 0
    %3462 = vmatprep.mubr.bf16.mxu0 0
    %3463 = vmatmul.mubr.bf16.gmra.mrb[0].mxu0 %v3339
    %v3464 = vpop.f32.mrb[0].mxu0
    %v3465 = vadd.f32 0.0, %v3464
    %v3466 = vpop.f32.mrb[0].mxu0
    %v3467 = vadd.f32 0.0, %v3466
    %v3468 = vpop.f32.mrb[0].mxu0
    %v3469 = vpop.f32.mrb[0].mxu0
    %3470 = vdwg.mxu0
    %3471 = vmatprep.subr.bf16.mxu0 %v3357
    %3472 = vmatpush1.bf16.msra.mxu0 %v3354
    %3473 = vmatprep.subr.bf16.mxu0 0
    %3474 = vmatpush1.bf16.msra.mxu0 0
    %3475 = vmatprep.subr.bf16.mxu0 0
    %3476 = vmatpush1.bf16.msra.mxu0 0
    %3477 = vmatprep.subr.bf16.mxu0 0
    %3478 = vmatpush1.bf16.msra.mxu0 0
    %3479 = vmatprep.subr.bf16.mxu0 0
    %3480 = vmatpush1.bf16.msra.mxu0 0
    %3481 = vmatprep.subr.bf16.mxu0 0
    %3482 = vmatpush1.bf16.msra.mxu0 0
    %3483 = vmatprep.subr.bf16.mxu0 0
    %3484 = vmatpush1.bf16.msra.mxu0 0
    %3485 = vmatprep.subr.bf16.mxu0 0
    %3486 = vmatpush1.bf16.msra.mxu0 0
    %3487 = vmatprep.subr.bf16.mxu0 0
    %3488 = vmatpush1.bf16.msra.mxu0 0
    %3489 = vmatprep.subr.bf16.mxu0 0
    %3490 = vmatpush1.bf16.msra.mxu0 0
    %3491 = vmatprep.subr.bf16.mxu0 0
    %3492 = vmatpush1.bf16.msra.mxu0 0
    %3493 = vmatprep.subr.bf16.mxu0 0
    %3494 = vmatpush1.bf16.msra.mxu0 0
    %3495 = vmatprep.subr.bf16.mxu0 0
    %3496 = vmatpush1.bf16.msra.mxu0 0
    %3497 = vmatprep.subr.bf16.mxu0 0
    %3498 = vmatpush1.bf16.msra.mxu0 0
    %3499 = vmatprep.subr.bf16.mxu0 0
    %3500 = vmatpush1.bf16.msra.mxu0 0
    %3501 = vmatprep.subr.bf16.mxu0 0
    %3502 = vmatpush1.bf16.msra.mxu0 0
    %3503 = vmatprep.mubr.bf16.mxu0 0
    %3504 = vmatmul.mubr.bf16.gmra.mrb[0].mxu0 %v3339
    %v3505 = vpop.f32.mrb[0].mxu0
    %v3506 = vadd.f32 0.0, %v3505
    %v3507 = vpop.f32.mrb[0].mxu0
    %v3508 = vadd.f32 0.0, %v3507
    %v3509 = vpop.f32.mrb[0].mxu0
    %v3510 = vpop.f32.mrb[0].mxu0
    %3511 = vdwg.mxu0
    %3512 = vmatprep.subr.bf16.mxu0 %v3363
    %3513 = vmatpush1.bf16.msra.mxu0 %v3360
    %3514 = vmatprep.subr.bf16.mxu0 0
    %3515 = vmatpush1.bf16.msra.mxu0 0
    %3516 = vmatprep.subr.bf16.mxu0 0
    %3517 = vmatpush1.bf16.msra.mxu0 0
    %3518 = vmatprep.subr.bf16.mxu0 0
    %3519 = vmatpush1.bf16.msra.mxu0 0
    %3520 = vmatprep.subr.bf16.mxu0 0
    %3521 = vmatpush1.bf16.msra.mxu0 0
    %3522 = vmatprep.subr.bf16.mxu0 0
    %3523 = vmatpush1.bf16.msra.mxu0 0
    %3524 = vmatprep.subr.bf16.mxu0 0
    %3525 = vmatpush1.bf16.msra.mxu0 0
    %3526 = vmatprep.subr.bf16.mxu0 0
    %3527 = vmatpush1.bf16.msra.mxu0 0
    %3528 = vmatprep.subr.bf16.mxu0 0
    %3529 = vmatpush1.bf16.msra.mxu0 0
    %3530 = vmatprep.subr.bf16.mxu0 0
    %3531 = vmatpush1.bf16.msra.mxu0 0
    %3532 = vmatprep.subr.bf16.mxu0 0
    %3533 = vmatpush1.bf16.msra.mxu0 0
    %3534 = vmatprep.subr.bf16.mxu0 0
    %3535 = vmatpush1.bf16.msra.mxu0 0
    %3536 = vmatprep.subr.bf16.mxu0 0
    %3537 = vmatpush1.bf16.msra.mxu0 0
    %3538 = vmatprep.subr.bf16.mxu0 0
    %3539 = vmatpush1.bf16.msra.mxu0 0
    %3540 = vmatprep.subr.bf16.mxu0 0
    %3541 = vmatpush1.bf16.msra.mxu0 0
    %3542 = vmatprep.subr.bf16.mxu0 0
    %3543 = vmatpush1.bf16.msra.mxu0 0
    %3544 = vmatprep.mubr.bf16.mxu0 0
    %3545 = vmatmul.mubr.bf16.gmra.mrb[0].mxu0 %v3339
    %v3546 = vpop.f32.mrb[0].mxu0
    %v3547 = vadd.f32 0.0, %v3546
    %v3548 = vpop.f32.mrb[0].mxu0
    %v3549 = vadd.f32 0.0, %v3548
    %v3550 = vpop.f32.mrb[0].mxu0
    %v3551 = vpop.f32.mrb[0].mxu0
    %3552 = vdwg.mxu0
    %3553 = vmatprep.subr.bf16.mxu0 %v3369
    %3554 = vmatpush1.bf16.msra.mxu0 %v3366
    %3555 = vmatprep.subr.bf16.mxu0 0
    %3556 = vmatpush1.bf16.msra.mxu0 0
    %3557 = vmatprep.subr.bf16.mxu0 0
    %3558 = vmatpush1.bf16.msra.mxu0 0
    %3559 = vmatprep.subr.bf16.mxu0 0
    %3560 = vmatpush1.bf16.msra.mxu0 0
    %3561 = vmatprep.subr.bf16.mxu0 0
    %3562 = vmatpush1.bf16.msra.mxu0 0
    %3563 = vmatprep.subr.bf16.mxu0 0
    %3564 = vmatpush1.bf16.msra.mxu0 0
    %3565 = vmatprep.subr.bf16.mxu0 0
    %3566 = vmatpush1.bf16.msra.mxu0 0
    %3567 = vmatprep.subr.bf16.mxu0 0
    %3568 = vmatpush1.bf16.msra.mxu0 0
    %3569 = vmatprep.subr.bf16.mxu0 0
    %3570 = vmatpush1.bf16.msra.mxu0 0
    %3571 = vmatprep.subr.bf16.mxu0 0
    %3572 = vmatpush1.bf16.msra.mxu0 0
    %3573 = vmatprep.subr.bf16.mxu0 0
    %3574 = vmatpush1.bf16.msra.mxu0 0
    %3575 = vmatprep.subr.bf16.mxu0 0
    %3576 = vmatpush1.bf16.msra.mxu0 0
    %3577 = vmatprep.subr.bf16.mxu0 0
    %3578 = vmatpush1.bf16.msra.mxu0 0
    %3579 = vmatprep.subr.bf16.mxu0 0
    %3580 = vmatpush1.bf16.msra.mxu0 0
    %3581 = vmatprep.subr.bf16.mxu0 0
    %3582 = vmatpush1.bf16.msra.mxu0 0
    %3583 = vmatprep.subr.bf16.mxu0 0
    %3584 = vmatpush1.bf16.msra.mxu0 0
    %3585 = vmatprep.mubr.bf16.mxu0 0
    %3586 = vmatmul.mubr.bf16.gmra.mrb[0].mxu0 %v3339
    %v3587 = vpop.f32.mrb[0].mxu0
    %v3588 = vadd.f32 0.0, %v3587
    %v3589 = vpop.f32.mrb[0].mxu0
    %v3590 = vadd.f32 0.0, %v3589
    %v3591 = vpop.f32.mrb[0].mxu0
    %v3592 = vpop.f32.mrb[0].mxu0
    %3593 = vdwg.mxu0
    %3594 = vmatprep.subr.bf16.mxu0 %v3375
    %3595 = vmatpush1.bf16.msra.mxu0 %v3372
    %3596 = vmatprep.subr.bf16.mxu0 0
    %3597 = vmatpush1.bf16.msra.mxu0 0
    %3598 = vmatprep.subr.bf16.mxu0 0
    %3599 = vmatpush1.bf16.msra.mxu0 0
    %3600 = vmatprep.subr.bf16.mxu0 0
    %3601 = vmatpush1.bf16.msra.mxu0 0
    %3602 = vmatprep.subr.bf16.mxu0 0
    %3603 = vmatpush1.bf16.msra.mxu0 0
    %3604 = vmatprep.subr.bf16.mxu0 0
    %3605 = vmatpush1.bf16.msra.mxu0 0
    %3606 = vmatprep.subr.bf16.mxu0 0
    %3607 = vmatpush1.bf16.msra.mxu0 0
    %3608 = vmatprep.subr.bf16.mxu0 0
    %3609 = vmatpush1.bf16.msra.mxu0 0
    %3610 = vmatprep.subr.bf16.mxu0 0
    %3611 = vmatpush1.bf16.msra.mxu0 0
    %3612 = vmatprep.subr.bf16.mxu0 0
    %3613 = vmatpush1.bf16.msra.mxu0 0
    %3614 = vmatprep.subr.bf16.mxu0 0
    %3615 = vmatpush1.bf16.msra.mxu0 0
    %3616 = vmatprep.subr.bf16.mxu0 0
    %3617 = vmatpush1.bf16.msra.mxu0 0
    %3618 = vmatprep.subr.bf16.mxu0 0
    %3619 = vmatpush1.bf16.msra.mxu0 0
    %3620 = vmatprep.subr.bf16.mxu0 0
    %3621 = vmatpush1.bf16.msra.mxu0 0
    %3622 = vmatprep.subr.bf16.mxu0 0
    %3623 = vmatpush1.bf16.msra.mxu0 0
    %3624 = vmatprep.subr.bf16.mxu0 0
    %3625 = vmatpush1.bf16.msra.mxu0 0
    %3626 = vmatprep.mubr.bf16.mxu0 0
    %3627 = vmatmul.mubr.bf16.gmra.mrb[0].mxu0 %v3339
    %v3628 = vpop.f32.mrb[0].mxu0
    %v3629 = vadd.f32 0.0, %v3628
    %v3630 = vpop.f32.mrb[0].mxu0
    %v3631 = vadd.f32 0.0, %v3630
    %v3632 = vpop.f32.mrb[0].mxu0
    %v3633 = vpop.f32.mrb[0].mxu0
    %3634 = vdwg.mxu0
    %3635 = vmatprep.subr.bf16.mxu0 %v3381
    %3636 = vmatpush1.bf16.msra.mxu0 %v3378
    %3637 = vmatprep.subr.bf16.mxu0 0
    %3638 = vmatpush1.bf16.msra.mxu0 0
    %3639 = vmatprep.subr.bf16.mxu0 0
    %3640 = vmatpush1.bf16.msra.mxu0 0
    %3641 = vmatprep.subr.bf16.mxu0 0
    %3642 = vmatpush1.bf16.msra.mxu0 0
    %3643 = vmatprep.subr.bf16.mxu0 0
    %3644 = vmatpush1.bf16.msra.mxu0 0
    %3645 = vmatprep.subr.bf16.mxu0 0
    %3646 = vmatpush1.bf16.msra.mxu0 0
    %3647 = vmatprep.subr.bf16.mxu0 0
    %3648 = vmatpush1.bf16.msra.mxu0 0
    %3649 = vmatprep.subr.bf16.mxu0 0
    %3650 = vmatpush1.bf16.msra.mxu0 0
    %3651 = vmatprep.subr.bf16.mxu0 0
    %3652 = vmatpush1.bf16.msra.mxu0 0
    %3653 = vmatprep.subr.bf16.mxu0 0
    %3654 = vmatpush1.bf16.msra.mxu0 0
    %3655 = vmatprep.subr.bf16.mxu0 0
    %3656 = vmatpush1.bf16.msra.mxu0 0
    %3657 = vmatprep.subr.bf16.mxu0 0
    %3658 = vmatpush1.bf16.msra.mxu0 0
    %3659 = vmatprep.subr.bf16.mxu0 0
    %3660 = vmatpush1.bf16.msra.mxu0 0
    %3661 = vmatprep.subr.bf16.mxu0 0
    %3662 = vmatpush1.bf16.msra.mxu0 0
    %3663 = vmatprep.subr.bf16.mxu0 0
    %3664 = vmatpush1.bf16.msra.mxu0 0
    %3665 = vmatprep.subr.bf16.mxu0 0
    %3666 = vmatpush1.bf16.msra.mxu0 0
    %3667 = vmatprep.mubr.bf16.mxu0 0
    %3668 = vmatmul.mubr.bf16.gmra.mrb[0].mxu0 %v3339
    %v3669 = vpop.f32.mrb[0].mxu0
    %v3670 = vadd.f32 0.0, %v3669
    %v3671 = vpop.f32.mrb[0].mxu0
    %v3672 = vadd.f32 0.0, %v3671
    %v3673 = vpop.f32.mrb[0].mxu0
    %v3674 = vpop.f32.mrb[0].mxu0
    %3675 = vdwg.mxu0
    %3676 = vmatprep.subr.bf16.mxu0 %v3387
    %3677 = vmatpush1.bf16.msra.mxu0 %v3384
    %3678 = vmatprep.subr.bf16.mxu0 0
    %3679 = vmatpush1.bf16.msra.mxu0 0
    %3680 = vmatprep.subr.bf16.mxu0 0
    %3681 = vmatpush1.bf16.msra.mxu0 0
    %3682 = vmatprep.subr.bf16.mxu0 0
    %3683 = vmatpush1.bf16.msra.mxu0 0
    %3684 = vmatprep.subr.bf16.mxu0 0
    %3685 = vmatpush1.bf16.msra.mxu0 0
    %3686 = vmatprep.subr.bf16.mxu0 0
    %3687 = vmatpush1.bf16.msra.mxu0 0
    %3688 = vmatprep.subr.bf16.mxu0 0
    %3689 = vmatpush1.bf16.msra.mxu0 0
    %3690 = vmatprep.subr.bf16.mxu0 0
    %3691 = vmatpush1.bf16.msra.mxu0 0
    %3692 = vmatprep.subr.bf16.mxu0 0
    %3693 = vmatpush1.bf16.msra.mxu0 0
    %3694 = vmatprep.subr.bf16.mxu0 0
    %3695 = vmatpush1.bf16.msra.mxu0 0
    %3696 = vmatprep.subr.bf16.mxu0 0
    %3697 = vmatpush1.bf16.msra.mxu0 0
    %3698 = vmatprep.subr.bf16.mxu0 0
    %3699 = vmatpush1.bf16.msra.mxu0 0
    %3700 = vmatprep.subr.bf16.mxu0 0
    %3701 = vmatpush1.bf16.msra.mxu0 0
    %3702 = vmatprep.subr.bf16.mxu0 0
    %3703 = vmatpush1.bf16.msra.mxu0 0
    %3704 = vmatprep.subr.bf16.mxu0 0
    %3705 = vmatpush1.bf16.msra.mxu0 0
    %3706 = vmatprep.subr.bf16.mxu0 0
    %3707 = vmatpush1.bf16.msra.mxu0 0
    %3708 = vmatprep.mubr.bf16.mxu0 0
    %3709 = vmatmul.mubr.bf16.gmra.mrb[0].mxu0 %v3339
    %v3710 = vpop.f32.mrb[0].mxu0
    %v3711 = vadd.f32 0.0, %v3710
    %v3712 = vpop.f32.mrb[0].mxu0
    %v3713 = vadd.f32 0.0, %v3712
    %v3714 = vpop.f32.mrb[0].mxu0
    %v3715 = vpop.f32.mrb[0].mxu0
    %3716 = vdwg.mxu0
    %v3719 = vlaneseq
    %v3720 = vshrl.u32 %v3719, 7
    %v3721 = vsub.s32 0, %v3720
    %v3722 = vrot.slane %v163, %v3721
    %v3723 = vlaneseq
    %v3724 = vshrl.u32 %v3723, 7
    %v3725 = vsub.s32 1, %v3724
    %v3726 = vrot.slane %v163, %v3725
    %v3727 = vlaneseq
    %v3728 = vshrl.u32 %v3727, 7
    %v3729 = vsub.s32 2, %v3728
    %v3730 = vrot.slane %v163, %v3729
    %v3731 = vlaneseq
    %v3732 = vshrl.u32 %v3731, 7
    %v3733 = vsub.s32 3, %v3732
    %v3734 = vrot.slane %v163, %v3733
    %v3735 = vlaneseq
    %v3736 = vshrl.u32 %v3735, 7
    %v3737 = vsub.s32 4, %v3736
    %v3738 = vrot.slane %v163, %v3737
    %v3739 = vlaneseq
    %v3740 = vshrl.u32 %v3739, 7
    %v3741 = vsub.s32 5, %v3740
    %v3742 = vrot.slane %v163, %v3741
    %v3743 = vlaneseq
    %v3744 = vshrl.u32 %v3743, 7
    %v3745 = vsub.s32 6, %v3744
    %v3746 = vrot.slane %v163, %v3745
    %v3747 = vlaneseq
    %v3748 = vshrl.u32 %v3747, 7
    %v3749 = vsub.s32 7, %v3748
    %v3750 = vrot.slane %v163, %v3749
    %v3751 = vlaneseq
    %v3752 = vshrl.u32 %v3751, 7
    %v3753 = vsub.s32 0, %v3752
    %v3754 = vrot.slane %v167, %v3753
    %v3755 = vlaneseq
    %v3756 = vshrl.u32 %v3755, 7
    %v3757 = vsub.s32 1, %v3756
    %v3758 = vrot.slane %v167, %v3757
    %v3759 = vlaneseq
    %v3760 = vshrl.u32 %v3759, 7
    %v3761 = vsub.s32 2, %v3760
    %v3762 = vrot.slane %v167, %v3761
    %v3763 = vlaneseq
    %v3764 = vshrl.u32 %v3763, 7
    %v3765 = vsub.s32 3, %v3764
    %v3766 = vrot.slane %v167, %v3765
    %v3767 = vlaneseq
    %v3768 = vshrl.u32 %v3767, 7
    %v3769 = vsub.s32 4, %v3768
    %v3770 = vrot.slane %v167, %v3769
    %v3771 = vlaneseq
    %v3772 = vshrl.u32 %v3771, 7
    %v3773 = vsub.s32 5, %v3772
    %v3774 = vrot.slane %v167, %v3773
    %v3775 = vlaneseq
    %v3776 = vshrl.u32 %v3775, 7
    %v3777 = vsub.s32 6, %v3776
    %v3778 = vrot.slane %v167, %v3777
    %v3779 = vlaneseq
    %v3780 = vshrl.u32 %v3779, 7
    %v3781 = vsub.s32 7, %v3780
    %v3782 = vrot.slane %v167, %v3781
    %v3799 = vmul.f32 %v3424, %v3722
    %v3800 = vmul.f32 %v3426, %v3726
    %v3801 = vmul.f32 %v3465, %v3730
    %v3802 = vmul.f32 %v3467, %v3734
    %v3803 = vmul.f32 %v3506, %v3738
    %v3804 = vmul.f32 %v3508, %v3742
    %v3805 = vmul.f32 %v3547, %v3746
    %v3806 = vmul.f32 %v3549, %v3750
    %v3807 = vmul.f32 %v3588, %v3754
    %v3808 = vmul.f32 %v3590, %v3758
    %v3809 = vmul.f32 %v3629, %v3762
    %v3810 = vmul.f32 %v3631, %v3766
    %v3811 = vmul.f32 %v3670, %v3770
    %v3812 = vmul.f32 %v3672, %v3774
    %v3813 = vmul.f32 %v3711, %v3778
    %v3814 = vmul.f32 %v3713, %v3782
    %v3815 = vadd.f32 %v3217, %v3799
    %v3816 = vadd.f32 %v3218, %v3800
    %v3817 = vadd.f32 %v3219, %v3801
    %v3818 = vadd.f32 %v3220, %v3802
    %v3819 = vadd.f32 %v3221, %v3803
    %v3820 = vadd.f32 %v3222, %v3804
    %v3821 = vadd.f32 %v3223, %v3805
    %v3822 = vadd.f32 %v3224, %v3806
    %v3823 = vadd.f32 %v3225, %v3807
    %v3824 = vadd.f32 %v3226, %v3808
    %v3825 = vadd.f32 %v3227, %v3809
    %v3826 = vadd.f32 %v3228, %v3810
    %v3827 = vadd.f32 %v3229, %v3811
    %v3828 = vadd.f32 %v3230, %v3812
    %v3829 = vadd.f32 %v3231, %v3813
    %v3830 = vadd.f32 %v3232, %v3814
    %s3831 = scalar_lea.vmem %s4, 12
    %v3832 = vld [vmem:[%s3831] sm:$0x3]
    %3833 = vrot.lane.b32.xlu0 %v3270, 97
    %v3834 = vpop.permute.xlu0 %3833
    %3835 = vrot.lane.b32.xlu0 %v3271, 97
    %v3836 = vpop.permute.xlu0 %3835
    %3837 = vrot.lane.b32.xlu0 %v3272, 97
    %v3838 = vpop.permute.xlu0 %3837
    %3839 = vrot.lane.b32.xlu0 %v3273, 97
    %v3840 = vpop.permute.xlu0 %3839
    %3841 = vrot.lane.b32.xlu0 %v3274, 97
    %v3842 = vpop.permute.xlu0 %3841
    %3843 = vrot.lane.b32.xlu0 %v3275, 97
    %v3844 = vpop.permute.xlu0 %3843
    %3845 = vrot.lane.b32.xlu0 %v3276, 97
    %v3846 = vpop.permute.xlu0 %3845
    %3847 = vrot.lane.b32.xlu0 %v3277, 97
    %v3848 = vpop.permute.xlu0 %3847
    %3849 = vrot.lane.b32.xlu0 %v3278, 97
    %v3850 = vpop.permute.xlu0 %3849
    %3851 = vrot.lane.b32.xlu0 %v3279, 97
    %v3852 = vpop.permute.xlu0 %3851
    %3853 = vrot.lane.b32.xlu0 %v3280, 97
    %v3854 = vpop.permute.xlu0 %3853
    %3855 = vrot.lane.b32.xlu0 %v3281, 97
    %v3856 = vpop.permute.xlu0 %3855
    %3857 = vrot.lane.b32.xlu0 %v3282, 97
    %v3858 = vpop.permute.xlu0 %3857
    %3859 = vrot.lane.b32.xlu0 %v3283, 97
    %v3860 = vpop.permute.xlu0 %3859
    %3861 = vrot.lane.b32.xlu0 %v3284, 97
    %v3862 = vpop.permute.xlu0 %3861
    %3863 = vrot.lane.b32.xlu0 %v3285, 97
    %v3864 = vpop.permute.xlu0 %3863
    %3865 = vrot.lane.b32.xlu0 %v3286, 97
    %v3866 = vpop.permute.xlu0 %3865
    %vm3867 = vcmask 793600
    %v3868 = vsel %vm3867, %v3834, %v3836
    %v3869 = vsel %vm3867, %v3836, %v3838
    %v3870 = vsel %vm3867, %v3838, %v3840
    %v3871 = vsel %vm3867, %v3840, %v3842
    %v3872 = vsel %vm3867, %v3842, %v3844
    %v3873 = vsel %vm3867, %v3844, %v3846
    %v3874 = vsel %vm3867, %v3846, %v3848
    %v3875 = vsel %vm3867, %v3848, %v3850
    %v3876 = vsel %vm3867, %v3850, %v3852
    %v3877 = vsel %vm3867, %v3852, %v3854
    %v3878 = vsel %vm3867, %v3854, %v3856
    %v3879 = vsel %vm3867, %v3856, %v3858
    %v3880 = vsel %vm3867, %v3858, %v3860
    %v3881 = vsel %vm3867, %v3860, %v3862
    %v3882 = vsel %vm3867, %v3862, %v3864
    %v3883 = vsel %vm3867, %v3864, %v3866
    %v3885 = vsel %vm557, %v3832, 0
    %v3888 = vsel %vm561, %v3868, 0
    %v3891 = vsel %vm561, %v3869, 0
    %v3894 = vsel %vm561, %v3870, 0
    %v3897 = vsel %vm561, %v3871, 0
    %v3900 = vsel %vm561, %v3872, 0
    %v3903 = vsel %vm561, %v3873, 0
    %v3906 = vsel %vm561, %v3874, 0
    %v3909 = vsel %vm561, %v3875, 0
    %v3912 = vsel %vm561, %v3876, 0
    %v3915 = vsel %vm561, %v3877, 0
    %v3918 = vsel %vm561, %v3878, 0
    %v3921 = vsel %vm561, %v3879, 0
    %v3924 = vsel %vm561, %v3880, 0
    %v3927 = vsel %vm561, %v3881, 0
    %v3930 = vsel %vm561, %v3882, 0
    %v3933 = vsel %vm561, %v3883, 0
    %3935 = vmatprep.subr.bf16.mxu0 %v3891
    %3936 = vmatpush1.bf16.msra.mxu0 %v3888
    %3937 = vmatprep.subr.bf16.mxu0 0
    %3938 = vmatpush1.bf16.msra.mxu0 0
    %3939 = vmatprep.subr.bf16.mxu0 0
    %3940 = vmatpush1.bf16.msra.mxu0 0
    %3941 = vmatprep.subr.bf16.mxu0 0
    %3942 = vmatpush1.bf16.msra.mxu0 0
    %3943 = vmatprep.subr.bf16.mxu0 0
    %3944 = vmatpush1.bf16.msra.mxu0 0
    %3945 = vmatprep.subr.bf16.mxu0 0
    %3946 = vmatpush1.bf16.msra.mxu0 0
    %3947 = vmatprep.subr.bf16.mxu0 0
    %3948 = vmatpush1.bf16.msra.mxu0 0
    %3949 = vmatprep.subr.bf16.mxu0 0
    %3950 = vmatpush1.bf16.msra.mxu0 0
    %3951 = vmatprep.subr.bf16.mxu0 0
    %3952 = vmatpush1.bf16.msra.mxu0 0
    %3953 = vmatprep.subr.bf16.mxu0 0
    %3954 = vmatpush1.bf16.msra.mxu0 0
    %3955 = vmatprep.subr.bf16.mxu0 0
    %3956 = vmatpush1.bf16.msra.mxu0 0
    %3957 = vmatprep.subr.bf16.mxu0 0
    %3958 = vmatpush1.bf16.msra.mxu0 0
    %3959 = vmatprep.subr.bf16.mxu0 0
    %3960 = vmatpush1.bf16.msra.mxu0 0
    %3961 = vmatprep.subr.bf16.mxu0 0
    %3962 = vmatpush1.bf16.msra.mxu0 0
    %3963 = vmatprep.subr.bf16.mxu0 0
    %3964 = vmatpush1.bf16.msra.mxu0 0
    %3965 = vmatprep.subr.bf16.mxu0 0
    %3966 = vmatpush1.bf16.msra.mxu0 0
    %3967 = vmatprep.mubr.bf16.mxu0 0
    %3968 = vmatmul.mubr.bf16.gmra.mrb[0].mxu0 %v3885
    %v3969 = vpop.f32.mrb[0].mxu0
    %v3970 = vadd.f32 0.0, %v3969
    %v3971 = vpop.f32.mrb[0].mxu0
    %v3972 = vadd.f32 0.0, %v3971
    %v3973 = vpop.f32.mrb[0].mxu0
    %v3974 = vpop.f32.mrb[0].mxu0
    %3975 = vdwg.mxu0
    %3976 = vmatprep.subr.bf16.mxu0 %v3897
    %3977 = vmatpush1.bf16.msra.mxu0 %v3894
    %3978 = vmatprep.subr.bf16.mxu0 0
    %3979 = vmatpush1.bf16.msra.mxu0 0
    %3980 = vmatprep.subr.bf16.mxu0 0
    %3981 = vmatpush1.bf16.msra.mxu0 0
    %3982 = vmatprep.subr.bf16.mxu0 0
    %3983 = vmatpush1.bf16.msra.mxu0 0
    %3984 = vmatprep.subr.bf16.mxu0 0
    %3985 = vmatpush1.bf16.msra.mxu0 0
    %3986 = vmatprep.subr.bf16.mxu0 0
    %3987 = vmatpush1.bf16.msra.mxu0 0
    %3988 = vmatprep.subr.bf16.mxu0 0
    %3989 = vmatpush1.bf16.msra.mxu0 0
    %3990 = vmatprep.subr.bf16.mxu0 0
    %3991 = vmatpush1.bf16.msra.mxu0 0
    %3992 = vmatprep.subr.bf16.mxu0 0
    %3993 = vmatpush1.bf16.msra.mxu0 0
    %3994 = vmatprep.subr.bf16.mxu0 0
    %3995 = vmatpush1.bf16.msra.mxu0 0
    %3996 = vmatprep.subr.bf16.mxu0 0
    %3997 = vmatpush1.bf16.msra.mxu0 0
    %3998 = vmatprep.subr.bf16.mxu0 0
    %3999 = vmatpush1.bf16.msra.mxu0 0
    %4000 = vmatprep.subr.bf16.mxu0 0
    %4001 = vmatpush1.bf16.msra.mxu0 0
    %4002 = vmatprep.subr.bf16.mxu0 0
    %4003 = vmatpush1.bf16.msra.mxu0 0
    %4004 = vmatprep.subr.bf16.mxu0 0
    %4005 = vmatpush1.bf16.msra.mxu0 0
    %4006 = vmatprep.subr.bf16.mxu0 0
    %4007 = vmatpush1.bf16.msra.mxu0 0
    %4008 = vmatprep.mubr.bf16.mxu0 0
    %4009 = vmatmul.mubr.bf16.gmra.mrb[0].mxu0 %v3885
    %v4010 = vpop.f32.mrb[0].mxu0
    %v4011 = vadd.f32 0.0, %v4010
    %v4012 = vpop.f32.mrb[0].mxu0
    %v4013 = vadd.f32 0.0, %v4012
    %v4014 = vpop.f32.mrb[0].mxu0
    %v4015 = vpop.f32.mrb[0].mxu0
    %4016 = vdwg.mxu0
    %4017 = vmatprep.subr.bf16.mxu0 %v3903
    %4018 = vmatpush1.bf16.msra.mxu0 %v3900
    %4019 = vmatprep.subr.bf16.mxu0 0
    %4020 = vmatpush1.bf16.msra.mxu0 0
    %4021 = vmatprep.subr.bf16.mxu0 0
    %4022 = vmatpush1.bf16.msra.mxu0 0
    %4023 = vmatprep.subr.bf16.mxu0 0
    %4024 = vmatpush1.bf16.msra.mxu0 0
    %4025 = vmatprep.subr.bf16.mxu0 0
    %4026 = vmatpush1.bf16.msra.mxu0 0
    %4027 = vmatprep.subr.bf16.mxu0 0
    %4028 = vmatpush1.bf16.msra.mxu0 0
    %4029 = vmatprep.subr.bf16.mxu0 0
    %4030 = vmatpush1.bf16.msra.mxu0 0
    %4031 = vmatprep.subr.bf16.mxu0 0
    %4032 = vmatpush1.bf16.msra.mxu0 0
    %4033 = vmatprep.subr.bf16.mxu0 0
    %4034 = vmatpush1.bf16.msra.mxu0 0
    %4035 = vmatprep.subr.bf16.mxu0 0
    %4036 = vmatpush1.bf16.msra.mxu0 0
    %4037 = vmatprep.subr.bf16.mxu0 0
    %4038 = vmatpush1.bf16.msra.mxu0 0
    %4039 = vmatprep.subr.bf16.mxu0 0
    %4040 = vmatpush1.bf16.msra.mxu0 0
    %4041 = vmatprep.subr.bf16.mxu0 0
    %4042 = vmatpush1.bf16.msra.mxu0 0
    %4043 = vmatprep.subr.bf16.mxu0 0
    %4044 = vmatpush1.bf16.msra.mxu0 0
    %4045 = vmatprep.subr.bf16.mxu0 0
    %4046 = vmatpush1.bf16.msra.mxu0 0
    %4047 = vmatprep.subr.bf16.mxu0 0
    %4048 = vmatpush1.bf16.msra.mxu0 0
    %4049 = vmatprep.mubr.bf16.mxu0 0
    %4050 = vmatmul.mubr.bf16.gmra.mrb[0].mxu0 %v3885
    %v4051 = vpop.f32.mrb[0].mxu0
    %v4052 = vadd.f32 0.0, %v4051
    %v4053 = vpop.f32.mrb[0].mxu0
    %v4054 = vadd.f32 0.0, %v4053
    %v4055 = vpop.f32.mrb[0].mxu0
    %v4056 = vpop.f32.mrb[0].mxu0
    %4057 = vdwg.mxu0
    %4058 = vmatprep.subr.bf16.mxu0 %v3909
    %4059 = vmatpush1.bf16.msra.mxu0 %v3906
    %4060 = vmatprep.subr.bf16.mxu0 0
    %4061 = vmatpush1.bf16.msra.mxu0 0
    %4062 = vmatprep.subr.bf16.mxu0 0
    %4063 = vmatpush1.bf16.msra.mxu0 0
    %4064 = vmatprep.subr.bf16.mxu0 0
    %4065 = vmatpush1.bf16.msra.mxu0 0
    %4066 = vmatprep.subr.bf16.mxu0 0
    %4067 = vmatpush1.bf16.msra.mxu0 0
    %4068 = vmatprep.subr.bf16.mxu0 0
    %4069 = vmatpush1.bf16.msra.mxu0 0
    %4070 = vmatprep.subr.bf16.mxu0 0
    %4071 = vmatpush1.bf16.msra.mxu0 0
    %4072 = vmatprep.subr.bf16.mxu0 0
    %4073 = vmatpush1.bf16.msra.mxu0 0
    %4074 = vmatprep.subr.bf16.mxu0 0
    %4075 = vmatpush1.bf16.msra.mxu0 0
    %4076 = vmatprep.subr.bf16.mxu0 0
    %4077 = vmatpush1.bf16.msra.mxu0 0
    %4078 = vmatprep.subr.bf16.mxu0 0
    %4079 = vmatpush1.bf16.msra.mxu0 0
    %4080 = vmatprep.subr.bf16.mxu0 0
    %4081 = vmatpush1.bf16.msra.mxu0 0
    %4082 = vmatprep.subr.bf16.mxu0 0
    %4083 = vmatpush1.bf16.msra.mxu0 0
    %4084 = vmatprep.subr.bf16.mxu0 0
    %4085 = vmatpush1.bf16.msra.mxu0 0
    %4086 = vmatprep.subr.bf16.mxu0 0
    %4087 = vmatpush1.bf16.msra.mxu0 0
    %4088 = vmatprep.subr.bf16.mxu0 0
    %4089 = vmatpush1.bf16.msra.mxu0 0
    %4090 = vmatprep.mubr.bf16.mxu0 0
    %4091 = vmatmul.mubr.bf16.gmra.mrb[0].mxu0 %v3885
    %v4092 = vpop.f32.mrb[0].mxu0
    %v4093 = vadd.f32 0.0, %v4092
    %v4094 = vpop.f32.mrb[0].mxu0
    %v4095 = vadd.f32 0.0, %v4094
    %v4096 = vpop.f32.mrb[0].mxu0
    %v4097 = vpop.f32.mrb[0].mxu0
    %4098 = vdwg.mxu0
    %4099 = vmatprep.subr.bf16.mxu0 %v3915
    %4100 = vmatpush1.bf16.msra.mxu0 %v3912
    %4101 = vmatprep.subr.bf16.mxu0 0
    %4102 = vmatpush1.bf16.msra.mxu0 0
    %4103 = vmatprep.subr.bf16.mxu0 0
    %4104 = vmatpush1.bf16.msra.mxu0 0
    %4105 = vmatprep.subr.bf16.mxu0 0
    %4106 = vmatpush1.bf16.msra.mxu0 0
    %4107 = vmatprep.subr.bf16.mxu0 0
    %4108 = vmatpush1.bf16.msra.mxu0 0
    %4109 = vmatprep.subr.bf16.mxu0 0
    %4110 = vmatpush1.bf16.msra.mxu0 0
    %4111 = vmatprep.subr.bf16.mxu0 0
    %4112 = vmatpush1.bf16.msra.mxu0 0
    %4113 = vmatprep.subr.bf16.mxu0 0
    %4114 = vmatpush1.bf16.msra.mxu0 0
    %4115 = vmatprep.subr.bf16.mxu0 0
    %4116 = vmatpush1.bf16.msra.mxu0 0
    %4117 = vmatprep.subr.bf16.mxu0 0
    %4118 = vmatpush1.bf16.msra.mxu0 0
    %4119 = vmatprep.subr.bf16.mxu0 0
    %4120 = vmatpush1.bf16.msra.mxu0 0
    %4121 = vmatprep.subr.bf16.mxu0 0
    %4122 = vmatpush1.bf16.msra.mxu0 0
    %4123 = vmatprep.subr.bf16.mxu0 0
    %4124 = vmatpush1.bf16.msra.mxu0 0
    %4125 = vmatprep.subr.bf16.mxu0 0
    %4126 = vmatpush1.bf16.msra.mxu0 0
    %4127 = vmatprep.subr.bf16.mxu0 0
    %4128 = vmatpush1.bf16.msra.mxu0 0
    %4129 = vmatprep.subr.bf16.mxu0 0
    %4130 = vmatpush1.bf16.msra.mxu0 0
    %4131 = vmatprep.mubr.bf16.mxu0 0
    %4132 = vmatmul.mubr.bf16.gmra.mrb[0].mxu0 %v3885
    %v4133 = vpop.f32.mrb[0].mxu0
    %v4134 = vadd.f32 0.0, %v4133
    %v4135 = vpop.f32.mrb[0].mxu0
    %v4136 = vadd.f32 0.0, %v4135
    %v4137 = vpop.f32.mrb[0].mxu0
    %v4138 = vpop.f32.mrb[0].mxu0
    %4139 = vdwg.mxu0
    %4140 = vmatprep.subr.bf16.mxu0 %v3921
    %4141 = vmatpush1.bf16.msra.mxu0 %v3918
    %4142 = vmatprep.subr.bf16.mxu0 0
    %4143 = vmatpush1.bf16.msra.mxu0 0
    %4144 = vmatprep.subr.bf16.mxu0 0
    %4145 = vmatpush1.bf16.msra.mxu0 0
    %4146 = vmatprep.subr.bf16.mxu0 0
    %4147 = vmatpush1.bf16.msra.mxu0 0
    %4148 = vmatprep.subr.bf16.mxu0 0
    %4149 = vmatpush1.bf16.msra.mxu0 0
    %4150 = vmatprep.subr.bf16.mxu0 0
    %4151 = vmatpush1.bf16.msra.mxu0 0
    %4152 = vmatprep.subr.bf16.mxu0 0
    %4153 = vmatpush1.bf16.msra.mxu0 0
    %4154 = vmatprep.subr.bf16.mxu0 0
    %4155 = vmatpush1.bf16.msra.mxu0 0
    %4156 = vmatprep.subr.bf16.mxu0 0
    %4157 = vmatpush1.bf16.msra.mxu0 0
    %4158 = vmatprep.subr.bf16.mxu0 0
    %4159 = vmatpush1.bf16.msra.mxu0 0
    %4160 = vmatprep.subr.bf16.mxu0 0
    %4161 = vmatpush1.bf16.msra.mxu0 0
    %4162 = vmatprep.subr.bf16.mxu0 0
    %4163 = vmatpush1.bf16.msra.mxu0 0
    %4164 = vmatprep.subr.bf16.mxu0 0
    %4165 = vmatpush1.bf16.msra.mxu0 0
    %4166 = vmatprep.subr.bf16.mxu0 0
    %4167 = vmatpush1.bf16.msra.mxu0 0
    %4168 = vmatprep.subr.bf16.mxu0 0
    %4169 = vmatpush1.bf16.msra.mxu0 0
    %4170 = vmatprep.subr.bf16.mxu0 0
    %4171 = vmatpush1.bf16.msra.mxu0 0
    %4172 = vmatprep.mubr.bf16.mxu0 0
    %4173 = vmatmul.mubr.bf16.gmra.mrb[0].mxu0 %v3885
    %v4174 = vpop.f32.mrb[0].mxu0
    %v4175 = vadd.f32 0.0, %v4174
    %v4176 = vpop.f32.mrb[0].mxu0
    %v4177 = vadd.f32 0.0, %v4176
    %v4178 = vpop.f32.mrb[0].mxu0
    %v4179 = vpop.f32.mrb[0].mxu0
    %4180 = vdwg.mxu0
    %4181 = vmatprep.subr.bf16.mxu0 %v3927
    %4182 = vmatpush1.bf16.msra.mxu0 %v3924
    %4183 = vmatprep.subr.bf16.mxu0 0
    %4184 = vmatpush1.bf16.msra.mxu0 0
    %4185 = vmatprep.subr.bf16.mxu0 0
    %4186 = vmatpush1.bf16.msra.mxu0 0
    %4187 = vmatprep.subr.bf16.mxu0 0
    %4188 = vmatpush1.bf16.msra.mxu0 0
    %4189 = vmatprep.subr.bf16.mxu0 0
    %4190 = vmatpush1.bf16.msra.mxu0 0
    %4191 = vmatprep.subr.bf16.mxu0 0
    %4192 = vmatpush1.bf16.msra.mxu0 0
    %4193 = vmatprep.subr.bf16.mxu0 0
    %4194 = vmatpush1.bf16.msra.mxu0 0
    %4195 = vmatprep.subr.bf16.mxu0 0
    %4196 = vmatpush1.bf16.msra.mxu0 0
    %4197 = vmatprep.subr.bf16.mxu0 0
    %4198 = vmatpush1.bf16.msra.mxu0 0
    %4199 = vmatprep.subr.bf16.mxu0 0
    %4200 = vmatpush1.bf16.msra.mxu0 0
    %4201 = vmatprep.subr.bf16.mxu0 0
    %4202 = vmatpush1.bf16.msra.mxu0 0
    %4203 = vmatprep.subr.bf16.mxu0 0
    %4204 = vmatpush1.bf16.msra.mxu0 0
    %4205 = vmatprep.subr.bf16.mxu0 0
    %4206 = vmatpush1.bf16.msra.mxu0 0
    %4207 = vmatprep.subr.bf16.mxu0 0
    %4208 = vmatpush1.bf16.msra.mxu0 0
    %4209 = vmatprep.subr.bf16.mxu0 0
    %4210 = vmatpush1.bf16.msra.mxu0 0
    %4211 = vmatprep.subr.bf16.mxu0 0
    %4212 = vmatpush1.bf16.msra.mxu0 0
    %4213 = vmatprep.mubr.bf16.mxu0 0
    %4214 = vmatmul.mubr.bf16.gmra.mrb[0].mxu0 %v3885
    %v4215 = vpop.f32.mrb[0].mxu0
    %v4216 = vadd.f32 0.0, %v4215
    %v4217 = vpop.f32.mrb[0].mxu0
    %v4218 = vadd.f32 0.0, %v4217
    %v4219 = vpop.f32.mrb[0].mxu0
    %v4220 = vpop.f32.mrb[0].mxu0
    %4221 = vdwg.mxu0
    %4222 = vmatprep.subr.bf16.mxu0 %v3933
    %4223 = vmatpush1.bf16.msra.mxu0 %v3930
    %4224 = vmatprep.subr.bf16.mxu0 0
    %4225 = vmatpush1.bf16.msra.mxu0 0
    %4226 = vmatprep.subr.bf16.mxu0 0
    %4227 = vmatpush1.bf16.msra.mxu0 0
    %4228 = vmatprep.subr.bf16.mxu0 0
    %4229 = vmatpush1.bf16.msra.mxu0 0
    %4230 = vmatprep.subr.bf16.mxu0 0
    %4231 = vmatpush1.bf16.msra.mxu0 0
    %4232 = vmatprep.subr.bf16.mxu0 0
    %4233 = vmatpush1.bf16.msra.mxu0 0
    %4234 = vmatprep.subr.bf16.mxu0 0
    %4235 = vmatpush1.bf16.msra.mxu0 0
    %4236 = vmatprep.subr.bf16.mxu0 0
    %4237 = vmatpush1.bf16.msra.mxu0 0
    %4238 = vmatprep.subr.bf16.mxu0 0
    %4239 = vmatpush1.bf16.msra.mxu0 0
    %4240 = vmatprep.subr.bf16.mxu0 0
    %4241 = vmatpush1.bf16.msra.mxu0 0
    %4242 = vmatprep.subr.bf16.mxu0 0
    %4243 = vmatpush1.bf16.msra.mxu0 0
    %4244 = vmatprep.subr.bf16.mxu0 0
    %4245 = vmatpush1.bf16.msra.mxu0 0
    %4246 = vmatprep.subr.bf16.mxu0 0
    %4247 = vmatpush1.bf16.msra.mxu0 0
    %4248 = vmatprep.subr.bf16.mxu0 0
    %4249 = vmatpush1.bf16.msra.mxu0 0
    %4250 = vmatprep.subr.bf16.mxu0 0
    %4251 = vmatpush1.bf16.msra.mxu0 0
    %4252 = vmatprep.subr.bf16.mxu0 0
    %4253 = vmatpush1.bf16.msra.mxu0 0
    %4254 = vmatprep.mubr.bf16.mxu0 0
    %4255 = vmatmul.mubr.bf16.gmra.mrb[0].mxu0 %v3885
    %v4256 = vpop.f32.mrb[0].mxu0
    %v4257 = vadd.f32 0.0, %v4256
    %v4258 = vpop.f32.mrb[0].mxu0
    %v4259 = vadd.f32 0.0, %v4258
    %v4260 = vpop.f32.mrb[0].mxu0
    %v4261 = vpop.f32.mrb[0].mxu0
    %4262 = vdwg.mxu0
    %v4265 = vlaneseq
    %v4266 = vshrl.u32 %v4265, 7
    %v4267 = vsub.s32 0, %v4266
    %v4268 = vrot.slane %v171, %v4267
    %v4269 = vlaneseq
    %v4270 = vshrl.u32 %v4269, 7
    %v4271 = vsub.s32 1, %v4270
    %v4272 = vrot.slane %v171, %v4271
    %v4273 = vlaneseq
    %v4274 = vshrl.u32 %v4273, 7
    %v4275 = vsub.s32 2, %v4274
    %v4276 = vrot.slane %v171, %v4275
    %v4277 = vlaneseq
    %v4278 = vshrl.u32 %v4277, 7
    %v4279 = vsub.s32 3, %v4278
    %v4280 = vrot.slane %v171, %v4279
    %v4281 = vlaneseq
    %v4282 = vshrl.u32 %v4281, 7
    %v4283 = vsub.s32 4, %v4282
    %v4284 = vrot.slane %v171, %v4283
    %v4285 = vlaneseq
    %v4286 = vshrl.u32 %v4285, 7
    %v4287 = vsub.s32 5, %v4286
    %v4288 = vrot.slane %v171, %v4287
    %v4289 = vlaneseq
    %v4290 = vshrl.u32 %v4289, 7
    %v4291 = vsub.s32 6, %v4290
    %v4292 = vrot.slane %v171, %v4291
    %v4293 = vlaneseq
    %v4294 = vshrl.u32 %v4293, 7
    %v4295 = vsub.s32 7, %v4294
    %v4296 = vrot.slane %v171, %v4295
    %v4297 = vlaneseq
    %v4298 = vshrl.u32 %v4297, 7
    %v4299 = vsub.s32 0, %v4298
    %v4300 = vrot.slane %v175, %v4299
    %v4301 = vlaneseq
    %v4302 = vshrl.u32 %v4301, 7
    %v4303 = vsub.s32 1, %v4302
    %v4304 = vrot.slane %v175, %v4303
    %v4305 = vlaneseq
    %v4306 = vshrl.u32 %v4305, 7
    %v4307 = vsub.s32 2, %v4306
    %v4308 = vrot.slane %v175, %v4307
    %v4309 = vlaneseq
    %v4310 = vshrl.u32 %v4309, 7
    %v4311 = vsub.s32 3, %v4310
    %v4312 = vrot.slane %v175, %v4311
    %v4313 = vlaneseq
    %v4314 = vshrl.u32 %v4313, 7
    %v4315 = vsub.s32 4, %v4314
    %v4316 = vrot.slane %v175, %v4315
    %v4317 = vlaneseq
    %v4318 = vshrl.u32 %v4317, 7
    %v4319 = vsub.s32 5, %v4318
    %v4320 = vrot.slane %v175, %v4319
    %v4321 = vlaneseq
    %v4322 = vshrl.u32 %v4321, 7
    %v4323 = vsub.s32 6, %v4322
    %v4324 = vrot.slane %v175, %v4323
    %v4325 = vlaneseq
    %v4326 = vshrl.u32 %v4325, 7
    %v4327 = vsub.s32 7, %v4326
    %v4328 = vrot.slane %v175, %v4327
    %v4345 = vmul.f32 %v3970, %v4268
    %v4346 = vmul.f32 %v3972, %v4272
    %v4347 = vmul.f32 %v4011, %v4276
    %v4348 = vmul.f32 %v4013, %v4280
    %v4349 = vmul.f32 %v4052, %v4284
    %v4350 = vmul.f32 %v4054, %v4288
    %v4351 = vmul.f32 %v4093, %v4292
    %v4352 = vmul.f32 %v4095, %v4296
    %v4353 = vmul.f32 %v4134, %v4300
    %v4354 = vmul.f32 %v4136, %v4304
    %v4355 = vmul.f32 %v4175, %v4308
    %v4356 = vmul.f32 %v4177, %v4312
    %v4357 = vmul.f32 %v4216, %v4316
    %v4358 = vmul.f32 %v4218, %v4320
    %v4359 = vmul.f32 %v4257, %v4324
    %v4360 = vmul.f32 %v4259, %v4328
    %v4361 = vadd.f32 %v3815, %v4345
    %v4362 = vadd.f32 %v3816, %v4346
    %v4363 = vadd.f32 %v3817, %v4347
    %v4364 = vadd.f32 %v3818, %v4348
    %v4365 = vadd.f32 %v3819, %v4349
    %v4366 = vadd.f32 %v3820, %v4350
    %v4367 = vadd.f32 %v3821, %v4351
    %v4368 = vadd.f32 %v3822, %v4352
    %v4369 = vadd.f32 %v3823, %v4353
    %v4370 = vadd.f32 %v3824, %v4354
    %v4371 = vadd.f32 %v3825, %v4355
    %v4372 = vadd.f32 %v3826, %v4356
    %v4373 = vadd.f32 %v3827, %v4357
    %v4374 = vadd.f32 %v3828, %v4358
    %v4375 = vadd.f32 %v3829, %v4359
    %v4376 = vadd.f32 %v3830, %v4360
    %s4377 = scalar_lea.vmem %s4, 14
    %v4378 = vld [vmem:[%s4377] sm:$0x3]
    %4379 = vrot.lane.b32.xlu0 %v3270, 96
    %v4380 = vpop.permute.xlu0 %4379
    %4381 = vrot.lane.b32.xlu0 %v3271, 96
    %v4382 = vpop.permute.xlu0 %4381
    %4383 = vrot.lane.b32.xlu0 %v3272, 96
    %v4384 = vpop.permute.xlu0 %4383
    %4385 = vrot.lane.b32.xlu0 %v3273, 96
    %v4386 = vpop.permute.xlu0 %4385
    %4387 = vrot.lane.b32.xlu0 %v3274, 96
    %v4388 = vpop.permute.xlu0 %4387
    %4389 = vrot.lane.b32.xlu0 %v3275, 96
    %v4390 = vpop.permute.xlu0 %4389
    %4391 = vrot.lane.b32.xlu0 %v3276, 96
    %v4392 = vpop.permute.xlu0 %4391
    %4393 = vrot.lane.b32.xlu0 %v3277, 96
    %v4394 = vpop.permute.xlu0 %4393
    %4395 = vrot.lane.b32.xlu0 %v3278, 96
    %v4396 = vpop.permute.xlu0 %4395
    %4397 = vrot.lane.b32.xlu0 %v3279, 96
    %v4398 = vpop.permute.xlu0 %4397
    %4399 = vrot.lane.b32.xlu0 %v3280, 96
    %v4400 = vpop.permute.xlu0 %4399
    %4401 = vrot.lane.b32.xlu0 %v3281, 96
    %v4402 = vpop.permute.xlu0 %4401
    %4403 = vrot.lane.b32.xlu0 %v3282, 96
    %v4404 = vpop.permute.xlu0 %4403
    %4405 = vrot.lane.b32.xlu0 %v3283, 96
    %v4406 = vpop.permute.xlu0 %4405
    %4407 = vrot.lane.b32.xlu0 %v3284, 96
    %v4408 = vpop.permute.xlu0 %4407
    %4409 = vrot.lane.b32.xlu0 %v3285, 96
    %v4410 = vpop.permute.xlu0 %4409
    %4411 = vrot.lane.b32.xlu0 %v3286, 96
    %v4412 = vpop.permute.xlu0 %4411
    %vm4413 = vcmask 785408
    %v4414 = vsel %vm4413, %v4380, %v4382
    %v4415 = vsel %vm4413, %v4382, %v4384
    %v4416 = vsel %vm4413, %v4384, %v4386
    %v4417 = vsel %vm4413, %v4386, %v4388
    %v4418 = vsel %vm4413, %v4388, %v4390
    %v4419 = vsel %vm4413, %v4390, %v4392
    %v4420 = vsel %vm4413, %v4392, %v4394
    %v4421 = vsel %vm4413, %v4394, %v4396
    %v4422 = vsel %vm4413, %v4396, %v4398
    %v4423 = vsel %vm4413, %v4398, %v4400
    %v4424 = vsel %vm4413, %v4400, %v4402
    %v4425 = vsel %vm4413, %v4402, %v4404
    %v4426 = vsel %vm4413, %v4404, %v4406
    %v4427 = vsel %vm4413, %v4406, %v4408
    %v4428 = vsel %vm4413, %v4408, %v4410
    %v4429 = vsel %vm4413, %v4410, %v4412
    %v4431 = vsel %vm557, %v4378, 0
    %v4434 = vsel %vm561, %v4414, 0
    %v4437 = vsel %vm561, %v4415, 0
    %v4440 = vsel %vm561, %v4416, 0
    %v4443 = vsel %vm561, %v4417, 0
    %v4446 = vsel %vm561, %v4418, 0
    %v4449 = vsel %vm561, %v4419, 0
    %v4452 = vsel %vm561, %v4420, 0
    %v4455 = vsel %vm561, %v4421, 0
    %v4458 = vsel %vm561, %v4422, 0
    %v4461 = vsel %vm561, %v4423, 0
    %v4464 = vsel %vm561, %v4424, 0
    %v4467 = vsel %vm561, %v4425, 0
    %v4470 = vsel %vm561, %v4426, 0
    %v4473 = vsel %vm561, %v4427, 0
    %v4476 = vsel %vm561, %v4428, 0
    %v4479 = vsel %vm561, %v4429, 0
    %4481 = vmatprep.subr.bf16.mxu0 %v4437
    %4482 = vmatpush1.bf16.msra.mxu0 %v4434
    %4483 = vmatprep.subr.bf16.mxu0 0
    %4484 = vmatpush1.bf16.msra.mxu0 0
    %4485 = vmatprep.subr.bf16.mxu0 0
    %4486 = vmatpush1.bf16.msra.mxu0 0
    %4487 = vmatprep.subr.bf16.mxu0 0
    %4488 = vmatpush1.bf16.msra.mxu0 0
    %4489 = vmatprep.subr.bf16.mxu0 0
    %4490 = vmatpush1.bf16.msra.mxu0 0
    %4491 = vmatprep.subr.bf16.mxu0 0
    %4492 = vmatpush1.bf16.msra.mxu0 0
    %4493 = vmatprep.subr.bf16.mxu0 0
    %4494 = vmatpush1.bf16.msra.mxu0 0
    %4495 = vmatprep.subr.bf16.mxu0 0
    %4496 = vmatpush1.bf16.msra.mxu0 0
    %4497 = vmatprep.subr.bf16.mxu0 0
    %4498 = vmatpush1.bf16.msra.mxu0 0
    %4499 = vmatprep.subr.bf16.mxu0 0
    %4500 = vmatpush1.bf16.msra.mxu0 0
    %4501 = vmatprep.subr.bf16.mxu0 0
    %4502 = vmatpush1.bf16.msra.mxu0 0
    %4503 = vmatprep.subr.bf16.mxu0 0
    %4504 = vmatpush1.bf16.msra.mxu0 0
    %4505 = vmatprep.subr.bf16.mxu0 0
    %4506 = vmatpush1.bf16.msra.mxu0 0
    %4507 = vmatprep.subr.bf16.mxu0 0
    %4508 = vmatpush1.bf16.msra.mxu0 0
    %4509 = vmatprep.subr.bf16.mxu0 0
    %4510 = vmatpush1.bf16.msra.mxu0 0
    %4511 = vmatprep.subr.bf16.mxu0 0
    %4512 = vmatpush1.bf16.msra.mxu0 0
    %4513 = vmatprep.mubr.bf16.mxu0 0
    %4514 = vmatmul.mubr.bf16.gmra.mrb[0].mxu0 %v4431
    %v4515 = vpop.f32.mrb[0].mxu0
    %v4516 = vadd.f32 0.0, %v4515
    %v4517 = vpop.f32.mrb[0].mxu0
    %v4518 = vadd.f32 0.0, %v4517
    %v4519 = vpop.f32.mrb[0].mxu0
    %v4520 = vpop.f32.mrb[0].mxu0
    %4521 = vdwg.mxu0
    %4522 = vmatprep.subr.bf16.mxu0 %v4443
    %4523 = vmatpush1.bf16.msra.mxu0 %v4440
    %4524 = vmatprep.subr.bf16.mxu0 0
    %4525 = vmatpush1.bf16.msra.mxu0 0
    %4526 = vmatprep.subr.bf16.mxu0 0
    %4527 = vmatpush1.bf16.msra.mxu0 0
    %4528 = vmatprep.subr.bf16.mxu0 0
    %4529 = vmatpush1.bf16.msra.mxu0 0
    %4530 = vmatprep.subr.bf16.mxu0 0
    %4531 = vmatpush1.bf16.msra.mxu0 0
    %4532 = vmatprep.subr.bf16.mxu0 0
    %4533 = vmatpush1.bf16.msra.mxu0 0
    %4534 = vmatprep.subr.bf16.mxu0 0
    %4535 = vmatpush1.bf16.msra.mxu0 0
    %4536 = vmatprep.subr.bf16.mxu0 0
    %4537 = vmatpush1.bf16.msra.mxu0 0
    %4538 = vmatprep.subr.bf16.mxu0 0
    %4539 = vmatpush1.bf16.msra.mxu0 0
    %4540 = vmatprep.subr.bf16.mxu0 0
    %4541 = vmatpush1.bf16.msra.mxu0 0
    %4542 = vmatprep.subr.bf16.mxu0 0
    %4543 = vmatpush1.bf16.msra.mxu0 0
    %4544 = vmatprep.subr.bf16.mxu0 0
    %4545 = vmatpush1.bf16.msra.mxu0 0
    %4546 = vmatprep.subr.bf16.mxu0 0
    %4547 = vmatpush1.bf16.msra.mxu0 0
    %4548 = vmatprep.subr.bf16.mxu0 0
    %4549 = vmatpush1.bf16.msra.mxu0 0
    %4550 = vmatprep.subr.bf16.mxu0 0
    %4551 = vmatpush1.bf16.msra.mxu0 0
    %4552 = vmatprep.subr.bf16.mxu0 0
    %4553 = vmatpush1.bf16.msra.mxu0 0
    %4554 = vmatprep.mubr.bf16.mxu0 0
    %4555 = vmatmul.mubr.bf16.gmra.mrb[0].mxu0 %v4431
    %v4556 = vpop.f32.mrb[0].mxu0
    %v4557 = vadd.f32 0.0, %v4556
    %v4558 = vpop.f32.mrb[0].mxu0
    %v4559 = vadd.f32 0.0, %v4558
    %v4560 = vpop.f32.mrb[0].mxu0
    %v4561 = vpop.f32.mrb[0].mxu0
    %4562 = vdwg.mxu0
    %4563 = vmatprep.subr.bf16.mxu0 %v4449
    %4564 = vmatpush1.bf16.msra.mxu0 %v4446
    %4565 = vmatprep.subr.bf16.mxu0 0
    %4566 = vmatpush1.bf16.msra.mxu0 0
    %4567 = vmatprep.subr.bf16.mxu0 0
    %4568 = vmatpush1.bf16.msra.mxu0 0
    %4569 = vmatprep.subr.bf16.mxu0 0
    %4570 = vmatpush1.bf16.msra.mxu0 0
    %4571 = vmatprep.subr.bf16.mxu0 0
    %4572 = vmatpush1.bf16.msra.mxu0 0
    %4573 = vmatprep.subr.bf16.mxu0 0
    %4574 = vmatpush1.bf16.msra.mxu0 0
    %4575 = vmatprep.subr.bf16.mxu0 0
    %4576 = vmatpush1.bf16.msra.mxu0 0
    %4577 = vmatprep.subr.bf16.mxu0 0
    %4578 = vmatpush1.bf16.msra.mxu0 0
    %4579 = vmatprep.subr.bf16.mxu0 0
    %4580 = vmatpush1.bf16.msra.mxu0 0
    %4581 = vmatprep.subr.bf16.mxu0 0
    %4582 = vmatpush1.bf16.msra.mxu0 0
    %4583 = vmatprep.subr.bf16.mxu0 0
    %4584 = vmatpush1.bf16.msra.mxu0 0
    %4585 = vmatprep.subr.bf16.mxu0 0
    %4586 = vmatpush1.bf16.msra.mxu0 0
    %4587 = vmatprep.subr.bf16.mxu0 0
    %4588 = vmatpush1.bf16.msra.mxu0 0
    %4589 = vmatprep.subr.bf16.mxu0 0
    %4590 = vmatpush1.bf16.msra.mxu0 0
    %4591 = vmatprep.subr.bf16.mxu0 0
    %4592 = vmatpush1.bf16.msra.mxu0 0
    %4593 = vmatprep.subr.bf16.mxu0 0
    %4594 = vmatpush1.bf16.msra.mxu0 0
    %4595 = vmatprep.mubr.bf16.mxu0 0
    %4596 = vmatmul.mubr.bf16.gmra.mrb[0].mxu0 %v4431
    %v4597 = vpop.f32.mrb[0].mxu0
    %v4598 = vadd.f32 0.0, %v4597
    %v4599 = vpop.f32.mrb[0].mxu0
    %v4600 = vadd.f32 0.0, %v4599
    %v4601 = vpop.f32.mrb[0].mxu0
    %v4602 = vpop.f32.mrb[0].mxu0
    %4603 = vdwg.mxu0
    %4604 = vmatprep.subr.bf16.mxu0 %v4455
    %4605 = vmatpush1.bf16.msra.mxu0 %v4452
    %4606 = vmatprep.subr.bf16.mxu0 0
    %4607 = vmatpush1.bf16.msra.mxu0 0
    %4608 = vmatprep.subr.bf16.mxu0 0
    %4609 = vmatpush1.bf16.msra.mxu0 0
    %4610 = vmatprep.subr.bf16.mxu0 0
    %4611 = vmatpush1.bf16.msra.mxu0 0
    %4612 = vmatprep.subr.bf16.mxu0 0
    %4613 = vmatpush1.bf16.msra.mxu0 0
    %4614 = vmatprep.subr.bf16.mxu0 0
    %4615 = vmatpush1.bf16.msra.mxu0 0
    %4616 = vmatprep.subr.bf16.mxu0 0
    %4617 = vmatpush1.bf16.msra.mxu0 0
    %4618 = vmatprep.subr.bf16.mxu0 0
    %4619 = vmatpush1.bf16.msra.mxu0 0
    %4620 = vmatprep.subr.bf16.mxu0 0
    %4621 = vmatpush1.bf16.msra.mxu0 0
    %4622 = vmatprep.subr.bf16.mxu0 0
    %4623 = vmatpush1.bf16.msra.mxu0 0
    %4624 = vmatprep.subr.bf16.mxu0 0
    %4625 = vmatpush1.bf16.msra.mxu0 0
    %4626 = vmatprep.subr.bf16.mxu0 0
    %4627 = vmatpush1.bf16.msra.mxu0 0
    %4628 = vmatprep.subr.bf16.mxu0 0
    %4629 = vmatpush1.bf16.msra.mxu0 0
    %4630 = vmatprep.subr.bf16.mxu0 0
    %4631 = vmatpush1.bf16.msra.mxu0 0
    %4632 = vmatprep.subr.bf16.mxu0 0
    %4633 = vmatpush1.bf16.msra.mxu0 0
    %4634 = vmatprep.subr.bf16.mxu0 0
    %4635 = vmatpush1.bf16.msra.mxu0 0
    %4636 = vmatprep.mubr.bf16.mxu0 0
    %4637 = vmatmul.mubr.bf16.gmra.mrb[0].mxu0 %v4431
    %v4638 = vpop.f32.mrb[0].mxu0
    %v4639 = vadd.f32 0.0, %v4638
    %v4640 = vpop.f32.mrb[0].mxu0
    %v4641 = vadd.f32 0.0, %v4640
    %v4642 = vpop.f32.mrb[0].mxu0
    %v4643 = vpop.f32.mrb[0].mxu0
    %4644 = vdwg.mxu0
    %4645 = vmatprep.subr.bf16.mxu0 %v4461
    %4646 = vmatpush1.bf16.msra.mxu0 %v4458
    %4647 = vmatprep.subr.bf16.mxu0 0
    %4648 = vmatpush1.bf16.msra.mxu0 0
    %4649 = vmatprep.subr.bf16.mxu0 0
    %4650 = vmatpush1.bf16.msra.mxu0 0
    %4651 = vmatprep.subr.bf16.mxu0 0
    %4652 = vmatpush1.bf16.msra.mxu0 0
    %4653 = vmatprep.subr.bf16.mxu0 0
    %4654 = vmatpush1.bf16.msra.mxu0 0
    %4655 = vmatprep.subr.bf16.mxu0 0
    %4656 = vmatpush1.bf16.msra.mxu0 0
    %4657 = vmatprep.subr.bf16.mxu0 0
    %4658 = vmatpush1.bf16.msra.mxu0 0
    %4659 = vmatprep.subr.bf16.mxu0 0
    %4660 = vmatpush1.bf16.msra.mxu0 0
    %4661 = vmatprep.subr.bf16.mxu0 0
    %4662 = vmatpush1.bf16.msra.mxu0 0
    %4663 = vmatprep.subr.bf16.mxu0 0
    %4664 = vmatpush1.bf16.msra.mxu0 0
    %4665 = vmatprep.subr.bf16.mxu0 0
    %4666 = vmatpush1.bf16.msra.mxu0 0
    %4667 = vmatprep.subr.bf16.mxu0 0
    %4668 = vmatpush1.bf16.msra.mxu0 0
    %4669 = vmatprep.subr.bf16.mxu0 0
    %4670 = vmatpush1.bf16.msra.mxu0 0
    %4671 = vmatprep.subr.bf16.mxu0 0
    %4672 = vmatpush1.bf16.msra.mxu0 0
    %4673 = vmatprep.subr.bf16.mxu0 0
    %4674 = vmatpush1.bf16.msra.mxu0 0
    %4675 = vmatprep.subr.bf16.mxu0 0
    %4676 = vmatpush1.bf16.msra.mxu0 0
    %4677 = vmatprep.mubr.bf16.mxu0 0
    %4678 = vmatmul.mubr.bf16.gmra.mrb[0].mxu0 %v4431
    %v4679 = vpop.f32.mrb[0].mxu0
    %v4680 = vadd.f32 0.0, %v4679
    %v4681 = vpop.f32.mrb[0].mxu0
    %v4682 = vadd.f32 0.0, %v4681
    %v4683 = vpop.f32.mrb[0].mxu0
    %v4684 = vpop.f32.mrb[0].mxu0
    %4685 = vdwg.mxu0
    %4686 = vmatprep.subr.bf16.mxu0 %v4467
    %4687 = vmatpush1.bf16.msra.mxu0 %v4464
    %4688 = vmatprep.subr.bf16.mxu0 0
    %4689 = vmatpush1.bf16.msra.mxu0 0
    %4690 = vmatprep.subr.bf16.mxu0 0
    %4691 = vmatpush1.bf16.msra.mxu0 0
    %4692 = vmatprep.subr.bf16.mxu0 0
    %4693 = vmatpush1.bf16.msra.mxu0 0
    %4694 = vmatprep.subr.bf16.mxu0 0
    %4695 = vmatpush1.bf16.msra.mxu0 0
    %4696 = vmatprep.subr.bf16.mxu0 0
    %4697 = vmatpush1.bf16.msra.mxu0 0
    %4698 = vmatprep.subr.bf16.mxu0 0
    %4699 = vmatpush1.bf16.msra.mxu0 0
    %4700 = vmatprep.subr.bf16.mxu0 0
    %4701 = vmatpush1.bf16.msra.mxu0 0
    %4702 = vmatprep.subr.bf16.mxu0 0
    %4703 = vmatpush1.bf16.msra.mxu0 0
    %4704 = vmatprep.subr.bf16.mxu0 0
    %4705 = vmatpush1.bf16.msra.mxu0 0
    %4706 = vmatprep.subr.bf16.mxu0 0
    %4707 = vmatpush1.bf16.msra.mxu0 0
    %4708 = vmatprep.subr.bf16.mxu0 0
    %4709 = vmatpush1.bf16.msra.mxu0 0
    %4710 = vmatprep.subr.bf16.mxu0 0
    %4711 = vmatpush1.bf16.msra.mxu0 0
    %4712 = vmatprep.subr.bf16.mxu0 0
    %4713 = vmatpush1.bf16.msra.mxu0 0
    %4714 = vmatprep.subr.bf16.mxu0 0
    %4715 = vmatpush1.bf16.msra.mxu0 0
    %4716 = vmatprep.subr.bf16.mxu0 0
    %4717 = vmatpush1.bf16.msra.mxu0 0
    %4718 = vmatprep.mubr.bf16.mxu0 0
    %4719 = vmatmul.mubr.bf16.gmra.mrb[0].mxu0 %v4431
    %v4720 = vpop.f32.mrb[0].mxu0
    %v4721 = vadd.f32 0.0, %v4720
    %v4722 = vpop.f32.mrb[0].mxu0
    %v4723 = vadd.f32 0.0, %v4722
    %v4724 = vpop.f32.mrb[0].mxu0
    %v4725 = vpop.f32.mrb[0].mxu0
    %4726 = vdwg.mxu0
    %4727 = vmatprep.subr.bf16.mxu0 %v4473
    %4728 = vmatpush1.bf16.msra.mxu0 %v4470
    %4729 = vmatprep.subr.bf16.mxu0 0
    %4730 = vmatpush1.bf16.msra.mxu0 0
    %4731 = vmatprep.subr.bf16.mxu0 0
    %4732 = vmatpush1.bf16.msra.mxu0 0
    %4733 = vmatprep.subr.bf16.mxu0 0
    %4734 = vmatpush1.bf16.msra.mxu0 0
    %4735 = vmatprep.subr.bf16.mxu0 0
    %4736 = vmatpush1.bf16.msra.mxu0 0
    %4737 = vmatprep.subr.bf16.mxu0 0
    %4738 = vmatpush1.bf16.msra.mxu0 0
    %4739 = vmatprep.subr.bf16.mxu0 0
    %4740 = vmatpush1.bf16.msra.mxu0 0
    %4741 = vmatprep.subr.bf16.mxu0 0
    %4742 = vmatpush1.bf16.msra.mxu0 0
    %4743 = vmatprep.subr.bf16.mxu0 0
    %4744 = vmatpush1.bf16.msra.mxu0 0
    %4745 = vmatprep.subr.bf16.mxu0 0
    %4746 = vmatpush1.bf16.msra.mxu0 0
    %4747 = vmatprep.subr.bf16.mxu0 0
    %4748 = vmatpush1.bf16.msra.mxu0 0
    %4749 = vmatprep.subr.bf16.mxu0 0
    %4750 = vmatpush1.bf16.msra.mxu0 0
    %4751 = vmatprep.subr.bf16.mxu0 0
    %4752 = vmatpush1.bf16.msra.mxu0 0
    %4753 = vmatprep.subr.bf16.mxu0 0
    %4754 = vmatpush1.bf16.msra.mxu0 0
    %4755 = vmatprep.subr.bf16.mxu0 0
    %4756 = vmatpush1.bf16.msra.mxu0 0
    %4757 = vmatprep.subr.bf16.mxu0 0
    %4758 = vmatpush1.bf16.msra.mxu0 0
    %4759 = vmatprep.mubr.bf16.mxu0 0
    %4760 = vmatmul.mubr.bf16.gmra.mrb[0].mxu0 %v4431
    %v4761 = vpop.f32.mrb[0].mxu0
    %v4762 = vadd.f32 0.0, %v4761
    %v4763 = vpop.f32.mrb[0].mxu0
    %v4764 = vadd.f32 0.0, %v4763
    %v4765 = vpop.f32.mrb[0].mxu0
    %v4766 = vpop.f32.mrb[0].mxu0
    %4767 = vdwg.mxu0
    %4768 = vmatprep.subr.bf16.mxu0 %v4479
    %4769 = vmatpush1.bf16.msra.mxu0 %v4476
    %4770 = vmatprep.subr.bf16.mxu0 0
    %4771 = vmatpush1.bf16.msra.mxu0 0
    %4772 = vmatprep.subr.bf16.mxu0 0
    %4773 = vmatpush1.bf16.msra.mxu0 0
    %4774 = vmatprep.subr.bf16.mxu0 0
    %4775 = vmatpush1.bf16.msra.mxu0 0
    %4776 = vmatprep.subr.bf16.mxu0 0
    %4777 = vmatpush1.bf16.msra.mxu0 0
    %4778 = vmatprep.subr.bf16.mxu0 0
    %4779 = vmatpush1.bf16.msra.mxu0 0
    %4780 = vmatprep.subr.bf16.mxu0 0
    %4781 = vmatpush1.bf16.msra.mxu0 0
    %4782 = vmatprep.subr.bf16.mxu0 0
    %4783 = vmatpush1.bf16.msra.mxu0 0
    %4784 = vmatprep.subr.bf16.mxu0 0
    %4785 = vmatpush1.bf16.msra.mxu0 0
    %4786 = vmatprep.subr.bf16.mxu0 0
    %4787 = vmatpush1.bf16.msra.mxu0 0
    %4788 = vmatprep.subr.bf16.mxu0 0
    %4789 = vmatpush1.bf16.msra.mxu0 0
    %4790 = vmatprep.subr.bf16.mxu0 0
    %4791 = vmatpush1.bf16.msra.mxu0 0
    %4792 = vmatprep.subr.bf16.mxu0 0
    %4793 = vmatpush1.bf16.msra.mxu0 0
    %4794 = vmatprep.subr.bf16.mxu0 0
    %4795 = vmatpush1.bf16.msra.mxu0 0
    %4796 = vmatprep.subr.bf16.mxu0 0
    %4797 = vmatpush1.bf16.msra.mxu0 0
    %4798 = vmatprep.subr.bf16.mxu0 0
    %4799 = vmatpush1.bf16.msra.mxu0 0
    %4800 = vmatprep.mubr.bf16.mxu0 0
    %4801 = vmatmul.mubr.bf16.gmra.mrb[0].mxu0 %v4431
    %v4802 = vpop.f32.mrb[0].mxu0
    %v4803 = vadd.f32 0.0, %v4802
    %v4804 = vpop.f32.mrb[0].mxu0
    %v4805 = vadd.f32 0.0, %v4804
    %v4806 = vpop.f32.mrb[0].mxu0
    %v4807 = vpop.f32.mrb[0].mxu0
    %4808 = vdwg.mxu0
    %v4811 = vlaneseq
    %v4812 = vshrl.u32 %v4811, 7
    %v4813 = vsub.s32 0, %v4812
    %v4814 = vrot.slane %v179, %v4813
    %v4815 = vlaneseq
    %v4816 = vshrl.u32 %v4815, 7
    %v4817 = vsub.s32 1, %v4816
    %v4818 = vrot.slane %v179, %v4817
    %v4819 = vlaneseq
    %v4820 = vshrl.u32 %v4819, 7
    %v4821 = vsub.s32 2, %v4820
    %v4822 = vrot.slane %v179, %v4821
    %v4823 = vlaneseq
    %v4824 = vshrl.u32 %v4823, 7
    %v4825 = vsub.s32 3, %v4824
    %v4826 = vrot.slane %v179, %v4825
    %v4827 = vlaneseq
    %v4828 = vshrl.u32 %v4827, 7
    %v4829 = vsub.s32 4, %v4828
    %v4830 = vrot.slane %v179, %v4829
    %v4831 = vlaneseq
    %v4832 = vshrl.u32 %v4831, 7
    %v4833 = vsub.s32 5, %v4832
    %v4834 = vrot.slane %v179, %v4833
    %v4835 = vlaneseq
    %v4836 = vshrl.u32 %v4835, 7
    %v4837 = vsub.s32 6, %v4836
    %v4838 = vrot.slane %v179, %v4837
    %v4839 = vlaneseq
    %v4840 = vshrl.u32 %v4839, 7
    %v4841 = vsub.s32 7, %v4840
    %v4842 = vrot.slane %v179, %v4841
    %v4843 = vlaneseq
    %v4844 = vshrl.u32 %v4843, 7
    %v4845 = vsub.s32 0, %v4844
    %v4846 = vrot.slane %v183, %v4845
    %v4847 = vlaneseq
    %v4848 = vshrl.u32 %v4847, 7
    %v4849 = vsub.s32 1, %v4848
    %v4850 = vrot.slane %v183, %v4849
    %v4851 = vlaneseq
    %v4852 = vshrl.u32 %v4851, 7
    %v4853 = vsub.s32 2, %v4852
    %v4854 = vrot.slane %v183, %v4853
    %v4855 = vlaneseq
    %v4856 = vshrl.u32 %v4855, 7
    %v4857 = vsub.s32 3, %v4856
    %v4858 = vrot.slane %v183, %v4857
    %v4859 = vlaneseq
    %v4860 = vshrl.u32 %v4859, 7
    %v4861 = vsub.s32 4, %v4860
    %v4862 = vrot.slane %v183, %v4861
    %v4863 = vlaneseq
    %v4864 = vshrl.u32 %v4863, 7
    %v4865 = vsub.s32 5, %v4864
    %v4866 = vrot.slane %v183, %v4865
    %v4867 = vlaneseq
    %v4868 = vshrl.u32 %v4867, 7
    %v4869 = vsub.s32 6, %v4868
    %v4870 = vrot.slane %v183, %v4869
    %v4871 = vlaneseq
    %v4872 = vshrl.u32 %v4871, 7
    %v4873 = vsub.s32 7, %v4872
    %v4874 = vrot.slane %v183, %v4873
    %v4891 = vmul.f32 %v4516, %v4814
    %v4892 = vmul.f32 %v4518, %v4818
    %v4893 = vmul.f32 %v4557, %v4822
    %v4894 = vmul.f32 %v4559, %v4826
    %v4895 = vmul.f32 %v4598, %v4830
    %v4896 = vmul.f32 %v4600, %v4834
    %v4897 = vmul.f32 %v4639, %v4838
    %v4898 = vmul.f32 %v4641, %v4842
    %v4899 = vmul.f32 %v4680, %v4846
    %v4900 = vmul.f32 %v4682, %v4850
    %v4901 = vmul.f32 %v4721, %v4854
    %v4902 = vmul.f32 %v4723, %v4858
    %v4903 = vmul.f32 %v4762, %v4862
    %v4904 = vmul.f32 %v4764, %v4866
    %v4905 = vmul.f32 %v4803, %v4870
    %v4906 = vmul.f32 %v4805, %v4874
    %v4907 = vadd.f32 %v4361, %v4891
    %v4908 = vadd.f32 %v4362, %v4892
    %v4909 = vadd.f32 %v4363, %v4893
    %v4910 = vadd.f32 %v4364, %v4894
    %v4911 = vadd.f32 %v4365, %v4895
    %v4912 = vadd.f32 %v4366, %v4896
    %v4913 = vadd.f32 %v4367, %v4897
    %v4914 = vadd.f32 %v4368, %v4898
    %v4915 = vadd.f32 %v4369, %v4899
    %v4916 = vadd.f32 %v4370, %v4900
    %v4917 = vadd.f32 %v4371, %v4901
    %v4918 = vadd.f32 %v4372, %v4902
    %v4919 = vadd.f32 %v4373, %v4903
    %v4920 = vadd.f32 %v4374, %v4904
    %v4921 = vadd.f32 %v4375, %v4905
    %v4922 = vadd.f32 %v4376, %v4906
    %s4923 = scalar_lea.vmem %s4, 16
    %v4924 = vld [vmem:[%s4923] sm:$0x3]
    %4925 = vrot.lane.b32.xlu0 %v3270, 95
    %v4926 = vpop.permute.xlu0 %4925
    %4927 = vrot.lane.b32.xlu0 %v3271, 95
    %v4928 = vpop.permute.xlu0 %4927
    %4929 = vrot.lane.b32.xlu0 %v3272, 95
    %v4930 = vpop.permute.xlu0 %4929
    %4931 = vrot.lane.b32.xlu0 %v3273, 95
    %v4932 = vpop.permute.xlu0 %4931
    %4933 = vrot.lane.b32.xlu0 %v3274, 95
    %v4934 = vpop.permute.xlu0 %4933
    %4935 = vrot.lane.b32.xlu0 %v3275, 95
    %v4936 = vpop.permute.xlu0 %4935
    %4937 = vrot.lane.b32.xlu0 %v3276, 95
    %v4938 = vpop.permute.xlu0 %4937
    %4939 = vrot.lane.b32.xlu0 %v3277, 95
    %v4940 = vpop.permute.xlu0 %4939
    %4941 = vrot.lane.b32.xlu0 %v3278, 95
    %v4942 = vpop.permute.xlu0 %4941
    %4943 = vrot.lane.b32.xlu0 %v3279, 95
    %v4944 = vpop.permute.xlu0 %4943
    %4945 = vrot.lane.b32.xlu0 %v3280, 95
    %v4946 = vpop.permute.xlu0 %4945
    %4947 = vrot.lane.b32.xlu0 %v3281, 95
    %v4948 = vpop.permute.xlu0 %4947
    %4949 = vrot.lane.b32.xlu0 %v3282, 95
    %v4950 = vpop.permute.xlu0 %4949
    %4951 = vrot.lane.b32.xlu0 %v3283, 95
    %v4952 = vpop.permute.xlu0 %4951
    %4953 = vrot.lane.b32.xlu0 %v3284, 95
    %v4954 = vpop.permute.xlu0 %4953
    %4955 = vrot.lane.b32.xlu0 %v3285, 95
    %v4956 = vpop.permute.xlu0 %4955
    %4957 = vrot.lane.b32.xlu0 %v3286, 95
    %v4958 = vpop.permute.xlu0 %4957
    %vm4959 = vcmask 777216
    %v4960 = vsel %vm4959, %v4926, %v4928
    %v4961 = vsel %vm4959, %v4928, %v4930
    %v4962 = vsel %vm4959, %v4930, %v4932
    %v4963 = vsel %vm4959, %v4932, %v4934
    %v4964 = vsel %vm4959, %v4934, %v4936
    %v4965 = vsel %vm4959, %v4936, %v4938
    %v4966 = vsel %vm4959, %v4938, %v4940
    %v4967 = vsel %vm4959, %v4940, %v4942
    %v4968 = vsel %vm4959, %v4942, %v4944
    %v4969 = vsel %vm4959, %v4944, %v4946
    %v4970 = vsel %vm4959, %v4946, %v4948
    %v4971 = vsel %vm4959, %v4948, %v4950
    %v4972 = vsel %vm4959, %v4950, %v4952
    %v4973 = vsel %vm4959, %v4952, %v4954
    %v4974 = vsel %vm4959, %v4954, %v4956
    %v4975 = vsel %vm4959, %v4956, %v4958
    %v4977 = vsel %vm557, %v4924, 0
    %v4980 = vsel %vm561, %v4960, 0
    %v4983 = vsel %vm561, %v4961, 0
    %v4986 = vsel %vm561, %v4962, 0
    %v4989 = vsel %vm561, %v4963, 0
    %v4992 = vsel %vm561, %v4964, 0
    %v4995 = vsel %vm561, %v4965, 0
    %v4998 = vsel %vm561, %v4966, 0
    %v5001 = vsel %vm561, %v4967, 0
    %v5004 = vsel %vm561, %v4968, 0
    %v5007 = vsel %vm561, %v4969, 0
    %v5010 = vsel %vm561, %v4970, 0
    %v5013 = vsel %vm561, %v4971, 0
    %v5016 = vsel %vm561, %v4972, 0
    %v5019 = vsel %vm561, %v4973, 0
    %v5022 = vsel %vm561, %v4974, 0
    %v5025 = vsel %vm561, %v4975, 0
    %5027 = vmatprep.subr.bf16.mxu0 %v4983
    %5028 = vmatpush1.bf16.msra.mxu0 %v4980
    %5029 = vmatprep.subr.bf16.mxu0 0
    %5030 = vmatpush1.bf16.msra.mxu0 0
    %5031 = vmatprep.subr.bf16.mxu0 0
    %5032 = vmatpush1.bf16.msra.mxu0 0
    %5033 = vmatprep.subr.bf16.mxu0 0
    %5034 = vmatpush1.bf16.msra.mxu0 0
    %5035 = vmatprep.subr.bf16.mxu0 0
    %5036 = vmatpush1.bf16.msra.mxu0 0
    %5037 = vmatprep.subr.bf16.mxu0 0
    %5038 = vmatpush1.bf16.msra.mxu0 0
    %5039 = vmatprep.subr.bf16.mxu0 0
    %5040 = vmatpush1.bf16.msra.mxu0 0
    %5041 = vmatprep.subr.bf16.mxu0 0
    %5042 = vmatpush1.bf16.msra.mxu0 0
    %5043 = vmatprep.subr.bf16.mxu0 0
    %5044 = vmatpush1.bf16.msra.mxu0 0
    %5045 = vmatprep.subr.bf16.mxu0 0
    %5046 = vmatpush1.bf16.msra.mxu0 0
    %5047 = vmatprep.subr.bf16.mxu0 0
    %5048 = vmatpush1.bf16.msra.mxu0 0
    %5049 = vmatprep.subr.bf16.mxu0 0
    %5050 = vmatpush1.bf16.msra.mxu0 0
    %5051 = vmatprep.subr.bf16.mxu0 0
    %5052 = vmatpush1.bf16.msra.mxu0 0
    %5053 = vmatprep.subr.bf16.mxu0 0
    %5054 = vmatpush1.bf16.msra.mxu0 0
    %5055 = vmatprep.subr.bf16.mxu0 0
    %5056 = vmatpush1.bf16.msra.mxu0 0
    %5057 = vmatprep.subr.bf16.mxu0 0
    %5058 = vmatpush1.bf16.msra.mxu0 0
    %5059 = vmatprep.mubr.bf16.mxu0 0
    %5060 = vmatmul.mubr.bf16.gmra.mrb[0].mxu0 %v4977
    %v5061 = vpop.f32.mrb[0].mxu0
    %v5062 = vadd.f32 0.0, %v5061
    %v5063 = vpop.f32.mrb[0].mxu0
    %v5064 = vadd.f32 0.0, %v5063
    %v5065 = vpop.f32.mrb[0].mxu0
    %v5066 = vpop.f32.mrb[0].mxu0
    %5067 = vdwg.mxu0
    %5068 = vmatprep.subr.bf16.mxu0 %v4989
    %5069 = vmatpush1.bf16.msra.mxu0 %v4986
    %5070 = vmatprep.subr.bf16.mxu0 0
    %5071 = vmatpush1.bf16.msra.mxu0 0
    %5072 = vmatprep.subr.bf16.mxu0 0
    %5073 = vmatpush1.bf16.msra.mxu0 0
    %5074 = vmatprep.subr.bf16.mxu0 0
    %5075 = vmatpush1.bf16.msra.mxu0 0
    %5076 = vmatprep.subr.bf16.mxu0 0
    %5077 = vmatpush1.bf16.msra.mxu0 0
    %5078 = vmatprep.subr.bf16.mxu0 0
    %5079 = vmatpush1.bf16.msra.mxu0 0
    %5080 = vmatprep.subr.bf16.mxu0 0
    %5081 = vmatpush1.bf16.msra.mxu0 0
    %5082 = vmatprep.subr.bf16.mxu0 0
    %5083 = vmatpush1.bf16.msra.mxu0 0
    %5084 = vmatprep.subr.bf16.mxu0 0
    %5085 = vmatpush1.bf16.msra.mxu0 0
    %5086 = vmatprep.subr.bf16.mxu0 0
    %5087 = vmatpush1.bf16.msra.mxu0 0
    %5088 = vmatprep.subr.bf16.mxu0 0
    %5089 = vmatpush1.bf16.msra.mxu0 0
    %5090 = vmatprep.subr.bf16.mxu0 0
    %5091 = vmatpush1.bf16.msra.mxu0 0
    %5092 = vmatprep.subr.bf16.mxu0 0
    %5093 = vmatpush1.bf16.msra.mxu0 0
    %5094 = vmatprep.subr.bf16.mxu0 0
    %5095 = vmatpush1.bf16.msra.mxu0 0
    %5096 = vmatprep.subr.bf16.mxu0 0
    %5097 = vmatpush1.bf16.msra.mxu0 0
    %5098 = vmatprep.subr.bf16.mxu0 0
    %5099 = vmatpush1.bf16.msra.mxu0 0
    %5100 = vmatprep.mubr.bf16.mxu0 0
    %5101 = vmatmul.mubr.bf16.gmra.mrb[0].mxu0 %v4977
    %v5102 = vpop.f32.mrb[0].mxu0
    %v5103 = vadd.f32 0.0, %v5102
    %v5104 = vpop.f32.mrb[0].mxu0
    %v5105 = vadd.f32 0.0, %v5104
    %v5106 = vpop.f32.mrb[0].mxu0
    %v5107 = vpop.f32.mrb[0].mxu0
    %5108 = vdwg.mxu0
    %5109 = vmatprep.subr.bf16.mxu0 %v4995
    %5110 = vmatpush1.bf16.msra.mxu0 %v4992
    %5111 = vmatprep.subr.bf16.mxu0 0
    %5112 = vmatpush1.bf16.msra.mxu0 0
    %5113 = vmatprep.subr.bf16.mxu0 0
    %5114 = vmatpush1.bf16.msra.mxu0 0
    %5115 = vmatprep.subr.bf16.mxu0 0
    %5116 = vmatpush1.bf16.msra.mxu0 0
    %5117 = vmatprep.subr.bf16.mxu0 0
    %5118 = vmatpush1.bf16.msra.mxu0 0
    %5119 = vmatprep.subr.bf16.mxu0 0
    %5120 = vmatpush1.bf16.msra.mxu0 0
    %5121 = vmatprep.subr.bf16.mxu0 0
    %5122 = vmatpush1.bf16.msra.mxu0 0
    %5123 = vmatprep.subr.bf16.mxu0 0
    %5124 = vmatpush1.bf16.msra.mxu0 0
    %5125 = vmatprep.subr.bf16.mxu0 0
    %5126 = vmatpush1.bf16.msra.mxu0 0
    %5127 = vmatprep.subr.bf16.mxu0 0
    %5128 = vmatpush1.bf16.msra.mxu0 0
    %5129 = vmatprep.subr.bf16.mxu0 0
    %5130 = vmatpush1.bf16.msra.mxu0 0
    %5131 = vmatprep.subr.bf16.mxu0 0
    %5132 = vmatpush1.bf16.msra.mxu0 0
    %5133 = vmatprep.subr.bf16.mxu0 0
    %5134 = vmatpush1.bf16.msra.mxu0 0
    %5135 = vmatprep.subr.bf16.mxu0 0
    %5136 = vmatpush1.bf16.msra.mxu0 0
    %5137 = vmatprep.subr.bf16.mxu0 0
    %5138 = vmatpush1.bf16.msra.mxu0 0
    %5139 = vmatprep.subr.bf16.mxu0 0
    %5140 = vmatpush1.bf16.msra.mxu0 0
    %5141 = vmatprep.mubr.bf16.mxu0 0
    %5142 = vmatmul.mubr.bf16.gmra.mrb[0].mxu0 %v4977
    %v5143 = vpop.f32.mrb[0].mxu0
    %v5144 = vadd.f32 0.0, %v5143
    %v5145 = vpop.f32.mrb[0].mxu0
    %v5146 = vadd.f32 0.0, %v5145
    %v5147 = vpop.f32.mrb[0].mxu0
    %v5148 = vpop.f32.mrb[0].mxu0
    %5149 = vdwg.mxu0
    %5150 = vmatprep.subr.bf16.mxu0 %v5001
    %5151 = vmatpush1.bf16.msra.mxu0 %v4998
    %5152 = vmatprep.subr.bf16.mxu0 0
    %5153 = vmatpush1.bf16.msra.mxu0 0
    %5154 = vmatprep.subr.bf16.mxu0 0
    %5155 = vmatpush1.bf16.msra.mxu0 0
    %5156 = vmatprep.subr.bf16.mxu0 0
    %5157 = vmatpush1.bf16.msra.mxu0 0
    %5158 = vmatprep.subr.bf16.mxu0 0
    %5159 = vmatpush1.bf16.msra.mxu0 0
    %5160 = vmatprep.subr.bf16.mxu0 0
    %5161 = vmatpush1.bf16.msra.mxu0 0
    %5162 = vmatprep.subr.bf16.mxu0 0
    %5163 = vmatpush1.bf16.msra.mxu0 0
    %5164 = vmatprep.subr.bf16.mxu0 0
    %5165 = vmatpush1.bf16.msra.mxu0 0
    %5166 = vmatprep.subr.bf16.mxu0 0
    %5167 = vmatpush1.bf16.msra.mxu0 0
    %5168 = vmatprep.subr.bf16.mxu0 0
    %5169 = vmatpush1.bf16.msra.mxu0 0
    %5170 = vmatprep.subr.bf16.mxu0 0
    %5171 = vmatpush1.bf16.msra.mxu0 0
    %5172 = vmatprep.subr.bf16.mxu0 0
    %5173 = vmatpush1.bf16.msra.mxu0 0
    %5174 = vmatprep.subr.bf16.mxu0 0
    %5175 = vmatpush1.bf16.msra.mxu0 0
    %5176 = vmatprep.subr.bf16.mxu0 0
    %5177 = vmatpush1.bf16.msra.mxu0 0
    %5178 = vmatprep.subr.bf16.mxu0 0
    %5179 = vmatpush1.bf16.msra.mxu0 0
    %5180 = vmatprep.subr.bf16.mxu0 0
    %5181 = vmatpush1.bf16.msra.mxu0 0
    %5182 = vmatprep.mubr.bf16.mxu0 0
    %5183 = vmatmul.mubr.bf16.gmra.mrb[0].mxu0 %v4977
    %v5184 = vpop.f32.mrb[0].mxu0
    %v5185 = vadd.f32 0.0, %v5184
    %v5186 = vpop.f32.mrb[0].mxu0
    %v5187 = vadd.f32 0.0, %v5186
    %v5188 = vpop.f32.mrb[0].mxu0
    %v5189 = vpop.f32.mrb[0].mxu0
    %5190 = vdwg.mxu0
    %5191 = vmatprep.subr.bf16.mxu0 %v5007
    %5192 = vmatpush1.bf16.msra.mxu0 %v5004
    %5193 = vmatprep.subr.bf16.mxu0 0
    %5194 = vmatpush1.bf16.msra.mxu0 0
    %5195 = vmatprep.subr.bf16.mxu0 0
    %5196 = vmatpush1.bf16.msra.mxu0 0
    %5197 = vmatprep.subr.bf16.mxu0 0
    %5198 = vmatpush1.bf16.msra.mxu0 0
    %5199 = vmatprep.subr.bf16.mxu0 0
    %5200 = vmatpush1.bf16.msra.mxu0 0
    %5201 = vmatprep.subr.bf16.mxu0 0
    %5202 = vmatpush1.bf16.msra.mxu0 0
    %5203 = vmatprep.subr.bf16.mxu0 0
    %5204 = vmatpush1.bf16.msra.mxu0 0
    %5205 = vmatprep.subr.bf16.mxu0 0
    %5206 = vmatpush1.bf16.msra.mxu0 0
    %5207 = vmatprep.subr.bf16.mxu0 0
    %5208 = vmatpush1.bf16.msra.mxu0 0
    %5209 = vmatprep.subr.bf16.mxu0 0
    %5210 = vmatpush1.bf16.msra.mxu0 0
    %5211 = vmatprep.subr.bf16.mxu0 0
    %5212 = vmatpush1.bf16.msra.mxu0 0
    %5213 = vmatprep.subr.bf16.mxu0 0
    %5214 = vmatpush1.bf16.msra.mxu0 0
    %5215 = vmatprep.subr.bf16.mxu0 0
    %5216 = vmatpush1.bf16.msra.mxu0 0
    %5217 = vmatprep.subr.bf16.mxu0 0
    %5218 = vmatpush1.bf16.msra.mxu0 0
    %5219 = vmatprep.subr.bf16.mxu0 0
    %5220 = vmatpush1.bf16.msra.mxu0 0
    %5221 = vmatprep.subr.bf16.mxu0 0
    %5222 = vmatpush1.bf16.msra.mxu0 0
    %5223 = vmatprep.mubr.bf16.mxu0 0
    %5224 = vmatmul.mubr.bf16.gmra.mrb[0].mxu0 %v4977
    %v5225 = vpop.f32.mrb[0].mxu0
    %v5226 = vadd.f32 0.0, %v5225
    %v5227 = vpop.f32.mrb[0].mxu0
    %v5228 = vadd.f32 0.0, %v5227
    %v5229 = vpop.f32.mrb[0].mxu0
    %v5230 = vpop.f32.mrb[0].mxu0
    %5231 = vdwg.mxu0
    %5232 = vmatprep.subr.bf16.mxu0 %v5013
    %5233 = vmatpush1.bf16.msra.mxu0 %v5010
    %5234 = vmatprep.subr.bf16.mxu0 0
    %5235 = vmatpush1.bf16.msra.mxu0 0
    %5236 = vmatprep.subr.bf16.mxu0 0
    %5237 = vmatpush1.bf16.msra.mxu0 0
    %5238 = vmatprep.subr.bf16.mxu0 0
    %5239 = vmatpush1.bf16.msra.mxu0 0
    %5240 = vmatprep.subr.bf16.mxu0 0
    %5241 = vmatpush1.bf16.msra.mxu0 0
    %5242 = vmatprep.subr.bf16.mxu0 0
    %5243 = vmatpush1.bf16.msra.mxu0 0
    %5244 = vmatprep.subr.bf16.mxu0 0
    %5245 = vmatpush1.bf16.msra.mxu0 0
    %5246 = vmatprep.subr.bf16.mxu0 0
    %5247 = vmatpush1.bf16.msra.mxu0 0
    %5248 = vmatprep.subr.bf16.mxu0 0
    %5249 = vmatpush1.bf16.msra.mxu0 0
    %5250 = vmatprep.subr.bf16.mxu0 0
    %5251 = vmatpush1.bf16.msra.mxu0 0
    %5252 = vmatprep.subr.bf16.mxu0 0
    %5253 = vmatpush1.bf16.msra.mxu0 0
    %5254 = vmatprep.subr.bf16.mxu0 0
    %5255 = vmatpush1.bf16.msra.mxu0 0
    %5256 = vmatprep.subr.bf16.mxu0 0
    %5257 = vmatpush1.bf16.msra.mxu0 0
    %5258 = vmatprep.subr.bf16.mxu0 0
    %5259 = vmatpush1.bf16.msra.mxu0 0
    %5260 = vmatprep.subr.bf16.mxu0 0
    %5261 = vmatpush1.bf16.msra.mxu0 0
    %5262 = vmatprep.subr.bf16.mxu0 0
    %5263 = vmatpush1.bf16.msra.mxu0 0
    %5264 = vmatprep.mubr.bf16.mxu0 0
    %5265 = vmatmul.mubr.bf16.gmra.mrb[0].mxu0 %v4977
    %v5266 = vpop.f32.mrb[0].mxu0
    %v5267 = vadd.f32 0.0, %v5266
    %v5268 = vpop.f32.mrb[0].mxu0
    %v5269 = vadd.f32 0.0, %v5268
    %v5270 = vpop.f32.mrb[0].mxu0
    %v5271 = vpop.f32.mrb[0].mxu0
    %5272 = vdwg.mxu0
    %5273 = vmatprep.subr.bf16.mxu0 %v5019
    %5274 = vmatpush1.bf16.msra.mxu0 %v5016
    %5275 = vmatprep.subr.bf16.mxu0 0
    %5276 = vmatpush1.bf16.msra.mxu0 0
    %5277 = vmatprep.subr.bf16.mxu0 0
    %5278 = vmatpush1.bf16.msra.mxu0 0
    %5279 = vmatprep.subr.bf16.mxu0 0
    %5280 = vmatpush1.bf16.msra.mxu0 0
    %5281 = vmatprep.subr.bf16.mxu0 0
    %5282 = vmatpush1.bf16.msra.mxu0 0
    %5283 = vmatprep.subr.bf16.mxu0 0
    %5284 = vmatpush1.bf16.msra.mxu0 0
    %5285 = vmatprep.subr.bf16.mxu0 0
    %5286 = vmatpush1.bf16.msra.mxu0 0
    %5287 = vmatprep.subr.bf16.mxu0 0
    %5288 = vmatpush1.bf16.msra.mxu0 0
    %5289 = vmatprep.subr.bf16.mxu0 0
    %5290 = vmatpush1.bf16.msra.mxu0 0
    %5291 = vmatprep.subr.bf16.mxu0 0
    %5292 = vmatpush1.bf16.msra.mxu0 0
    %5293 = vmatprep.subr.bf16.mxu0 0
    %5294 = vmatpush1.bf16.msra.mxu0 0
    %5295 = vmatprep.subr.bf16.mxu0 0
    %5296 = vmatpush1.bf16.msra.mxu0 0
    %5297 = vmatprep.subr.bf16.mxu0 0
    %5298 = vmatpush1.bf16.msra.mxu0 0
    %5299 = vmatprep.subr.bf16.mxu0 0
    %5300 = vmatpush1.bf16.msra.mxu0 0
    %5301 = vmatprep.subr.bf16.mxu0 0
    %5302 = vmatpush1.bf16.msra.mxu0 0
    %5303 = vmatprep.subr.bf16.mxu0 0
    %5304 = vmatpush1.bf16.msra.mxu0 0
    %5305 = vmatprep.mubr.bf16.mxu0 0
    %5306 = vmatmul.mubr.bf16.gmra.mrb[0].mxu0 %v4977
    %v5307 = vpop.f32.mrb[0].mxu0
    %v5308 = vadd.f32 0.0, %v5307
    %v5309 = vpop.f32.mrb[0].mxu0
    %v5310 = vadd.f32 0.0, %v5309
    %v5311 = vpop.f32.mrb[0].mxu0
    %v5312 = vpop.f32.mrb[0].mxu0
    %5313 = vdwg.mxu0
    %5314 = vmatprep.subr.bf16.mxu0 %v5025
    %5315 = vmatpush1.bf16.msra.mxu0 %v5022
    %5316 = vmatprep.subr.bf16.mxu0 0
    %5317 = vmatpush1.bf16.msra.mxu0 0
    %5318 = vmatprep.subr.bf16.mxu0 0
    %5319 = vmatpush1.bf16.msra.mxu0 0
    %5320 = vmatprep.subr.bf16.mxu0 0
    %5321 = vmatpush1.bf16.msra.mxu0 0
    %5322 = vmatprep.subr.bf16.mxu0 0
    %5323 = vmatpush1.bf16.msra.mxu0 0
    %5324 = vmatprep.subr.bf16.mxu0 0
    %5325 = vmatpush1.bf16.msra.mxu0 0
    %5326 = vmatprep.subr.bf16.mxu0 0
    %5327 = vmatpush1.bf16.msra.mxu0 0
    %5328 = vmatprep.subr.bf16.mxu0 0
    %5329 = vmatpush1.bf16.msra.mxu0 0
    %5330 = vmatprep.subr.bf16.mxu0 0
    %5331 = vmatpush1.bf16.msra.mxu0 0
    %5332 = vmatprep.subr.bf16.mxu0 0
    %5333 = vmatpush1.bf16.msra.mxu0 0
    %5334 = vmatprep.subr.bf16.mxu0 0
    %5335 = vmatpush1.bf16.msra.mxu0 0
    %5336 = vmatprep.subr.bf16.mxu0 0
    %5337 = vmatpush1.bf16.msra.mxu0 0
    %5338 = vmatprep.subr.bf16.mxu0 0
    %5339 = vmatpush1.bf16.msra.mxu0 0
    %5340 = vmatprep.subr.bf16.mxu0 0
    %5341 = vmatpush1.bf16.msra.mxu0 0
    %5342 = vmatprep.subr.bf16.mxu0 0
    %5343 = vmatpush1.bf16.msra.mxu0 0
    %5344 = vmatprep.subr.bf16.mxu0 0
    %5345 = vmatpush1.bf16.msra.mxu0 0
    %5346 = vmatprep.mubr.bf16.mxu0 0
    %5347 = vmatmul.mubr.bf16.gmra.mrb[0].mxu0 %v4977
    %v5348 = vpop.f32.mrb[0].mxu0
    %v5349 = vadd.f32 0.0, %v5348
    %v5350 = vpop.f32.mrb[0].mxu0
    %v5351 = vadd.f32 0.0, %v5350
    %v5352 = vpop.f32.mrb[0].mxu0
    %v5353 = vpop.f32.mrb[0].mxu0
    %5354 = vdwg.mxu0
    %v5357 = vlaneseq
    %v5358 = vshrl.u32 %v5357, 7
    %v5359 = vsub.s32 0, %v5358
    %v5360 = vrot.slane %v187, %v5359
    %v5361 = vlaneseq
    %v5362 = vshrl.u32 %v5361, 7
    %v5363 = vsub.s32 1, %v5362
    %v5364 = vrot.slane %v187, %v5363
    %v5365 = vlaneseq
    %v5366 = vshrl.u32 %v5365, 7
    %v5367 = vsub.s32 2, %v5366
    %v5368 = vrot.slane %v187, %v5367
    %v5369 = vlaneseq
    %v5370 = vshrl.u32 %v5369, 7
    %v5371 = vsub.s32 3, %v5370
    %v5372 = vrot.slane %v187, %v5371
    %v5373 = vlaneseq
    %v5374 = vshrl.u32 %v5373, 7
    %v5375 = vsub.s32 4, %v5374
    %v5376 = vrot.slane %v187, %v5375
    %v5377 = vlaneseq
    %v5378 = vshrl.u32 %v5377, 7
    %v5379 = vsub.s32 5, %v5378
    %v5380 = vrot.slane %v187, %v5379
    %v5381 = vlaneseq
    %v5382 = vshrl.u32 %v5381, 7
    %v5383 = vsub.s32 6, %v5382
    %v5384 = vrot.slane %v187, %v5383
    %v5385 = vlaneseq
    %v5386 = vshrl.u32 %v5385, 7
    %v5387 = vsub.s32 7, %v5386
    %v5388 = vrot.slane %v187, %v5387
    %v5389 = vlaneseq
    %v5390 = vshrl.u32 %v5389, 7
    %v5391 = vsub.s32 0, %v5390
    %v5392 = vrot.slane %v191, %v5391
    %v5393 = vlaneseq
    %v5394 = vshrl.u32 %v5393, 7
    %v5395 = vsub.s32 1, %v5394
    %v5396 = vrot.slane %v191, %v5395
    %v5397 = vlaneseq
    %v5398 = vshrl.u32 %v5397, 7
    %v5399 = vsub.s32 2, %v5398
    %v5400 = vrot.slane %v191, %v5399
    %v5401 = vlaneseq
    %v5402 = vshrl.u32 %v5401, 7
    %v5403 = vsub.s32 3, %v5402
    %v5404 = vrot.slane %v191, %v5403
    %v5405 = vlaneseq
    %v5406 = vshrl.u32 %v5405, 7
    %v5407 = vsub.s32 4, %v5406
    %v5408 = vrot.slane %v191, %v5407
    %v5409 = vlaneseq
    %v5410 = vshrl.u32 %v5409, 7
    %v5411 = vsub.s32 5, %v5410
    %v5412 = vrot.slane %v191, %v5411
    %v5413 = vlaneseq
    %v5414 = vshrl.u32 %v5413, 7
    %v5415 = vsub.s32 6, %v5414
    %v5416 = vrot.slane %v191, %v5415
    %v5417 = vlaneseq
    %v5418 = vshrl.u32 %v5417, 7
    %v5419 = vsub.s32 7, %v5418
    %v5420 = vrot.slane %v191, %v5419
    %v5437 = vmul.f32 %v5062, %v5360
    %v5438 = vmul.f32 %v5064, %v5364
    %v5439 = vmul.f32 %v5103, %v5368
    %v5440 = vmul.f32 %v5105, %v5372
    %v5441 = vmul.f32 %v5144, %v5376
    %v5442 = vmul.f32 %v5146, %v5380
    %v5443 = vmul.f32 %v5185, %v5384
    %v5444 = vmul.f32 %v5187, %v5388
    %v5445 = vmul.f32 %v5226, %v5392
    %v5446 = vmul.f32 %v5228, %v5396
    %v5447 = vmul.f32 %v5267, %v5400
    %v5448 = vmul.f32 %v5269, %v5404
    %v5449 = vmul.f32 %v5308, %v5408
    %v5450 = vmul.f32 %v5310, %v5412
    %v5451 = vmul.f32 %v5349, %v5416
    %v5452 = vmul.f32 %v5351, %v5420
    %v5453 = vadd.f32 %v4907, %v5437
    %v5454 = vadd.f32 %v4908, %v5438
    %v5455 = vadd.f32 %v4909, %v5439
    %v5456 = vadd.f32 %v4910, %v5440
    %v5457 = vadd.f32 %v4911, %v5441
    %v5458 = vadd.f32 %v4912, %v5442
    %v5459 = vadd.f32 %v4913, %v5443
    %v5460 = vadd.f32 %v4914, %v5444
    %v5461 = vadd.f32 %v4915, %v5445
    %v5462 = vadd.f32 %v4916, %v5446
    %v5463 = vadd.f32 %v4917, %v5447
    %v5464 = vadd.f32 %v4918, %v5448
    %v5465 = vadd.f32 %v4919, %v5449
    %v5466 = vadd.f32 %v4920, %v5450
    %v5467 = vadd.f32 %v4921, %v5451
    %v5468 = vadd.f32 %v4922, %v5452
    %v5485 = vrot.slane %v5453, 4
    %v5486 = vrot.slane %v5454, 4
    %v5487 = vrot.slane %v5455, 4
    %v5488 = vrot.slane %v5456, 4
    %v5489 = vrot.slane %v5457, 4
    %v5490 = vrot.slane %v5458, 4
    %v5491 = vrot.slane %v5459, 4
    %v5492 = vrot.slane %v5460, 4
    %v5493 = vrot.slane %v5461, 4
    %v5494 = vrot.slane %v5462, 4
    %v5495 = vrot.slane %v5463, 4
    %v5496 = vrot.slane %v5464, 4
    %v5497 = vrot.slane %v5465, 4
    %v5498 = vrot.slane %v5466, 4
    %v5499 = vrot.slane %v5467, 4
    %v5500 = vrot.slane %v5468, 4
    %5517 = vst [vmem:[#allocation2] sm:$0xf0] %v5485
    %5518 = vst [vmem:[#allocation2 + $0x8] sm:$0xf0] %v5486
    %5519 = vst [vmem:[#allocation2 + $0x10] sm:$0xf0] %v5487
    %5520 = vst [vmem:[#allocation2 + $0x18] sm:$0xf0] %v5488
    %5521 = vst [vmem:[#allocation2 + $0x20] sm:$0xf0] %v5489
    %5522 = vst [vmem:[#allocation2 + $0x28] sm:$0xf0] %v5490
    %5523 = vst [vmem:[#allocation2 + $0x30] sm:$0xf0] %v5491
    %5524 = vst [vmem:[#allocation2 + $0x38] sm:$0xf0] %v5492
    %5525 = vst [vmem:[#allocation2 + $0x40] sm:$0xf0] %v5493
    %5526 = vst [vmem:[#allocation2 + $0x48] sm:$0xf0] %v5494
    %5527 = vst [vmem:[#allocation2 + $0x50] sm:$0xf0] %v5495
    %5528 = vst [vmem:[#allocation2 + $0x58] sm:$0xf0] %v5496
    %5529 = vst [vmem:[#allocation2 + $0x60] sm:$0xf0] %v5497
    %5530 = vst [vmem:[#allocation2 + $0x68] sm:$0xf0] %v5498
    %5531 = vst [vmem:[#allocation2 + $0x70] sm:$0xf0] %v5499
    %5532 = vst [vmem:[#allocation2 + $0x78] sm:$0xf0] %v5500
    %v5533 = vsel %vm208, %v5453, 0.0
    %v5534 = vsel %vm208, %v5454, 0.0
    %v5535 = vadd.f32 %v5533, %v5534
    %v5536 = vsel %vm208, %v5455, 0.0
    %v5537 = vadd.f32 %v5535, %v5536
    %v5538 = vsel %vm208, %v5456, 0.0
    %v5539 = vadd.f32 %v5537, %v5538
    %v5540 = vsel %vm208, %v5457, 0.0
    %v5541 = vadd.f32 %v5539, %v5540
    %v5542 = vsel %vm208, %v5458, 0.0
    %v5543 = vadd.f32 %v5541, %v5542
    %v5544 = vsel %vm208, %v5459, 0.0
    %v5545 = vadd.f32 %v5543, %v5544
    %v5546 = vsel %vm208, %v5460, 0.0
    %v5547 = vadd.f32 %v5545, %v5546
    %v5548 = vsel %vm208, %v5461, 0.0
    %v5549 = vadd.f32 %v5547, %v5548
    %v5550 = vsel %vm208, %v5462, 0.0
    %v5551 = vadd.f32 %v5549, %v5550
    %v5552 = vsel %vm208, %v5463, 0.0
    %v5553 = vadd.f32 %v5551, %v5552
    %v5554 = vsel %vm208, %v5464, 0.0
    %v5555 = vadd.f32 %v5553, %v5554
    %v5556 = vsel %vm208, %v5465, 0.0
    %v5557 = vadd.f32 %v5555, %v5556
    %v5558 = vsel %vm208, %v5466, 0.0
    %v5559 = vadd.f32 %v5557, %v5558
    %v5560 = vsel %vm208, %v5467, 0.0
    %v5561 = vadd.f32 %v5559, %v5560
    %v5562 = vsel %vm208, %v5468, 0.0
    %v5563 = vadd.f32 %v5561, %v5562
    %5564 = vadd.xlane.f32.xlu0 %v5563
    %v5565 = vpop.xlane.xlu0 %5564
    %5566 = vst.msk [vmem:[#allocation4 + $0x4] sm:$0xf] %vm242, %v5565
    %v5567 = vmul.f32 %v5453, %v5453
    %v5568 = vmul.f32 %v5454, %v5454
    %v5569 = vmul.f32 %v5455, %v5455
    %v5570 = vmul.f32 %v5456, %v5456
    %v5571 = vmul.f32 %v5457, %v5457
    %v5572 = vmul.f32 %v5458, %v5458
    %v5573 = vmul.f32 %v5459, %v5459
    %v5574 = vmul.f32 %v5460, %v5460
    %v5575 = vmul.f32 %v5461, %v5461
    %v5576 = vmul.f32 %v5462, %v5462
    %v5577 = vmul.f32 %v5463, %v5463
    %v5578 = vmul.f32 %v5464, %v5464
    %v5579 = vmul.f32 %v5465, %v5465
    %v5580 = vmul.f32 %v5466, %v5466
    %v5581 = vmul.f32 %v5467, %v5467
    %v5582 = vmul.f32 %v5468, %v5468
    %v5583 = vsel %vm208, %v5567, 0.0
    %v5584 = vsel %vm208, %v5568, 0.0
    %v5585 = vadd.f32 %v5583, %v5584
    %v5586 = vsel %vm208, %v5569, 0.0
    %v5587 = vadd.f32 %v5585, %v5586
    %v5588 = vsel %vm208, %v5570, 0.0
    %v5589 = vadd.f32 %v5587, %v5588
    %v5590 = vsel %vm208, %v5571, 0.0
    %v5591 = vadd.f32 %v5589, %v5590
    %v5592 = vsel %vm208, %v5572, 0.0
    %v5593 = vadd.f32 %v5591, %v5592
    %v5594 = vsel %vm208, %v5573, 0.0
    %v5595 = vadd.f32 %v5593, %v5594
    %v5596 = vsel %vm208, %v5574, 0.0
    %v5597 = vadd.f32 %v5595, %v5596
    %v5598 = vsel %vm208, %v5575, 0.0
    %v5599 = vadd.f32 %v5597, %v5598
    %v5600 = vsel %vm208, %v5576, 0.0
    %v5601 = vadd.f32 %v5599, %v5600
    %v5602 = vsel %vm208, %v5577, 0.0
    %v5603 = vadd.f32 %v5601, %v5602
    %v5604 = vsel %vm208, %v5578, 0.0
    %v5605 = vadd.f32 %v5603, %v5604
    %v5606 = vsel %vm208, %v5579, 0.0
    %v5607 = vadd.f32 %v5605, %v5606
    %v5608 = vsel %vm208, %v5580, 0.0
    %v5609 = vadd.f32 %v5607, %v5608
    %v5610 = vsel %vm208, %v5581, 0.0
    %v5611 = vadd.f32 %v5609, %v5610
    %v5612 = vsel %vm208, %v5582, 0.0
    %v5613 = vadd.f32 %v5611, %v5612
    %5614 = vadd.xlane.f32.xlu0 %v5613
    %v5615 = vpop.xlane.xlu0 %5614
    %5616 = vst.msk [vmem:[#allocation5 + $0x4] sm:$0xf] %vm242, %v5615
    %v5617 = vld [vmem:[#allocation4] sm:$0xff]
    %v5618 = vld [vmem:[#allocation5] sm:$0xff]
    %v5619 = vld [vmem:[%s5] sm:$0xff]
    %v5620 = vld [vmem:[%s6] sm:$0xff]
    %v5621 = vmul.f32 %v5617, 0.00048828125
    %v5622 = vmul.f32 %v5618, 0.00048828125
    %v5623 = vmul.f32 %v5621, %v5621
    %v5624 = vsub.f32 %v5622, %v5623
    %v5625 = vadd.f32 %v5624, 1e-05
    %v5626 = vrsqrt.pop %v5625
    %v5627 = vmul.f32 %v5619, %v5626
    %v5628 = vmul.f32 %v5621, %v5627
    %v5629 = vsub.f32 %v5620, %v5628
    %v5630 = vld [vmem:[#allocation2] sm:$0xff]
    %v5631 = vld [vmem:[#allocation2 + $0x8] sm:$0xff]
    %v5632 = vld [vmem:[#allocation2 + $0x10] sm:$0xff]
    %v5633 = vld [vmem:[#allocation2 + $0x18] sm:$0xff]
    %v5634 = vld [vmem:[#allocation2 + $0x20] sm:$0xff]
    %v5635 = vld [vmem:[#allocation2 + $0x28] sm:$0xff]
    %v5636 = vld [vmem:[#allocation2 + $0x30] sm:$0xff]
    %v5637 = vld [vmem:[#allocation2 + $0x38] sm:$0xff]
    %v5638 = vld [vmem:[#allocation2 + $0x40] sm:$0xff]
    %v5639 = vld [vmem:[#allocation2 + $0x48] sm:$0xff]
    %v5640 = vld [vmem:[#allocation2 + $0x50] sm:$0xff]
    %v5641 = vld [vmem:[#allocation2 + $0x58] sm:$0xff]
    %v5642 = vld [vmem:[#allocation2 + $0x60] sm:$0xff]
    %v5643 = vld [vmem:[#allocation2 + $0x68] sm:$0xff]
    %v5644 = vld [vmem:[#allocation2 + $0x70] sm:$0xff]
    %v5645 = vld [vmem:[#allocation2 + $0x78] sm:$0xff]
    %5647 = vset.pattern.permute.xlu0 0
    %5648 = vperm.xlu0 %5647, %v5627
    %v5649 = vpop.permute.xlu0 %5648
    %v5651 = vmul.f32 %v5630, %v5649
    %v5652 = vmul.f32 %v5631, %v5649
    %v5653 = vmul.f32 %v5632, %v5649
    %v5654 = vmul.f32 %v5633, %v5649
    %v5655 = vmul.f32 %v5634, %v5649
    %v5656 = vmul.f32 %v5635, %v5649
    %v5657 = vmul.f32 %v5636, %v5649
    %v5658 = vmul.f32 %v5637, %v5649
    %v5659 = vmul.f32 %v5638, %v5649
    %v5660 = vmul.f32 %v5639, %v5649
    %v5661 = vmul.f32 %v5640, %v5649
    %v5662 = vmul.f32 %v5641, %v5649
    %v5663 = vmul.f32 %v5642, %v5649
    %v5664 = vmul.f32 %v5643, %v5649
    %v5665 = vmul.f32 %v5644, %v5649
    %v5666 = vmul.f32 %v5645, %v5649
    %5668 = vset.pattern.permute.xlu0 0
    %5669 = vperm.xlu0 %5668, %v5629
    %v5670 = vpop.permute.xlu0 %5669
    %v5672 = vadd.f32 %v5651, %v5670
    %v5673 = vadd.f32 %v5652, %v5670
    %v5674 = vadd.f32 %v5653, %v5670
    %v5675 = vadd.f32 %v5654, %v5670
    %v5676 = vadd.f32 %v5655, %v5670
    %v5677 = vadd.f32 %v5656, %v5670
    %v5678 = vadd.f32 %v5657, %v5670
    %v5679 = vadd.f32 %v5658, %v5670
    %v5680 = vadd.f32 %v5659, %v5670
    %v5681 = vadd.f32 %v5660, %v5670
    %v5682 = vadd.f32 %v5661, %v5670
    %v5683 = vadd.f32 %v5662, %v5670
    %v5684 = vadd.f32 %v5663, %v5670
    %v5685 = vadd.f32 %v5664, %v5670
    %v5686 = vadd.f32 %v5665, %v5670
    %v5687 = vadd.f32 %v5666, %v5670
    %v5688 = vmax.f32 %v5672, 0.0
    %v5689 = vmax.f32 %v5673, 0.0
    %v5690 = vmax.f32 %v5674, 0.0
    %v5691 = vmax.f32 %v5675, 0.0
    %v5692 = vmax.f32 %v5676, 0.0
    %v5693 = vmax.f32 %v5677, 0.0
    %v5694 = vmax.f32 %v5678, 0.0
    %v5695 = vmax.f32 %v5679, 0.0
    %v5696 = vmax.f32 %v5680, 0.0
    %v5697 = vmax.f32 %v5681, 0.0
    %v5698 = vmax.f32 %v5682, 0.0
    %v5699 = vmax.f32 %v5683, 0.0
    %v5700 = vmax.f32 %v5684, 0.0
    %v5701 = vmax.f32 %v5685, 0.0
    %v5702 = vmax.f32 %v5686, 0.0
    %v5703 = vmax.f32 %v5687, 0.0
    %v5704 = vpack.c.bf16 %v5688, %v5688
    %v5705 = vpack.c.bf16 %v5689, %v5689
    %v5706 = vpack.c.bf16 %v5690, %v5690
    %v5707 = vpack.c.bf16 %v5691, %v5691
    %v5708 = vpack.c.bf16 %v5692, %v5692
    %v5709 = vpack.c.bf16 %v5693, %v5693
    %v5710 = vpack.c.bf16 %v5694, %v5694
    %v5711 = vpack.c.bf16 %v5695, %v5695
    %v5712 = vpack.c.bf16 %v5696, %v5696
    %v5713 = vpack.c.bf16 %v5697, %v5697
    %v5714 = vpack.c.bf16 %v5698, %v5698
    %v5715 = vpack.c.bf16 %v5699, %v5699
    %v5716 = vpack.c.bf16 %v5700, %v5700
    %v5717 = vpack.c.bf16 %v5701, %v5701
    %v5718 = vpack.c.bf16 %v5702, %v5702
    %v5719 = vpack.c.bf16 %v5703, %v5703
    %v5736 = vunpack.c.l.b16 %v5704
    %v5737 = vunpack.c.l.b16 %v5705
    %v5738 = vunpack.c.l.b16 %v5706
    %v5739 = vunpack.c.l.b16 %v5707
    %v5740 = vunpack.c.l.b16 %v5708
    %v5741 = vunpack.c.l.b16 %v5709
    %v5742 = vunpack.c.l.b16 %v5710
    %v5743 = vunpack.c.l.b16 %v5711
    %v5744 = vunpack.c.l.b16 %v5712
    %v5745 = vunpack.c.l.b16 %v5713
    %v5746 = vunpack.c.l.b16 %v5714
    %v5747 = vunpack.c.l.b16 %v5715
    %v5748 = vunpack.c.l.b16 %v5716
    %v5749 = vunpack.c.l.b16 %v5717
    %v5750 = vunpack.c.l.b16 %v5718
    %v5751 = vunpack.c.l.b16 %v5719
    %v5752 = vpack.c.b16 %v5737, %v5736
    %v5753 = vpack.c.b16 %v5739, %v5738
    %v5754 = vpack.c.b16 %v5741, %v5740
    %v5755 = vpack.c.b16 %v5743, %v5742
    %v5756 = vpack.c.b16 %v5745, %v5744
    %v5757 = vpack.c.b16 %v5747, %v5746
    %v5758 = vpack.c.b16 %v5749, %v5748
    %v5759 = vpack.c.b16 %v5751, %v5750
    %5768 = vst [vmem:[#allocation3 + $0x4] sm:$0xff] %v5752
    %5769 = vst [vmem:[#allocation3 + $0xc] sm:$0xff] %v5753
    %5770 = vst [vmem:[#allocation3 + $0x14] sm:$0xff] %v5754
    %5771 = vst [vmem:[#allocation3 + $0x1c] sm:$0xff] %v5755
    %5772 = vst [vmem:[#allocation3 + $0x24] sm:$0xff] %v5756
    %5773 = vst [vmem:[#allocation3 + $0x2c] sm:$0xff] %v5757
    %5774 = vst [vmem:[#allocation3 + $0x34] sm:$0xff] %v5758
    %5775 = vst [vmem:[#allocation3 + $0x3c] sm:$0xff] %v5759
    %v5776 = vld [vmem:[#allocation3] sm:$0xff]
    %v5777 = vld [vmem:[#allocation3 + $0x8] sm:$0xff]
    %v5778 = vld [vmem:[#allocation3 + $0x10] sm:$0xff]
    %v5779 = vld [vmem:[#allocation3 + $0x18] sm:$0xff]
    %v5780 = vld [vmem:[#allocation3 + $0x20] sm:$0xff]
    %v5781 = vld [vmem:[#allocation3 + $0x28] sm:$0xff]
    %v5782 = vld [vmem:[#allocation3 + $0x30] sm:$0xff]
    %v5783 = vld [vmem:[#allocation3 + $0x38] sm:$0xff]
    %v5784 = vld [vmem:[#allocation3 + $0x40] sm:$0xf]
    %v5785 = vld [vmem:[%s7] sm:$0x3]
    %v5795 = vunpack.c.l.b16 %v5776
    %v5796 = vunpack.c.h.b16 %v5776
    %v5797 = vunpack.c.l.b16 %v5777
    %v5798 = vunpack.c.h.b16 %v5777
    %v5799 = vunpack.c.l.b16 %v5778
    %v5800 = vunpack.c.h.b16 %v5778
    %v5801 = vunpack.c.l.b16 %v5779
    %v5802 = vunpack.c.h.b16 %v5779
    %v5803 = vunpack.c.l.b16 %v5780
    %v5804 = vunpack.c.h.b16 %v5780
    %v5805 = vunpack.c.l.b16 %v5781
    %v5806 = vunpack.c.h.b16 %v5781
    %v5807 = vunpack.c.l.b16 %v5782
    %v5808 = vunpack.c.h.b16 %v5782
    %v5809 = vunpack.c.l.b16 %v5783
    %v5810 = vunpack.c.h.b16 %v5783
    %v5811 = vunpack.c.l.b16 %v5784
    %v5812 = vpack.c.b16 %v5795, %v5795
    %v5813 = vpack.c.b16 %v5796, %v5796
    %v5814 = vpack.c.b16 %v5797, %v5797
    %v5815 = vpack.c.b16 %v5798, %v5798
    %v5816 = vpack.c.b16 %v5799, %v5799
    %v5817 = vpack.c.b16 %v5800, %v5800
    %v5818 = vpack.c.b16 %v5801, %v5801
    %v5819 = vpack.c.b16 %v5802, %v5802
    %v5820 = vpack.c.b16 %v5803, %v5803
    %v5821 = vpack.c.b16 %v5804, %v5804
    %v5822 = vpack.c.b16 %v5805, %v5805
    %v5823 = vpack.c.b16 %v5806, %v5806
    %v5824 = vpack.c.b16 %v5807, %v5807
    %v5825 = vpack.c.b16 %v5808, %v5808
    %v5826 = vpack.c.b16 %v5809, %v5809
    %v5827 = vpack.c.b16 %v5810, %v5810
    %v5828 = vpack.c.b16 %v5811, %v5811
    %5829 = vrot.lane.b32.xlu0 %v5812, 33
    %v5830 = vpop.permute.xlu0 %5829
    %5831 = vrot.lane.b32.xlu0 %v5813, 33
    %v5832 = vpop.permute.xlu0 %5831
    %5833 = vrot.lane.b32.xlu0 %v5814, 33
    %v5834 = vpop.permute.xlu0 %5833
    %5835 = vrot.lane.b32.xlu0 %v5815, 33
    %v5836 = vpop.permute.xlu0 %5835
    %5837 = vrot.lane.b32.xlu0 %v5816, 33
    %v5838 = vpop.permute.xlu0 %5837
    %5839 = vrot.lane.b32.xlu0 %v5817, 33
    %v5840 = vpop.permute.xlu0 %5839
    %5841 = vrot.lane.b32.xlu0 %v5818, 33
    %v5842 = vpop.permute.xlu0 %5841
    %5843 = vrot.lane.b32.xlu0 %v5819, 33
    %v5844 = vpop.permute.xlu0 %5843
    %5845 = vrot.lane.b32.xlu0 %v5820, 33
    %v5846 = vpop.permute.xlu0 %5845
    %5847 = vrot.lane.b32.xlu0 %v5821, 33
    %v5848 = vpop.permute.xlu0 %5847
    %5849 = vrot.lane.b32.xlu0 %v5822, 33
    %v5850 = vpop.permute.xlu0 %5849
    %5851 = vrot.lane.b32.xlu0 %v5823, 33
    %v5852 = vpop.permute.xlu0 %5851
    %5853 = vrot.lane.b32.xlu0 %v5824, 33
    %v5854 = vpop.permute.xlu0 %5853
    %5855 = vrot.lane.b32.xlu0 %v5825, 33
    %v5856 = vpop.permute.xlu0 %5855
    %5857 = vrot.lane.b32.xlu0 %v5826, 33
    %v5858 = vpop.permute.xlu0 %5857
    %5859 = vrot.lane.b32.xlu0 %v5827, 33
    %v5860 = vpop.permute.xlu0 %5859
    %5861 = vrot.lane.b32.xlu0 %v5828, 33
    %v5862 = vpop.permute.xlu0 %5861
    %v5863 = vsel %vm540, %v5830, %v5832
    %v5864 = vsel %vm540, %v5832, %v5834
    %v5865 = vsel %vm540, %v5834, %v5836
    %v5866 = vsel %vm540, %v5836, %v5838
    %v5867 = vsel %vm540, %v5838, %v5840
    %v5868 = vsel %vm540, %v5840, %v5842
    %v5869 = vsel %vm540, %v5842, %v5844
    %v5870 = vsel %vm540, %v5844, %v5846
    %v5871 = vsel %vm540, %v5846, %v5848
    %v5872 = vsel %vm540, %v5848, %v5850
    %v5873 = vsel %vm540, %v5850, %v5852
    %v5874 = vsel %vm540, %v5852, %v5854
    %v5875 = vsel %vm540, %v5854, %v5856
    %v5876 = vsel %vm540, %v5856, %v5858
    %v5877 = vsel %vm540, %v5858, %v5860
    %v5878 = vsel %vm540, %v5860, %v5862
    %vm5879 = vcmask 64512
    %v5881 = vsel %vm5879, %v5785, 0
    %v5884 = vsel %vm208, %v5863, 0
    %v5887 = vsel %vm208, %v5864, 0
    %v5890 = vsel %vm208, %v5865, 0
    %v5893 = vsel %vm208, %v5866, 0
    %v5896 = vsel %vm208, %v5867, 0
    %v5899 = vsel %vm208, %v5868, 0
    %v5902 = vsel %vm208, %v5869, 0
    %v5905 = vsel %vm208, %v5870, 0
    %v5908 = vsel %vm208, %v5871, 0
    %v5911 = vsel %vm208, %v5872, 0
    %v5914 = vsel %vm208, %v5873, 0
    %v5917 = vsel %vm208, %v5874, 0
    %v5920 = vsel %vm208, %v5875, 0
    %v5923 = vsel %vm208, %v5876, 0
    %v5926 = vsel %vm208, %v5877, 0
    %v5929 = vsel %vm208, %v5878, 0
    %5931 = vmatprep.subr.bf16.mxu0 %v5887
    %5932 = vmatpush1.bf16.msra.mxu0 %v5884
    %5933 = vmatprep.subr.bf16.mxu0 0
    %5934 = vmatpush1.bf16.msra.mxu0 0
    %5935 = vmatprep.subr.bf16.mxu0 0
    %5936 = vmatpush1.bf16.msra.mxu0 0
    %5937 = vmatprep.subr.bf16.mxu0 0
    %5938 = vmatpush1.bf16.msra.mxu0 0
    %5939 = vmatprep.subr.bf16.mxu0 0
    %5940 = vmatpush1.bf16.msra.mxu0 0
    %5941 = vmatprep.subr.bf16.mxu0 0
    %5942 = vmatpush1.bf16.msra.mxu0 0
    %5943 = vmatprep.subr.bf16.mxu0 0
    %5944 = vmatpush1.bf16.msra.mxu0 0
    %5945 = vmatprep.subr.bf16.mxu0 0
    %5946 = vmatpush1.bf16.msra.mxu0 0
    %5947 = vmatprep.subr.bf16.mxu0 0
    %5948 = vmatpush1.bf16.msra.mxu0 0
    %5949 = vmatprep.subr.bf16.mxu0 0
    %5950 = vmatpush1.bf16.msra.mxu0 0
    %5951 = vmatprep.subr.bf16.mxu0 0
    %5952 = vmatpush1.bf16.msra.mxu0 0
    %5953 = vmatprep.subr.bf16.mxu0 0
    %5954 = vmatpush1.bf16.msra.mxu0 0
    %5955 = vmatprep.subr.bf16.mxu0 0
    %5956 = vmatpush1.bf16.msra.mxu0 0
    %5957 = vmatprep.subr.bf16.mxu0 0
    %5958 = vmatpush1.bf16.msra.mxu0 0
    %5959 = vmatprep.subr.bf16.mxu0 0
    %5960 = vmatpush1.bf16.msra.mxu0 0
    %5961 = vmatprep.subr.bf16.mxu0 0
    %5962 = vmatpush1.bf16.msra.mxu0 0
    %5963 = vmatprep.mubr.bf16.mxu0 0
    %5964 = vmatmul.mubr.bf16.gmra.mrb[0].mxu0 %v5881
    %v5965 = vpop.f32.mrb[0].mxu0
    %v5966 = vadd.f32 0.0, %v5965
    %v5967 = vpop.f32.mrb[0].mxu0
    %v5968 = vadd.f32 0.0, %v5967
    %v5969 = vpop.f32.mrb[0].mxu0
    %v5970 = vpop.f32.mrb[0].mxu0
    %5971 = vdwg.mxu0
    %5972 = vmatprep.subr.bf16.mxu0 %v5893
    %5973 = vmatpush1.bf16.msra.mxu0 %v5890
    %5974 = vmatprep.subr.bf16.mxu0 0
    %5975 = vmatpush1.bf16.msra.mxu0 0
    %5976 = vmatprep.subr.bf16.mxu0 0
    %5977 = vmatpush1.bf16.msra.mxu0 0
    %5978 = vmatprep.subr.bf16.mxu0 0
    %5979 = vmatpush1.bf16.msra.mxu0 0
    %5980 = vmatprep.subr.bf16.mxu0 0
    %5981 = vmatpush1.bf16.msra.mxu0 0
    %5982 = vmatprep.subr.bf16.mxu0 0
    %5983 = vmatpush1.bf16.msra.mxu0 0
    %5984 = vmatprep.subr.bf16.mxu0 0
    %5985 = vmatpush1.bf16.msra.mxu0 0
    %5986 = vmatprep.subr.bf16.mxu0 0
    %5987 = vmatpush1.bf16.msra.mxu0 0
    %5988 = vmatprep.subr.bf16.mxu0 0
    %5989 = vmatpush1.bf16.msra.mxu0 0
    %5990 = vmatprep.subr.bf16.mxu0 0
    %5991 = vmatpush1.bf16.msra.mxu0 0
    %5992 = vmatprep.subr.bf16.mxu0 0
    %5993 = vmatpush1.bf16.msra.mxu0 0
    %5994 = vmatprep.subr.bf16.mxu0 0
    %5995 = vmatpush1.bf16.msra.mxu0 0
    %5996 = vmatprep.subr.bf16.mxu0 0
    %5997 = vmatpush1.bf16.msra.mxu0 0
    %5998 = vmatprep.subr.bf16.mxu0 0
    %5999 = vmatpush1.bf16.msra.mxu0 0
    %6000 = vmatprep.subr.bf16.mxu0 0
    %6001 = vmatpush1.bf16.msra.mxu0 0
    %6002 = vmatprep.subr.bf16.mxu0 0
    %6003 = vmatpush1.bf16.msra.mxu0 0
    %6004 = vmatprep.mubr.bf16.mxu0 0
    %6005 = vmatmul.mubr.bf16.gmra.mrb[0].mxu0 %v5881
    %v6006 = vpop.f32.mrb[0].mxu0
    %v6007 = vadd.f32 0.0, %v6006
    %v6008 = vpop.f32.mrb[0].mxu0
    %v6009 = vadd.f32 0.0, %v6008
    %v6010 = vpop.f32.mrb[0].mxu0
    %v6011 = vpop.f32.mrb[0].mxu0
    %6012 = vdwg.mxu0
    %6013 = vmatprep.subr.bf16.mxu0 %v5899
    %6014 = vmatpush1.bf16.msra.mxu0 %v5896
    %6015 = vmatprep.subr.bf16.mxu0 0
    %6016 = vmatpush1.bf16.msra.mxu0 0
    %6017 = vmatprep.subr.bf16.mxu0 0
    %6018 = vmatpush1.bf16.msra.mxu0 0
    %6019 = vmatprep.subr.bf16.mxu0 0
    %6020 = vmatpush1.bf16.msra.mxu0 0
    %6021 = vmatprep.subr.bf16.mxu0 0
    %6022 = vmatpush1.bf16.msra.mxu0 0
    %6023 = vmatprep.subr.bf16.mxu0 0
    %6024 = vmatpush1.bf16.msra.mxu0 0
    %6025 = vmatprep.subr.bf16.mxu0 0
    %6026 = vmatpush1.bf16.msra.mxu0 0
    %6027 = vmatprep.subr.bf16.mxu0 0
    %6028 = vmatpush1.bf16.msra.mxu0 0
    %6029 = vmatprep.subr.bf16.mxu0 0
    %6030 = vmatpush1.bf16.msra.mxu0 0
    %6031 = vmatprep.subr.bf16.mxu0 0
    %6032 = vmatpush1.bf16.msra.mxu0 0
    %6033 = vmatprep.subr.bf16.mxu0 0
    %6034 = vmatpush1.bf16.msra.mxu0 0
    %6035 = vmatprep.subr.bf16.mxu0 0
    %6036 = vmatpush1.bf16.msra.mxu0 0
    %6037 = vmatprep.subr.bf16.mxu0 0
    %6038 = vmatpush1.bf16.msra.mxu0 0
    %6039 = vmatprep.subr.bf16.mxu0 0
    %6040 = vmatpush1.bf16.msra.mxu0 0
    %6041 = vmatprep.subr.bf16.mxu0 0
    %6042 = vmatpush1.bf16.msra.mxu0 0
    %6043 = vmatprep.subr.bf16.mxu0 0
    %6044 = vmatpush1.bf16.msra.mxu0 0
    %6045 = vmatprep.mubr.bf16.mxu0 0
    %6046 = vmatmul.mubr.bf16.gmra.mrb[0].mxu0 %v5881
    %v6047 = vpop.f32.mrb[0].mxu0
    %v6048 = vadd.f32 0.0, %v6047
    %v6049 = vpop.f32.mrb[0].mxu0
    %v6050 = vadd.f32 0.0, %v6049
    %v6051 = vpop.f32.mrb[0].mxu0
    %v6052 = vpop.f32.mrb[0].mxu0
    %6053 = vdwg.mxu0
    %6054 = vmatprep.subr.bf16.mxu0 %v5905
    %6055 = vmatpush1.bf16.msra.mxu0 %v5902
    %6056 = vmatprep.subr.bf16.mxu0 0
    %6057 = vmatpush1.bf16.msra.mxu0 0
    %6058 = vmatprep.subr.bf16.mxu0 0
    %6059 = vmatpush1.bf16.msra.mxu0 0
    %6060 = vmatprep.subr.bf16.mxu0 0
    %6061 = vmatpush1.bf16.msra.mxu0 0
    %6062 = vmatprep.subr.bf16.mxu0 0
    %6063 = vmatpush1.bf16.msra.mxu0 0
    %6064 = vmatprep.subr.bf16.mxu0 0
    %6065 = vmatpush1.bf16.msra.mxu0 0
    %6066 = vmatprep.subr.bf16.mxu0 0
    %6067 = vmatpush1.bf16.msra.mxu0 0
    %6068 = vmatprep.subr.bf16.mxu0 0
    %6069 = vmatpush1.bf16.msra.mxu0 0
    %6070 = vmatprep.subr.bf16.mxu0 0
    %6071 = vmatpush1.bf16.msra.mxu0 0
    %6072 = vmatprep.subr.bf16.mxu0 0
    %6073 = vmatpush1.bf16.msra.mxu0 0
    %6074 = vmatprep.subr.bf16.mxu0 0
    %6075 = vmatpush1.bf16.msra.mxu0 0
    %6076 = vmatprep.subr.bf16.mxu0 0
    %6077 = vmatpush1.bf16.msra.mxu0 0
    %6078 = vmatprep.subr.bf16.mxu0 0
    %6079 = vmatpush1.bf16.msra.mxu0 0
    %6080 = vmatprep.subr.bf16.mxu0 0
    %6081 = vmatpush1.bf16.msra.mxu0 0
    %6082 = vmatprep.subr.bf16.mxu0 0
    %6083 = vmatpush1.bf16.msra.mxu0 0
    %6084 = vmatprep.subr.bf16.mxu0 0
    %6085 = vmatpush1.bf16.msra.mxu0 0
    %6086 = vmatprep.mubr.bf16.mxu0 0
    %6087 = vmatmul.mubr.bf16.gmra.mrb[0].mxu0 %v5881
    %v6088 = vpop.f32.mrb[0].mxu0
    %v6089 = vadd.f32 0.0, %v6088
    %v6090 = vpop.f32.mrb[0].mxu0
    %v6091 = vadd.f32 0.0, %v6090
    %v6092 = vpop.f32.mrb[0].mxu0
    %v6093 = vpop.f32.mrb[0].mxu0
    %6094 = vdwg.mxu0
    %6095 = vmatprep.subr.bf16.mxu0 %v5911
    %6096 = vmatpush1.bf16.msra.mxu0 %v5908
    %6097 = vmatprep.subr.bf16.mxu0 0
    %6098 = vmatpush1.bf16.msra.mxu0 0
    %6099 = vmatprep.subr.bf16.mxu0 0
    %6100 = vmatpush1.bf16.msra.mxu0 0
    %6101 = vmatprep.subr.bf16.mxu0 0
    %6102 = vmatpush1.bf16.msra.mxu0 0
    %6103 = vmatprep.subr.bf16.mxu0 0
    %6104 = vmatpush1.bf16.msra.mxu0 0
    %6105 = vmatprep.subr.bf16.mxu0 0
    %6106 = vmatpush1.bf16.msra.mxu0 0
    %6107 = vmatprep.subr.bf16.mxu0 0
    %6108 = vmatpush1.bf16.msra.mxu0 0
    %6109 = vmatprep.subr.bf16.mxu0 0
    %6110 = vmatpush1.bf16.msra.mxu0 0
    %6111 = vmatprep.subr.bf16.mxu0 0
    %6112 = vmatpush1.bf16.msra.mxu0 0
    %6113 = vmatprep.subr.bf16.mxu0 0
    %6114 = vmatpush1.bf16.msra.mxu0 0
    %6115 = vmatprep.subr.bf16.mxu0 0
    %6116 = vmatpush1.bf16.msra.mxu0 0
    %6117 = vmatprep.subr.bf16.mxu0 0
    %6118 = vmatpush1.bf16.msra.mxu0 0
    %6119 = vmatprep.subr.bf16.mxu0 0
    %6120 = vmatpush1.bf16.msra.mxu0 0
    %6121 = vmatprep.subr.bf16.mxu0 0
    %6122 = vmatpush1.bf16.msra.mxu0 0
    %6123 = vmatprep.subr.bf16.mxu0 0
    %6124 = vmatpush1.bf16.msra.mxu0 0
    %6125 = vmatprep.subr.bf16.mxu0 0
    %6126 = vmatpush1.bf16.msra.mxu0 0
    %6127 = vmatprep.mubr.bf16.mxu0 0
    %6128 = vmatmul.mubr.bf16.gmra.mrb[0].mxu0 %v5881
    %v6129 = vpop.f32.mrb[0].mxu0
    %v6130 = vadd.f32 0.0, %v6129
    %v6131 = vpop.f32.mrb[0].mxu0
    %v6132 = vadd.f32 0.0, %v6131
    %v6133 = vpop.f32.mrb[0].mxu0
    %v6134 = vpop.f32.mrb[0].mxu0
    %6135 = vdwg.mxu0
    %6136 = vmatprep.subr.bf16.mxu0 %v5917
    %6137 = vmatpush1.bf16.msra.mxu0 %v5914
    %6138 = vmatprep.subr.bf16.mxu0 0
    %6139 = vmatpush1.bf16.msra.mxu0 0
    %6140 = vmatprep.subr.bf16.mxu0 0
    %6141 = vmatpush1.bf16.msra.mxu0 0
    %6142 = vmatprep.subr.bf16.mxu0 0
    %6143 = vmatpush1.bf16.msra.mxu0 0
    %6144 = vmatprep.subr.bf16.mxu0 0
    %6145 = vmatpush1.bf16.msra.mxu0 0
    %6146 = vmatprep.subr.bf16.mxu0 0
    %6147 = vmatpush1.bf16.msra.mxu0 0
    %6148 = vmatprep.subr.bf16.mxu0 0
    %6149 = vmatpush1.bf16.msra.mxu0 0
    %6150 = vmatprep.subr.bf16.mxu0 0
    %6151 = vmatpush1.bf16.msra.mxu0 0
    %6152 = vmatprep.subr.bf16.mxu0 0
    %6153 = vmatpush1.bf16.msra.mxu0 0
    %6154 = vmatprep.subr.bf16.mxu0 0
    %6155 = vmatpush1.bf16.msra.mxu0 0
    %6156 = vmatprep.subr.bf16.mxu0 0
    %6157 = vmatpush1.bf16.msra.mxu0 0
    %6158 = vmatprep.subr.bf16.mxu0 0
    %6159 = vmatpush1.bf16.msra.mxu0 0
    %6160 = vmatprep.subr.bf16.mxu0 0
    %6161 = vmatpush1.bf16.msra.mxu0 0
    %6162 = vmatprep.subr.bf16.mxu0 0
    %6163 = vmatpush1.bf16.msra.mxu0 0
    %6164 = vmatprep.subr.bf16.mxu0 0
    %6165 = vmatpush1.bf16.msra.mxu0 0
    %6166 = vmatprep.subr.bf16.mxu0 0
    %6167 = vmatpush1.bf16.msra.mxu0 0
    %6168 = vmatprep.mubr.bf16.mxu0 0
    %6169 = vmatmul.mubr.bf16.gmra.mrb[0].mxu0 %v5881
    %v6170 = vpop.f32.mrb[0].mxu0
    %v6171 = vadd.f32 0.0, %v6170
    %v6172 = vpop.f32.mrb[0].mxu0
    %v6173 = vadd.f32 0.0, %v6172
    %v6174 = vpop.f32.mrb[0].mxu0
    %v6175 = vpop.f32.mrb[0].mxu0
    %6176 = vdwg.mxu0
    %6177 = vmatprep.subr.bf16.mxu0 %v5923
    %6178 = vmatpush1.bf16.msra.mxu0 %v5920
    %6179 = vmatprep.subr.bf16.mxu0 0
    %6180 = vmatpush1.bf16.msra.mxu0 0
    %6181 = vmatprep.subr.bf16.mxu0 0
    %6182 = vmatpush1.bf16.msra.mxu0 0
    %6183 = vmatprep.subr.bf16.mxu0 0
    %6184 = vmatpush1.bf16.msra.mxu0 0
    %6185 = vmatprep.subr.bf16.mxu0 0
    %6186 = vmatpush1.bf16.msra.mxu0 0
    %6187 = vmatprep.subr.bf16.mxu0 0
    %6188 = vmatpush1.bf16.msra.mxu0 0
    %6189 = vmatprep.subr.bf16.mxu0 0
    %6190 = vmatpush1.bf16.msra.mxu0 0
    %6191 = vmatprep.subr.bf16.mxu0 0
    %6192 = vmatpush1.bf16.msra.mxu0 0
    %6193 = vmatprep.subr.bf16.mxu0 0
    %6194 = vmatpush1.bf16.msra.mxu0 0
    %6195 = vmatprep.subr.bf16.mxu0 0
    %6196 = vmatpush1.bf16.msra.mxu0 0
    %6197 = vmatprep.subr.bf16.mxu0 0
    %6198 = vmatpush1.bf16.msra.mxu0 0
    %6199 = vmatprep.subr.bf16.mxu0 0
    %6200 = vmatpush1.bf16.msra.mxu0 0
    %6201 = vmatprep.subr.bf16.mxu0 0
    %6202 = vmatpush1.bf16.msra.mxu0 0
    %6203 = vmatprep.subr.bf16.mxu0 0
    %6204 = vmatpush1.bf16.msra.mxu0 0
    %6205 = vmatprep.subr.bf16.mxu0 0
    %6206 = vmatpush1.bf16.msra.mxu0 0
    %6207 = vmatprep.subr.bf16.mxu0 0
    %6208 = vmatpush1.bf16.msra.mxu0 0
    %6209 = vmatprep.mubr.bf16.mxu0 0
    %6210 = vmatmul.mubr.bf16.gmra.mrb[0].mxu0 %v5881
    %v6211 = vpop.f32.mrb[0].mxu0
    %v6212 = vadd.f32 0.0, %v6211
    %v6213 = vpop.f32.mrb[0].mxu0
    %v6214 = vadd.f32 0.0, %v6213
    %v6215 = vpop.f32.mrb[0].mxu0
    %v6216 = vpop.f32.mrb[0].mxu0
    %6217 = vdwg.mxu0
    %6218 = vmatprep.subr.bf16.mxu0 %v5929
    %6219 = vmatpush1.bf16.msra.mxu0 %v5926
    %6220 = vmatprep.subr.bf16.mxu0 0
    %6221 = vmatpush1.bf16.msra.mxu0 0
    %6222 = vmatprep.subr.bf16.mxu0 0
    %6223 = vmatpush1.bf16.msra.mxu0 0
    %6224 = vmatprep.subr.bf16.mxu0 0
    %6225 = vmatpush1.bf16.msra.mxu0 0
    %6226 = vmatprep.subr.bf16.mxu0 0
    %6227 = vmatpush1.bf16.msra.mxu0 0
    %6228 = vmatprep.subr.bf16.mxu0 0
    %6229 = vmatpush1.bf16.msra.mxu0 0
    %6230 = vmatprep.subr.bf16.mxu0 0
    %6231 = vmatpush1.bf16.msra.mxu0 0
    %6232 = vmatprep.subr.bf16.mxu0 0
    %6233 = vmatpush1.bf16.msra.mxu0 0
    %6234 = vmatprep.subr.bf16.mxu0 0
    %6235 = vmatpush1.bf16.msra.mxu0 0
    %6236 = vmatprep.subr.bf16.mxu0 0
    %6237 = vmatpush1.bf16.msra.mxu0 0
    %6238 = vmatprep.subr.bf16.mxu0 0
    %6239 = vmatpush1.bf16.msra.mxu0 0
    %6240 = vmatprep.subr.bf16.mxu0 0
    %6241 = vmatpush1.bf16.msra.mxu0 0
    %6242 = vmatprep.subr.bf16.mxu0 0
    %6243 = vmatpush1.bf16.msra.mxu0 0
    %6244 = vmatprep.subr.bf16.mxu0 0
    %6245 = vmatpush1.bf16.msra.mxu0 0
    %6246 = vmatprep.subr.bf16.mxu0 0
    %6247 = vmatpush1.bf16.msra.mxu0 0
    %6248 = vmatprep.subr.bf16.mxu0 0
    %6249 = vmatpush1.bf16.msra.mxu0 0
    %6250 = vmatprep.mubr.bf16.mxu0 0
    %6251 = vmatmul.mubr.bf16.gmra.mrb[0].mxu0 %v5881
    %v6252 = vpop.f32.mrb[0].mxu0
    %v6253 = vadd.f32 0.0, %v6252
    %v6254 = vpop.f32.mrb[0].mxu0
    %v6255 = vadd.f32 0.0, %v6254
    %v6256 = vpop.f32.mrb[0].mxu0
    %v6257 = vpop.f32.mrb[0].mxu0
    %6258 = vdwg.mxu0
    %v6259 = vmul.f32 %v5966, %v943
    %v6260 = vmul.f32 %v5968, %v947
    %v6261 = vmul.f32 %v6007, %v951
    %v6262 = vmul.f32 %v6009, %v955
    %v6263 = vmul.f32 %v6048, %v959
    %v6264 = vmul.f32 %v6050, %v963
    %v6265 = vmul.f32 %v6089, %v967
    %v6266 = vmul.f32 %v6091, %v971
    %v6267 = vmul.f32 %v6130, %v975
    %v6268 = vmul.f32 %v6132, %v979
    %v6269 = vmul.f32 %v6171, %v983
    %v6270 = vmul.f32 %v6173, %v987
    %v6271 = vmul.f32 %v6212, %v991
    %v6272 = vmul.f32 %v6214, %v995
    %v6273 = vmul.f32 %v6253, %v999
    %v6274 = vmul.f32 %v6255, %v1003
    %v6275 = vadd.f32 %v6259, 0.0
    %v6276 = vadd.f32 %v6260, 0.0
    %v6277 = vadd.f32 %v6261, 0.0
    %v6278 = vadd.f32 %v6262, 0.0
    %v6279 = vadd.f32 %v6263, 0.0
    %v6280 = vadd.f32 %v6264, 0.0
    %v6281 = vadd.f32 %v6265, 0.0
    %v6282 = vadd.f32 %v6266, 0.0
    %v6283 = vadd.f32 %v6267, 0.0
    %v6284 = vadd.f32 %v6268, 0.0
    %v6285 = vadd.f32 %v6269, 0.0
    %v6286 = vadd.f32 %v6270, 0.0
    %v6287 = vadd.f32 %v6271, 0.0
    %v6288 = vadd.f32 %v6272, 0.0
    %v6289 = vadd.f32 %v6273, 0.0
    %v6290 = vadd.f32 %v6274, 0.0
    %s6291 = scalar_lea.vmem %s7, 2
    %v6292 = vld [vmem:[%s6291] sm:$0x3]
    %6293 = vrot.lane.b32.xlu0 %v5812, 32
    %v6294 = vpop.permute.xlu0 %6293
    %6295 = vrot.lane.b32.xlu0 %v5813, 32
    %v6296 = vpop.permute.xlu0 %6295
    %6297 = vrot.lane.b32.xlu0 %v5814, 32
    %v6298 = vpop.permute.xlu0 %6297
    %6299 = vrot.lane.b32.xlu0 %v5815, 32
    %v6300 = vpop.permute.xlu0 %6299
    %6301 = vrot.lane.b32.xlu0 %v5816, 32
    %v6302 = vpop.permute.xlu0 %6301
    %6303 = vrot.lane.b32.xlu0 %v5817, 32
    %v6304 = vpop.permute.xlu0 %6303
    %6305 = vrot.lane.b32.xlu0 %v5818, 32
    %v6306 = vpop.permute.xlu0 %6305
    %6307 = vrot.lane.b32.xlu0 %v5819, 32
    %v6308 = vpop.permute.xlu0 %6307
    %6309 = vrot.lane.b32.xlu0 %v5820, 32
    %v6310 = vpop.permute.xlu0 %6309
    %6311 = vrot.lane.b32.xlu0 %v5821, 32
    %v6312 = vpop.permute.xlu0 %6311
    %6313 = vrot.lane.b32.xlu0 %v5822, 32
    %v6314 = vpop.permute.xlu0 %6313
    %6315 = vrot.lane.b32.xlu0 %v5823, 32
    %v6316 = vpop.permute.xlu0 %6315
    %6317 = vrot.lane.b32.xlu0 %v5824, 32
    %v6318 = vpop.permute.xlu0 %6317
    %6319 = vrot.lane.b32.xlu0 %v5825, 32
    %v6320 = vpop.permute.xlu0 %6319
    %6321 = vrot.lane.b32.xlu0 %v5826, 32
    %v6322 = vpop.permute.xlu0 %6321
    %6323 = vrot.lane.b32.xlu0 %v5827, 32
    %v6324 = vpop.permute.xlu0 %6323
    %6325 = vrot.lane.b32.xlu0 %v5828, 32
    %v6326 = vpop.permute.xlu0 %6325
    %v6327 = vsel %vm1088, %v6294, %v6296
    %v6328 = vsel %vm1088, %v6296, %v6298
    %v6329 = vsel %vm1088, %v6298, %v6300
    %v6330 = vsel %vm1088, %v6300, %v6302
    %v6331 = vsel %vm1088, %v6302, %v6304
    %v6332 = vsel %vm1088, %v6304, %v6306
    %v6333 = vsel %vm1088, %v6306, %v6308
    %v6334 = vsel %vm1088, %v6308, %v6310
    %v6335 = vsel %vm1088, %v6310, %v6312
    %v6336 = vsel %vm1088, %v6312, %v6314
    %v6337 = vsel %vm1088, %v6314, %v6316
    %v6338 = vsel %vm1088, %v6316, %v6318
    %v6339 = vsel %vm1088, %v6318, %v6320
    %v6340 = vsel %vm1088, %v6320, %v6322
    %v6341 = vsel %vm1088, %v6322, %v6324
    %v6342 = vsel %vm1088, %v6324, %v6326
    %v6344 = vsel %vm5879, %v6292, 0
    %v6347 = vsel %vm208, %v6327, 0
    %v6350 = vsel %vm208, %v6328, 0
    %v6353 = vsel %vm208, %v6329, 0
    %v6356 = vsel %vm208, %v6330, 0
    %v6359 = vsel %vm208, %v6331, 0
    %v6362 = vsel %vm208, %v6332, 0
    %v6365 = vsel %vm208, %v6333, 0
    %v6368 = vsel %vm208, %v6334, 0
    %v6371 = vsel %vm208, %v6335, 0
    %v6374 = vsel %vm208, %v6336, 0
    %v6377 = vsel %vm208, %v6337, 0
    %v6380 = vsel %vm208, %v6338, 0
    %v6383 = vsel %vm208, %v6339, 0
    %v6386 = vsel %vm208, %v6340, 0
    %v6389 = vsel %vm208, %v6341, 0
    %v6392 = vsel %vm208, %v6342, 0
    %6394 = vmatprep.subr.bf16.mxu0 %v6350
    %6395 = vmatpush1.bf16.msra.mxu0 %v6347
    %6396 = vmatprep.subr.bf16.mxu0 0
    %6397 = vmatpush1.bf16.msra.mxu0 0
    %6398 = vmatprep.subr.bf16.mxu0 0
    %6399 = vmatpush1.bf16.msra.mxu0 0
    %6400 = vmatprep.subr.bf16.mxu0 0
    %6401 = vmatpush1.bf16.msra.mxu0 0
    %6402 = vmatprep.subr.bf16.mxu0 0
    %6403 = vmatpush1.bf16.msra.mxu0 0
    %6404 = vmatprep.subr.bf16.mxu0 0
    %6405 = vmatpush1.bf16.msra.mxu0 0
    %6406 = vmatprep.subr.bf16.mxu0 0
    %6407 = vmatpush1.bf16.msra.mxu0 0
    %6408 = vmatprep.subr.bf16.mxu0 0
    %6409 = vmatpush1.bf16.msra.mxu0 0
    %6410 = vmatprep.subr.bf16.mxu0 0
    %6411 = vmatpush1.bf16.msra.mxu0 0
    %6412 = vmatprep.subr.bf16.mxu0 0
    %6413 = vmatpush1.bf16.msra.mxu0 0
    %6414 = vmatprep.subr.bf16.mxu0 0
    %6415 = vmatpush1.bf16.msra.mxu0 0
    %6416 = vmatprep.subr.bf16.mxu0 0
    %6417 = vmatpush1.bf16.msra.mxu0 0
    %6418 = vmatprep.subr.bf16.mxu0 0
    %6419 = vmatpush1.bf16.msra.mxu0 0
    %6420 = vmatprep.subr.bf16.mxu0 0
    %6421 = vmatpush1.bf16.msra.mxu0 0
    %6422 = vmatprep.subr.bf16.mxu0 0
    %6423 = vmatpush1.bf16.msra.mxu0 0
    %6424 = vmatprep.subr.bf16.mxu0 0
    %6425 = vmatpush1.bf16.msra.mxu0 0
    %6426 = vmatprep.mubr.bf16.mxu0 0
    %6427 = vmatmul.mubr.bf16.gmra.mrb[0].mxu0 %v6344
    %v6428 = vpop.f32.mrb[0].mxu0
    %v6429 = vadd.f32 0.0, %v6428
    %v6430 = vpop.f32.mrb[0].mxu0
    %v6431 = vadd.f32 0.0, %v6430
    %v6432 = vpop.f32.mrb[0].mxu0
    %v6433 = vpop.f32.mrb[0].mxu0
    %6434 = vdwg.mxu0
    %6435 = vmatprep.subr.bf16.mxu0 %v6356
    %6436 = vmatpush1.bf16.msra.mxu0 %v6353
    %6437 = vmatprep.subr.bf16.mxu0 0
    %6438 = vmatpush1.bf16.msra.mxu0 0
    %6439 = vmatprep.subr.bf16.mxu0 0
    %6440 = vmatpush1.bf16.msra.mxu0 0
    %6441 = vmatprep.subr.bf16.mxu0 0
    %6442 = vmatpush1.bf16.msra.mxu0 0
    %6443 = vmatprep.subr.bf16.mxu0 0
    %6444 = vmatpush1.bf16.msra.mxu0 0
    %6445 = vmatprep.subr.bf16.mxu0 0
    %6446 = vmatpush1.bf16.msra.mxu0 0
    %6447 = vmatprep.subr.bf16.mxu0 0
    %6448 = vmatpush1.bf16.msra.mxu0 0
    %6449 = vmatprep.subr.bf16.mxu0 0
    %6450 = vmatpush1.bf16.msra.mxu0 0
    %6451 = vmatprep.subr.bf16.mxu0 0
    %6452 = vmatpush1.bf16.msra.mxu0 0
    %6453 = vmatprep.subr.bf16.mxu0 0
    %6454 = vmatpush1.bf16.msra.mxu0 0
    %6455 = vmatprep.subr.bf16.mxu0 0
    %6456 = vmatpush1.bf16.msra.mxu0 0
    %6457 = vmatprep.subr.bf16.mxu0 0
    %6458 = vmatpush1.bf16.msra.mxu0 0
    %6459 = vmatprep.subr.bf16.mxu0 0
    %6460 = vmatpush1.bf16.msra.mxu0 0
    %6461 = vmatprep.subr.bf16.mxu0 0
    %6462 = vmatpush1.bf16.msra.mxu0 0
    %6463 = vmatprep.subr.bf16.mxu0 0
    %6464 = vmatpush1.bf16.msra.mxu0 0
    %6465 = vmatprep.subr.bf16.mxu0 0
    %6466 = vmatpush1.bf16.msra.mxu0 0
    %6467 = vmatprep.mubr.bf16.mxu0 0
    %6468 = vmatmul.mubr.bf16.gmra.mrb[0].mxu0 %v6344
    %v6469 = vpop.f32.mrb[0].mxu0
    %v6470 = vadd.f32 0.0, %v6469
    %v6471 = vpop.f32.mrb[0].mxu0
    %v6472 = vadd.f32 0.0, %v6471
    %v6473 = vpop.f32.mrb[0].mxu0
    %v6474 = vpop.f32.mrb[0].mxu0
    %6475 = vdwg.mxu0
    %6476 = vmatprep.subr.bf16.mxu0 %v6362
    %6477 = vmatpush1.bf16.msra.mxu0 %v6359
    %6478 = vmatprep.subr.bf16.mxu0 0
    %6479 = vmatpush1.bf16.msra.mxu0 0
    %6480 = vmatprep.subr.bf16.mxu0 0
    %6481 = vmatpush1.bf16.msra.mxu0 0
    %6482 = vmatprep.subr.bf16.mxu0 0
    %6483 = vmatpush1.bf16.msra.mxu0 0
    %6484 = vmatprep.subr.bf16.mxu0 0
    %6485 = vmatpush1.bf16.msra.mxu0 0
    %6486 = vmatprep.subr.bf16.mxu0 0
    %6487 = vmatpush1.bf16.msra.mxu0 0
    %6488 = vmatprep.subr.bf16.mxu0 0
    %6489 = vmatpush1.bf16.msra.mxu0 0
    %6490 = vmatprep.subr.bf16.mxu0 0
    %6491 = vmatpush1.bf16.msra.mxu0 0
    %6492 = vmatprep.subr.bf16.mxu0 0
    %6493 = vmatpush1.bf16.msra.mxu0 0
    %6494 = vmatprep.subr.bf16.mxu0 0
    %6495 = vmatpush1.bf16.msra.mxu0 0
    %6496 = vmatprep.subr.bf16.mxu0 0
    %6497 = vmatpush1.bf16.msra.mxu0 0
    %6498 = vmatprep.subr.bf16.mxu0 0
    %6499 = vmatpush1.bf16.msra.mxu0 0
    %6500 = vmatprep.subr.bf16.mxu0 0
    %6501 = vmatpush1.bf16.msra.mxu0 0
    %6502 = vmatprep.subr.bf16.mxu0 0
    %6503 = vmatpush1.bf16.msra.mxu0 0
    %6504 = vmatprep.subr.bf16.mxu0 0
    %6505 = vmatpush1.bf16.msra.mxu0 0
    %6506 = vmatprep.subr.bf16.mxu0 0
    %6507 = vmatpush1.bf16.msra.mxu0 0
    %6508 = vmatprep.mubr.bf16.mxu0 0
    %6509 = vmatmul.mubr.bf16.gmra.mrb[0].mxu0 %v6344
    %v6510 = vpop.f32.mrb[0].mxu0
    %v6511 = vadd.f32 0.0, %v6510
    %v6512 = vpop.f32.mrb[0].mxu0
    %v6513 = vadd.f32 0.0, %v6512
    %v6514 = vpop.f32.mrb[0].mxu0
    %v6515 = vpop.f32.mrb[0].mxu0
    %6516 = vdwg.mxu0
    %6517 = vmatprep.subr.bf16.mxu0 %v6368
    %6518 = vmatpush1.bf16.msra.mxu0 %v6365
    %6519 = vmatprep.subr.bf16.mxu0 0
    %6520 = vmatpush1.bf16.msra.mxu0 0
    %6521 = vmatprep.subr.bf16.mxu0 0
    %6522 = vmatpush1.bf16.msra.mxu0 0
    %6523 = vmatprep.subr.bf16.mxu0 0
    %6524 = vmatpush1.bf16.msra.mxu0 0
    %6525 = vmatprep.subr.bf16.mxu0 0
    %6526 = vmatpush1.bf16.msra.mxu0 0
    %6527 = vmatprep.subr.bf16.mxu0 0
    %6528 = vmatpush1.bf16.msra.mxu0 0
    %6529 = vmatprep.subr.bf16.mxu0 0
    %6530 = vmatpush1.bf16.msra.mxu0 0
    %6531 = vmatprep.subr.bf16.mxu0 0
    %6532 = vmatpush1.bf16.msra.mxu0 0
    %6533 = vmatprep.subr.bf16.mxu0 0
    %6534 = vmatpush1.bf16.msra.mxu0 0
    %6535 = vmatprep.subr.bf16.mxu0 0
    %6536 = vmatpush1.bf16.msra.mxu0 0
    %6537 = vmatprep.subr.bf16.mxu0 0
    %6538 = vmatpush1.bf16.msra.mxu0 0
    %6539 = vmatprep.subr.bf16.mxu0 0
    %6540 = vmatpush1.bf16.msra.mxu0 0
    %6541 = vmatprep.subr.bf16.mxu0 0
    %6542 = vmatpush1.bf16.msra.mxu0 0
    %6543 = vmatprep.subr.bf16.mxu0 0
    %6544 = vmatpush1.bf16.msra.mxu0 0
    %6545 = vmatprep.subr.bf16.mxu0 0
    %6546 = vmatpush1.bf16.msra.mxu0 0
    %6547 = vmatprep.subr.bf16.mxu0 0
    %6548 = vmatpush1.bf16.msra.mxu0 0
    %6549 = vmatprep.mubr.bf16.mxu0 0
    %6550 = vmatmul.mubr.bf16.gmra.mrb[0].mxu0 %v6344
    %v6551 = vpop.f32.mrb[0].mxu0
    %v6552 = vadd.f32 0.0, %v6551
    %v6553 = vpop.f32.mrb[0].mxu0
    %v6554 = vadd.f32 0.0, %v6553
    %v6555 = vpop.f32.mrb[0].mxu0
    %v6556 = vpop.f32.mrb[0].mxu0
    %6557 = vdwg.mxu0
    %6558 = vmatprep.subr.bf16.mxu0 %v6374
    %6559 = vmatpush1.bf16.msra.mxu0 %v6371
    %6560 = vmatprep.subr.bf16.mxu0 0
    %6561 = vmatpush1.bf16.msra.mxu0 0
    %6562 = vmatprep.subr.bf16.mxu0 0
    %6563 = vmatpush1.bf16.msra.mxu0 0
    %6564 = vmatprep.subr.bf16.mxu0 0
    %6565 = vmatpush1.bf16.msra.mxu0 0
    %6566 = vmatprep.subr.bf16.mxu0 0
    %6567 = vmatpush1.bf16.msra.mxu0 0
    %6568 = vmatprep.subr.bf16.mxu0 0
    %6569 = vmatpush1.bf16.msra.mxu0 0
    %6570 = vmatprep.subr.bf16.mxu0 0
    %6571 = vmatpush1.bf16.msra.mxu0 0
    %6572 = vmatprep.subr.bf16.mxu0 0
    %6573 = vmatpush1.bf16.msra.mxu0 0
    %6574 = vmatprep.subr.bf16.mxu0 0
    %6575 = vmatpush1.bf16.msra.mxu0 0
    %6576 = vmatprep.subr.bf16.mxu0 0
    %6577 = vmatpush1.bf16.msra.mxu0 0
    %6578 = vmatprep.subr.bf16.mxu0 0
    %6579 = vmatpush1.bf16.msra.mxu0 0
    %6580 = vmatprep.subr.bf16.mxu0 0
    %6581 = vmatpush1.bf16.msra.mxu0 0
    %6582 = vmatprep.subr.bf16.mxu0 0
    %6583 = vmatpush1.bf16.msra.mxu0 0
    %6584 = vmatprep.subr.bf16.mxu0 0
    %6585 = vmatpush1.bf16.msra.mxu0 0
    %6586 = vmatprep.subr.bf16.mxu0 0
    %6587 = vmatpush1.bf16.msra.mxu0 0
    %6588 = vmatprep.subr.bf16.mxu0 0
    %6589 = vmatpush1.bf16.msra.mxu0 0
    %6590 = vmatprep.mubr.bf16.mxu0 0
    %6591 = vmatmul.mubr.bf16.gmra.mrb[0].mxu0 %v6344
    %v6592 = vpop.f32.mrb[0].mxu0
    %v6593 = vadd.f32 0.0, %v6592
    %v6594 = vpop.f32.mrb[0].mxu0
    %v6595 = vadd.f32 0.0, %v6594
    %v6596 = vpop.f32.mrb[0].mxu0
    %v6597 = vpop.f32.mrb[0].mxu0
    %6598 = vdwg.mxu0
    %6599 = vmatprep.subr.bf16.mxu0 %v6380
    %6600 = vmatpush1.bf16.msra.mxu0 %v6377
    %6601 = vmatprep.subr.bf16.mxu0 0
    %6602 = vmatpush1.bf16.msra.mxu0 0
    %6603 = vmatprep.subr.bf16.mxu0 0
    %6604 = vmatpush1.bf16.msra.mxu0 0
    %6605 = vmatprep.subr.bf16.mxu0 0
    %6606 = vmatpush1.bf16.msra.mxu0 0
    %6607 = vmatprep.subr.bf16.mxu0 0
    %6608 = vmatpush1.bf16.msra.mxu0 0
    %6609 = vmatprep.subr.bf16.mxu0 0
    %6610 = vmatpush1.bf16.msra.mxu0 0
    %6611 = vmatprep.subr.bf16.mxu0 0
    %6612 = vmatpush1.bf16.msra.mxu0 0
    %6613 = vmatprep.subr.bf16.mxu0 0
    %6614 = vmatpush1.bf16.msra.mxu0 0
    %6615 = vmatprep.subr.bf16.mxu0 0
    %6616 = vmatpush1.bf16.msra.mxu0 0
    %6617 = vmatprep.subr.bf16.mxu0 0
    %6618 = vmatpush1.bf16.msra.mxu0 0
    %6619 = vmatprep.subr.bf16.mxu0 0
    %6620 = vmatpush1.bf16.msra.mxu0 0
    %6621 = vmatprep.subr.bf16.mxu0 0
    %6622 = vmatpush1.bf16.msra.mxu0 0
    %6623 = vmatprep.subr.bf16.mxu0 0
    %6624 = vmatpush1.bf16.msra.mxu0 0
    %6625 = vmatprep.subr.bf16.mxu0 0
    %6626 = vmatpush1.bf16.msra.mxu0 0
    %6627 = vmatprep.subr.bf16.mxu0 0
    %6628 = vmatpush1.bf16.msra.mxu0 0
    %6629 = vmatprep.subr.bf16.mxu0 0
    %6630 = vmatpush1.bf16.msra.mxu0 0
    %6631 = vmatprep.mubr.bf16.mxu0 0
    %6632 = vmatmul.mubr.bf16.gmra.mrb[0].mxu0 %v6344
    %v6633 = vpop.f32.mrb[0].mxu0
    %v6634 = vadd.f32 0.0, %v6633
    %v6635 = vpop.f32.mrb[0].mxu0
    %v6636 = vadd.f32 0.0, %v6635
    %v6637 = vpop.f32.mrb[0].mxu0
    %v6638 = vpop.f32.mrb[0].mxu0
    %6639 = vdwg.mxu0
    %6640 = vmatprep.subr.bf16.mxu0 %v6386
    %6641 = vmatpush1.bf16.msra.mxu0 %v6383
    %6642 = vmatprep.subr.bf16.mxu0 0
    %6643 = vmatpush1.bf16.msra.mxu0 0
    %6644 = vmatprep.subr.bf16.mxu0 0
    %6645 = vmatpush1.bf16.msra.mxu0 0
    %6646 = vmatprep.subr.bf16.mxu0 0
    %6647 = vmatpush1.bf16.msra.mxu0 0
    %6648 = vmatprep.subr.bf16.mxu0 0
    %6649 = vmatpush1.bf16.msra.mxu0 0
    %6650 = vmatprep.subr.bf16.mxu0 0
    %6651 = vmatpush1.bf16.msra.mxu0 0
    %6652 = vmatprep.subr.bf16.mxu0 0
    %6653 = vmatpush1.bf16.msra.mxu0 0
    %6654 = vmatprep.subr.bf16.mxu0 0
    %6655 = vmatpush1.bf16.msra.mxu0 0
    %6656 = vmatprep.subr.bf16.mxu0 0
    %6657 = vmatpush1.bf16.msra.mxu0 0
    %6658 = vmatprep.subr.bf16.mxu0 0
    %6659 = vmatpush1.bf16.msra.mxu0 0
    %6660 = vmatprep.subr.bf16.mxu0 0
    %6661 = vmatpush1.bf16.msra.mxu0 0
    %6662 = vmatprep.subr.bf16.mxu0 0
    %6663 = vmatpush1.bf16.msra.mxu0 0
    %6664 = vmatprep.subr.bf16.mxu0 0
    %6665 = vmatpush1.bf16.msra.mxu0 0
    %6666 = vmatprep.subr.bf16.mxu0 0
    %6667 = vmatpush1.bf16.msra.mxu0 0
    %6668 = vmatprep.subr.bf16.mxu0 0
    %6669 = vmatpush1.bf16.msra.mxu0 0
    %6670 = vmatprep.subr.bf16.mxu0 0
    %6671 = vmatpush1.bf16.msra.mxu0 0
    %6672 = vmatprep.mubr.bf16.mxu0 0
    %6673 = vmatmul.mubr.bf16.gmra.mrb[0].mxu0 %v6344
    %v6674 = vpop.f32.mrb[0].mxu0
    %v6675 = vadd.f32 0.0, %v6674
    %v6676 = vpop.f32.mrb[0].mxu0
    %v6677 = vadd.f32 0.0, %v6676
    %v6678 = vpop.f32.mrb[0].mxu0
    %v6679 = vpop.f32.mrb[0].mxu0
    %6680 = vdwg.mxu0
    %6681 = vmatprep.subr.bf16.mxu0 %v6392
    %6682 = vmatpush1.bf16.msra.mxu0 %v6389
    %6683 = vmatprep.subr.bf16.mxu0 0
    %6684 = vmatpush1.bf16.msra.mxu0 0
    %6685 = vmatprep.subr.bf16.mxu0 0
    %6686 = vmatpush1.bf16.msra.mxu0 0
    %6687 = vmatprep.subr.bf16.mxu0 0
    %6688 = vmatpush1.bf16.msra.mxu0 0
    %6689 = vmatprep.subr.bf16.mxu0 0
    %6690 = vmatpush1.bf16.msra.mxu0 0
    %6691 = vmatprep.subr.bf16.mxu0 0
    %6692 = vmatpush1.bf16.msra.mxu0 0
    %6693 = vmatprep.subr.bf16.mxu0 0
    %6694 = vmatpush1.bf16.msra.mxu0 0
    %6695 = vmatprep.subr.bf16.mxu0 0
    %6696 = vmatpush1.bf16.msra.mxu0 0
    %6697 = vmatprep.subr.bf16.mxu0 0
    %6698 = vmatpush1.bf16.msra.mxu0 0
    %6699 = vmatprep.subr.bf16.mxu0 0
    %6700 = vmatpush1.bf16.msra.mxu0 0
    %6701 = vmatprep.subr.bf16.mxu0 0
    %6702 = vmatpush1.bf16.msra.mxu0 0
    %6703 = vmatprep.subr.bf16.mxu0 0
    %6704 = vmatpush1.bf16.msra.mxu0 0
    %6705 = vmatprep.subr.bf16.mxu0 0
    %6706 = vmatpush1.bf16.msra.mxu0 0
    %6707 = vmatprep.subr.bf16.mxu0 0
    %6708 = vmatpush1.bf16.msra.mxu0 0
    %6709 = vmatprep.subr.bf16.mxu0 0
    %6710 = vmatpush1.bf16.msra.mxu0 0
    %6711 = vmatprep.subr.bf16.mxu0 0
    %6712 = vmatpush1.bf16.msra.mxu0 0
    %6713 = vmatprep.mubr.bf16.mxu0 0
    %6714 = vmatmul.mubr.bf16.gmra.mrb[0].mxu0 %v6344
    %v6715 = vpop.f32.mrb[0].mxu0
    %v6716 = vadd.f32 0.0, %v6715
    %v6717 = vpop.f32.mrb[0].mxu0
    %v6718 = vadd.f32 0.0, %v6717
    %v6719 = vpop.f32.mrb[0].mxu0
    %v6720 = vpop.f32.mrb[0].mxu0
    %6721 = vdwg.mxu0
    %v6722 = vmul.f32 %v6429, %v1489
    %v6723 = vmul.f32 %v6431, %v1493
    %v6724 = vmul.f32 %v6470, %v1497
    %v6725 = vmul.f32 %v6472, %v1501
    %v6726 = vmul.f32 %v6511, %v1505
    %v6727 = vmul.f32 %v6513, %v1509
    %v6728 = vmul.f32 %v6552, %v1513
    %v6729 = vmul.f32 %v6554, %v1517
    %v6730 = vmul.f32 %v6593, %v1521
    %v6731 = vmul.f32 %v6595, %v1525
    %v6732 = vmul.f32 %v6634, %v1529
    %v6733 = vmul.f32 %v6636, %v1533
    %v6734 = vmul.f32 %v6675, %v1537
    %v6735 = vmul.f32 %v6677, %v1541
    %v6736 = vmul.f32 %v6716, %v1545
    %v6737 = vmul.f32 %v6718, %v1549
    %v6738 = vadd.f32 %v6275, %v6722
    %v6739 = vadd.f32 %v6276, %v6723
    %v6740 = vadd.f32 %v6277, %v6724
    %v6741 = vadd.f32 %v6278, %v6725
    %v6742 = vadd.f32 %v6279, %v6726
    %v6743 = vadd.f32 %v6280, %v6727
    %v6744 = vadd.f32 %v6281, %v6728
    %v6745 = vadd.f32 %v6282, %v6729
    %v6746 = vadd.f32 %v6283, %v6730
    %v6747 = vadd.f32 %v6284, %v6731
    %v6748 = vadd.f32 %v6285, %v6732
    %v6749 = vadd.f32 %v6286, %v6733
    %v6750 = vadd.f32 %v6287, %v6734
    %v6751 = vadd.f32 %v6288, %v6735
    %v6752 = vadd.f32 %v6289, %v6736
    %v6753 = vadd.f32 %v6290, %v6737
    %s6754 = scalar_lea.vmem %s7, 4
    %v6755 = vld [vmem:[%s6754] sm:$0x3]
    %6756 = vrot.lane.b32.xlu0 %v5812, 31
    %v6757 = vpop.permute.xlu0 %6756
    %6758 = vrot.lane.b32.xlu0 %v5813, 31
    %v6759 = vpop.permute.xlu0 %6758
    %6760 = vrot.lane.b32.xlu0 %v5814, 31
    %v6761 = vpop.permute.xlu0 %6760
    %6762 = vrot.lane.b32.xlu0 %v5815, 31
    %v6763 = vpop.permute.xlu0 %6762
    %6764 = vrot.lane.b32.xlu0 %v5816, 31
    %v6765 = vpop.permute.xlu0 %6764
    %6766 = vrot.lane.b32.xlu0 %v5817, 31
    %v6767 = vpop.permute.xlu0 %6766
    %6768 = vrot.lane.b32.xlu0 %v5818, 31
    %v6769 = vpop.permute.xlu0 %6768
    %6770 = vrot.lane.b32.xlu0 %v5819, 31
    %v6771 = vpop.permute.xlu0 %6770
    %6772 = vrot.lane.b32.xlu0 %v5820, 31
    %v6773 = vpop.permute.xlu0 %6772
    %6774 = vrot.lane.b32.xlu0 %v5821, 31
    %v6775 = vpop.permute.xlu0 %6774
    %6776 = vrot.lane.b32.xlu0 %v5822, 31
    %v6777 = vpop.permute.xlu0 %6776
    %6778 = vrot.lane.b32.xlu0 %v5823, 31
    %v6779 = vpop.permute.xlu0 %6778
    %6780 = vrot.lane.b32.xlu0 %v5824, 31
    %v6781 = vpop.permute.xlu0 %6780
    %6782 = vrot.lane.b32.xlu0 %v5825, 31
    %v6783 = vpop.permute.xlu0 %6782
    %6784 = vrot.lane.b32.xlu0 %v5826, 31
    %v6785 = vpop.permute.xlu0 %6784
    %6786 = vrot.lane.b32.xlu0 %v5827, 31
    %v6787 = vpop.permute.xlu0 %6786
    %6788 = vrot.lane.b32.xlu0 %v5828, 31
    %v6789 = vpop.permute.xlu0 %6788
    %v6790 = vsel %vm1634, %v6757, %v6759
    %v6791 = vsel %vm1634, %v6759, %v6761
    %v6792 = vsel %vm1634, %v6761, %v6763
    %v6793 = vsel %vm1634, %v6763, %v6765
    %v6794 = vsel %vm1634, %v6765, %v6767
    %v6795 = vsel %vm1634, %v6767, %v6769
    %v6796 = vsel %vm1634, %v6769, %v6771
    %v6797 = vsel %vm1634, %v6771, %v6773
    %v6798 = vsel %vm1634, %v6773, %v6775
    %v6799 = vsel %vm1634, %v6775, %v6777
    %v6800 = vsel %vm1634, %v6777, %v6779
    %v6801 = vsel %vm1634, %v6779, %v6781
    %v6802 = vsel %vm1634, %v6781, %v6783
    %v6803 = vsel %vm1634, %v6783, %v6785
    %v6804 = vsel %vm1634, %v6785, %v6787
    %v6805 = vsel %vm1634, %v6787, %v6789
    %v6807 = vsel %vm5879, %v6755, 0
    %v6810 = vsel %vm208, %v6790, 0
    %v6813 = vsel %vm208, %v6791, 0
    %v6816 = vsel %vm208, %v6792, 0
    %v6819 = vsel %vm208, %v6793, 0
    %v6822 = vsel %vm208, %v6794, 0
    %v6825 = vsel %vm208, %v6795, 0
    %v6828 = vsel %vm208, %v6796, 0
    %v6831 = vsel %vm208, %v6797, 0
    %v6834 = vsel %vm208, %v6798, 0
    %v6837 = vsel %vm208, %v6799, 0
    %v6840 = vsel %vm208, %v6800, 0
    %v6843 = vsel %vm208, %v6801, 0
    %v6846 = vsel %vm208, %v6802, 0
    %v6849 = vsel %vm208, %v6803, 0
    %v6852 = vsel %vm208, %v6804, 0
    %v6855 = vsel %vm208, %v6805, 0
    %6857 = vmatprep.subr.bf16.mxu0 %v6813
    %6858 = vmatpush1.bf16.msra.mxu0 %v6810
    %6859 = vmatprep.subr.bf16.mxu0 0
    %6860 = vmatpush1.bf16.msra.mxu0 0
    %6861 = vmatprep.subr.bf16.mxu0 0
    %6862 = vmatpush1.bf16.msra.mxu0 0
    %6863 = vmatprep.subr.bf16.mxu0 0
    %6864 = vmatpush1.bf16.msra.mxu0 0
    %6865 = vmatprep.subr.bf16.mxu0 0
    %6866 = vmatpush1.bf16.msra.mxu0 0
    %6867 = vmatprep.subr.bf16.mxu0 0
    %6868 = vmatpush1.bf16.msra.mxu0 0
    %6869 = vmatprep.subr.bf16.mxu0 0
    %6870 = vmatpush1.bf16.msra.mxu0 0
    %6871 = vmatprep.subr.bf16.mxu0 0
    %6872 = vmatpush1.bf16.msra.mxu0 0
    %6873 = vmatprep.subr.bf16.mxu0 0
    %6874 = vmatpush1.bf16.msra.mxu0 0
    %6875 = vmatprep.subr.bf16.mxu0 0
    %6876 = vmatpush1.bf16.msra.mxu0 0
    %6877 = vmatprep.subr.bf16.mxu0 0
    %6878 = vmatpush1.bf16.msra.mxu0 0
    %6879 = vmatprep.subr.bf16.mxu0 0
    %6880 = vmatpush1.bf16.msra.mxu0 0
    %6881 = vmatprep.subr.bf16.mxu0 0
    %6882 = vmatpush1.bf16.msra.mxu0 0
    %6883 = vmatprep.subr.bf16.mxu0 0
    %6884 = vmatpush1.bf16.msra.mxu0 0
    %6885 = vmatprep.subr.bf16.mxu0 0
    %6886 = vmatpush1.bf16.msra.mxu0 0
    %6887 = vmatprep.subr.bf16.mxu0 0
    %6888 = vmatpush1.bf16.msra.mxu0 0
    %6889 = vmatprep.mubr.bf16.mxu0 0
    %6890 = vmatmul.mubr.bf16.gmra.mrb[0].mxu0 %v6807
    %v6891 = vpop.f32.mrb[0].mxu0
    %v6892 = vadd.f32 0.0, %v6891
    %v6893 = vpop.f32.mrb[0].mxu0
    %v6894 = vadd.f32 0.0, %v6893
    %v6895 = vpop.f32.mrb[0].mxu0
    %v6896 = vpop.f32.mrb[0].mxu0
    %6897 = vdwg.mxu0
    %6898 = vmatprep.subr.bf16.mxu0 %v6819
    %6899 = vmatpush1.bf16.msra.mxu0 %v6816
    %6900 = vmatprep.subr.bf16.mxu0 0
    %6901 = vmatpush1.bf16.msra.mxu0 0
    %6902 = vmatprep.subr.bf16.mxu0 0
    %6903 = vmatpush1.bf16.msra.mxu0 0
    %6904 = vmatprep.subr.bf16.mxu0 0
    %6905 = vmatpush1.bf16.msra.mxu0 0
    %6906 = vmatprep.subr.bf16.mxu0 0
    %6907 = vmatpush1.bf16.msra.mxu0 0
    %6908 = vmatprep.subr.bf16.mxu0 0
    %6909 = vmatpush1.bf16.msra.mxu0 0
    %6910 = vmatprep.subr.bf16.mxu0 0
    %6911 = vmatpush1.bf16.msra.mxu0 0
    %6912 = vmatprep.subr.bf16.mxu0 0
    %6913 = vmatpush1.bf16.msra.mxu0 0
    %6914 = vmatprep.subr.bf16.mxu0 0
    %6915 = vmatpush1.bf16.msra.mxu0 0
    %6916 = vmatprep.subr.bf16.mxu0 0
    %6917 = vmatpush1.bf16.msra.mxu0 0
    %6918 = vmatprep.subr.bf16.mxu0 0
    %6919 = vmatpush1.bf16.msra.mxu0 0
    %6920 = vmatprep.subr.bf16.mxu0 0
    %6921 = vmatpush1.bf16.msra.mxu0 0
    %6922 = vmatprep.subr.bf16.mxu0 0
    %6923 = vmatpush1.bf16.msra.mxu0 0
    %6924 = vmatprep.subr.bf16.mxu0 0
    %6925 = vmatpush1.bf16.msra.mxu0 0
    %6926 = vmatprep.subr.bf16.mxu0 0
    %6927 = vmatpush1.bf16.msra.mxu0 0
    %6928 = vmatprep.subr.bf16.mxu0 0
    %6929 = vmatpush1.bf16.msra.mxu0 0
    %6930 = vmatprep.mubr.bf16.mxu0 0
    %6931 = vmatmul.mubr.bf16.gmra.mrb[0].mxu0 %v6807
    %v6932 = vpop.f32.mrb[0].mxu0
    %v6933 = vadd.f32 0.0, %v6932
    %v6934 = vpop.f32.mrb[0].mxu0
    %v6935 = vadd.f32 0.0, %v6934
    %v6936 = vpop.f32.mrb[0].mxu0
    %v6937 = vpop.f32.mrb[0].mxu0
    %6938 = vdwg.mxu0
    %6939 = vmatprep.subr.bf16.mxu0 %v6825
    %6940 = vmatpush1.bf16.msra.mxu0 %v6822
    %6941 = vmatprep.subr.bf16.mxu0 0
    %6942 = vmatpush1.bf16.msra.mxu0 0
    %6943 = vmatprep.subr.bf16.mxu0 0
    %6944 = vmatpush1.bf16.msra.mxu0 0
    %6945 = vmatprep.subr.bf16.mxu0 0
    %6946 = vmatpush1.bf16.msra.mxu0 0
    %6947 = vmatprep.subr.bf16.mxu0 0
    %6948 = vmatpush1.bf16.msra.mxu0 0
    %6949 = vmatprep.subr.bf16.mxu0 0
    %6950 = vmatpush1.bf16.msra.mxu0 0
    %6951 = vmatprep.subr.bf16.mxu0 0
    %6952 = vmatpush1.bf16.msra.mxu0 0
    %6953 = vmatprep.subr.bf16.mxu0 0
    %6954 = vmatpush1.bf16.msra.mxu0 0
    %6955 = vmatprep.subr.bf16.mxu0 0
    %6956 = vmatpush1.bf16.msra.mxu0 0
    %6957 = vmatprep.subr.bf16.mxu0 0
    %6958 = vmatpush1.bf16.msra.mxu0 0
    %6959 = vmatprep.subr.bf16.mxu0 0
    %6960 = vmatpush1.bf16.msra.mxu0 0
    %6961 = vmatprep.subr.bf16.mxu0 0
    %6962 = vmatpush1.bf16.msra.mxu0 0
    %6963 = vmatprep.subr.bf16.mxu0 0
    %6964 = vmatpush1.bf16.msra.mxu0 0
    %6965 = vmatprep.subr.bf16.mxu0 0
    %6966 = vmatpush1.bf16.msra.mxu0 0
    %6967 = vmatprep.subr.bf16.mxu0 0
    %6968 = vmatpush1.bf16.msra.mxu0 0
    %6969 = vmatprep.subr.bf16.mxu0 0
    %6970 = vmatpush1.bf16.msra.mxu0 0
    %6971 = vmatprep.mubr.bf16.mxu0 0
    %6972 = vmatmul.mubr.bf16.gmra.mrb[0].mxu0 %v6807
    %v6973 = vpop.f32.mrb[0].mxu0
    %v6974 = vadd.f32 0.0, %v6973
    %v6975 = vpop.f32.mrb[0].mxu0
    %v6976 = vadd.f32 0.0, %v6975
    %v6977 = vpop.f32.mrb[0].mxu0
    %v6978 = vpop.f32.mrb[0].mxu0
    %6979 = vdwg.mxu0
    %6980 = vmatprep.subr.bf16.mxu0 %v6831
    %6981 = vmatpush1.bf16.msra.mxu0 %v6828
    %6982 = vmatprep.subr.bf16.mxu0 0
    %6983 = vmatpush1.bf16.msra.mxu0 0
    %6984 = vmatprep.subr.bf16.mxu0 0
    %6985 = vmatpush1.bf16.msra.mxu0 0
    %6986 = vmatprep.subr.bf16.mxu0 0
    %6987 = vmatpush1.bf16.msra.mxu0 0
    %6988 = vmatprep.subr.bf16.mxu0 0
    %6989 = vmatpush1.bf16.msra.mxu0 0
    %6990 = vmatprep.subr.bf16.mxu0 0
    %6991 = vmatpush1.bf16.msra.mxu0 0
    %6992 = vmatprep.subr.bf16.mxu0 0
    %6993 = vmatpush1.bf16.msra.mxu0 0
    %6994 = vmatprep.subr.bf16.mxu0 0
    %6995 = vmatpush1.bf16.msra.mxu0 0
    %6996 = vmatprep.subr.bf16.mxu0 0
    %6997 = vmatpush1.bf16.msra.mxu0 0
    %6998 = vmatprep.subr.bf16.mxu0 0
    %6999 = vmatpush1.bf16.msra.mxu0 0
    %7000 = vmatprep.subr.bf16.mxu0 0
    %7001 = vmatpush1.bf16.msra.mxu0 0
    %7002 = vmatprep.subr.bf16.mxu0 0
    %7003 = vmatpush1.bf16.msra.mxu0 0
    %7004 = vmatprep.subr.bf16.mxu0 0
    %7005 = vmatpush1.bf16.msra.mxu0 0
    %7006 = vmatprep.subr.bf16.mxu0 0
    %7007 = vmatpush1.bf16.msra.mxu0 0
    %7008 = vmatprep.subr.bf16.mxu0 0
    %7009 = vmatpush1.bf16.msra.mxu0 0
    %7010 = vmatprep.subr.bf16.mxu0 0
    %7011 = vmatpush1.bf16.msra.mxu0 0
    %7012 = vmatprep.mubr.bf16.mxu0 0
    %7013 = vmatmul.mubr.bf16.gmra.mrb[0].mxu0 %v6807
    %v7014 = vpop.f32.mrb[0].mxu0
    %v7015 = vadd.f32 0.0, %v7014
    %v7016 = vpop.f32.mrb[0].mxu0
    %v7017 = vadd.f32 0.0, %v7016
    %v7018 = vpop.f32.mrb[0].mxu0
    %v7019 = vpop.f32.mrb[0].mxu0
    %7020 = vdwg.mxu0
    %7021 = vmatprep.subr.bf16.mxu0 %v6837
    %7022 = vmatpush1.bf16.msra.mxu0 %v6834
    %7023 = vmatprep.subr.bf16.mxu0 0
    %7024 = vmatpush1.bf16.msra.mxu0 0
    %7025 = vmatprep.subr.bf16.mxu0 0
    %7026 = vmatpush1.bf16.msra.mxu0 0
    %7027 = vmatprep.subr.bf16.mxu0 0
    %7028 = vmatpush1.bf16.msra.mxu0 0
    %7029 = vmatprep.subr.bf16.mxu0 0
    %7030 = vmatpush1.bf16.msra.mxu0 0
    %7031 = vmatprep.subr.bf16.mxu0 0
    %7032 = vmatpush1.bf16.msra.mxu0 0
    %7033 = vmatprep.subr.bf16.mxu0 0
    %7034 = vmatpush1.bf16.msra.mxu0 0
    %7035 = vmatprep.subr.bf16.mxu0 0
    %7036 = vmatpush1.bf16.msra.mxu0 0
    %7037 = vmatprep.subr.bf16.mxu0 0
    %7038 = vmatpush1.bf16.msra.mxu0 0
    %7039 = vmatprep.subr.bf16.mxu0 0
    %7040 = vmatpush1.bf16.msra.mxu0 0
    %7041 = vmatprep.subr.bf16.mxu0 0
    %7042 = vmatpush1.bf16.msra.mxu0 0
    %7043 = vmatprep.subr.bf16.mxu0 0
    %7044 = vmatpush1.bf16.msra.mxu0 0
    %7045 = vmatprep.subr.bf16.mxu0 0
    %7046 = vmatpush1.bf16.msra.mxu0 0
    %7047 = vmatprep.subr.bf16.mxu0 0
    %7048 = vmatpush1.bf16.msra.mxu0 0
    %7049 = vmatprep.subr.bf16.mxu0 0
    %7050 = vmatpush1.bf16.msra.mxu0 0
    %7051 = vmatprep.subr.bf16.mxu0 0
    %7052 = vmatpush1.bf16.msra.mxu0 0
    %7053 = vmatprep.mubr.bf16.mxu0 0
    %7054 = vmatmul.mubr.bf16.gmra.mrb[0].mxu0 %v6807
    %v7055 = vpop.f32.mrb[0].mxu0
    %v7056 = vadd.f32 0.0, %v7055
    %v7057 = vpop.f32.mrb[0].mxu0
    %v7058 = vadd.f32 0.0, %v7057
    %v7059 = vpop.f32.mrb[0].mxu0
    %v7060 = vpop.f32.mrb[0].mxu0
    %7061 = vdwg.mxu0
    %7062 = vmatprep.subr.bf16.mxu0 %v6843
    %7063 = vmatpush1.bf16.msra.mxu0 %v6840
    %7064 = vmatprep.subr.bf16.mxu0 0
    %7065 = vmatpush1.bf16.msra.mxu0 0
    %7066 = vmatprep.subr.bf16.mxu0 0
    %7067 = vmatpush1.bf16.msra.mxu0 0
    %7068 = vmatprep.subr.bf16.mxu0 0
    %7069 = vmatpush1.bf16.msra.mxu0 0
    %7070 = vmatprep.subr.bf16.mxu0 0
    %7071 = vmatpush1.bf16.msra.mxu0 0
    %7072 = vmatprep.subr.bf16.mxu0 0
    %7073 = vmatpush1.bf16.msra.mxu0 0
    %7074 = vmatprep.subr.bf16.mxu0 0
    %7075 = vmatpush1.bf16.msra.mxu0 0
    %7076 = vmatprep.subr.bf16.mxu0 0
    %7077 = vmatpush1.bf16.msra.mxu0 0
    %7078 = vmatprep.subr.bf16.mxu0 0
    %7079 = vmatpush1.bf16.msra.mxu0 0
    %7080 = vmatprep.subr.bf16.mxu0 0
    %7081 = vmatpush1.bf16.msra.mxu0 0
    %7082 = vmatprep.subr.bf16.mxu0 0
    %7083 = vmatpush1.bf16.msra.mxu0 0
    %7084 = vmatprep.subr.bf16.mxu0 0
    %7085 = vmatpush1.bf16.msra.mxu0 0
    %7086 = vmatprep.subr.bf16.mxu0 0
    %7087 = vmatpush1.bf16.msra.mxu0 0
    %7088 = vmatprep.subr.bf16.mxu0 0
    %7089 = vmatpush1.bf16.msra.mxu0 0
    %7090 = vmatprep.subr.bf16.mxu0 0
    %7091 = vmatpush1.bf16.msra.mxu0 0
    %7092 = vmatprep.subr.bf16.mxu0 0
    %7093 = vmatpush1.bf16.msra.mxu0 0
    %7094 = vmatprep.mubr.bf16.mxu0 0
    %7095 = vmatmul.mubr.bf16.gmra.mrb[0].mxu0 %v6807
    %v7096 = vpop.f32.mrb[0].mxu0
    %v7097 = vadd.f32 0.0, %v7096
    %v7098 = vpop.f32.mrb[0].mxu0
    %v7099 = vadd.f32 0.0, %v7098
    %v7100 = vpop.f32.mrb[0].mxu0
    %v7101 = vpop.f32.mrb[0].mxu0
    %7102 = vdwg.mxu0
    %7103 = vmatprep.subr.bf16.mxu0 %v6849
    %7104 = vmatpush1.bf16.msra.mxu0 %v6846
    %7105 = vmatprep.subr.bf16.mxu0 0
    %7106 = vmatpush1.bf16.msra.mxu0 0
    %7107 = vmatprep.subr.bf16.mxu0 0
    %7108 = vmatpush1.bf16.msra.mxu0 0
    %7109 = vmatprep.subr.bf16.mxu0 0
    %7110 = vmatpush1.bf16.msra.mxu0 0
    %7111 = vmatprep.subr.bf16.mxu0 0
    %7112 = vmatpush1.bf16.msra.mxu0 0
    %7113 = vmatprep.subr.bf16.mxu0 0
    %7114 = vmatpush1.bf16.msra.mxu0 0
    %7115 = vmatprep.subr.bf16.mxu0 0
    %7116 = vmatpush1.bf16.msra.mxu0 0
    %7117 = vmatprep.subr.bf16.mxu0 0
    %7118 = vmatpush1.bf16.msra.mxu0 0
    %7119 = vmatprep.subr.bf16.mxu0 0
    %7120 = vmatpush1.bf16.msra.mxu0 0
    %7121 = vmatprep.subr.bf16.mxu0 0
    %7122 = vmatpush1.bf16.msra.mxu0 0
    %7123 = vmatprep.subr.bf16.mxu0 0
    %7124 = vmatpush1.bf16.msra.mxu0 0
    %7125 = vmatprep.subr.bf16.mxu0 0
    %7126 = vmatpush1.bf16.msra.mxu0 0
    %7127 = vmatprep.subr.bf16.mxu0 0
    %7128 = vmatpush1.bf16.msra.mxu0 0
    %7129 = vmatprep.subr.bf16.mxu0 0
    %7130 = vmatpush1.bf16.msra.mxu0 0
    %7131 = vmatprep.subr.bf16.mxu0 0
    %7132 = vmatpush1.bf16.msra.mxu0 0
    %7133 = vmatprep.subr.bf16.mxu0 0
    %7134 = vmatpush1.bf16.msra.mxu0 0
    %7135 = vmatprep.mubr.bf16.mxu0 0
    %7136 = vmatmul.mubr.bf16.gmra.mrb[0].mxu0 %v6807
    %v7137 = vpop.f32.mrb[0].mxu0
    %v7138 = vadd.f32 0.0, %v7137
    %v7139 = vpop.f32.mrb[0].mxu0
    %v7140 = vadd.f32 0.0, %v7139
    %v7141 = vpop.f32.mrb[0].mxu0
    %v7142 = vpop.f32.mrb[0].mxu0
    %7143 = vdwg.mxu0
    %7144 = vmatprep.subr.bf16.mxu0 %v6855
    %7145 = vmatpush1.bf16.msra.mxu0 %v6852
    %7146 = vmatprep.subr.bf16.mxu0 0
    %7147 = vmatpush1.bf16.msra.mxu0 0
    %7148 = vmatprep.subr.bf16.mxu0 0
    %7149 = vmatpush1.bf16.msra.mxu0 0
    %7150 = vmatprep.subr.bf16.mxu0 0
    %7151 = vmatpush1.bf16.msra.mxu0 0
    %7152 = vmatprep.subr.bf16.mxu0 0
    %7153 = vmatpush1.bf16.msra.mxu0 0
    %7154 = vmatprep.subr.bf16.mxu0 0
    %7155 = vmatpush1.bf16.msra.mxu0 0
    %7156 = vmatprep.subr.bf16.mxu0 0
    %7157 = vmatpush1.bf16.msra.mxu0 0
    %7158 = vmatprep.subr.bf16.mxu0 0
    %7159 = vmatpush1.bf16.msra.mxu0 0
    %7160 = vmatprep.subr.bf16.mxu0 0
    %7161 = vmatpush1.bf16.msra.mxu0 0
    %7162 = vmatprep.subr.bf16.mxu0 0
    %7163 = vmatpush1.bf16.msra.mxu0 0
    %7164 = vmatprep.subr.bf16.mxu0 0
    %7165 = vmatpush1.bf16.msra.mxu0 0
    %7166 = vmatprep.subr.bf16.mxu0 0
    %7167 = vmatpush1.bf16.msra.mxu0 0
    %7168 = vmatprep.subr.bf16.mxu0 0
    %7169 = vmatpush1.bf16.msra.mxu0 0
    %7170 = vmatprep.subr.bf16.mxu0 0
    %7171 = vmatpush1.bf16.msra.mxu0 0
    %7172 = vmatprep.subr.bf16.mxu0 0
    %7173 = vmatpush1.bf16.msra.mxu0 0
    %7174 = vmatprep.subr.bf16.mxu0 0
    %7175 = vmatpush1.bf16.msra.mxu0 0
    %7176 = vmatprep.mubr.bf16.mxu0 0
    %7177 = vmatmul.mubr.bf16.gmra.mrb[0].mxu0 %v6807
    %v7178 = vpop.f32.mrb[0].mxu0
    %v7179 = vadd.f32 0.0, %v7178
    %v7180 = vpop.f32.mrb[0].mxu0
    %v7181 = vadd.f32 0.0, %v7180
    %v7182 = vpop.f32.mrb[0].mxu0
    %v7183 = vpop.f32.mrb[0].mxu0
    %7184 = vdwg.mxu0
    %v7185 = vmul.f32 %v6892, %v2035
    %v7186 = vmul.f32 %v6894, %v2039
    %v7187 = vmul.f32 %v6933, %v2043
    %v7188 = vmul.f32 %v6935, %v2047
    %v7189 = vmul.f32 %v6974, %v2051
    %v7190 = vmul.f32 %v6976, %v2055
    %v7191 = vmul.f32 %v7015, %v2059
    %v7192 = vmul.f32 %v7017, %v2063
    %v7193 = vmul.f32 %v7056, %v2067
    %v7194 = vmul.f32 %v7058, %v2071
    %v7195 = vmul.f32 %v7097, %v2075
    %v7196 = vmul.f32 %v7099, %v2079
    %v7197 = vmul.f32 %v7138, %v2083
    %v7198 = vmul.f32 %v7140, %v2087
    %v7199 = vmul.f32 %v7179, %v2091
    %v7200 = vmul.f32 %v7181, %v2095
    %v7201 = vadd.f32 %v6738, %v7185
    %v7202 = vadd.f32 %v6739, %v7186
    %v7203 = vadd.f32 %v6740, %v7187
    %v7204 = vadd.f32 %v6741, %v7188
    %v7205 = vadd.f32 %v6742, %v7189
    %v7206 = vadd.f32 %v6743, %v7190
    %v7207 = vadd.f32 %v6744, %v7191
    %v7208 = vadd.f32 %v6745, %v7192
    %v7209 = vadd.f32 %v6746, %v7193
    %v7210 = vadd.f32 %v6747, %v7194
    %v7211 = vadd.f32 %v6748, %v7195
    %v7212 = vadd.f32 %v6749, %v7196
    %v7213 = vadd.f32 %v6750, %v7197
    %v7214 = vadd.f32 %v6751, %v7198
    %v7215 = vadd.f32 %v6752, %v7199
    %v7216 = vadd.f32 %v6753, %v7200
    %s7217 = scalar_lea.vmem %s7, 6
    %v7218 = vld [vmem:[%s7217] sm:$0x3]
    %7219 = vrot.lane.b32.xlu0 %v5812, 1
    %v7220 = vpop.permute.xlu0 %7219
    %7221 = vrot.lane.b32.xlu0 %v5813, 1
    %v7222 = vpop.permute.xlu0 %7221
    %7223 = vrot.lane.b32.xlu0 %v5814, 1
    %v7224 = vpop.permute.xlu0 %7223
    %7225 = vrot.lane.b32.xlu0 %v5815, 1
    %v7226 = vpop.permute.xlu0 %7225
    %7227 = vrot.lane.b32.xlu0 %v5816, 1
    %v7228 = vpop.permute.xlu0 %7227
    %7229 = vrot.lane.b32.xlu0 %v5817, 1
    %v7230 = vpop.permute.xlu0 %7229
    %7231 = vrot.lane.b32.xlu0 %v5818, 1
    %v7232 = vpop.permute.xlu0 %7231
    %7233 = vrot.lane.b32.xlu0 %v5819, 1
    %v7234 = vpop.permute.xlu0 %7233
    %7235 = vrot.lane.b32.xlu0 %v5820, 1
    %v7236 = vpop.permute.xlu0 %7235
    %7237 = vrot.lane.b32.xlu0 %v5821, 1
    %v7238 = vpop.permute.xlu0 %7237
    %7239 = vrot.lane.b32.xlu0 %v5822, 1
    %v7240 = vpop.permute.xlu0 %7239
    %7241 = vrot.lane.b32.xlu0 %v5823, 1
    %v7242 = vpop.permute.xlu0 %7241
    %7243 = vrot.lane.b32.xlu0 %v5824, 1
    %v7244 = vpop.permute.xlu0 %7243
    %7245 = vrot.lane.b32.xlu0 %v5825, 1
    %v7246 = vpop.permute.xlu0 %7245
    %7247 = vrot.lane.b32.xlu0 %v5826, 1
    %v7248 = vpop.permute.xlu0 %7247
    %7249 = vrot.lane.b32.xlu0 %v5827, 1
    %v7250 = vpop.permute.xlu0 %7249
    %7251 = vrot.lane.b32.xlu0 %v5828, 1
    %v7252 = vpop.permute.xlu0 %7251
    %v7253 = vsel %vm2180, %v7220, %v7222
    %v7254 = vsel %vm2180, %v7222, %v7224
    %v7255 = vsel %vm2180, %v7224, %v7226
    %v7256 = vsel %vm2180, %v7226, %v7228
    %v7257 = vsel %vm2180, %v7228, %v7230
    %v7258 = vsel %vm2180, %v7230, %v7232
    %v7259 = vsel %vm2180, %v7232, %v7234
    %v7260 = vsel %vm2180, %v7234, %v7236
    %v7261 = vsel %vm2180, %v7236, %v7238
    %v7262 = vsel %vm2180, %v7238, %v7240
    %v7263 = vsel %vm2180, %v7240, %v7242
    %v7264 = vsel %vm2180, %v7242, %v7244
    %v7265 = vsel %vm2180, %v7244, %v7246
    %v7266 = vsel %vm2180, %v7246, %v7248
    %v7267 = vsel %vm2180, %v7248, %v7250
    %v7268 = vsel %vm2180, %v7250, %v7252
    %v7270 = vsel %vm5879, %v7218, 0
    %v7273 = vsel %vm208, %v7253, 0
    %v7276 = vsel %vm208, %v7254, 0
    %v7279 = vsel %vm208, %v7255, 0
    %v7282 = vsel %vm208, %v7256, 0
    %v7285 = vsel %vm208, %v7257, 0
    %v7288 = vsel %vm208, %v7258, 0
    %v7291 = vsel %vm208, %v7259, 0
    %v7294 = vsel %vm208, %v7260, 0
    %v7297 = vsel %vm208, %v7261, 0
    %v7300 = vsel %vm208, %v7262, 0
    %v7303 = vsel %vm208, %v7263, 0
    %v7306 = vsel %vm208, %v7264, 0
    %v7309 = vsel %vm208, %v7265, 0
    %v7312 = vsel %vm208, %v7266, 0
    %v7315 = vsel %vm208, %v7267, 0
    %v7318 = vsel %vm208, %v7268, 0
    %7320 = vmatprep.subr.bf16.mxu0 %v7276
    %7321 = vmatpush1.bf16.msra.mxu0 %v7273
    %7322 = vmatprep.subr.bf16.mxu0 0
    %7323 = vmatpush1.bf16.msra.mxu0 0
    %7324 = vmatprep.subr.bf16.mxu0 0
    %7325 = vmatpush1.bf16.msra.mxu0 0
    %7326 = vmatprep.subr.bf16.mxu0 0
    %7327 = vmatpush1.bf16.msra.mxu0 0
    %7328 = vmatprep.subr.bf16.mxu0 0
    %7329 = vmatpush1.bf16.msra.mxu0 0
    %7330 = vmatprep.subr.bf16.mxu0 0
    %7331 = vmatpush1.bf16.msra.mxu0 0
    %7332 = vmatprep.subr.bf16.mxu0 0
    %7333 = vmatpush1.bf16.msra.mxu0 0
    %7334 = vmatprep.subr.bf16.mxu0 0
    %7335 = vmatpush1.bf16.msra.mxu0 0
    %7336 = vmatprep.subr.bf16.mxu0 0
    %7337 = vmatpush1.bf16.msra.mxu0 0
    %7338 = vmatprep.subr.bf16.mxu0 0
    %7339 = vmatpush1.bf16.msra.mxu0 0
    %7340 = vmatprep.subr.bf16.mxu0 0
    %7341 = vmatpush1.bf16.msra.mxu0 0
    %7342 = vmatprep.subr.bf16.mxu0 0
    %7343 = vmatpush1.bf16.msra.mxu0 0
    %7344 = vmatprep.subr.bf16.mxu0 0
    %7345 = vmatpush1.bf16.msra.mxu0 0
    %7346 = vmatprep.subr.bf16.mxu0 0
    %7347 = vmatpush1.bf16.msra.mxu0 0
    %7348 = vmatprep.subr.bf16.mxu0 0
    %7349 = vmatpush1.bf16.msra.mxu0 0
    %7350 = vmatprep.subr.bf16.mxu0 0
    %7351 = vmatpush1.bf16.msra.mxu0 0
    %7352 = vmatprep.mubr.bf16.mxu0 0
    %7353 = vmatmul.mubr.bf16.gmra.mrb[0].mxu0 %v7270
    %v7354 = vpop.f32.mrb[0].mxu0
    %v7355 = vadd.f32 0.0, %v7354
    %v7356 = vpop.f32.mrb[0].mxu0
    %v7357 = vadd.f32 0.0, %v7356
    %v7358 = vpop.f32.mrb[0].mxu0
    %v7359 = vpop.f32.mrb[0].mxu0
    %7360 = vdwg.mxu0
    %7361 = vmatprep.subr.bf16.mxu0 %v7282
    %7362 = vmatpush1.bf16.msra.mxu0 %v7279
    %7363 = vmatprep.subr.bf16.mxu0 0
    %7364 = vmatpush1.bf16.msra.mxu0 0
    %7365 = vmatprep.subr.bf16.mxu0 0
    %7366 = vmatpush1.bf16.msra.mxu0 0
    %7367 = vmatprep.subr.bf16.mxu0 0
    %7368 = vmatpush1.bf16.msra.mxu0 0
    %7369 = vmatprep.subr.bf16.mxu0 0
    %7370 = vmatpush1.bf16.msra.mxu0 0
    %7371 = vmatprep.subr.bf16.mxu0 0
    %7372 = vmatpush1.bf16.msra.mxu0 0
    %7373 = vmatprep.subr.bf16.mxu0 0
    %7374 = vmatpush1.bf16.msra.mxu0 0
    %7375 = vmatprep.subr.bf16.mxu0 0
    %7376 = vmatpush1.bf16.msra.mxu0 0
    %7377 = vmatprep.subr.bf16.mxu0 0
    %7378 = vmatpush1.bf16.msra.mxu0 0
    %7379 = vmatprep.subr.bf16.mxu0 0
    %7380 = vmatpush1.bf16.msra.mxu0 0
    %7381 = vmatprep.subr.bf16.mxu0 0
    %7382 = vmatpush1.bf16.msra.mxu0 0
    %7383 = vmatprep.subr.bf16.mxu0 0
    %7384 = vmatpush1.bf16.msra.mxu0 0
    %7385 = vmatprep.subr.bf16.mxu0 0
    %7386 = vmatpush1.bf16.msra.mxu0 0
    %7387 = vmatprep.subr.bf16.mxu0 0
    %7388 = vmatpush1.bf16.msra.mxu0 0
    %7389 = vmatprep.subr.bf16.mxu0 0
    %7390 = vmatpush1.bf16.msra.mxu0 0
    %7391 = vmatprep.subr.bf16.mxu0 0
    %7392 = vmatpush1.bf16.msra.mxu0 0
    %7393 = vmatprep.mubr.bf16.mxu0 0
    %7394 = vmatmul.mubr.bf16.gmra.mrb[0].mxu0 %v7270
    %v7395 = vpop.f32.mrb[0].mxu0
    %v7396 = vadd.f32 0.0, %v7395
    %v7397 = vpop.f32.mrb[0].mxu0
    %v7398 = vadd.f32 0.0, %v7397
    %v7399 = vpop.f32.mrb[0].mxu0
    %v7400 = vpop.f32.mrb[0].mxu0
    %7401 = vdwg.mxu0
    %7402 = vmatprep.subr.bf16.mxu0 %v7288
    %7403 = vmatpush1.bf16.msra.mxu0 %v7285
    %7404 = vmatprep.subr.bf16.mxu0 0
    %7405 = vmatpush1.bf16.msra.mxu0 0
    %7406 = vmatprep.subr.bf16.mxu0 0
    %7407 = vmatpush1.bf16.msra.mxu0 0
    %7408 = vmatprep.subr.bf16.mxu0 0
    %7409 = vmatpush1.bf16.msra.mxu0 0
    %7410 = vmatprep.subr.bf16.mxu0 0
    %7411 = vmatpush1.bf16.msra.mxu0 0
    %7412 = vmatprep.subr.bf16.mxu0 0
    %7413 = vmatpush1.bf16.msra.mxu0 0
    %7414 = vmatprep.subr.bf16.mxu0 0
    %7415 = vmatpush1.bf16.msra.mxu0 0
    %7416 = vmatprep.subr.bf16.mxu0 0
    %7417 = vmatpush1.bf16.msra.mxu0 0
    %7418 = vmatprep.subr.bf16.mxu0 0
    %7419 = vmatpush1.bf16.msra.mxu0 0
    %7420 = vmatprep.subr.bf16.mxu0 0
    %7421 = vmatpush1.bf16.msra.mxu0 0
    %7422 = vmatprep.subr.bf16.mxu0 0
    %7423 = vmatpush1.bf16.msra.mxu0 0
    %7424 = vmatprep.subr.bf16.mxu0 0
    %7425 = vmatpush1.bf16.msra.mxu0 0
    %7426 = vmatprep.subr.bf16.mxu0 0
    %7427 = vmatpush1.bf16.msra.mxu0 0
    %7428 = vmatprep.subr.bf16.mxu0 0
    %7429 = vmatpush1.bf16.msra.mxu0 0
    %7430 = vmatprep.subr.bf16.mxu0 0
    %7431 = vmatpush1.bf16.msra.mxu0 0
    %7432 = vmatprep.subr.bf16.mxu0 0
    %7433 = vmatpush1.bf16.msra.mxu0 0
    %7434 = vmatprep.mubr.bf16.mxu0 0
    %7435 = vmatmul.mubr.bf16.gmra.mrb[0].mxu0 %v7270
    %v7436 = vpop.f32.mrb[0].mxu0
    %v7437 = vadd.f32 0.0, %v7436
    %v7438 = vpop.f32.mrb[0].mxu0
    %v7439 = vadd.f32 0.0, %v7438
    %v7440 = vpop.f32.mrb[0].mxu0
    %v7441 = vpop.f32.mrb[0].mxu0
    %7442 = vdwg.mxu0
    %7443 = vmatprep.subr.bf16.mxu0 %v7294
    %7444 = vmatpush1.bf16.msra.mxu0 %v7291
    %7445 = vmatprep.subr.bf16.mxu0 0
    %7446 = vmatpush1.bf16.msra.mxu0 0
    %7447 = vmatprep.subr.bf16.mxu0 0
    %7448 = vmatpush1.bf16.msra.mxu0 0
    %7449 = vmatprep.subr.bf16.mxu0 0
    %7450 = vmatpush1.bf16.msra.mxu0 0
    %7451 = vmatprep.subr.bf16.mxu0 0
    %7452 = vmatpush1.bf16.msra.mxu0 0
    %7453 = vmatprep.subr.bf16.mxu0 0
    %7454 = vmatpush1.bf16.msra.mxu0 0
    %7455 = vmatprep.subr.bf16.mxu0 0
    %7456 = vmatpush1.bf16.msra.mxu0 0
    %7457 = vmatprep.subr.bf16.mxu0 0
    %7458 = vmatpush1.bf16.msra.mxu0 0
    %7459 = vmatprep.subr.bf16.mxu0 0
    %7460 = vmatpush1.bf16.msra.mxu0 0
    %7461 = vmatprep.subr.bf16.mxu0 0
    %7462 = vmatpush1.bf16.msra.mxu0 0
    %7463 = vmatprep.subr.bf16.mxu0 0
    %7464 = vmatpush1.bf16.msra.mxu0 0
    %7465 = vmatprep.subr.bf16.mxu0 0
    %7466 = vmatpush1.bf16.msra.mxu0 0
    %7467 = vmatprep.subr.bf16.mxu0 0
    %7468 = vmatpush1.bf16.msra.mxu0 0
    %7469 = vmatprep.subr.bf16.mxu0 0
    %7470 = vmatpush1.bf16.msra.mxu0 0
    %7471 = vmatprep.subr.bf16.mxu0 0
    %7472 = vmatpush1.bf16.msra.mxu0 0
    %7473 = vmatprep.subr.bf16.mxu0 0
    %7474 = vmatpush1.bf16.msra.mxu0 0
    %7475 = vmatprep.mubr.bf16.mxu0 0
    %7476 = vmatmul.mubr.bf16.gmra.mrb[0].mxu0 %v7270
    %v7477 = vpop.f32.mrb[0].mxu0
    %v7478 = vadd.f32 0.0, %v7477
    %v7479 = vpop.f32.mrb[0].mxu0
    %v7480 = vadd.f32 0.0, %v7479
    %v7481 = vpop.f32.mrb[0].mxu0
    %v7482 = vpop.f32.mrb[0].mxu0
    %7483 = vdwg.mxu0
    %7484 = vmatprep.subr.bf16.mxu0 %v7300
    %7485 = vmatpush1.bf16.msra.mxu0 %v7297
    %7486 = vmatprep.subr.bf16.mxu0 0
    %7487 = vmatpush1.bf16.msra.mxu0 0
    %7488 = vmatprep.subr.bf16.mxu0 0
    %7489 = vmatpush1.bf16.msra.mxu0 0
    %7490 = vmatprep.subr.bf16.mxu0 0
    %7491 = vmatpush1.bf16.msra.mxu0 0
    %7492 = vmatprep.subr.bf16.mxu0 0
    %7493 = vmatpush1.bf16.msra.mxu0 0
    %7494 = vmatprep.subr.bf16.mxu0 0
    %7495 = vmatpush1.bf16.msra.mxu0 0
    %7496 = vmatprep.subr.bf16.mxu0 0
    %7497 = vmatpush1.bf16.msra.mxu0 0
    %7498 = vmatprep.subr.bf16.mxu0 0
    %7499 = vmatpush1.bf16.msra.mxu0 0
    %7500 = vmatprep.subr.bf16.mxu0 0
    %7501 = vmatpush1.bf16.msra.mxu0 0
    %7502 = vmatprep.subr.bf16.mxu0 0
    %7503 = vmatpush1.bf16.msra.mxu0 0
    %7504 = vmatprep.subr.bf16.mxu0 0
    %7505 = vmatpush1.bf16.msra.mxu0 0
    %7506 = vmatprep.subr.bf16.mxu0 0
    %7507 = vmatpush1.bf16.msra.mxu0 0
    %7508 = vmatprep.subr.bf16.mxu0 0
    %7509 = vmatpush1.bf16.msra.mxu0 0
    %7510 = vmatprep.subr.bf16.mxu0 0
    %7511 = vmatpush1.bf16.msra.mxu0 0
    %7512 = vmatprep.subr.bf16.mxu0 0
    %7513 = vmatpush1.bf16.msra.mxu0 0
    %7514 = vmatprep.subr.bf16.mxu0 0
    %7515 = vmatpush1.bf16.msra.mxu0 0
    %7516 = vmatprep.mubr.bf16.mxu0 0
    %7517 = vmatmul.mubr.bf16.gmra.mrb[0].mxu0 %v7270
    %v7518 = vpop.f32.mrb[0].mxu0
    %v7519 = vadd.f32 0.0, %v7518
    %v7520 = vpop.f32.mrb[0].mxu0
    %v7521 = vadd.f32 0.0, %v7520
    %v7522 = vpop.f32.mrb[0].mxu0
    %v7523 = vpop.f32.mrb[0].mxu0
    %7524 = vdwg.mxu0
    %7525 = vmatprep.subr.bf16.mxu0 %v7306
    %7526 = vmatpush1.bf16.msra.mxu0 %v7303
    %7527 = vmatprep.subr.bf16.mxu0 0
    %7528 = vmatpush1.bf16.msra.mxu0 0
    %7529 = vmatprep.subr.bf16.mxu0 0
    %7530 = vmatpush1.bf16.msra.mxu0 0
    %7531 = vmatprep.subr.bf16.mxu0 0
    %7532 = vmatpush1.bf16.msra.mxu0 0
    %7533 = vmatprep.subr.bf16.mxu0 0
    %7534 = vmatpush1.bf16.msra.mxu0 0
    %7535 = vmatprep.subr.bf16.mxu0 0
    %7536 = vmatpush1.bf16.msra.mxu0 0
    %7537 = vmatprep.subr.bf16.mxu0 0
    %7538 = vmatpush1.bf16.msra.mxu0 0
    %7539 = vmatprep.subr.bf16.mxu0 0
    %7540 = vmatpush1.bf16.msra.mxu0 0
    %7541 = vmatprep.subr.bf16.mxu0 0
    %7542 = vmatpush1.bf16.msra.mxu0 0
    %7543 = vmatprep.subr.bf16.mxu0 0
    %7544 = vmatpush1.bf16.msra.mxu0 0
    %7545 = vmatprep.subr.bf16.mxu0 0
    %7546 = vmatpush1.bf16.msra.mxu0 0
    %7547 = vmatprep.subr.bf16.mxu0 0
    %7548 = vmatpush1.bf16.msra.mxu0 0
    %7549 = vmatprep.subr.bf16.mxu0 0
    %7550 = vmatpush1.bf16.msra.mxu0 0
    %7551 = vmatprep.subr.bf16.mxu0 0
    %7552 = vmatpush1.bf16.msra.mxu0 0
    %7553 = vmatprep.subr.bf16.mxu0 0
    %7554 = vmatpush1.bf16.msra.mxu0 0
    %7555 = vmatprep.subr.bf16.mxu0 0
    %7556 = vmatpush1.bf16.msra.mxu0 0
    %7557 = vmatprep.mubr.bf16.mxu0 0
    %7558 = vmatmul.mubr.bf16.gmra.mrb[0].mxu0 %v7270
    %v7559 = vpop.f32.mrb[0].mxu0
    %v7560 = vadd.f32 0.0, %v7559
    %v7561 = vpop.f32.mrb[0].mxu0
    %v7562 = vadd.f32 0.0, %v7561
    %v7563 = vpop.f32.mrb[0].mxu0
    %v7564 = vpop.f32.mrb[0].mxu0
    %7565 = vdwg.mxu0
    %7566 = vmatprep.subr.bf16.mxu0 %v7312
    %7567 = vmatpush1.bf16.msra.mxu0 %v7309
    %7568 = vmatprep.subr.bf16.mxu0 0
    %7569 = vmatpush1.bf16.msra.mxu0 0
    %7570 = vmatprep.subr.bf16.mxu0 0
    %7571 = vmatpush1.bf16.msra.mxu0 0
    %7572 = vmatprep.subr.bf16.mxu0 0
    %7573 = vmatpush1.bf16.msra.mxu0 0
    %7574 = vmatprep.subr.bf16.mxu0 0
    %7575 = vmatpush1.bf16.msra.mxu0 0
    %7576 = vmatprep.subr.bf16.mxu0 0
    %7577 = vmatpush1.bf16.msra.mxu0 0
    %7578 = vmatprep.subr.bf16.mxu0 0
    %7579 = vmatpush1.bf16.msra.mxu0 0
    %7580 = vmatprep.subr.bf16.mxu0 0
    %7581 = vmatpush1.bf16.msra.mxu0 0
    %7582 = vmatprep.subr.bf16.mxu0 0
    %7583 = vmatpush1.bf16.msra.mxu0 0
    %7584 = vmatprep.subr.bf16.mxu0 0
    %7585 = vmatpush1.bf16.msra.mxu0 0
    %7586 = vmatprep.subr.bf16.mxu0 0
    %7587 = vmatpush1.bf16.msra.mxu0 0
    %7588 = vmatprep.subr.bf16.mxu0 0
    %7589 = vmatpush1.bf16.msra.mxu0 0
    %7590 = vmatprep.subr.bf16.mxu0 0
    %7591 = vmatpush1.bf16.msra.mxu0 0
    %7592 = vmatprep.subr.bf16.mxu0 0
    %7593 = vmatpush1.bf16.msra.mxu0 0
    %7594 = vmatprep.subr.bf16.mxu0 0
    %7595 = vmatpush1.bf16.msra.mxu0 0
    %7596 = vmatprep.subr.bf16.mxu0 0
    %7597 = vmatpush1.bf16.msra.mxu0 0
    %7598 = vmatprep.mubr.bf16.mxu0 0
    %7599 = vmatmul.mubr.bf16.gmra.mrb[0].mxu0 %v7270
    %v7600 = vpop.f32.mrb[0].mxu0
    %v7601 = vadd.f32 0.0, %v7600
    %v7602 = vpop.f32.mrb[0].mxu0
    %v7603 = vadd.f32 0.0, %v7602
    %v7604 = vpop.f32.mrb[0].mxu0
    %v7605 = vpop.f32.mrb[0].mxu0
    %7606 = vdwg.mxu0
    %7607 = vmatprep.subr.bf16.mxu0 %v7318
    %7608 = vmatpush1.bf16.msra.mxu0 %v7315
    %7609 = vmatprep.subr.bf16.mxu0 0
    %7610 = vmatpush1.bf16.msra.mxu0 0
    %7611 = vmatprep.subr.bf16.mxu0 0
    %7612 = vmatpush1.bf16.msra.mxu0 0
    %7613 = vmatprep.subr.bf16.mxu0 0
    %7614 = vmatpush1.bf16.msra.mxu0 0
    %7615 = vmatprep.subr.bf16.mxu0 0
    %7616 = vmatpush1.bf16.msra.mxu0 0
    %7617 = vmatprep.subr.bf16.mxu0 0
    %7618 = vmatpush1.bf16.msra.mxu0 0
    %7619 = vmatprep.subr.bf16.mxu0 0
    %7620 = vmatpush1.bf16.msra.mxu0 0
    %7621 = vmatprep.subr.bf16.mxu0 0
    %7622 = vmatpush1.bf16.msra.mxu0 0
    %7623 = vmatprep.subr.bf16.mxu0 0
    %7624 = vmatpush1.bf16.msra.mxu0 0
    %7625 = vmatprep.subr.bf16.mxu0 0
    %7626 = vmatpush1.bf16.msra.mxu0 0
    %7627 = vmatprep.subr.bf16.mxu0 0
    %7628 = vmatpush1.bf16.msra.mxu0 0
    %7629 = vmatprep.subr.bf16.mxu0 0
    %7630 = vmatpush1.bf16.msra.mxu0 0
    %7631 = vmatprep.subr.bf16.mxu0 0
    %7632 = vmatpush1.bf16.msra.mxu0 0
    %7633 = vmatprep.subr.bf16.mxu0 0
    %7634 = vmatpush1.bf16.msra.mxu0 0
    %7635 = vmatprep.subr.bf16.mxu0 0
    %7636 = vmatpush1.bf16.msra.mxu0 0
    %7637 = vmatprep.subr.bf16.mxu0 0
    %7638 = vmatpush1.bf16.msra.mxu0 0
    %7639 = vmatprep.mubr.bf16.mxu0 0
    %7640 = vmatmul.mubr.bf16.gmra.mrb[0].mxu0 %v7270
    %v7641 = vpop.f32.mrb[0].mxu0
    %v7642 = vadd.f32 0.0, %v7641
    %v7643 = vpop.f32.mrb[0].mxu0
    %v7644 = vadd.f32 0.0, %v7643
    %v7645 = vpop.f32.mrb[0].mxu0
    %v7646 = vpop.f32.mrb[0].mxu0
    %7647 = vdwg.mxu0
    %v7648 = vmul.f32 %v7355, %v2581
    %v7649 = vmul.f32 %v7357, %v2585
    %v7650 = vmul.f32 %v7396, %v2589
    %v7651 = vmul.f32 %v7398, %v2593
    %v7652 = vmul.f32 %v7437, %v2597
    %v7653 = vmul.f32 %v7439, %v2601
    %v7654 = vmul.f32 %v7478, %v2605
    %v7655 = vmul.f32 %v7480, %v2609
    %v7656 = vmul.f32 %v7519, %v2613
    %v7657 = vmul.f32 %v7521, %v2617
    %v7658 = vmul.f32 %v7560, %v2621
    %v7659 = vmul.f32 %v7562, %v2625
    %v7660 = vmul.f32 %v7601, %v2629
    %v7661 = vmul.f32 %v7603, %v2633
    %v7662 = vmul.f32 %v7642, %v2637
    %v7663 = vmul.f32 %v7644, %v2641
    %v7664 = vadd.f32 %v7201, %v7648
    %v7665 = vadd.f32 %v7202, %v7649
    %v7666 = vadd.f32 %v7203, %v7650
    %v7667 = vadd.f32 %v7204, %v7651
    %v7668 = vadd.f32 %v7205, %v7652
    %v7669 = vadd.f32 %v7206, %v7653
    %v7670 = vadd.f32 %v7207, %v7654
    %v7671 = vadd.f32 %v7208, %v7655
    %v7672 = vadd.f32 %v7209, %v7656
    %v7673 = vadd.f32 %v7210, %v7657
    %v7674 = vadd.f32 %v7211, %v7658
    %v7675 = vadd.f32 %v7212, %v7659
    %v7676 = vadd.f32 %v7213, %v7660
    %v7677 = vadd.f32 %v7214, %v7661
    %v7678 = vadd.f32 %v7215, %v7662
    %v7679 = vadd.f32 %v7216, %v7663
    %v7680 = vld [vmem:[#allocation3 + $0x4] sm:$0xff]
    %v7681 = vld [vmem:[#allocation3 + $0xc] sm:$0xff]
    %v7682 = vld [vmem:[#allocation3 + $0x14] sm:$0xff]
    %v7683 = vld [vmem:[#allocation3 + $0x1c] sm:$0xff]
    %v7684 = vld [vmem:[#allocation3 + $0x24] sm:$0xff]
    %v7685 = vld [vmem:[#allocation3 + $0x2c] sm:$0xff]
    %v7686 = vld [vmem:[#allocation3 + $0x34] sm:$0xff]
    %v7687 = vld [vmem:[#allocation3 + $0x3c] sm:$0xff]
    %s7688 = scalar_lea.vmem %s7, 8
    %v7689 = vld [vmem:[%s7688] sm:$0x3]
    %v7698 = vunpack.c.l.b16 %v7680
    %v7699 = vunpack.c.h.b16 %v7680
    %v7700 = vunpack.c.l.b16 %v7681
    %v7701 = vunpack.c.h.b16 %v7681
    %v7702 = vunpack.c.l.b16 %v7682
    %v7703 = vunpack.c.h.b16 %v7682
    %v7704 = vunpack.c.l.b16 %v7683
    %v7705 = vunpack.c.h.b16 %v7683
    %v7706 = vunpack.c.l.b16 %v7684
    %v7707 = vunpack.c.h.b16 %v7684
    %v7708 = vunpack.c.l.b16 %v7685
    %v7709 = vunpack.c.h.b16 %v7685
    %v7710 = vunpack.c.l.b16 %v7686
    %v7711 = vunpack.c.h.b16 %v7686
    %v7712 = vunpack.c.l.b16 %v7687
    %v7713 = vunpack.c.h.b16 %v7687
    %v7714 = vpack.c.b16 %v7698, %v7698
    %v7715 = vpack.c.b16 %v7699, %v7699
    %v7716 = vpack.c.b16 %v7700, %v7700
    %v7717 = vpack.c.b16 %v7701, %v7701
    %v7718 = vpack.c.b16 %v7702, %v7702
    %v7719 = vpack.c.b16 %v7703, %v7703
    %v7720 = vpack.c.b16 %v7704, %v7704
    %v7721 = vpack.c.b16 %v7705, %v7705
    %v7722 = vpack.c.b16 %v7706, %v7706
    %v7723 = vpack.c.b16 %v7707, %v7707
    %v7724 = vpack.c.b16 %v7708, %v7708
    %v7725 = vpack.c.b16 %v7709, %v7709
    %v7726 = vpack.c.b16 %v7710, %v7710
    %v7727 = vpack.c.b16 %v7711, %v7711
    %v7728 = vpack.c.b16 %v7712, %v7712
    %v7729 = vpack.c.b16 %v7713, %v7713
    %v7731 = vsel %vm5879, %v7689, 0
    %v7734 = vsel %vm208, %v7714, 0
    %v7737 = vsel %vm208, %v7715, 0
    %v7740 = vsel %vm208, %v7716, 0
    %v7743 = vsel %vm208, %v7717, 0
    %v7746 = vsel %vm208, %v7718, 0
    %v7749 = vsel %vm208, %v7719, 0
    %v7752 = vsel %vm208, %v7720, 0
    %v7755 = vsel %vm208, %v7721, 0
    %v7758 = vsel %vm208, %v7722, 0
    %v7761 = vsel %vm208, %v7723, 0
    %v7764 = vsel %vm208, %v7724, 0
    %v7767 = vsel %vm208, %v7725, 0
    %v7770 = vsel %vm208, %v7726, 0
    %v7773 = vsel %vm208, %v7727, 0
    %v7776 = vsel %vm208, %v7728, 0
    %v7779 = vsel %vm208, %v7729, 0
    %7781 = vmatprep.subr.bf16.mxu0 %v7737
    %7782 = vmatpush1.bf16.msra.mxu0 %v7734
    %7783 = vmatprep.subr.bf16.mxu0 0
    %7784 = vmatpush1.bf16.msra.mxu0 0
    %7785 = vmatprep.subr.bf16.mxu0 0
    %7786 = vmatpush1.bf16.msra.mxu0 0
    %7787 = vmatprep.subr.bf16.mxu0 0
    %7788 = vmatpush1.bf16.msra.mxu0 0
    %7789 = vmatprep.subr.bf16.mxu0 0
    %7790 = vmatpush1.bf16.msra.mxu0 0
    %7791 = vmatprep.subr.bf16.mxu0 0
    %7792 = vmatpush1.bf16.msra.mxu0 0
    %7793 = vmatprep.subr.bf16.mxu0 0
    %7794 = vmatpush1.bf16.msra.mxu0 0
    %7795 = vmatprep.subr.bf16.mxu0 0
    %7796 = vmatpush1.bf16.msra.mxu0 0
    %7797 = vmatprep.subr.bf16.mxu0 0
    %7798 = vmatpush1.bf16.msra.mxu0 0
    %7799 = vmatprep.subr.bf16.mxu0 0
    %7800 = vmatpush1.bf16.msra.mxu0 0
    %7801 = vmatprep.subr.bf16.mxu0 0
    %7802 = vmatpush1.bf16.msra.mxu0 0
    %7803 = vmatprep.subr.bf16.mxu0 0
    %7804 = vmatpush1.bf16.msra.mxu0 0
    %7805 = vmatprep.subr.bf16.mxu0 0
    %7806 = vmatpush1.bf16.msra.mxu0 0
    %7807 = vmatprep.subr.bf16.mxu0 0
    %7808 = vmatpush1.bf16.msra.mxu0 0
    %7809 = vmatprep.subr.bf16.mxu0 0
    %7810 = vmatpush1.bf16.msra.mxu0 0
    %7811 = vmatprep.subr.bf16.mxu0 0
    %7812 = vmatpush1.bf16.msra.mxu0 0
    %7813 = vmatprep.mubr.bf16.mxu0 0
    %7814 = vmatmul.mubr.bf16.gmra.mrb[0].mxu0 %v7731
    %v7815 = vpop.f32.mrb[0].mxu0
    %v7816 = vadd.f32 0.0, %v7815
    %v7817 = vpop.f32.mrb[0].mxu0
    %v7818 = vadd.f32 0.0, %v7817
    %v7819 = vpop.f32.mrb[0].mxu0
    %v7820 = vpop.f32.mrb[0].mxu0
    %7821 = vdwg.mxu0
    %7822 = vmatprep.subr.bf16.mxu0 %v7743
    %7823 = vmatpush1.bf16.msra.mxu0 %v7740
    %7824 = vmatprep.subr.bf16.mxu0 0
    %7825 = vmatpush1.bf16.msra.mxu0 0
    %7826 = vmatprep.subr.bf16.mxu0 0
    %7827 = vmatpush1.bf16.msra.mxu0 0
    %7828 = vmatprep.subr.bf16.mxu0 0
    %7829 = vmatpush1.bf16.msra.mxu0 0
    %7830 = vmatprep.subr.bf16.mxu0 0
    %7831 = vmatpush1.bf16.msra.mxu0 0
    %7832 = vmatprep.subr.bf16.mxu0 0
    %7833 = vmatpush1.bf16.msra.mxu0 0
    %7834 = vmatprep.subr.bf16.mxu0 0
    %7835 = vmatpush1.bf16.msra.mxu0 0
    %7836 = vmatprep.subr.bf16.mxu0 0
    %7837 = vmatpush1.bf16.msra.mxu0 0
    %7838 = vmatprep.subr.bf16.mxu0 0
    %7839 = vmatpush1.bf16.msra.mxu0 0
    %7840 = vmatprep.subr.bf16.mxu0 0
    %7841 = vmatpush1.bf16.msra.mxu0 0
    %7842 = vmatprep.subr.bf16.mxu0 0
    %7843 = vmatpush1.bf16.msra.mxu0 0
    %7844 = vmatprep.subr.bf16.mxu0 0
    %7845 = vmatpush1.bf16.msra.mxu0 0
    %7846 = vmatprep.subr.bf16.mxu0 0
    %7847 = vmatpush1.bf16.msra.mxu0 0
    %7848 = vmatprep.subr.bf16.mxu0 0
    %7849 = vmatpush1.bf16.msra.mxu0 0
    %7850 = vmatprep.subr.bf16.mxu0 0
    %7851 = vmatpush1.bf16.msra.mxu0 0
    %7852 = vmatprep.subr.bf16.mxu0 0
    %7853 = vmatpush1.bf16.msra.mxu0 0
    %7854 = vmatprep.mubr.bf16.mxu0 0
    %7855 = vmatmul.mubr.bf16.gmra.mrb[0].mxu0 %v7731
    %v7856 = vpop.f32.mrb[0].mxu0
    %v7857 = vadd.f32 0.0, %v7856
    %v7858 = vpop.f32.mrb[0].mxu0
    %v7859 = vadd.f32 0.0, %v7858
    %v7860 = vpop.f32.mrb[0].mxu0
    %v7861 = vpop.f32.mrb[0].mxu0
    %7862 = vdwg.mxu0
    %7863 = vmatprep.subr.bf16.mxu0 %v7749
    %7864 = vmatpush1.bf16.msra.mxu0 %v7746
    %7865 = vmatprep.subr.bf16.mxu0 0
    %7866 = vmatpush1.bf16.msra.mxu0 0
    %7867 = vmatprep.subr.bf16.mxu0 0
    %7868 = vmatpush1.bf16.msra.mxu0 0
    %7869 = vmatprep.subr.bf16.mxu0 0
    %7870 = vmatpush1.bf16.msra.mxu0 0
    %7871 = vmatprep.subr.bf16.mxu0 0
    %7872 = vmatpush1.bf16.msra.mxu0 0
    %7873 = vmatprep.subr.bf16.mxu0 0
    %7874 = vmatpush1.bf16.msra.mxu0 0
    %7875 = vmatprep.subr.bf16.mxu0 0
    %7876 = vmatpush1.bf16.msra.mxu0 0
    %7877 = vmatprep.subr.bf16.mxu0 0
    %7878 = vmatpush1.bf16.msra.mxu0 0
    %7879 = vmatprep.subr.bf16.mxu0 0
    %7880 = vmatpush1.bf16.msra.mxu0 0
    %7881 = vmatprep.subr.bf16.mxu0 0
    %7882 = vmatpush1.bf16.msra.mxu0 0
    %7883 = vmatprep.subr.bf16.mxu0 0
    %7884 = vmatpush1.bf16.msra.mxu0 0
    %7885 = vmatprep.subr.bf16.mxu0 0
    %7886 = vmatpush1.bf16.msra.mxu0 0
    %7887 = vmatprep.subr.bf16.mxu0 0
    %7888 = vmatpush1.bf16.msra.mxu0 0
    %7889 = vmatprep.subr.bf16.mxu0 0
    %7890 = vmatpush1.bf16.msra.mxu0 0
    %7891 = vmatprep.subr.bf16.mxu0 0
    %7892 = vmatpush1.bf16.msra.mxu0 0
    %7893 = vmatprep.subr.bf16.mxu0 0
    %7894 = vmatpush1.bf16.msra.mxu0 0
    %7895 = vmatprep.mubr.bf16.mxu0 0
    %7896 = vmatmul.mubr.bf16.gmra.mrb[0].mxu0 %v7731
    %v7897 = vpop.f32.mrb[0].mxu0
    %v7898 = vadd.f32 0.0, %v7897
    %v7899 = vpop.f32.mrb[0].mxu0
    %v7900 = vadd.f32 0.0, %v7899
    %v7901 = vpop.f32.mrb[0].mxu0
    %v7902 = vpop.f32.mrb[0].mxu0
    %7903 = vdwg.mxu0
    %7904 = vmatprep.subr.bf16.mxu0 %v7755
    %7905 = vmatpush1.bf16.msra.mxu0 %v7752
    %7906 = vmatprep.subr.bf16.mxu0 0
    %7907 = vmatpush1.bf16.msra.mxu0 0
    %7908 = vmatprep.subr.bf16.mxu0 0
    %7909 = vmatpush1.bf16.msra.mxu0 0
    %7910 = vmatprep.subr.bf16.mxu0 0
    %7911 = vmatpush1.bf16.msra.mxu0 0
    %7912 = vmatprep.subr.bf16.mxu0 0
    %7913 = vmatpush1.bf16.msra.mxu0 0
    %7914 = vmatprep.subr.bf16.mxu0 0
    %7915 = vmatpush1.bf16.msra.mxu0 0
    %7916 = vmatprep.subr.bf16.mxu0 0
    %7917 = vmatpush1.bf16.msra.mxu0 0
    %7918 = vmatprep.subr.bf16.mxu0 0
    %7919 = vmatpush1.bf16.msra.mxu0 0
    %7920 = vmatprep.subr.bf16.mxu0 0
    %7921 = vmatpush1.bf16.msra.mxu0 0
    %7922 = vmatprep.subr.bf16.mxu0 0
    %7923 = vmatpush1.bf16.msra.mxu0 0
    %7924 = vmatprep.subr.bf16.mxu0 0
    %7925 = vmatpush1.bf16.msra.mxu0 0
    %7926 = vmatprep.subr.bf16.mxu0 0
    %7927 = vmatpush1.bf16.msra.mxu0 0
    %7928 = vmatprep.subr.bf16.mxu0 0
    %7929 = vmatpush1.bf16.msra.mxu0 0
    %7930 = vmatprep.subr.bf16.mxu0 0
    %7931 = vmatpush1.bf16.msra.mxu0 0
    %7932 = vmatprep.subr.bf16.mxu0 0
    %7933 = vmatpush1.bf16.msra.mxu0 0
    %7934 = vmatprep.subr.bf16.mxu0 0
    %7935 = vmatpush1.bf16.msra.mxu0 0
    %7936 = vmatprep.mubr.bf16.mxu0 0
    %7937 = vmatmul.mubr.bf16.gmra.mrb[0].mxu0 %v7731
    %v7938 = vpop.f32.mrb[0].mxu0
    %v7939 = vadd.f32 0.0, %v7938
    %v7940 = vpop.f32.mrb[0].mxu0
    %v7941 = vadd.f32 0.0, %v7940
    %v7942 = vpop.f32.mrb[0].mxu0
    %v7943 = vpop.f32.mrb[0].mxu0
    %7944 = vdwg.mxu0
    %7945 = vmatprep.subr.bf16.mxu0 %v7761
    %7946 = vmatpush1.bf16.msra.mxu0 %v7758
    %7947 = vmatprep.subr.bf16.mxu0 0
    %7948 = vmatpush1.bf16.msra.mxu0 0
    %7949 = vmatprep.subr.bf16.mxu0 0
    %7950 = vmatpush1.bf16.msra.mxu0 0
    %7951 = vmatprep.subr.bf16.mxu0 0
    %7952 = vmatpush1.bf16.msra.mxu0 0
    %7953 = vmatprep.subr.bf16.mxu0 0
    %7954 = vmatpush1.bf16.msra.mxu0 0
    %7955 = vmatprep.subr.bf16.mxu0 0
    %7956 = vmatpush1.bf16.msra.mxu0 0
    %7957 = vmatprep.subr.bf16.mxu0 0
    %7958 = vmatpush1.bf16.msra.mxu0 0
    %7959 = vmatprep.subr.bf16.mxu0 0
    %7960 = vmatpush1.bf16.msra.mxu0 0
    %7961 = vmatprep.subr.bf16.mxu0 0
    %7962 = vmatpush1.bf16.msra.mxu0 0
    %7963 = vmatprep.subr.bf16.mxu0 0
    %7964 = vmatpush1.bf16.msra.mxu0 0
    %7965 = vmatprep.subr.bf16.mxu0 0
    %7966 = vmatpush1.bf16.msra.mxu0 0
    %7967 = vmatprep.subr.bf16.mxu0 0
    %7968 = vmatpush1.bf16.msra.mxu0 0
    %7969 = vmatprep.subr.bf16.mxu0 0
    %7970 = vmatpush1.bf16.msra.mxu0 0
    %7971 = vmatprep.subr.bf16.mxu0 0
    %7972 = vmatpush1.bf16.msra.mxu0 0
    %7973 = vmatprep.subr.bf16.mxu0 0
    %7974 = vmatpush1.bf16.msra.mxu0 0
    %7975 = vmatprep.subr.bf16.mxu0 0
    %7976 = vmatpush1.bf16.msra.mxu0 0
    %7977 = vmatprep.mubr.bf16.mxu0 0
    %7978 = vmatmul.mubr.bf16.gmra.mrb[0].mxu0 %v7731
    %v7979 = vpop.f32.mrb[0].mxu0
    %v7980 = vadd.f32 0.0, %v7979
    %v7981 = vpop.f32.mrb[0].mxu0
    %v7982 = vadd.f32 0.0, %v7981
    %v7983 = vpop.f32.mrb[0].mxu0
    %v7984 = vpop.f32.mrb[0].mxu0
    %7985 = vdwg.mxu0
    %7986 = vmatprep.subr.bf16.mxu0 %v7767
    %7987 = vmatpush1.bf16.msra.mxu0 %v7764
    %7988 = vmatprep.subr.bf16.mxu0 0
    %7989 = vmatpush1.bf16.msra.mxu0 0
    %7990 = vmatprep.subr.bf16.mxu0 0
    %7991 = vmatpush1.bf16.msra.mxu0 0
    %7992 = vmatprep.subr.bf16.mxu0 0
    %7993 = vmatpush1.bf16.msra.mxu0 0
    %7994 = vmatprep.subr.bf16.mxu0 0
    %7995 = vmatpush1.bf16.msra.mxu0 0
    %7996 = vmatprep.subr.bf16.mxu0 0
    %7997 = vmatpush1.bf16.msra.mxu0 0
    %7998 = vmatprep.subr.bf16.mxu0 0
    %7999 = vmatpush1.bf16.msra.mxu0 0
    %8000 = vmatprep.subr.bf16.mxu0 0
    %8001 = vmatpush1.bf16.msra.mxu0 0
    %8002 = vmatprep.subr.bf16.mxu0 0
    %8003 = vmatpush1.bf16.msra.mxu0 0
    %8004 = vmatprep.subr.bf16.mxu0 0
    %8005 = vmatpush1.bf16.msra.mxu0 0
    %8006 = vmatprep.subr.bf16.mxu0 0
    %8007 = vmatpush1.bf16.msra.mxu0 0
    %8008 = vmatprep.subr.bf16.mxu0 0
    %8009 = vmatpush1.bf16.msra.mxu0 0
    %8010 = vmatprep.subr.bf16.mxu0 0
    %8011 = vmatpush1.bf16.msra.mxu0 0
    %8012 = vmatprep.subr.bf16.mxu0 0
    %8013 = vmatpush1.bf16.msra.mxu0 0
    %8014 = vmatprep.subr.bf16.mxu0 0
    %8015 = vmatpush1.bf16.msra.mxu0 0
    %8016 = vmatprep.subr.bf16.mxu0 0
    %8017 = vmatpush1.bf16.msra.mxu0 0
    %8018 = vmatprep.mubr.bf16.mxu0 0
    %8019 = vmatmul.mubr.bf16.gmra.mrb[0].mxu0 %v7731
    %v8020 = vpop.f32.mrb[0].mxu0
    %v8021 = vadd.f32 0.0, %v8020
    %v8022 = vpop.f32.mrb[0].mxu0
    %v8023 = vadd.f32 0.0, %v8022
    %v8024 = vpop.f32.mrb[0].mxu0
    %v8025 = vpop.f32.mrb[0].mxu0
    %8026 = vdwg.mxu0
    %8027 = vmatprep.subr.bf16.mxu0 %v7773
    %8028 = vmatpush1.bf16.msra.mxu0 %v7770
    %8029 = vmatprep.subr.bf16.mxu0 0
    %8030 = vmatpush1.bf16.msra.mxu0 0
    %8031 = vmatprep.subr.bf16.mxu0 0
    %8032 = vmatpush1.bf16.msra.mxu0 0
    %8033 = vmatprep.subr.bf16.mxu0 0
    %8034 = vmatpush1.bf16.msra.mxu0 0
    %8035 = vmatprep.subr.bf16.mxu0 0
    %8036 = vmatpush1.bf16.msra.mxu0 0
    %8037 = vmatprep.subr.bf16.mxu0 0
    %8038 = vmatpush1.bf16.msra.mxu0 0
    %8039 = vmatprep.subr.bf16.mxu0 0
    %8040 = vmatpush1.bf16.msra.mxu0 0
    %8041 = vmatprep.subr.bf16.mxu0 0
    %8042 = vmatpush1.bf16.msra.mxu0 0
    %8043 = vmatprep.subr.bf16.mxu0 0
    %8044 = vmatpush1.bf16.msra.mxu0 0
    %8045 = vmatprep.subr.bf16.mxu0 0
    %8046 = vmatpush1.bf16.msra.mxu0 0
    %8047 = vmatprep.subr.bf16.mxu0 0
    %8048 = vmatpush1.bf16.msra.mxu0 0
    %8049 = vmatprep.subr.bf16.mxu0 0
    %8050 = vmatpush1.bf16.msra.mxu0 0
    %8051 = vmatprep.subr.bf16.mxu0 0
    %8052 = vmatpush1.bf16.msra.mxu0 0
    %8053 = vmatprep.subr.bf16.mxu0 0
    %8054 = vmatpush1.bf16.msra.mxu0 0
    %8055 = vmatprep.subr.bf16.mxu0 0
    %8056 = vmatpush1.bf16.msra.mxu0 0
    %8057 = vmatprep.subr.bf16.mxu0 0
    %8058 = vmatpush1.bf16.msra.mxu0 0
    %8059 = vmatprep.mubr.bf16.mxu0 0
    %8060 = vmatmul.mubr.bf16.gmra.mrb[0].mxu0 %v7731
    %v8061 = vpop.f32.mrb[0].mxu0
    %v8062 = vadd.f32 0.0, %v8061
    %v8063 = vpop.f32.mrb[0].mxu0
    %v8064 = vadd.f32 0.0, %v8063
    %v8065 = vpop.f32.mrb[0].mxu0
    %v8066 = vpop.f32.mrb[0].mxu0
    %8067 = vdwg.mxu0
    %8068 = vmatprep.subr.bf16.mxu0 %v7779
    %8069 = vmatpush1.bf16.msra.mxu0 %v7776
    %8070 = vmatprep.subr.bf16.mxu0 0
    %8071 = vmatpush1.bf16.msra.mxu0 0
    %8072 = vmatprep.subr.bf16.mxu0 0
    %8073 = vmatpush1.bf16.msra.mxu0 0
    %8074 = vmatprep.subr.bf16.mxu0 0
    %8075 = vmatpush1.bf16.msra.mxu0 0
    %8076 = vmatprep.subr.bf16.mxu0 0
    %8077 = vmatpush1.bf16.msra.mxu0 0
    %8078 = vmatprep.subr.bf16.mxu0 0
    %8079 = vmatpush1.bf16.msra.mxu0 0
    %8080 = vmatprep.subr.bf16.mxu0 0
    %8081 = vmatpush1.bf16.msra.mxu0 0
    %8082 = vmatprep.subr.bf16.mxu0 0
    %8083 = vmatpush1.bf16.msra.mxu0 0
    %8084 = vmatprep.subr.bf16.mxu0 0
    %8085 = vmatpush1.bf16.msra.mxu0 0
    %8086 = vmatprep.subr.bf16.mxu0 0
    %8087 = vmatpush1.bf16.msra.mxu0 0
    %8088 = vmatprep.subr.bf16.mxu0 0
    %8089 = vmatpush1.bf16.msra.mxu0 0
    %8090 = vmatprep.subr.bf16.mxu0 0
    %8091 = vmatpush1.bf16.msra.mxu0 0
    %8092 = vmatprep.subr.bf16.mxu0 0
    %8093 = vmatpush1.bf16.msra.mxu0 0
    %8094 = vmatprep.subr.bf16.mxu0 0
    %8095 = vmatpush1.bf16.msra.mxu0 0
    %8096 = vmatprep.subr.bf16.mxu0 0
    %8097 = vmatpush1.bf16.msra.mxu0 0
    %8098 = vmatprep.subr.bf16.mxu0 0
    %8099 = vmatpush1.bf16.msra.mxu0 0
    %8100 = vmatprep.mubr.bf16.mxu0 0
    %8101 = vmatmul.mubr.bf16.gmra.mrb[0].mxu0 %v7731
    %v8102 = vpop.f32.mrb[0].mxu0
    %v8103 = vadd.f32 0.0, %v8102
    %v8104 = vpop.f32.mrb[0].mxu0
    %v8105 = vadd.f32 0.0, %v8104
    %v8106 = vpop.f32.mrb[0].mxu0
    %v8107 = vpop.f32.mrb[0].mxu0
    %8108 = vdwg.mxu0
    %v8109 = vmul.f32 %v7816, %v3124
    %v8110 = vmul.f32 %v7818, %v3128
    %v8111 = vmul.f32 %v7857, %v3132
    %v8112 = vmul.f32 %v7859, %v3136
    %v8113 = vmul.f32 %v7898, %v3140
    %v8114 = vmul.f32 %v7900, %v3144
    %v8115 = vmul.f32 %v7939, %v3148
    %v8116 = vmul.f32 %v7941, %v3152
    %v8117 = vmul.f32 %v7980, %v3156
    %v8118 = vmul.f32 %v7982, %v3160
    %v8119 = vmul.f32 %v8021, %v3164
    %v8120 = vmul.f32 %v8023, %v3168
    %v8121 = vmul.f32 %v8062, %v3172
    %v8122 = vmul.f32 %v8064, %v3176
    %v8123 = vmul.f32 %v8103, %v3180
    %v8124 = vmul.f32 %v8105, %v3184
    %v8125 = vadd.f32 %v7664, %v8109
    %v8126 = vadd.f32 %v7665, %v8110
    %v8127 = vadd.f32 %v7666, %v8111
    %v8128 = vadd.f32 %v7667, %v8112
    %v8129 = vadd.f32 %v7668, %v8113
    %v8130 = vadd.f32 %v7669, %v8114
    %v8131 = vadd.f32 %v7670, %v8115
    %v8132 = vadd.f32 %v7671, %v8116
    %v8133 = vadd.f32 %v7672, %v8117
    %v8134 = vadd.f32 %v7673, %v8118
    %v8135 = vadd.f32 %v7674, %v8119
    %v8136 = vadd.f32 %v7675, %v8120
    %v8137 = vadd.f32 %v7676, %v8121
    %v8138 = vadd.f32 %v7677, %v8122
    %v8139 = vadd.f32 %v7678, %v8123
    %v8140 = vadd.f32 %v7679, %v8124
    %v8141 = vld [vmem:[#allocation3 + $0x4] sm:$0xff]
    %v8142 = vld [vmem:[#allocation3 + $0xc] sm:$0xff]
    %v8143 = vld [vmem:[#allocation3 + $0x14] sm:$0xff]
    %v8144 = vld [vmem:[#allocation3 + $0x1c] sm:$0xff]
    %v8145 = vld [vmem:[#allocation3 + $0x24] sm:$0xff]
    %v8146 = vld [vmem:[#allocation3 + $0x2c] sm:$0xff]
    %v8147 = vld [vmem:[#allocation3 + $0x34] sm:$0xff]
    %v8148 = vld [vmem:[#allocation3 + $0x3c] sm:$0xff]
    %v8149 = vld [vmem:[#allocation3 + $0x44] sm:$0xf]
    %s8150 = scalar_lea.vmem %s7, 10
    %v8151 = vld [vmem:[%s8150] sm:$0x3]
    %v8161 = vunpack.c.l.b16 %v8141
    %v8162 = vunpack.c.h.b16 %v8141
    %v8163 = vunpack.c.l.b16 %v8142
    %v8164 = vunpack.c.h.b16 %v8142
    %v8165 = vunpack.c.l.b16 %v8143
    %v8166 = vunpack.c.h.b16 %v8143
    %v8167 = vunpack.c.l.b16 %v8144
    %v8168 = vunpack.c.h.b16 %v8144
    %v8169 = vunpack.c.l.b16 %v8145
    %v8170 = vunpack.c.h.b16 %v8145
    %v8171 = vunpack.c.l.b16 %v8146
    %v8172 = vunpack.c.h.b16 %v8146
    %v8173 = vunpack.c.l.b16 %v8147
    %v8174 = vunpack.c.h.b16 %v8147
    %v8175 = vunpack.c.l.b16 %v8148
    %v8176 = vunpack.c.h.b16 %v8148
    %v8177 = vunpack.c.l.b16 %v8149
    %v8178 = vpack.c.b16 %v8161, %v8161
    %v8179 = vpack.c.b16 %v8162, %v8162
    %v8180 = vpack.c.b16 %v8163, %v8163
    %v8181 = vpack.c.b16 %v8164, %v8164
    %v8182 = vpack.c.b16 %v8165, %v8165
    %v8183 = vpack.c.b16 %v8166, %v8166
    %v8184 = vpack.c.b16 %v8167, %v8167
    %v8185 = vpack.c.b16 %v8168, %v8168
    %v8186 = vpack.c.b16 %v8169, %v8169
    %v8187 = vpack.c.b16 %v8170, %v8170
    %v8188 = vpack.c.b16 %v8171, %v8171
    %v8189 = vpack.c.b16 %v8172, %v8172
    %v8190 = vpack.c.b16 %v8173, %v8173
    %v8191 = vpack.c.b16 %v8174, %v8174
    %v8192 = vpack.c.b16 %v8175, %v8175
    %v8193 = vpack.c.b16 %v8176, %v8176
    %v8194 = vpack.c.b16 %v8177, %v8177
    %8195 = vrot.lane.b32.xlu0 %v8178, 127
    %v8196 = vpop.permute.xlu0 %8195
    %8197 = vrot.lane.b32.xlu0 %v8179, 127
    %v8198 = vpop.permute.xlu0 %8197
    %8199 = vrot.lane.b32.xlu0 %v8180, 127
    %v8200 = vpop.permute.xlu0 %8199
    %8201 = vrot.lane.b32.xlu0 %v8181, 127
    %v8202 = vpop.permute.xlu0 %8201
    %8203 = vrot.lane.b32.xlu0 %v8182, 127
    %v8204 = vpop.permute.xlu0 %8203
    %8205 = vrot.lane.b32.xlu0 %v8183, 127
    %v8206 = vpop.permute.xlu0 %8205
    %8207 = vrot.lane.b32.xlu0 %v8184, 127
    %v8208 = vpop.permute.xlu0 %8207
    %8209 = vrot.lane.b32.xlu0 %v8185, 127
    %v8210 = vpop.permute.xlu0 %8209
    %8211 = vrot.lane.b32.xlu0 %v8186, 127
    %v8212 = vpop.permute.xlu0 %8211
    %8213 = vrot.lane.b32.xlu0 %v8187, 127
    %v8214 = vpop.permute.xlu0 %8213
    %8215 = vrot.lane.b32.xlu0 %v8188, 127
    %v8216 = vpop.permute.xlu0 %8215
    %8217 = vrot.lane.b32.xlu0 %v8189, 127
    %v8218 = vpop.permute.xlu0 %8217
    %8219 = vrot.lane.b32.xlu0 %v8190, 127
    %v8220 = vpop.permute.xlu0 %8219
    %8221 = vrot.lane.b32.xlu0 %v8191, 127
    %v8222 = vpop.permute.xlu0 %8221
    %8223 = vrot.lane.b32.xlu0 %v8192, 127
    %v8224 = vpop.permute.xlu0 %8223
    %8225 = vrot.lane.b32.xlu0 %v8193, 127
    %v8226 = vpop.permute.xlu0 %8225
    %8227 = vrot.lane.b32.xlu0 %v8194, 127
    %v8228 = vpop.permute.xlu0 %8227
    %v8229 = vsel %vm3321, %v8196, %v8198
    %v8230 = vsel %vm3321, %v8198, %v8200
    %v8231 = vsel %vm3321, %v8200, %v8202
    %v8232 = vsel %vm3321, %v8202, %v8204
    %v8233 = vsel %vm3321, %v8204, %v8206
    %v8234 = vsel %vm3321, %v8206, %v8208
    %v8235 = vsel %vm3321, %v8208, %v8210
    %v8236 = vsel %vm3321, %v8210, %v8212
    %v8237 = vsel %vm3321, %v8212, %v8214
    %v8238 = vsel %vm3321, %v8214, %v8216
    %v8239 = vsel %vm3321, %v8216, %v8218
    %v8240 = vsel %vm3321, %v8218, %v8220
    %v8241 = vsel %vm3321, %v8220, %v8222
    %v8242 = vsel %vm3321, %v8222, %v8224
    %v8243 = vsel %vm3321, %v8224, %v8226
    %v8244 = vsel %vm3321, %v8226, %v8228
    %v8246 = vsel %vm5879, %v8151, 0
    %v8249 = vsel %vm208, %v8229, 0
    %v8252 = vsel %vm208, %v8230, 0
    %v8255 = vsel %vm208, %v8231, 0
    %v8258 = vsel %vm208, %v8232, 0
    %v8261 = vsel %vm208, %v8233, 0
    %v8264 = vsel %vm208, %v8234, 0
    %v8267 = vsel %vm208, %v8235, 0
    %v8270 = vsel %vm208, %v8236, 0
    %v8273 = vsel %vm208, %v8237, 0
    %v8276 = vsel %vm208, %v8238, 0
    %v8279 = vsel %vm208, %v8239, 0
    %v8282 = vsel %vm208, %v8240, 0
    %v8285 = vsel %vm208, %v8241, 0
    %v8288 = vsel %vm208, %v8242, 0
    %v8291 = vsel %vm208, %v8243, 0
    %v8294 = vsel %vm208, %v8244, 0
    %8296 = vmatprep.subr.bf16.mxu0 %v8252
    %8297 = vmatpush1.bf16.msra.mxu0 %v8249
    %8298 = vmatprep.subr.bf16.mxu0 0
    %8299 = vmatpush1.bf16.msra.mxu0 0
    %8300 = vmatprep.subr.bf16.mxu0 0
    %8301 = vmatpush1.bf16.msra.mxu0 0
    %8302 = vmatprep.subr.bf16.mxu0 0
    %8303 = vmatpush1.bf16.msra.mxu0 0
    %8304 = vmatprep.subr.bf16.mxu0 0
    %8305 = vmatpush1.bf16.msra.mxu0 0
    %8306 = vmatprep.subr.bf16.mxu0 0
    %8307 = vmatpush1.bf16.msra.mxu0 0
    %8308 = vmatprep.subr.bf16.mxu0 0
    %8309 = vmatpush1.bf16.msra.mxu0 0
    %8310 = vmatprep.subr.bf16.mxu0 0
    %8311 = vmatpush1.bf16.msra.mxu0 0
    %8312 = vmatprep.subr.bf16.mxu0 0
    %8313 = vmatpush1.bf16.msra.mxu0 0
    %8314 = vmatprep.subr.bf16.mxu0 0
    %8315 = vmatpush1.bf16.msra.mxu0 0
    %8316 = vmatprep.subr.bf16.mxu0 0
    %8317 = vmatpush1.bf16.msra.mxu0 0
    %8318 = vmatprep.subr.bf16.mxu0 0
    %8319 = vmatpush1.bf16.msra.mxu0 0
    %8320 = vmatprep.subr.bf16.mxu0 0
    %8321 = vmatpush1.bf16.msra.mxu0 0
    %8322 = vmatprep.subr.bf16.mxu0 0
    %8323 = vmatpush1.bf16.msra.mxu0 0
    %8324 = vmatprep.subr.bf16.mxu0 0
    %8325 = vmatpush1.bf16.msra.mxu0 0
    %8326 = vmatprep.subr.bf16.mxu0 0
    %8327 = vmatpush1.bf16.msra.mxu0 0
    %8328 = vmatprep.mubr.bf16.mxu0 0
    %8329 = vmatmul.mubr.bf16.gmra.mrb[0].mxu0 %v8246
    %v8330 = vpop.f32.mrb[0].mxu0
    %v8331 = vadd.f32 0.0, %v8330
    %v8332 = vpop.f32.mrb[0].mxu0
    %v8333 = vadd.f32 0.0, %v8332
    %v8334 = vpop.f32.mrb[0].mxu0
    %v8335 = vpop.f32.mrb[0].mxu0
    %8336 = vdwg.mxu0
    %8337 = vmatprep.subr.bf16.mxu0 %v8258
    %8338 = vmatpush1.bf16.msra.mxu0 %v8255
    %8339 = vmatprep.subr.bf16.mxu0 0
    %8340 = vmatpush1.bf16.msra.mxu0 0
    %8341 = vmatprep.subr.bf16.mxu0 0
    %8342 = vmatpush1.bf16.msra.mxu0 0
    %8343 = vmatprep.subr.bf16.mxu0 0
    %8344 = vmatpush1.bf16.msra.mxu0 0
    %8345 = vmatprep.subr.bf16.mxu0 0
    %8346 = vmatpush1.bf16.msra.mxu0 0
    %8347 = vmatprep.subr.bf16.mxu0 0
    %8348 = vmatpush1.bf16.msra.mxu0 0
    %8349 = vmatprep.subr.bf16.mxu0 0
    %8350 = vmatpush1.bf16.msra.mxu0 0
    %8351 = vmatprep.subr.bf16.mxu0 0
    %8352 = vmatpush1.bf16.msra.mxu0 0
    %8353 = vmatprep.subr.bf16.mxu0 0
    %8354 = vmatpush1.bf16.msra.mxu0 0
    %8355 = vmatprep.subr.bf16.mxu0 0
    %8356 = vmatpush1.bf16.msra.mxu0 0
    %8357 = vmatprep.subr.bf16.mxu0 0
    %8358 = vmatpush1.bf16.msra.mxu0 0
    %8359 = vmatprep.subr.bf16.mxu0 0
    %8360 = vmatpush1.bf16.msra.mxu0 0
    %8361 = vmatprep.subr.bf16.mxu0 0
    %8362 = vmatpush1.bf16.msra.mxu0 0
    %8363 = vmatprep.subr.bf16.mxu0 0
    %8364 = vmatpush1.bf16.msra.mxu0 0
    %8365 = vmatprep.subr.bf16.mxu0 0
    %8366 = vmatpush1.bf16.msra.mxu0 0
    %8367 = vmatprep.subr.bf16.mxu0 0
    %8368 = vmatpush1.bf16.msra.mxu0 0
    %8369 = vmatprep.mubr.bf16.mxu0 0
    %8370 = vmatmul.mubr.bf16.gmra.mrb[0].mxu0 %v8246
    %v8371 = vpop.f32.mrb[0].mxu0
    %v8372 = vadd.f32 0.0, %v8371
    %v8373 = vpop.f32.mrb[0].mxu0
    %v8374 = vadd.f32 0.0, %v8373
    %v8375 = vpop.f32.mrb[0].mxu0
    %v8376 = vpop.f32.mrb[0].mxu0
    %8377 = vdwg.mxu0
    %8378 = vmatprep.subr.bf16.mxu0 %v8264
    %8379 = vmatpush1.bf16.msra.mxu0 %v8261
    %8380 = vmatprep.subr.bf16.mxu0 0
    %8381 = vmatpush1.bf16.msra.mxu0 0
    %8382 = vmatprep.subr.bf16.mxu0 0
    %8383 = vmatpush1.bf16.msra.mxu0 0
    %8384 = vmatprep.subr.bf16.mxu0 0
    %8385 = vmatpush1.bf16.msra.mxu0 0
    %8386 = vmatprep.subr.bf16.mxu0 0
    %8387 = vmatpush1.bf16.msra.mxu0 0
    %8388 = vmatprep.subr.bf16.mxu0 0
    %8389 = vmatpush1.bf16.msra.mxu0 0
    %8390 = vmatprep.subr.bf16.mxu0 0
    %8391 = vmatpush1.bf16.msra.mxu0 0
    %8392 = vmatprep.subr.bf16.mxu0 0
    %8393 = vmatpush1.bf16.msra.mxu0 0
    %8394 = vmatprep.subr.bf16.mxu0 0
    %8395 = vmatpush1.bf16.msra.mxu0 0
    %8396 = vmatprep.subr.bf16.mxu0 0
    %8397 = vmatpush1.bf16.msra.mxu0 0
    %8398 = vmatprep.subr.bf16.mxu0 0
    %8399 = vmatpush1.bf16.msra.mxu0 0
    %8400 = vmatprep.subr.bf16.mxu0 0
    %8401 = vmatpush1.bf16.msra.mxu0 0
    %8402 = vmatprep.subr.bf16.mxu0 0
    %8403 = vmatpush1.bf16.msra.mxu0 0
    %8404 = vmatprep.subr.bf16.mxu0 0
    %8405 = vmatpush1.bf16.msra.mxu0 0
    %8406 = vmatprep.subr.bf16.mxu0 0
    %8407 = vmatpush1.bf16.msra.mxu0 0
    %8408 = vmatprep.subr.bf16.mxu0 0
    %8409 = vmatpush1.bf16.msra.mxu0 0
    %8410 = vmatprep.mubr.bf16.mxu0 0
    %8411 = vmatmul.mubr.bf16.gmra.mrb[0].mxu0 %v8246
    %v8412 = vpop.f32.mrb[0].mxu0
    %v8413 = vadd.f32 0.0, %v8412
    %v8414 = vpop.f32.mrb[0].mxu0
    %v8415 = vadd.f32 0.0, %v8414
    %v8416 = vpop.f32.mrb[0].mxu0
    %v8417 = vpop.f32.mrb[0].mxu0
    %8418 = vdwg.mxu0
    %8419 = vmatprep.subr.bf16.mxu0 %v8270
    %8420 = vmatpush1.bf16.msra.mxu0 %v8267
    %8421 = vmatprep.subr.bf16.mxu0 0
    %8422 = vmatpush1.bf16.msra.mxu0 0
    %8423 = vmatprep.subr.bf16.mxu0 0
    %8424 = vmatpush1.bf16.msra.mxu0 0
    %8425 = vmatprep.subr.bf16.mxu0 0
    %8426 = vmatpush1.bf16.msra.mxu0 0
    %8427 = vmatprep.subr.bf16.mxu0 0
    %8428 = vmatpush1.bf16.msra.mxu0 0
    %8429 = vmatprep.subr.bf16.mxu0 0
    %8430 = vmatpush1.bf16.msra.mxu0 0
    %8431 = vmatprep.subr.bf16.mxu0 0
    %8432 = vmatpush1.bf16.msra.mxu0 0
    %8433 = vmatprep.subr.bf16.mxu0 0
    %8434 = vmatpush1.bf16.msra.mxu0 0
    %8435 = vmatprep.subr.bf16.mxu0 0
    %8436 = vmatpush1.bf16.msra.mxu0 0
    %8437 = vmatprep.subr.bf16.mxu0 0
    %8438 = vmatpush1.bf16.msra.mxu0 0
    %8439 = vmatprep.subr.bf16.mxu0 0
    %8440 = vmatpush1.bf16.msra.mxu0 0
    %8441 = vmatprep.subr.bf16.mxu0 0
    %8442 = vmatpush1.bf16.msra.mxu0 0
    %8443 = vmatprep.subr.bf16.mxu0 0
    %8444 = vmatpush1.bf16.msra.mxu0 0
    %8445 = vmatprep.subr.bf16.mxu0 0
    %8446 = vmatpush1.bf16.msra.mxu0 0
    %8447 = vmatprep.subr.bf16.mxu0 0
    %8448 = vmatpush1.bf16.msra.mxu0 0
    %8449 = vmatprep.subr.bf16.mxu0 0
    %8450 = vmatpush1.bf16.msra.mxu0 0
    %8451 = vmatprep.mubr.bf16.mxu0 0
    %8452 = vmatmul.mubr.bf16.gmra.mrb[0].mxu0 %v8246
    %v8453 = vpop.f32.mrb[0].mxu0
    %v8454 = vadd.f32 0.0, %v8453
    %v8455 = vpop.f32.mrb[0].mxu0
    %v8456 = vadd.f32 0.0, %v8455
    %v8457 = vpop.f32.mrb[0].mxu0
    %v8458 = vpop.f32.mrb[0].mxu0
    %8459 = vdwg.mxu0
    %8460 = vmatprep.subr.bf16.mxu0 %v8276
    %8461 = vmatpush1.bf16.msra.mxu0 %v8273
    %8462 = vmatprep.subr.bf16.mxu0 0
    %8463 = vmatpush1.bf16.msra.mxu0 0
    %8464 = vmatprep.subr.bf16.mxu0 0
    %8465 = vmatpush1.bf16.msra.mxu0 0
    %8466 = vmatprep.subr.bf16.mxu0 0
    %8467 = vmatpush1.bf16.msra.mxu0 0
    %8468 = vmatprep.subr.bf16.mxu0 0
    %8469 = vmatpush1.bf16.msra.mxu0 0
    %8470 = vmatprep.subr.bf16.mxu0 0
    %8471 = vmatpush1.bf16.msra.mxu0 0
    %8472 = vmatprep.subr.bf16.mxu0 0
    %8473 = vmatpush1.bf16.msra.mxu0 0
    %8474 = vmatprep.subr.bf16.mxu0 0
    %8475 = vmatpush1.bf16.msra.mxu0 0
    %8476 = vmatprep.subr.bf16.mxu0 0
    %8477 = vmatpush1.bf16.msra.mxu0 0
    %8478 = vmatprep.subr.bf16.mxu0 0
    %8479 = vmatpush1.bf16.msra.mxu0 0
    %8480 = vmatprep.subr.bf16.mxu0 0
    %8481 = vmatpush1.bf16.msra.mxu0 0
    %8482 = vmatprep.subr.bf16.mxu0 0
    %8483 = vmatpush1.bf16.msra.mxu0 0
    %8484 = vmatprep.subr.bf16.mxu0 0
    %8485 = vmatpush1.bf16.msra.mxu0 0
    %8486 = vmatprep.subr.bf16.mxu0 0
    %8487 = vmatpush1.bf16.msra.mxu0 0
    %8488 = vmatprep.subr.bf16.mxu0 0
    %8489 = vmatpush1.bf16.msra.mxu0 0
    %8490 = vmatprep.subr.bf16.mxu0 0
    %8491 = vmatpush1.bf16.msra.mxu0 0
    %8492 = vmatprep.mubr.bf16.mxu0 0
    %8493 = vmatmul.mubr.bf16.gmra.mrb[0].mxu0 %v8246
    %v8494 = vpop.f32.mrb[0].mxu0
    %v8495 = vadd.f32 0.0, %v8494
    %v8496 = vpop.f32.mrb[0].mxu0
    %v8497 = vadd.f32 0.0, %v8496
    %v8498 = vpop.f32.mrb[0].mxu0
    %v8499 = vpop.f32.mrb[0].mxu0
    %8500 = vdwg.mxu0
    %8501 = vmatprep.subr.bf16.mxu0 %v8282
    %8502 = vmatpush1.bf16.msra.mxu0 %v8279
    %8503 = vmatprep.subr.bf16.mxu0 0
    %8504 = vmatpush1.bf16.msra.mxu0 0
    %8505 = vmatprep.subr.bf16.mxu0 0
    %8506 = vmatpush1.bf16.msra.mxu0 0
    %8507 = vmatprep.subr.bf16.mxu0 0
    %8508 = vmatpush1.bf16.msra.mxu0 0
    %8509 = vmatprep.subr.bf16.mxu0 0
    %8510 = vmatpush1.bf16.msra.mxu0 0
    %8511 = vmatprep.subr.bf16.mxu0 0
    %8512 = vmatpush1.bf16.msra.mxu0 0
    %8513 = vmatprep.subr.bf16.mxu0 0
    %8514 = vmatpush1.bf16.msra.mxu0 0
    %8515 = vmatprep.subr.bf16.mxu0 0
    %8516 = vmatpush1.bf16.msra.mxu0 0
    %8517 = vmatprep.subr.bf16.mxu0 0
    %8518 = vmatpush1.bf16.msra.mxu0 0
    %8519 = vmatprep.subr.bf16.mxu0 0
    %8520 = vmatpush1.bf16.msra.mxu0 0
    %8521 = vmatprep.subr.bf16.mxu0 0
    %8522 = vmatpush1.bf16.msra.mxu0 0
    %8523 = vmatprep.subr.bf16.mxu0 0
    %8524 = vmatpush1.bf16.msra.mxu0 0
    %8525 = vmatprep.subr.bf16.mxu0 0
    %8526 = vmatpush1.bf16.msra.mxu0 0
    %8527 = vmatprep.subr.bf16.mxu0 0
    %8528 = vmatpush1.bf16.msra.mxu0 0
    %8529 = vmatprep.subr.bf16.mxu0 0
    %8530 = vmatpush1.bf16.msra.mxu0 0
    %8531 = vmatprep.subr.bf16.mxu0 0
    %8532 = vmatpush1.bf16.msra.mxu0 0
    %8533 = vmatprep.mubr.bf16.mxu0 0
    %8534 = vmatmul.mubr.bf16.gmra.mrb[0].mxu0 %v8246
    %v8535 = vpop.f32.mrb[0].mxu0
    %v8536 = vadd.f32 0.0, %v8535
    %v8537 = vpop.f32.mrb[0].mxu0
    %v8538 = vadd.f32 0.0, %v8537
    %v8539 = vpop.f32.mrb[0].mxu0
    %v8540 = vpop.f32.mrb[0].mxu0
    %8541 = vdwg.mxu0
    %8542 = vmatprep.subr.bf16.mxu0 %v8288
    %8543 = vmatpush1.bf16.msra.mxu0 %v8285
    %8544 = vmatprep.subr.bf16.mxu0 0
    %8545 = vmatpush1.bf16.msra.mxu0 0
    %8546 = vmatprep.subr.bf16.mxu0 0
    %8547 = vmatpush1.bf16.msra.mxu0 0
    %8548 = vmatprep.subr.bf16.mxu0 0
    %8549 = vmatpush1.bf16.msra.mxu0 0
    %8550 = vmatprep.subr.bf16.mxu0 0
    %8551 = vmatpush1.bf16.msra.mxu0 0
    %8552 = vmatprep.subr.bf16.mxu0 0
    %8553 = vmatpush1.bf16.msra.mxu0 0
    %8554 = vmatprep.subr.bf16.mxu0 0
    %8555 = vmatpush1.bf16.msra.mxu0 0
    %8556 = vmatprep.subr.bf16.mxu0 0
    %8557 = vmatpush1.bf16.msra.mxu0 0
    %8558 = vmatprep.subr.bf16.mxu0 0
    %8559 = vmatpush1.bf16.msra.mxu0 0
    %8560 = vmatprep.subr.bf16.mxu0 0
    %8561 = vmatpush1.bf16.msra.mxu0 0
    %8562 = vmatprep.subr.bf16.mxu0 0
    %8563 = vmatpush1.bf16.msra.mxu0 0
    %8564 = vmatprep.subr.bf16.mxu0 0
    %8565 = vmatpush1.bf16.msra.mxu0 0
    %8566 = vmatprep.subr.bf16.mxu0 0
    %8567 = vmatpush1.bf16.msra.mxu0 0
    %8568 = vmatprep.subr.bf16.mxu0 0
    %8569 = vmatpush1.bf16.msra.mxu0 0
    %8570 = vmatprep.subr.bf16.mxu0 0
    %8571 = vmatpush1.bf16.msra.mxu0 0
    %8572 = vmatprep.subr.bf16.mxu0 0
    %8573 = vmatpush1.bf16.msra.mxu0 0
    %8574 = vmatprep.mubr.bf16.mxu0 0
    %8575 = vmatmul.mubr.bf16.gmra.mrb[0].mxu0 %v8246
    %v8576 = vpop.f32.mrb[0].mxu0
    %v8577 = vadd.f32 0.0, %v8576
    %v8578 = vpop.f32.mrb[0].mxu0
    %v8579 = vadd.f32 0.0, %v8578
    %v8580 = vpop.f32.mrb[0].mxu0
    %v8581 = vpop.f32.mrb[0].mxu0
    %8582 = vdwg.mxu0
    %8583 = vmatprep.subr.bf16.mxu0 %v8294
    %8584 = vmatpush1.bf16.msra.mxu0 %v8291
    %8585 = vmatprep.subr.bf16.mxu0 0
    %8586 = vmatpush1.bf16.msra.mxu0 0
    %8587 = vmatprep.subr.bf16.mxu0 0
    %8588 = vmatpush1.bf16.msra.mxu0 0
    %8589 = vmatprep.subr.bf16.mxu0 0
    %8590 = vmatpush1.bf16.msra.mxu0 0
    %8591 = vmatprep.subr.bf16.mxu0 0
    %8592 = vmatpush1.bf16.msra.mxu0 0
    %8593 = vmatprep.subr.bf16.mxu0 0
    %8594 = vmatpush1.bf16.msra.mxu0 0
    %8595 = vmatprep.subr.bf16.mxu0 0
    %8596 = vmatpush1.bf16.msra.mxu0 0
    %8597 = vmatprep.subr.bf16.mxu0 0
    %8598 = vmatpush1.bf16.msra.mxu0 0
    %8599 = vmatprep.subr.bf16.mxu0 0
    %8600 = vmatpush1.bf16.msra.mxu0 0
    %8601 = vmatprep.subr.bf16.mxu0 0
    %8602 = vmatpush1.bf16.msra.mxu0 0
    %8603 = vmatprep.subr.bf16.mxu0 0
    %8604 = vmatpush1.bf16.msra.mxu0 0
    %8605 = vmatprep.subr.bf16.mxu0 0
    %8606 = vmatpush1.bf16.msra.mxu0 0
    %8607 = vmatprep.subr.bf16.mxu0 0
    %8608 = vmatpush1.bf16.msra.mxu0 0
    %8609 = vmatprep.subr.bf16.mxu0 0
    %8610 = vmatpush1.bf16.msra.mxu0 0
    %8611 = vmatprep.subr.bf16.mxu0 0
    %8612 = vmatpush1.bf16.msra.mxu0 0
    %8613 = vmatprep.subr.bf16.mxu0 0
    %8614 = vmatpush1.bf16.msra.mxu0 0
    %8615 = vmatprep.mubr.bf16.mxu0 0
    %8616 = vmatmul.mubr.bf16.gmra.mrb[0].mxu0 %v8246
    %v8617 = vpop.f32.mrb[0].mxu0
    %v8618 = vadd.f32 0.0, %v8617
    %v8619 = vpop.f32.mrb[0].mxu0
    %v8620 = vadd.f32 0.0, %v8619
    %v8621 = vpop.f32.mrb[0].mxu0
    %v8622 = vpop.f32.mrb[0].mxu0
    %8623 = vdwg.mxu0
    %v8624 = vmul.f32 %v8331, %v3722
    %v8625 = vmul.f32 %v8333, %v3726
    %v8626 = vmul.f32 %v8372, %v3730
    %v8627 = vmul.f32 %v8374, %v3734
    %v8628 = vmul.f32 %v8413, %v3738
    %v8629 = vmul.f32 %v8415, %v3742
    %v8630 = vmul.f32 %v8454, %v3746
    %v8631 = vmul.f32 %v8456, %v3750
    %v8632 = vmul.f32 %v8495, %v3754
    %v8633 = vmul.f32 %v8497, %v3758
    %v8634 = vmul.f32 %v8536, %v3762
    %v8635 = vmul.f32 %v8538, %v3766
    %v8636 = vmul.f32 %v8577, %v3770
    %v8637 = vmul.f32 %v8579, %v3774
    %v8638 = vmul.f32 %v8618, %v3778
    %v8639 = vmul.f32 %v8620, %v3782
    %v8640 = vadd.f32 %v8125, %v8624
    %v8641 = vadd.f32 %v8126, %v8625
    %v8642 = vadd.f32 %v8127, %v8626
    %v8643 = vadd.f32 %v8128, %v8627
    %v8644 = vadd.f32 %v8129, %v8628
    %v8645 = vadd.f32 %v8130, %v8629
    %v8646 = vadd.f32 %v8131, %v8630
    %v8647 = vadd.f32 %v8132, %v8631
    %v8648 = vadd.f32 %v8133, %v8632
    %v8649 = vadd.f32 %v8134, %v8633
    %v8650 = vadd.f32 %v8135, %v8634
    %v8651 = vadd.f32 %v8136, %v8635
    %v8652 = vadd.f32 %v8137, %v8636
    %v8653 = vadd.f32 %v8138, %v8637
    %v8654 = vadd.f32 %v8139, %v8638
    %v8655 = vadd.f32 %v8140, %v8639
    %s8656 = scalar_lea.vmem %s7, 12
    %v8657 = vld [vmem:[%s8656] sm:$0x3]
    %8658 = vrot.lane.b32.xlu0 %v8178, 97
    %v8659 = vpop.permute.xlu0 %8658
    %8660 = vrot.lane.b32.xlu0 %v8179, 97
    %v8661 = vpop.permute.xlu0 %8660
    %8662 = vrot.lane.b32.xlu0 %v8180, 97
    %v8663 = vpop.permute.xlu0 %8662
    %8664 = vrot.lane.b32.xlu0 %v8181, 97
    %v8665 = vpop.permute.xlu0 %8664
    %8666 = vrot.lane.b32.xlu0 %v8182, 97
    %v8667 = vpop.permute.xlu0 %8666
    %8668 = vrot.lane.b32.xlu0 %v8183, 97
    %v8669 = vpop.permute.xlu0 %8668
    %8670 = vrot.lane.b32.xlu0 %v8184, 97
    %v8671 = vpop.permute.xlu0 %8670
    %8672 = vrot.lane.b32.xlu0 %v8185, 97
    %v8673 = vpop.permute.xlu0 %8672
    %8674 = vrot.lane.b32.xlu0 %v8186, 97
    %v8675 = vpop.permute.xlu0 %8674
    %8676 = vrot.lane.b32.xlu0 %v8187, 97
    %v8677 = vpop.permute.xlu0 %8676
    %8678 = vrot.lane.b32.xlu0 %v8188, 97
    %v8679 = vpop.permute.xlu0 %8678
    %8680 = vrot.lane.b32.xlu0 %v8189, 97
    %v8681 = vpop.permute.xlu0 %8680
    %8682 = vrot.lane.b32.xlu0 %v8190, 97
    %v8683 = vpop.permute.xlu0 %8682
    %8684 = vrot.lane.b32.xlu0 %v8191, 97
    %v8685 = vpop.permute.xlu0 %8684
    %8686 = vrot.lane.b32.xlu0 %v8192, 97
    %v8687 = vpop.permute.xlu0 %8686
    %8688 = vrot.lane.b32.xlu0 %v8193, 97
    %v8689 = vpop.permute.xlu0 %8688
    %8690 = vrot.lane.b32.xlu0 %v8194, 97
    %v8691 = vpop.permute.xlu0 %8690
    %v8692 = vsel %vm3867, %v8659, %v8661
    %v8693 = vsel %vm3867, %v8661, %v8663
    %v8694 = vsel %vm3867, %v8663, %v8665
    %v8695 = vsel %vm3867, %v8665, %v8667
    %v8696 = vsel %vm3867, %v8667, %v8669
    %v8697 = vsel %vm3867, %v8669, %v8671
    %v8698 = vsel %vm3867, %v8671, %v8673
    %v8699 = vsel %vm3867, %v8673, %v8675
    %v8700 = vsel %vm3867, %v8675, %v8677
    %v8701 = vsel %vm3867, %v8677, %v8679
    %v8702 = vsel %vm3867, %v8679, %v8681
    %v8703 = vsel %vm3867, %v8681, %v8683
    %v8704 = vsel %vm3867, %v8683, %v8685
    %v8705 = vsel %vm3867, %v8685, %v8687
    %v8706 = vsel %vm3867, %v8687, %v8689
    %v8707 = vsel %vm3867, %v8689, %v8691
    %v8709 = vsel %vm5879, %v8657, 0
    %v8712 = vsel %vm208, %v8692, 0
    %v8715 = vsel %vm208, %v8693, 0
    %v8718 = vsel %vm208, %v8694, 0
    %v8721 = vsel %vm208, %v8695, 0
    %v8724 = vsel %vm208, %v8696, 0
    %v8727 = vsel %vm208, %v8697, 0
    %v8730 = vsel %vm208, %v8698, 0
    %v8733 = vsel %vm208, %v8699, 0
    %v8736 = vsel %vm208, %v8700, 0
    %v8739 = vsel %vm208, %v8701, 0
    %v8742 = vsel %vm208, %v8702, 0
    %v8745 = vsel %vm208, %v8703, 0
    %v8748 = vsel %vm208, %v8704, 0
    %v8751 = vsel %vm208, %v8705, 0
    %v8754 = vsel %vm208, %v8706, 0
    %v8757 = vsel %vm208, %v8707, 0
    %8759 = vmatprep.subr.bf16.mxu0 %v8715
    %8760 = vmatpush1.bf16.msra.mxu0 %v8712
    %8761 = vmatprep.subr.bf16.mxu0 0
    %8762 = vmatpush1.bf16.msra.mxu0 0
    %8763 = vmatprep.subr.bf16.mxu0 0
    %8764 = vmatpush1.bf16.msra.mxu0 0
    %8765 = vmatprep.subr.bf16.mxu0 0
    %8766 = vmatpush1.bf16.msra.mxu0 0
    %8767 = vmatprep.subr.bf16.mxu0 0
    %8768 = vmatpush1.bf16.msra.mxu0 0
    %8769 = vmatprep.subr.bf16.mxu0 0
    %8770 = vmatpush1.bf16.msra.mxu0 0
    %8771 = vmatprep.subr.bf16.mxu0 0
    %8772 = vmatpush1.bf16.msra.mxu0 0
    %8773 = vmatprep.subr.bf16.mxu0 0
    %8774 = vmatpush1.bf16.msra.mxu0 0
    %8775 = vmatprep.subr.bf16.mxu0 0
    %8776 = vmatpush1.bf16.msra.mxu0 0
    %8777 = vmatprep.subr.bf16.mxu0 0
    %8778 = vmatpush1.bf16.msra.mxu0 0
    %8779 = vmatprep.subr.bf16.mxu0 0
    %8780 = vmatpush1.bf16.msra.mxu0 0
    %8781 = vmatprep.subr.bf16.mxu0 0
    %8782 = vmatpush1.bf16.msra.mxu0 0
    %8783 = vmatprep.subr.bf16.mxu0 0
    %8784 = vmatpush1.bf16.msra.mxu0 0
    %8785 = vmatprep.subr.bf16.mxu0 0
    %8786 = vmatpush1.bf16.msra.mxu0 0
    %8787 = vmatprep.subr.bf16.mxu0 0
    %8788 = vmatpush1.bf16.msra.mxu0 0
    %8789 = vmatprep.subr.bf16.mxu0 0
    %8790 = vmatpush1.bf16.msra.mxu0 0
    %8791 = vmatprep.mubr.bf16.mxu0 0
    %8792 = vmatmul.mubr.bf16.gmra.mrb[0].mxu0 %v8709
    %v8793 = vpop.f32.mrb[0].mxu0
    %v8794 = vadd.f32 0.0, %v8793
    %v8795 = vpop.f32.mrb[0].mxu0
    %v8796 = vadd.f32 0.0, %v8795
    %v8797 = vpop.f32.mrb[0].mxu0
    %v8798 = vpop.f32.mrb[0].mxu0
    %8799 = vdwg.mxu0
    %8800 = vmatprep.subr.bf16.mxu0 %v8721
    %8801 = vmatpush1.bf16.msra.mxu0 %v8718
    %8802 = vmatprep.subr.bf16.mxu0 0
    %8803 = vmatpush1.bf16.msra.mxu0 0
    %8804 = vmatprep.subr.bf16.mxu0 0
    %8805 = vmatpush1.bf16.msra.mxu0 0
    %8806 = vmatprep.subr.bf16.mxu0 0
    %8807 = vmatpush1.bf16.msra.mxu0 0
    %8808 = vmatprep.subr.bf16.mxu0 0
    %8809 = vmatpush1.bf16.msra.mxu0 0
    %8810 = vmatprep.subr.bf16.mxu0 0
    %8811 = vmatpush1.bf16.msra.mxu0 0
    %8812 = vmatprep.subr.bf16.mxu0 0
    %8813 = vmatpush1.bf16.msra.mxu0 0
    %8814 = vmatprep.subr.bf16.mxu0 0
    %8815 = vmatpush1.bf16.msra.mxu0 0
    %8816 = vmatprep.subr.bf16.mxu0 0
    %8817 = vmatpush1.bf16.msra.mxu0 0
    %8818 = vmatprep.subr.bf16.mxu0 0
    %8819 = vmatpush1.bf16.msra.mxu0 0
    %8820 = vmatprep.subr.bf16.mxu0 0
    %8821 = vmatpush1.bf16.msra.mxu0 0
    %8822 = vmatprep.subr.bf16.mxu0 0
    %8823 = vmatpush1.bf16.msra.mxu0 0
    %8824 = vmatprep.subr.bf16.mxu0 0
    %8825 = vmatpush1.bf16.msra.mxu0 0
    %8826 = vmatprep.subr.bf16.mxu0 0
    %8827 = vmatpush1.bf16.msra.mxu0 0
    %8828 = vmatprep.subr.bf16.mxu0 0
    %8829 = vmatpush1.bf16.msra.mxu0 0
    %8830 = vmatprep.subr.bf16.mxu0 0
    %8831 = vmatpush1.bf16.msra.mxu0 0
    %8832 = vmatprep.mubr.bf16.mxu0 0
    %8833 = vmatmul.mubr.bf16.gmra.mrb[0].mxu0 %v8709
    %v8834 = vpop.f32.mrb[0].mxu0
    %v8835 = vadd.f32 0.0, %v8834
    %v8836 = vpop.f32.mrb[0].mxu0
    %v8837 = vadd.f32 0.0, %v8836
    %v8838 = vpop.f32.mrb[0].mxu0
    %v8839 = vpop.f32.mrb[0].mxu0
    %8840 = vdwg.mxu0
    %8841 = vmatprep.subr.bf16.mxu0 %v8727
    %8842 = vmatpush1.bf16.msra.mxu0 %v8724
    %8843 = vmatprep.subr.bf16.mxu0 0
    %8844 = vmatpush1.bf16.msra.mxu0 0
    %8845 = vmatprep.subr.bf16.mxu0 0
    %8846 = vmatpush1.bf16.msra.mxu0 0
    %8847 = vmatprep.subr.bf16.mxu0 0
    %8848 = vmatpush1.bf16.msra.mxu0 0
    %8849 = vmatprep.subr.bf16.mxu0 0
    %8850 = vmatpush1.bf16.msra.mxu0 0
    %8851 = vmatprep.subr.bf16.mxu0 0
    %8852 = vmatpush1.bf16.msra.mxu0 0
    %8853 = vmatprep.subr.bf16.mxu0 0
    %8854 = vmatpush1.bf16.msra.mxu0 0
    %8855 = vmatprep.subr.bf16.mxu0 0
    %8856 = vmatpush1.bf16.msra.mxu0 0
    %8857 = vmatprep.subr.bf16.mxu0 0
    %8858 = vmatpush1.bf16.msra.mxu0 0
    %8859 = vmatprep.subr.bf16.mxu0 0
    %8860 = vmatpush1.bf16.msra.mxu0 0
    %8861 = vmatprep.subr.bf16.mxu0 0
    %8862 = vmatpush1.bf16.msra.mxu0 0
    %8863 = vmatprep.subr.bf16.mxu0 0
    %8864 = vmatpush1.bf16.msra.mxu0 0
    %8865 = vmatprep.subr.bf16.mxu0 0
    %8866 = vmatpush1.bf16.msra.mxu0 0
    %8867 = vmatprep.subr.bf16.mxu0 0
    %8868 = vmatpush1.bf16.msra.mxu0 0
    %8869 = vmatprep.subr.bf16.mxu0 0
    %8870 = vmatpush1.bf16.msra.mxu0 0
    %8871 = vmatprep.subr.bf16.mxu0 0
    %8872 = vmatpush1.bf16.msra.mxu0 0
    %8873 = vmatprep.mubr.bf16.mxu0 0
    %8874 = vmatmul.mubr.bf16.gmra.mrb[0].mxu0 %v8709
    %v8875 = vpop.f32.mrb[0].mxu0
    %v8876 = vadd.f32 0.0, %v8875
    %v8877 = vpop.f32.mrb[0].mxu0
    %v8878 = vadd.f32 0.0, %v8877
    %v8879 = vpop.f32.mrb[0].mxu0
    %v8880 = vpop.f32.mrb[0].mxu0
    %8881 = vdwg.mxu0
    %8882 = vmatprep.subr.bf16.mxu0 %v8733
    %8883 = vmatpush1.bf16.msra.mxu0 %v8730
    %8884 = vmatprep.subr.bf16.mxu0 0
    %8885 = vmatpush1.bf16.msra.mxu0 0
    %8886 = vmatprep.subr.bf16.mxu0 0
    %8887 = vmatpush1.bf16.msra.mxu0 0
    %8888 = vmatprep.subr.bf16.mxu0 0
    %8889 = vmatpush1.bf16.msra.mxu0 0
    %8890 = vmatprep.subr.bf16.mxu0 0
    %8891 = vmatpush1.bf16.msra.mxu0 0
    %8892 = vmatprep.subr.bf16.mxu0 0
    %8893 = vmatpush1.bf16.msra.mxu0 0
    %8894 = vmatprep.subr.bf16.mxu0 0
    %8895 = vmatpush1.bf16.msra.mxu0 0
    %8896 = vmatprep.subr.bf16.mxu0 0
    %8897 = vmatpush1.bf16.msra.mxu0 0
    %8898 = vmatprep.subr.bf16.mxu0 0
    %8899 = vmatpush1.bf16.msra.mxu0 0
    %8900 = vmatprep.subr.bf16.mxu0 0
    %8901 = vmatpush1.bf16.msra.mxu0 0
    %8902 = vmatprep.subr.bf16.mxu0 0
    %8903 = vmatpush1.bf16.msra.mxu0 0
    %8904 = vmatprep.subr.bf16.mxu0 0
    %8905 = vmatpush1.bf16.msra.mxu0 0
    %8906 = vmatprep.subr.bf16.mxu0 0
    %8907 = vmatpush1.bf16.msra.mxu0 0
    %8908 = vmatprep.subr.bf16.mxu0 0
    %8909 = vmatpush1.bf16.msra.mxu0 0
    %8910 = vmatprep.subr.bf16.mxu0 0
    %8911 = vmatpush1.bf16.msra.mxu0 0
    %8912 = vmatprep.subr.bf16.mxu0 0
    %8913 = vmatpush1.bf16.msra.mxu0 0
    %8914 = vmatprep.mubr.bf16.mxu0 0
    %8915 = vmatmul.mubr.bf16.gmra.mrb[0].mxu0 %v8709
    %v8916 = vpop.f32.mrb[0].mxu0
    %v8917 = vadd.f32 0.0, %v8916
    %v8918 = vpop.f32.mrb[0].mxu0
    %v8919 = vadd.f32 0.0, %v8918
    %v8920 = vpop.f32.mrb[0].mxu0
    %v8921 = vpop.f32.mrb[0].mxu0
    %8922 = vdwg.mxu0
    %8923 = vmatprep.subr.bf16.mxu0 %v8739
    %8924 = vmatpush1.bf16.msra.mxu0 %v8736
    %8925 = vmatprep.subr.bf16.mxu0 0
    %8926 = vmatpush1.bf16.msra.mxu0 0
    %8927 = vmatprep.subr.bf16.mxu0 0
    %8928 = vmatpush1.bf16.msra.mxu0 0
    %8929 = vmatprep.subr.bf16.mxu0 0
    %8930 = vmatpush1.bf16.msra.mxu0 0
    %8931 = vmatprep.subr.bf16.mxu0 0
    %8932 = vmatpush1.bf16.msra.mxu0 0
    %8933 = vmatprep.subr.bf16.mxu0 0
    %8934 = vmatpush1.bf16.msra.mxu0 0
    %8935 = vmatprep.subr.bf16.mxu0 0
    %8936 = vmatpush1.bf16.msra.mxu0 0
    %8937 = vmatprep.subr.bf16.mxu0 0
    %8938 = vmatpush1.bf16.msra.mxu0 0
    %8939 = vmatprep.subr.bf16.mxu0 0
    %8940 = vmatpush1.bf16.msra.mxu0 0
    %8941 = vmatprep.subr.bf16.mxu0 0
    %8942 = vmatpush1.bf16.msra.mxu0 0
    %8943 = vmatprep.subr.bf16.mxu0 0
    %8944 = vmatpush1.bf16.msra.mxu0 0
    %8945 = vmatprep.subr.bf16.mxu0 0
    %8946 = vmatpush1.bf16.msra.mxu0 0
    %8947 = vmatprep.subr.bf16.mxu0 0
    %8948 = vmatpush1.bf16.msra.mxu0 0
    %8949 = vmatprep.subr.bf16.mxu0 0
    %8950 = vmatpush1.bf16.msra.mxu0 0
    %8951 = vmatprep.subr.bf16.mxu0 0
    %8952 = vmatpush1.bf16.msra.mxu0 0
    %8953 = vmatprep.subr.bf16.mxu0 0
    %8954 = vmatpush1.bf16.msra.mxu0 0
    %8955 = vmatprep.mubr.bf16.mxu0 0
    %8956 = vmatmul.mubr.bf16.gmra.mrb[0].mxu0 %v8709
    %v8957 = vpop.f32.mrb[0].mxu0
    %v8958 = vadd.f32 0.0, %v8957
    %v8959 = vpop.f32.mrb[0].mxu0
    %v8960 = vadd.f32 0.0, %v8959
    %v8961 = vpop.f32.mrb[0].mxu0
    %v8962 = vpop.f32.mrb[0].mxu0
    %8963 = vdwg.mxu0
    %8964 = vmatprep.subr.bf16.mxu0 %v8745
    %8965 = vmatpush1.bf16.msra.mxu0 %v8742
    %8966 = vmatprep.subr.bf16.mxu0 0
    %8967 = vmatpush1.bf16.msra.mxu0 0
    %8968 = vmatprep.subr.bf16.mxu0 0
    %8969 = vmatpush1.bf16.msra.mxu0 0
    %8970 = vmatprep.subr.bf16.mxu0 0
    %8971 = vmatpush1.bf16.msra.mxu0 0
    %8972 = vmatprep.subr.bf16.mxu0 0
    %8973 = vmatpush1.bf16.msra.mxu0 0
    %8974 = vmatprep.subr.bf16.mxu0 0
    %8975 = vmatpush1.bf16.msra.mxu0 0
    %8976 = vmatprep.subr.bf16.mxu0 0
    %8977 = vmatpush1.bf16.msra.mxu0 0
    %8978 = vmatprep.subr.bf16.mxu0 0
    %8979 = vmatpush1.bf16.msra.mxu0 0
    %8980 = vmatprep.subr.bf16.mxu0 0
    %8981 = vmatpush1.bf16.msra.mxu0 0
    %8982 = vmatprep.subr.bf16.mxu0 0
    %8983 = vmatpush1.bf16.msra.mxu0 0
    %8984 = vmatprep.subr.bf16.mxu0 0
    %8985 = vmatpush1.bf16.msra.mxu0 0
    %8986 = vmatprep.subr.bf16.mxu0 0
    %8987 = vmatpush1.bf16.msra.mxu0 0
    %8988 = vmatprep.subr.bf16.mxu0 0
    %8989 = vmatpush1.bf16.msra.mxu0 0
    %8990 = vmatprep.subr.bf16.mxu0 0
    %8991 = vmatpush1.bf16.msra.mxu0 0
    %8992 = vmatprep.subr.bf16.mxu0 0
    %8993 = vmatpush1.bf16.msra.mxu0 0
    %8994 = vmatprep.subr.bf16.mxu0 0
    %8995 = vmatpush1.bf16.msra.mxu0 0
    %8996 = vmatprep.mubr.bf16.mxu0 0
    %8997 = vmatmul.mubr.bf16.gmra.mrb[0].mxu0 %v8709
    %v8998 = vpop.f32.mrb[0].mxu0
    %v8999 = vadd.f32 0.0, %v8998
    %v9000 = vpop.f32.mrb[0].mxu0
    %v9001 = vadd.f32 0.0, %v9000
    %v9002 = vpop.f32.mrb[0].mxu0
    %v9003 = vpop.f32.mrb[0].mxu0
    %9004 = vdwg.mxu0
    %9005 = vmatprep.subr.bf16.mxu0 %v8751
    %9006 = vmatpush1.bf16.msra.mxu0 %v8748
    %9007 = vmatprep.subr.bf16.mxu0 0
    %9008 = vmatpush1.bf16.msra.mxu0 0
    %9009 = vmatprep.subr.bf16.mxu0 0
    %9010 = vmatpush1.bf16.msra.mxu0 0
    %9011 = vmatprep.subr.bf16.mxu0 0
    %9012 = vmatpush1.bf16.msra.mxu0 0
    %9013 = vmatprep.subr.bf16.mxu0 0
    %9014 = vmatpush1.bf16.msra.mxu0 0
    %9015 = vmatprep.subr.bf16.mxu0 0
    %9016 = vmatpush1.bf16.msra.mxu0 0
    %9017 = vmatprep.subr.bf16.mxu0 0
    %9018 = vmatpush1.bf16.msra.mxu0 0
    %9019 = vmatprep.subr.bf16.mxu0 0
    %9020 = vmatpush1.bf16.msra.mxu0 0
    %9021 = vmatprep.subr.bf16.mxu0 0
    %9022 = vmatpush1.bf16.msra.mxu0 0
    %9023 = vmatprep.subr.bf16.mxu0 0
    %9024 = vmatpush1.bf16.msra.mxu0 0
    %9025 = vmatprep.subr.bf16.mxu0 0
    %9026 = vmatpush1.bf16.msra.mxu0 0
    %9027 = vmatprep.subr.bf16.mxu0 0
    %9028 = vmatpush1.bf16.msra.mxu0 0
    %9029 = vmatprep.subr.bf16.mxu0 0
    %9030 = vmatpush1.bf16.msra.mxu0 0
    %9031 = vmatprep.subr.bf16.mxu0 0
    %9032 = vmatpush1.bf16.msra.mxu0 0
    %9033 = vmatprep.subr.bf16.mxu0 0
    %9034 = vmatpush1.bf16.msra.mxu0 0
    %9035 = vmatprep.subr.bf16.mxu0 0
    %9036 = vmatpush1.bf16.msra.mxu0 0
    %9037 = vmatprep.mubr.bf16.mxu0 0
    %9038 = vmatmul.mubr.bf16.gmra.mrb[0].mxu0 %v8709
    %v9039 = vpop.f32.mrb[0].mxu0
    %v9040 = vadd.f32 0.0, %v9039
    %v9041 = vpop.f32.mrb[0].mxu0
    %v9042 = vadd.f32 0.0, %v9041
    %v9043 = vpop.f32.mrb[0].mxu0
    %v9044 = vpop.f32.mrb[0].mxu0
    %9045 = vdwg.mxu0
    %9046 = vmatprep.subr.bf16.mxu0 %v8757
    %9047 = vmatpush1.bf16.msra.mxu0 %v8754
    %9048 = vmatprep.subr.bf16.mxu0 0
    %9049 = vmatpush1.bf16.msra.mxu0 0
    %9050 = vmatprep.subr.bf16.mxu0 0
    %9051 = vmatpush1.bf16.msra.mxu0 0
    %9052 = vmatprep.subr.bf16.mxu0 0
    %9053 = vmatpush1.bf16.msra.mxu0 0
    %9054 = vmatprep.subr.bf16.mxu0 0
    %9055 = vmatpush1.bf16.msra.mxu0 0
    %9056 = vmatprep.subr.bf16.mxu0 0
    %9057 = vmatpush1.bf16.msra.mxu0 0
    %9058 = vmatprep.subr.bf16.mxu0 0
    %9059 = vmatpush1.bf16.msra.mxu0 0
    %9060 = vmatprep.subr.bf16.mxu0 0
    %9061 = vmatpush1.bf16.msra.mxu0 0
    %9062 = vmatprep.subr.bf16.mxu0 0
    %9063 = vmatpush1.bf16.msra.mxu0 0
    %9064 = vmatprep.subr.bf16.mxu0 0
    %9065 = vmatpush1.bf16.msra.mxu0 0
    %9066 = vmatprep.subr.bf16.mxu0 0
    %9067 = vmatpush1.bf16.msra.mxu0 0
    %9068 = vmatprep.subr.bf16.mxu0 0
    %9069 = vmatpush1.bf16.msra.mxu0 0
    %9070 = vmatprep.subr.bf16.mxu0 0
    %9071 = vmatpush1.bf16.msra.mxu0 0
    %9072 = vmatprep.subr.bf16.mxu0 0
    %9073 = vmatpush1.bf16.msra.mxu0 0
    %9074 = vmatprep.subr.bf16.mxu0 0
    %9075 = vmatpush1.bf16.msra.mxu0 0
    %9076 = vmatprep.subr.bf16.mxu0 0
    %9077 = vmatpush1.bf16.msra.mxu0 0
    %9078 = vmatprep.mubr.bf16.mxu0 0
    %9079 = vmatmul.mubr.bf16.gmra.mrb[0].mxu0 %v8709
    %v9080 = vpop.f32.mrb[0].mxu0
    %v9081 = vadd.f32 0.0, %v9080
    %v9082 = vpop.f32.mrb[0].mxu0
    %v9083 = vadd.f32 0.0, %v9082
    %v9084 = vpop.f32.mrb[0].mxu0
    %v9085 = vpop.f32.mrb[0].mxu0
    %9086 = vdwg.mxu0
    %v9087 = vmul.f32 %v8794, %v4268
    %v9088 = vmul.f32 %v8796, %v4272
    %v9089 = vmul.f32 %v8835, %v4276
    %v9090 = vmul.f32 %v8837, %v4280
    %v9091 = vmul.f32 %v8876, %v4284
    %v9092 = vmul.f32 %v8878, %v4288
    %v9093 = vmul.f32 %v8917, %v4292
    %v9094 = vmul.f32 %v8919, %v4296
    %v9095 = vmul.f32 %v8958, %v4300
    %v9096 = vmul.f32 %v8960, %v4304
    %v9097 = vmul.f32 %v8999, %v4308
    %v9098 = vmul.f32 %v9001, %v4312
    %v9099 = vmul.f32 %v9040, %v4316
    %v9100 = vmul.f32 %v9042, %v4320
    %v9101 = vmul.f32 %v9081, %v4324
    %v9102 = vmul.f32 %v9083, %v4328
    %v9103 = vadd.f32 %v8640, %v9087
    %v9104 = vadd.f32 %v8641, %v9088
    %v9105 = vadd.f32 %v8642, %v9089
    %v9106 = vadd.f32 %v8643, %v9090
    %v9107 = vadd.f32 %v8644, %v9091
    %v9108 = vadd.f32 %v8645, %v9092
    %v9109 = vadd.f32 %v8646, %v9093
    %v9110 = vadd.f32 %v8647, %v9094
    %v9111 = vadd.f32 %v8648, %v9095
    %v9112 = vadd.f32 %v8649, %v9096
    %v9113 = vadd.f32 %v8650, %v9097
    %v9114 = vadd.f32 %v8651, %v9098
    %v9115 = vadd.f32 %v8652, %v9099
    %v9116 = vadd.f32 %v8653, %v9100
    %v9117 = vadd.f32 %v8654, %v9101
    %v9118 = vadd.f32 %v8655, %v9102
    %s9119 = scalar_lea.vmem %s7, 14
    %v9120 = vld [vmem:[%s9119] sm:$0x3]
    %9121 = vrot.lane.b32.xlu0 %v8178, 96
    %v9122 = vpop.permute.xlu0 %9121
    %9123 = vrot.lane.b32.xlu0 %v8179, 96
    %v9124 = vpop.permute.xlu0 %9123
    %9125 = vrot.lane.b32.xlu0 %v8180, 96
    %v9126 = vpop.permute.xlu0 %9125
    %9127 = vrot.lane.b32.xlu0 %v8181, 96
    %v9128 = vpop.permute.xlu0 %9127
    %9129 = vrot.lane.b32.xlu0 %v8182, 96
    %v9130 = vpop.permute.xlu0 %9129
    %9131 = vrot.lane.b32.xlu0 %v8183, 96
    %v9132 = vpop.permute.xlu0 %9131
    %9133 = vrot.lane.b32.xlu0 %v8184, 96
    %v9134 = vpop.permute.xlu0 %9133
    %9135 = vrot.lane.b32.xlu0 %v8185, 96
    %v9136 = vpop.permute.xlu0 %9135
    %9137 = vrot.lane.b32.xlu0 %v8186, 96
    %v9138 = vpop.permute.xlu0 %9137
    %9139 = vrot.lane.b32.xlu0 %v8187, 96
    %v9140 = vpop.permute.xlu0 %9139
    %9141 = vrot.lane.b32.xlu0 %v8188, 96
    %v9142 = vpop.permute.xlu0 %9141
    %9143 = vrot.lane.b32.xlu0 %v8189, 96
    %v9144 = vpop.permute.xlu0 %9143
    %9145 = vrot.lane.b32.xlu0 %v8190, 96
    %v9146 = vpop.permute.xlu0 %9145
    %9147 = vrot.lane.b32.xlu0 %v8191, 96
    %v9148 = vpop.permute.xlu0 %9147
    %9149 = vrot.lane.b32.xlu0 %v8192, 96
    %v9150 = vpop.permute.xlu0 %9149
    %9151 = vrot.lane.b32.xlu0 %v8193, 96
    %v9152 = vpop.permute.xlu0 %9151
    %9153 = vrot.lane.b32.xlu0 %v8194, 96
    %v9154 = vpop.permute.xlu0 %9153
    %v9155 = vsel %vm4413, %v9122, %v9124
    %v9156 = vsel %vm4413, %v9124, %v9126
    %v9157 = vsel %vm4413, %v9126, %v9128
    %v9158 = vsel %vm4413, %v9128, %v9130
    %v9159 = vsel %vm4413, %v9130, %v9132
    %v9160 = vsel %vm4413, %v9132, %v9134
    %v9161 = vsel %vm4413, %v9134, %v9136
    %v9162 = vsel %vm4413, %v9136, %v9138
    %v9163 = vsel %vm4413, %v9138, %v9140
    %v9164 = vsel %vm4413, %v9140, %v9142
    %v9165 = vsel %vm4413, %v9142, %v9144
    %v9166 = vsel %vm4413, %v9144, %v9146
    %v9167 = vsel %vm4413, %v9146, %v9148
    %v9168 = vsel %vm4413, %v9148, %v9150
    %v9169 = vsel %vm4413, %v9150, %v9152
    %v9170 = vsel %vm4413, %v9152, %v9154
    %v9172 = vsel %vm5879, %v9120, 0
    %v9175 = vsel %vm208, %v9155, 0
    %v9178 = vsel %vm208, %v9156, 0
    %v9181 = vsel %vm208, %v9157, 0
    %v9184 = vsel %vm208, %v9158, 0
    %v9187 = vsel %vm208, %v9159, 0
    %v9190 = vsel %vm208, %v9160, 0
    %v9193 = vsel %vm208, %v9161, 0
    %v9196 = vsel %vm208, %v9162, 0
    %v9199 = vsel %vm208, %v9163, 0
    %v9202 = vsel %vm208, %v9164, 0
    %v9205 = vsel %vm208, %v9165, 0
    %v9208 = vsel %vm208, %v9166, 0
    %v9211 = vsel %vm208, %v9167, 0
    %v9214 = vsel %vm208, %v9168, 0
    %v9217 = vsel %vm208, %v9169, 0
    %v9220 = vsel %vm208, %v9170, 0
    %9222 = vmatprep.subr.bf16.mxu0 %v9178
    %9223 = vmatpush1.bf16.msra.mxu0 %v9175
    %9224 = vmatprep.subr.bf16.mxu0 0
    %9225 = vmatpush1.bf16.msra.mxu0 0
    %9226 = vmatprep.subr.bf16.mxu0 0
    %9227 = vmatpush1.bf16.msra.mxu0 0
    %9228 = vmatprep.subr.bf16.mxu0 0
    %9229 = vmatpush1.bf16.msra.mxu0 0
    %9230 = vmatprep.subr.bf16.mxu0 0
    %9231 = vmatpush1.bf16.msra.mxu0 0
    %9232 = vmatprep.subr.bf16.mxu0 0
    %9233 = vmatpush1.bf16.msra.mxu0 0
    %9234 = vmatprep.subr.bf16.mxu0 0
    %9235 = vmatpush1.bf16.msra.mxu0 0
    %9236 = vmatprep.subr.bf16.mxu0 0
    %9237 = vmatpush1.bf16.msra.mxu0 0
    %9238 = vmatprep.subr.bf16.mxu0 0
    %9239 = vmatpush1.bf16.msra.mxu0 0
    %9240 = vmatprep.subr.bf16.mxu0 0
    %9241 = vmatpush1.bf16.msra.mxu0 0
    %9242 = vmatprep.subr.bf16.mxu0 0
    %9243 = vmatpush1.bf16.msra.mxu0 0
    %9244 = vmatprep.subr.bf16.mxu0 0
    %9245 = vmatpush1.bf16.msra.mxu0 0
    %9246 = vmatprep.subr.bf16.mxu0 0
    %9247 = vmatpush1.bf16.msra.mxu0 0
    %9248 = vmatprep.subr.bf16.mxu0 0
    %9249 = vmatpush1.bf16.msra.mxu0 0
    %9250 = vmatprep.subr.bf16.mxu0 0
    %9251 = vmatpush1.bf16.msra.mxu0 0
    %9252 = vmatprep.subr.bf16.mxu0 0
    %9253 = vmatpush1.bf16.msra.mxu0 0
    %9254 = vmatprep.mubr.bf16.mxu0 0
    %9255 = vmatmul.mubr.bf16.gmra.mrb[0].mxu0 %v9172
    %v9256 = vpop.f32.mrb[0].mxu0
    %v9257 = vadd.f32 0.0, %v9256
    %v9258 = vpop.f32.mrb[0].mxu0
    %v9259 = vadd.f32 0.0, %v9258
    %v9260 = vpop.f32.mrb[0].mxu0
    %v9261 = vpop.f32.mrb[0].mxu0
    %9262 = vdwg.mxu0
    %9263 = vmatprep.subr.bf16.mxu0 %v9184
    %9264 = vmatpush1.bf16.msra.mxu0 %v9181
    %9265 = vmatprep.subr.bf16.mxu0 0
    %9266 = vmatpush1.bf16.msra.mxu0 0
    %9267 = vmatprep.subr.bf16.mxu0 0
    %9268 = vmatpush1.bf16.msra.mxu0 0
    %9269 = vmatprep.subr.bf16.mxu0 0
    %9270 = vmatpush1.bf16.msra.mxu0 0
    %9271 = vmatprep.subr.bf16.mxu0 0
    %9272 = vmatpush1.bf16.msra.mxu0 0
    %9273 = vmatprep.subr.bf16.mxu0 0
    %9274 = vmatpush1.bf16.msra.mxu0 0
    %9275 = vmatprep.subr.bf16.mxu0 0
    %9276 = vmatpush1.bf16.msra.mxu0 0
    %9277 = vmatprep.subr.bf16.mxu0 0
    %9278 = vmatpush1.bf16.msra.mxu0 0
    %9279 = vmatprep.subr.bf16.mxu0 0
    %9280 = vmatpush1.bf16.msra.mxu0 0
    %9281 = vmatprep.subr.bf16.mxu0 0
    %9282 = vmatpush1.bf16.msra.mxu0 0
    %9283 = vmatprep.subr.bf16.mxu0 0
    %9284 = vmatpush1.bf16.msra.mxu0 0
    %9285 = vmatprep.subr.bf16.mxu0 0
    %9286 = vmatpush1.bf16.msra.mxu0 0
    %9287 = vmatprep.subr.bf16.mxu0 0
    %9288 = vmatpush1.bf16.msra.mxu0 0
    %9289 = vmatprep.subr.bf16.mxu0 0
    %9290 = vmatpush1.bf16.msra.mxu0 0
    %9291 = vmatprep.subr.bf16.mxu0 0
    %9292 = vmatpush1.bf16.msra.mxu0 0
    %9293 = vmatprep.subr.bf16.mxu0 0
    %9294 = vmatpush1.bf16.msra.mxu0 0
    %9295 = vmatprep.mubr.bf16.mxu0 0
    %9296 = vmatmul.mubr.bf16.gmra.mrb[0].mxu0 %v9172
    %v9297 = vpop.f32.mrb[0].mxu0
    %v9298 = vadd.f32 0.0, %v9297
    %v9299 = vpop.f32.mrb[0].mxu0
    %v9300 = vadd.f32 0.0, %v9299
    %v9301 = vpop.f32.mrb[0].mxu0
    %v9302 = vpop.f32.mrb[0].mxu0
    %9303 = vdwg.mxu0
    %9304 = vmatprep.subr.bf16.mxu0 %v9190
    %9305 = vmatpush1.bf16.msra.mxu0 %v9187
    %9306 = vmatprep.subr.bf16.mxu0 0
    %9307 = vmatpush1.bf16.msra.mxu0 0
    %9308 = vmatprep.subr.bf16.mxu0 0
    %9309 = vmatpush1.bf16.msra.mxu0 0
    %9310 = vmatprep.subr.bf16.mxu0 0
    %9311 = vmatpush1.bf16.msra.mxu0 0
    %9312 = vmatprep.subr.bf16.mxu0 0
    %9313 = vmatpush1.bf16.msra.mxu0 0
    %9314 = vmatprep.subr.bf16.mxu0 0
    %9315 = vmatpush1.bf16.msra.mxu0 0
    %9316 = vmatprep.subr.bf16.mxu0 0
    %9317 = vmatpush1.bf16.msra.mxu0 0
    %9318 = vmatprep.subr.bf16.mxu0 0
    %9319 = vmatpush1.bf16.msra.mxu0 0
    %9320 = vmatprep.subr.bf16.mxu0 0
    %9321 = vmatpush1.bf16.msra.mxu0 0
    %9322 = vmatprep.subr.bf16.mxu0 0
    %9323 = vmatpush1.bf16.msra.mxu0 0
    %9324 = vmatprep.subr.bf16.mxu0 0
    %9325 = vmatpush1.bf16.msra.mxu0 0
    %9326 = vmatprep.subr.bf16.mxu0 0
    %9327 = vmatpush1.bf16.msra.mxu0 0
    %9328 = vmatprep.subr.bf16.mxu0 0
    %9329 = vmatpush1.bf16.msra.mxu0 0
    %9330 = vmatprep.subr.bf16.mxu0 0
    %9331 = vmatpush1.bf16.msra.mxu0 0
    %9332 = vmatprep.subr.bf16.mxu0 0
    %9333 = vmatpush1.bf16.msra.mxu0 0
    %9334 = vmatprep.subr.bf16.mxu0 0
    %9335 = vmatpush1.bf16.msra.mxu0 0
    %9336 = vmatprep.mubr.bf16.mxu0 0
    %9337 = vmatmul.mubr.bf16.gmra.mrb[0].mxu0 %v9172
    %v9338 = vpop.f32.mrb[0].mxu0
    %v9339 = vadd.f32 0.0, %v9338
    %v9340 = vpop.f32.mrb[0].mxu0
    %v9341 = vadd.f32 0.0, %v9340
    %v9342 = vpop.f32.mrb[0].mxu0
    %v9343 = vpop.f32.mrb[0].mxu0
    %9344 = vdwg.mxu0
    %9345 = vmatprep.subr.bf16.mxu0 %v9196
    %9346 = vmatpush1.bf16.msra.mxu0 %v9193
    %9347 = vmatprep.subr.bf16.mxu0 0
    %9348 = vmatpush1.bf16.msra.mxu0 0
    %9349 = vmatprep.subr.bf16.mxu0 0
    %9350 = vmatpush1.bf16.msra.mxu0 0
    %9351 = vmatprep.subr.bf16.mxu0 0
    %9352 = vmatpush1.bf16.msra.mxu0 0
    %9353 = vmatprep.subr.bf16.mxu0 0
    %9354 = vmatpush1.bf16.msra.mxu0 0
    %9355 = vmatprep.subr.bf16.mxu0 0
    %9356 = vmatpush1.bf16.msra.mxu0 0
    %9357 = vmatprep.subr.bf16.mxu0 0
    %9358 = vmatpush1.bf16.msra.mxu0 0
    %9359 = vmatprep.subr.bf16.mxu0 0
    %9360 = vmatpush1.bf16.msra.mxu0 0
    %9361 = vmatprep.subr.bf16.mxu0 0
    %9362 = vmatpush1.bf16.msra.mxu0 0
    %9363 = vmatprep.subr.bf16.mxu0 0
    %9364 = vmatpush1.bf16.msra.mxu0 0
    %9365 = vmatprep.subr.bf16.mxu0 0
    %9366 = vmatpush1.bf16.msra.mxu0 0
    %9367 = vmatprep.subr.bf16.mxu0 0
    %9368 = vmatpush1.bf16.msra.mxu0 0
    %9369 = vmatprep.subr.bf16.mxu0 0
    %9370 = vmatpush1.bf16.msra.mxu0 0
    %9371 = vmatprep.subr.bf16.mxu0 0
    %9372 = vmatpush1.bf16.msra.mxu0 0
    %9373 = vmatprep.subr.bf16.mxu0 0
    %9374 = vmatpush1.bf16.msra.mxu0 0
    %9375 = vmatprep.subr.bf16.mxu0 0
    %9376 = vmatpush1.bf16.msra.mxu0 0
    %9377 = vmatprep.mubr.bf16.mxu0 0
    %9378 = vmatmul.mubr.bf16.gmra.mrb[0].mxu0 %v9172
    %v9379 = vpop.f32.mrb[0].mxu0
    %v9380 = vadd.f32 0.0, %v9379
    %v9381 = vpop.f32.mrb[0].mxu0
    %v9382 = vadd.f32 0.0, %v9381
    %v9383 = vpop.f32.mrb[0].mxu0
    %v9384 = vpop.f32.mrb[0].mxu0
    %9385 = vdwg.mxu0
    %9386 = vmatprep.subr.bf16.mxu0 %v9202
    %9387 = vmatpush1.bf16.msra.mxu0 %v9199
    %9388 = vmatprep.subr.bf16.mxu0 0
    %9389 = vmatpush1.bf16.msra.mxu0 0
    %9390 = vmatprep.subr.bf16.mxu0 0
    %9391 = vmatpush1.bf16.msra.mxu0 0
    %9392 = vmatprep.subr.bf16.mxu0 0
    %9393 = vmatpush1.bf16.msra.mxu0 0
    %9394 = vmatprep.subr.bf16.mxu0 0
    %9395 = vmatpush1.bf16.msra.mxu0 0
    %9396 = vmatprep.subr.bf16.mxu0 0
    %9397 = vmatpush1.bf16.msra.mxu0 0
    %9398 = vmatprep.subr.bf16.mxu0 0
    %9399 = vmatpush1.bf16.msra.mxu0 0
    %9400 = vmatprep.subr.bf16.mxu0 0
    %9401 = vmatpush1.bf16.msra.mxu0 0
    %9402 = vmatprep.subr.bf16.mxu0 0
    %9403 = vmatpush1.bf16.msra.mxu0 0
    %9404 = vmatprep.subr.bf16.mxu0 0
    %9405 = vmatpush1.bf16.msra.mxu0 0
    %9406 = vmatprep.subr.bf16.mxu0 0
    %9407 = vmatpush1.bf16.msra.mxu0 0
    %9408 = vmatprep.subr.bf16.mxu0 0
    %9409 = vmatpush1.bf16.msra.mxu0 0
    %9410 = vmatprep.subr.bf16.mxu0 0
    %9411 = vmatpush1.bf16.msra.mxu0 0
    %9412 = vmatprep.subr.bf16.mxu0 0
    %9413 = vmatpush1.bf16.msra.mxu0 0
    %9414 = vmatprep.subr.bf16.mxu0 0
    %9415 = vmatpush1.bf16.msra.mxu0 0
    %9416 = vmatprep.subr.bf16.mxu0 0
    %9417 = vmatpush1.bf16.msra.mxu0 0
    %9418 = vmatprep.mubr.bf16.mxu0 0
    %9419 = vmatmul.mubr.bf16.gmra.mrb[0].mxu0 %v9172
    %v9420 = vpop.f32.mrb[0].mxu0
    %v9421 = vadd.f32 0.0, %v9420
    %v9422 = vpop.f32.mrb[0].mxu0
    %v9423 = vadd.f32 0.0, %v9422
    %v9424 = vpop.f32.mrb[0].mxu0
    %v9425 = vpop.f32.mrb[0].mxu0
    %9426 = vdwg.mxu0
    %9427 = vmatprep.subr.bf16.mxu0 %v9208
    %9428 = vmatpush1.bf16.msra.mxu0 %v9205
    %9429 = vmatprep.subr.bf16.mxu0 0
    %9430 = vmatpush1.bf16.msra.mxu0 0
    %9431 = vmatprep.subr.bf16.mxu0 0
    %9432 = vmatpush1.bf16.msra.mxu0 0
    %9433 = vmatprep.subr.bf16.mxu0 0
    %9434 = vmatpush1.bf16.msra.mxu0 0
    %9435 = vmatprep.subr.bf16.mxu0 0
    %9436 = vmatpush1.bf16.msra.mxu0 0
    %9437 = vmatprep.subr.bf16.mxu0 0
    %9438 = vmatpush1.bf16.msra.mxu0 0
    %9439 = vmatprep.subr.bf16.mxu0 0
    %9440 = vmatpush1.bf16.msra.mxu0 0
    %9441 = vmatprep.subr.bf16.mxu0 0
    %9442 = vmatpush1.bf16.msra.mxu0 0
    %9443 = vmatprep.subr.bf16.mxu0 0
    %9444 = vmatpush1.bf16.msra.mxu0 0
    %9445 = vmatprep.subr.bf16.mxu0 0
    %9446 = vmatpush1.bf16.msra.mxu0 0
    %9447 = vmatprep.subr.bf16.mxu0 0
    %9448 = vmatpush1.bf16.msra.mxu0 0
    %9449 = vmatprep.subr.bf16.mxu0 0
    %9450 = vmatpush1.bf16.msra.mxu0 0
    %9451 = vmatprep.subr.bf16.mxu0 0
    %9452 = vmatpush1.bf16.msra.mxu0 0
    %9453 = vmatprep.subr.bf16.mxu0 0
    %9454 = vmatpush1.bf16.msra.mxu0 0
    %9455 = vmatprep.subr.bf16.mxu0 0
    %9456 = vmatpush1.bf16.msra.mxu0 0
    %9457 = vmatprep.subr.bf16.mxu0 0
    %9458 = vmatpush1.bf16.msra.mxu0 0
    %9459 = vmatprep.mubr.bf16.mxu0 0
    %9460 = vmatmul.mubr.bf16.gmra.mrb[0].mxu0 %v9172
    %v9461 = vpop.f32.mrb[0].mxu0
    %v9462 = vadd.f32 0.0, %v9461
    %v9463 = vpop.f32.mrb[0].mxu0
    %v9464 = vadd.f32 0.0, %v9463
    %v9465 = vpop.f32.mrb[0].mxu0
    %v9466 = vpop.f32.mrb[0].mxu0
    %9467 = vdwg.mxu0
    %9468 = vmatprep.subr.bf16.mxu0 %v9214
    %9469 = vmatpush1.bf16.msra.mxu0 %v9211
    %9470 = vmatprep.subr.bf16.mxu0 0
    %9471 = vmatpush1.bf16.msra.mxu0 0
    %9472 = vmatprep.subr.bf16.mxu0 0
    %9473 = vmatpush1.bf16.msra.mxu0 0
    %9474 = vmatprep.subr.bf16.mxu0 0
    %9475 = vmatpush1.bf16.msra.mxu0 0
    %9476 = vmatprep.subr.bf16.mxu0 0
    %9477 = vmatpush1.bf16.msra.mxu0 0
    %9478 = vmatprep.subr.bf16.mxu0 0
    %9479 = vmatpush1.bf16.msra.mxu0 0
    %9480 = vmatprep.subr.bf16.mxu0 0
    %9481 = vmatpush1.bf16.msra.mxu0 0
    %9482 = vmatprep.subr.bf16.mxu0 0
    %9483 = vmatpush1.bf16.msra.mxu0 0
    %9484 = vmatprep.subr.bf16.mxu0 0
    %9485 = vmatpush1.bf16.msra.mxu0 0
    %9486 = vmatprep.subr.bf16.mxu0 0
    %9487 = vmatpush1.bf16.msra.mxu0 0
    %9488 = vmatprep.subr.bf16.mxu0 0
    %9489 = vmatpush1.bf16.msra.mxu0 0
    %9490 = vmatprep.subr.bf16.mxu0 0
    %9491 = vmatpush1.bf16.msra.mxu0 0
    %9492 = vmatprep.subr.bf16.mxu0 0
    %9493 = vmatpush1.bf16.msra.mxu0 0
    %9494 = vmatprep.subr.bf16.mxu0 0
    %9495 = vmatpush1.bf16.msra.mxu0 0
    %9496 = vmatprep.subr.bf16.mxu0 0
    %9497 = vmatpush1.bf16.msra.mxu0 0
    %9498 = vmatprep.subr.bf16.mxu0 0
    %9499 = vmatpush1.bf16.msra.mxu0 0
    %9500 = vmatprep.mubr.bf16.mxu0 0
    %9501 = vmatmul.mubr.bf16.gmra.mrb[0].mxu0 %v9172
    %v9502 = vpop.f32.mrb[0].mxu0
    %v9503 = vadd.f32 0.0, %v9502
    %v9504 = vpop.f32.mrb[0].mxu0
    %v9505 = vadd.f32 0.0, %v9504
    %v9506 = vpop.f32.mrb[0].mxu0
    %v9507 = vpop.f32.mrb[0].mxu0
    %9508 = vdwg.mxu0
    %9509 = vmatprep.subr.bf16.mxu0 %v9220
    %9510 = vmatpush1.bf16.msra.mxu0 %v9217
    %9511 = vmatprep.subr.bf16.mxu0 0
    %9512 = vmatpush1.bf16.msra.mxu0 0
    %9513 = vmatprep.subr.bf16.mxu0 0
    %9514 = vmatpush1.bf16.msra.mxu0 0
    %9515 = vmatprep.subr.bf16.mxu0 0
    %9516 = vmatpush1.bf16.msra.mxu0 0
    %9517 = vmatprep.subr.bf16.mxu0 0
    %9518 = vmatpush1.bf16.msra.mxu0 0
    %9519 = vmatprep.subr.bf16.mxu0 0
    %9520 = vmatpush1.bf16.msra.mxu0 0
    %9521 = vmatprep.subr.bf16.mxu0 0
    %9522 = vmatpush1.bf16.msra.mxu0 0
    %9523 = vmatprep.subr.bf16.mxu0 0
    %9524 = vmatpush1.bf16.msra.mxu0 0
    %9525 = vmatprep.subr.bf16.mxu0 0
    %9526 = vmatpush1.bf16.msra.mxu0 0
    %9527 = vmatprep.subr.bf16.mxu0 0
    %9528 = vmatpush1.bf16.msra.mxu0 0
    %9529 = vmatprep.subr.bf16.mxu0 0
    %9530 = vmatpush1.bf16.msra.mxu0 0
    %9531 = vmatprep.subr.bf16.mxu0 0
    %9532 = vmatpush1.bf16.msra.mxu0 0
    %9533 = vmatprep.subr.bf16.mxu0 0
    %9534 = vmatpush1.bf16.msra.mxu0 0
    %9535 = vmatprep.subr.bf16.mxu0 0
    %9536 = vmatpush1.bf16.msra.mxu0 0
    %9537 = vmatprep.subr.bf16.mxu0 0
    %9538 = vmatpush1.bf16.msra.mxu0 0
    %9539 = vmatprep.subr.bf16.mxu0 0
    %9540 = vmatpush1.bf16.msra.mxu0 0
    %9541 = vmatprep.mubr.bf16.mxu0 0
    %9542 = vmatmul.mubr.bf16.gmra.mrb[0].mxu0 %v9172
    %v9543 = vpop.f32.mrb[0].mxu0
    %v9544 = vadd.f32 0.0, %v9543
    %v9545 = vpop.f32.mrb[0].mxu0
    %v9546 = vadd.f32 0.0, %v9545
    %v9547 = vpop.f32.mrb[0].mxu0
    %v9548 = vpop.f32.mrb[0].mxu0
    %9549 = vdwg.mxu0
    %v9550 = vmul.f32 %v9257, %v4814
    %v9551 = vmul.f32 %v9259, %v4818
    %v9552 = vmul.f32 %v9298, %v4822
    %v9553 = vmul.f32 %v9300, %v4826
    %v9554 = vmul.f32 %v9339, %v4830
    %v9555 = vmul.f32 %v9341, %v4834
    %v9556 = vmul.f32 %v9380, %v4838
    %v9557 = vmul.f32 %v9382, %v4842
    %v9558 = vmul.f32 %v9421, %v4846
    %v9559 = vmul.f32 %v9423, %v4850
    %v9560 = vmul.f32 %v9462, %v4854
    %v9561 = vmul.f32 %v9464, %v4858
    %v9562 = vmul.f32 %v9503, %v4862
    %v9563 = vmul.f32 %v9505, %v4866
    %v9564 = vmul.f32 %v9544, %v4870
    %v9565 = vmul.f32 %v9546, %v4874
    %v9566 = vadd.f32 %v9103, %v9550
    %v9567 = vadd.f32 %v9104, %v9551
    %v9568 = vadd.f32 %v9105, %v9552
    %v9569 = vadd.f32 %v9106, %v9553
    %v9570 = vadd.f32 %v9107, %v9554
    %v9571 = vadd.f32 %v9108, %v9555
    %v9572 = vadd.f32 %v9109, %v9556
    %v9573 = vadd.f32 %v9110, %v9557
    %v9574 = vadd.f32 %v9111, %v9558
    %v9575 = vadd.f32 %v9112, %v9559
    %v9576 = vadd.f32 %v9113, %v9560
    %v9577 = vadd.f32 %v9114, %v9561
    %v9578 = vadd.f32 %v9115, %v9562
    %v9579 = vadd.f32 %v9116, %v9563
    %v9580 = vadd.f32 %v9117, %v9564
    %v9581 = vadd.f32 %v9118, %v9565
    %s9582 = scalar_lea.vmem %s7, 16
    %v9583 = vld [vmem:[%s9582] sm:$0x3]
    %9584 = vrot.lane.b32.xlu0 %v8178, 95
    %v9585 = vpop.permute.xlu0 %9584
    %9586 = vrot.lane.b32.xlu0 %v8179, 95
    %v9587 = vpop.permute.xlu0 %9586
    %9588 = vrot.lane.b32.xlu0 %v8180, 95
    %v9589 = vpop.permute.xlu0 %9588
    %9590 = vrot.lane.b32.xlu0 %v8181, 95
    %v9591 = vpop.permute.xlu0 %9590
    %9592 = vrot.lane.b32.xlu0 %v8182, 95
    %v9593 = vpop.permute.xlu0 %9592
    %9594 = vrot.lane.b32.xlu0 %v8183, 95
    %v9595 = vpop.permute.xlu0 %9594
    %9596 = vrot.lane.b32.xlu0 %v8184, 95
    %v9597 = vpop.permute.xlu0 %9596
    %9598 = vrot.lane.b32.xlu0 %v8185, 95
    %v9599 = vpop.permute.xlu0 %9598
    %9600 = vrot.lane.b32.xlu0 %v8186, 95
    %v9601 = vpop.permute.xlu0 %9600
    %9602 = vrot.lane.b32.xlu0 %v8187, 95
    %v9603 = vpop.permute.xlu0 %9602
    %9604 = vrot.lane.b32.xlu0 %v8188, 95
    %v9605 = vpop.permute.xlu0 %9604
    %9606 = vrot.lane.b32.xlu0 %v8189, 95
    %v9607 = vpop.permute.xlu0 %9606
    %9608 = vrot.lane.b32.xlu0 %v8190, 95
    %v9609 = vpop.permute.xlu0 %9608
    %9610 = vrot.lane.b32.xlu0 %v8191, 95
    %v9611 = vpop.permute.xlu0 %9610
    %9612 = vrot.lane.b32.xlu0 %v8192, 95
    %v9613 = vpop.permute.xlu0 %9612
    %9614 = vrot.lane.b32.xlu0 %v8193, 95
    %v9615 = vpop.permute.xlu0 %9614
    %9616 = vrot.lane.b32.xlu0 %v8194, 95
    %v9617 = vpop.permute.xlu0 %9616
    %v9618 = vsel %vm4959, %v9585, %v9587
    %v9619 = vsel %vm4959, %v9587, %v9589
    %v9620 = vsel %vm4959, %v9589, %v9591
    %v9621 = vsel %vm4959, %v9591, %v9593
    %v9622 = vsel %vm4959, %v9593, %v9595
    %v9623 = vsel %vm4959, %v9595, %v9597
    %v9624 = vsel %vm4959, %v9597, %v9599
    %v9625 = vsel %vm4959, %v9599, %v9601
    %v9626 = vsel %vm4959, %v9601, %v9603
    %v9627 = vsel %vm4959, %v9603, %v9605
    %v9628 = vsel %vm4959, %v9605, %v9607
    %v9629 = vsel %vm4959, %v9607, %v9609
    %v9630 = vsel %vm4959, %v9609, %v9611
    %v9631 = vsel %vm4959, %v9611, %v9613
    %v9632 = vsel %vm4959, %v9613, %v9615
    %v9633 = vsel %vm4959, %v9615, %v9617
    %v9635 = vsel %vm5879, %v9583, 0
    %v9638 = vsel %vm208, %v9618, 0
    %v9641 = vsel %vm208, %v9619, 0
    %v9644 = vsel %vm208, %v9620, 0
    %v9647 = vsel %vm208, %v9621, 0
    %v9650 = vsel %vm208, %v9622, 0
    %v9653 = vsel %vm208, %v9623, 0
    %v9656 = vsel %vm208, %v9624, 0
    %v9659 = vsel %vm208, %v9625, 0
    %v9662 = vsel %vm208, %v9626, 0
    %v9665 = vsel %vm208, %v9627, 0
    %v9668 = vsel %vm208, %v9628, 0
    %v9671 = vsel %vm208, %v9629, 0
    %v9674 = vsel %vm208, %v9630, 0
    %v9677 = vsel %vm208, %v9631, 0
    %v9680 = vsel %vm208, %v9632, 0
    %v9683 = vsel %vm208, %v9633, 0
    %9685 = vmatprep.subr.bf16.mxu0 %v9641
    %9686 = vmatpush1.bf16.msra.mxu0 %v9638
    %9687 = vmatprep.subr.bf16.mxu0 0
    %9688 = vmatpush1.bf16.msra.mxu0 0
    %9689 = vmatprep.subr.bf16.mxu0 0
    %9690 = vmatpush1.bf16.msra.mxu0 0
    %9691 = vmatprep.subr.bf16.mxu0 0
    %9692 = vmatpush1.bf16.msra.mxu0 0
    %9693 = vmatprep.subr.bf16.mxu0 0
    %9694 = vmatpush1.bf16.msra.mxu0 0
    %9695 = vmatprep.subr.bf16.mxu0 0
    %9696 = vmatpush1.bf16.msra.mxu0 0
    %9697 = vmatprep.subr.bf16.mxu0 0
    %9698 = vmatpush1.bf16.msra.mxu0 0
    %9699 = vmatprep.subr.bf16.mxu0 0
    %9700 = vmatpush1.bf16.msra.mxu0 0
    %9701 = vmatprep.subr.bf16.mxu0 0
    %9702 = vmatpush1.bf16.msra.mxu0 0
    %9703 = vmatprep.subr.bf16.mxu0 0
    %9704 = vmatpush1.bf16.msra.mxu0 0
    %9705 = vmatprep.subr.bf16.mxu0 0
    %9706 = vmatpush1.bf16.msra.mxu0 0
    %9707 = vmatprep.subr.bf16.mxu0 0
    %9708 = vmatpush1.bf16.msra.mxu0 0
    %9709 = vmatprep.subr.bf16.mxu0 0
    %9710 = vmatpush1.bf16.msra.mxu0 0
    %9711 = vmatprep.subr.bf16.mxu0 0
    %9712 = vmatpush1.bf16.msra.mxu0 0
    %9713 = vmatprep.subr.bf16.mxu0 0
    %9714 = vmatpush1.bf16.msra.mxu0 0
    %9715 = vmatprep.subr.bf16.mxu0 0
    %9716 = vmatpush1.bf16.msra.mxu0 0
    %9717 = vmatprep.mubr.bf16.mxu0 0
    %9718 = vmatmul.mubr.bf16.gmra.mrb[0].mxu0 %v9635
    %v9719 = vpop.f32.mrb[0].mxu0
    %v9720 = vadd.f32 0.0, %v9719
    %v9721 = vpop.f32.mrb[0].mxu0
    %v9722 = vadd.f32 0.0, %v9721
    %v9723 = vpop.f32.mrb[0].mxu0
    %v9724 = vpop.f32.mrb[0].mxu0
    %9725 = vdwg.mxu0
    %9726 = vmatprep.subr.bf16.mxu0 %v9647
    %9727 = vmatpush1.bf16.msra.mxu0 %v9644
    %9728 = vmatprep.subr.bf16.mxu0 0
    %9729 = vmatpush1.bf16.msra.mxu0 0
    %9730 = vmatprep.subr.bf16.mxu0 0
    %9731 = vmatpush1.bf16.msra.mxu0 0
    %9732 = vmatprep.subr.bf16.mxu0 0
    %9733 = vmatpush1.bf16.msra.mxu0 0
    %9734 = vmatprep.subr.bf16.mxu0 0
    %9735 = vmatpush1.bf16.msra.mxu0 0
    %9736 = vmatprep.subr.bf16.mxu0 0
    %9737 = vmatpush1.bf16.msra.mxu0 0
    %9738 = vmatprep.subr.bf16.mxu0 0
    %9739 = vmatpush1.bf16.msra.mxu0 0
    %9740 = vmatprep.subr.bf16.mxu0 0
    %9741 = vmatpush1.bf16.msra.mxu0 0
    %9742 = vmatprep.subr.bf16.mxu0 0
    %9743 = vmatpush1.bf16.msra.mxu0 0
    %9744 = vmatprep.subr.bf16.mxu0 0
    %9745 = vmatpush1.bf16.msra.mxu0 0
    %9746 = vmatprep.subr.bf16.mxu0 0
    %9747 = vmatpush1.bf16.msra.mxu0 0
    %9748 = vmatprep.subr.bf16.mxu0 0
    %9749 = vmatpush1.bf16.msra.mxu0 0
    %9750 = vmatprep.subr.bf16.mxu0 0
    %9751 = vmatpush1.bf16.msra.mxu0 0
    %9752 = vmatprep.subr.bf16.mxu0 0
    %9753 = vmatpush1.bf16.msra.mxu0 0
    %9754 = vmatprep.subr.bf16.mxu0 0
    %9755 = vmatpush1.bf16.msra.mxu0 0
    %9756 = vmatprep.subr.bf16.mxu0 0
    %9757 = vmatpush1.bf16.msra.mxu0 0
    %9758 = vmatprep.mubr.bf16.mxu0 0
    %9759 = vmatmul.mubr.bf16.gmra.mrb[0].mxu0 %v9635
    %v9760 = vpop.f32.mrb[0].mxu0
    %v9761 = vadd.f32 0.0, %v9760
    %v9762 = vpop.f32.mrb[0].mxu0
    %v9763 = vadd.f32 0.0, %v9762
    %v9764 = vpop.f32.mrb[0].mxu0
    %v9765 = vpop.f32.mrb[0].mxu0
    %9766 = vdwg.mxu0
    %9767 = vmatprep.subr.bf16.mxu0 %v9653
    %9768 = vmatpush1.bf16.msra.mxu0 %v9650
    %9769 = vmatprep.subr.bf16.mxu0 0
    %9770 = vmatpush1.bf16.msra.mxu0 0
    %9771 = vmatprep.subr.bf16.mxu0 0
    %9772 = vmatpush1.bf16.msra.mxu0 0
    %9773 = vmatprep.subr.bf16.mxu0 0
    %9774 = vmatpush1.bf16.msra.mxu0 0
    %9775 = vmatprep.subr.bf16.mxu0 0
    %9776 = vmatpush1.bf16.msra.mxu0 0
    %9777 = vmatprep.subr.bf16.mxu0 0
    %9778 = vmatpush1.bf16.msra.mxu0 0
    %9779 = vmatprep.subr.bf16.mxu0 0
    %9780 = vmatpush1.bf16.msra.mxu0 0
    %9781 = vmatprep.subr.bf16.mxu0 0
    %9782 = vmatpush1.bf16.msra.mxu0 0
    %9783 = vmatprep.subr.bf16.mxu0 0
    %9784 = vmatpush1.bf16.msra.mxu0 0
    %9785 = vmatprep.subr.bf16.mxu0 0
    %9786 = vmatpush1.bf16.msra.mxu0 0
    %9787 = vmatprep.subr.bf16.mxu0 0
    %9788 = vmatpush1.bf16.msra.mxu0 0
    %9789 = vmatprep.subr.bf16.mxu0 0
    %9790 = vmatpush1.bf16.msra.mxu0 0
    %9791 = vmatprep.subr.bf16.mxu0 0
    %9792 = vmatpush1.bf16.msra.mxu0 0
    %9793 = vmatprep.subr.bf16.mxu0 0
    %9794 = vmatpush1.bf16.msra.mxu0 0
    %9795 = vmatprep.subr.bf16.mxu0 0
    %9796 = vmatpush1.bf16.msra.mxu0 0
    %9797 = vmatprep.subr.bf16.mxu0 0
    %9798 = vmatpush1.bf16.msra.mxu0 0
    %9799 = vmatprep.mubr.bf16.mxu0 0
    %9800 = vmatmul.mubr.bf16.gmra.mrb[0].mxu0 %v9635
    %v9801 = vpop.f32.mrb[0].mxu0
    %v9802 = vadd.f32 0.0, %v9801
    %v9803 = vpop.f32.mrb[0].mxu0
    %v9804 = vadd.f32 0.0, %v9803
    %v9805 = vpop.f32.mrb[0].mxu0
    %v9806 = vpop.f32.mrb[0].mxu0
    %9807 = vdwg.mxu0
    %9808 = vmatprep.subr.bf16.mxu0 %v9659
    %9809 = vmatpush1.bf16.msra.mxu0 %v9656
    %9810 = vmatprep.subr.bf16.mxu0 0
    %9811 = vmatpush1.bf16.msra.mxu0 0
    %9812 = vmatprep.subr.bf16.mxu0 0
    %9813 = vmatpush1.bf16.msra.mxu0 0
    %9814 = vmatprep.subr.bf16.mxu0 0
    %9815 = vmatpush1.bf16.msra.mxu0 0
    %9816 = vmatprep.subr.bf16.mxu0 0
    %9817 = vmatpush1.bf16.msra.mxu0 0
    %9818 = vmatprep.subr.bf16.mxu0 0
    %9819 = vmatpush1.bf16.msra.mxu0 0
    %9820 = vmatprep.subr.bf16.mxu0 0
    %9821 = vmatpush1.bf16.msra.mxu0 0
    %9822 = vmatprep.subr.bf16.mxu0 0
    %9823 = vmatpush1.bf16.msra.mxu0 0
    %9824 = vmatprep.subr.bf16.mxu0 0
    %9825 = vmatpush1.bf16.msra.mxu0 0
    %9826 = vmatprep.subr.bf16.mxu0 0
    %9827 = vmatpush1.bf16.msra.mxu0 0
    %9828 = vmatprep.subr.bf16.mxu0 0
    %9829 = vmatpush1.bf16.msra.mxu0 0
    %9830 = vmatprep.subr.bf16.mxu0 0
    %9831 = vmatpush1.bf16.msra.mxu0 0
    %9832 = vmatprep.subr.bf16.mxu0 0
    %9833 = vmatpush1.bf16.msra.mxu0 0
    %9834 = vmatprep.subr.bf16.mxu0 0
    %9835 = vmatpush1.bf16.msra.mxu0 0
    %9836 = vmatprep.subr.bf16.mxu0 0
    %9837 = vmatpush1.bf16.msra.mxu0 0
    %9838 = vmatprep.subr.bf16.mxu0 0
    %9839 = vmatpush1.bf16.msra.mxu0 0
    %9840 = vmatprep.mubr.bf16.mxu0 0
    %9841 = vmatmul.mubr.bf16.gmra.mrb[0].mxu0 %v9635
    %v9842 = vpop.f32.mrb[0].mxu0
    %v9843 = vadd.f32 0.0, %v9842
    %v9844 = vpop.f32.mrb[0].mxu0
    %v9845 = vadd.f32 0.0, %v9844
    %v9846 = vpop.f32.mrb[0].mxu0
    %v9847 = vpop.f32.mrb[0].mxu0
    %9848 = vdwg.mxu0
    %9849 = vmatprep.subr.bf16.mxu0 %v9665
    %9850 = vmatpush1.bf16.msra.mxu0 %v9662
    %9851 = vmatprep.subr.bf16.mxu0 0
    %9852 = vmatpush1.bf16.msra.mxu0 0
    %9853 = vmatprep.subr.bf16.mxu0 0
    %9854 = vmatpush1.bf16.msra.mxu0 0
    %9855 = vmatprep.subr.bf16.mxu0 0
    %9856 = vmatpush1.bf16.msra.mxu0 0
    %9857 = vmatprep.subr.bf16.mxu0 0
    %9858 = vmatpush1.bf16.msra.mxu0 0
    %9859 = vmatprep.subr.bf16.mxu0 0
    %9860 = vmatpush1.bf16.msra.mxu0 0
    %9861 = vmatprep.subr.bf16.mxu0 0
    %9862 = vmatpush1.bf16.msra.mxu0 0
    %9863 = vmatprep.subr.bf16.mxu0 0
    %9864 = vmatpush1.bf16.msra.mxu0 0
    %9865 = vmatprep.subr.bf16.mxu0 0
    %9866 = vmatpush1.bf16.msra.mxu0 0
    %9867 = vmatprep.subr.bf16.mxu0 0
    %9868 = vmatpush1.bf16.msra.mxu0 0
    %9869 = vmatprep.subr.bf16.mxu0 0
    %9870 = vmatpush1.bf16.msra.mxu0 0
    %9871 = vmatprep.subr.bf16.mxu0 0
    %9872 = vmatpush1.bf16.msra.mxu0 0
    %9873 = vmatprep.subr.bf16.mxu0 0
    %9874 = vmatpush1.bf16.msra.mxu0 0
    %9875 = vmatprep.subr.bf16.mxu0 0
    %9876 = vmatpush1.bf16.msra.mxu0 0
    %9877 = vmatprep.subr.bf16.mxu0 0
    %9878 = vmatpush1.bf16.msra.mxu0 0
    %9879 = vmatprep.subr.bf16.mxu0 0
    %9880 = vmatpush1.bf16.msra.mxu0 0
    %9881 = vmatprep.mubr.bf16.mxu0 0
    %9882 = vmatmul.mubr.bf16.gmra.mrb[0].mxu0 %v9635
    %v9883 = vpop.f32.mrb[0].mxu0
    %v9884 = vadd.f32 0.0, %v9883
    %v9885 = vpop.f32.mrb[0].mxu0
    %v9886 = vadd.f32 0.0, %v9885
    %v9887 = vpop.f32.mrb[0].mxu0
    %v9888 = vpop.f32.mrb[0].mxu0
    %9889 = vdwg.mxu0
    %9890 = vmatprep.subr.bf16.mxu0 %v9671
    %9891 = vmatpush1.bf16.msra.mxu0 %v9668
    %9892 = vmatprep.subr.bf16.mxu0 0
    %9893 = vmatpush1.bf16.msra.mxu0 0
    %9894 = vmatprep.subr.bf16.mxu0 0
    %9895 = vmatpush1.bf16.msra.mxu0 0
    %9896 = vmatprep.subr.bf16.mxu0 0
    %9897 = vmatpush1.bf16.msra.mxu0 0
    %9898 = vmatprep.subr.bf16.mxu0 0
    %9899 = vmatpush1.bf16.msra.mxu0 0
    %9900 = vmatprep.subr.bf16.mxu0 0
    %9901 = vmatpush1.bf16.msra.mxu0 0
    %9902 = vmatprep.subr.bf16.mxu0 0
    %9903 = vmatpush1.bf16.msra.mxu0 0
    %9904 = vmatprep.subr.bf16.mxu0 0
    %9905 = vmatpush1.bf16.msra.mxu0 0
    %9906 = vmatprep.subr.bf16.mxu0 0
    %9907 = vmatpush1.bf16.msra.mxu0 0
    %9908 = vmatprep.subr.bf16.mxu0 0
    %9909 = vmatpush1.bf16.msra.mxu0 0
    %9910 = vmatprep.subr.bf16.mxu0 0
    %9911 = vmatpush1.bf16.msra.mxu0 0
    %9912 = vmatprep.subr.bf16.mxu0 0
    %9913 = vmatpush1.bf16.msra.mxu0 0
    %9914 = vmatprep.subr.bf16.mxu0 0
    %9915 = vmatpush1.bf16.msra.mxu0 0
    %9916 = vmatprep.subr.bf16.mxu0 0
    %9917 = vmatpush1.bf16.msra.mxu0 0
    %9918 = vmatprep.subr.bf16.mxu0 0
    %9919 = vmatpush1.bf16.msra.mxu0 0
    %9920 = vmatprep.subr.bf16.mxu0 0
    %9921 = vmatpush1.bf16.msra.mxu0 0
    %9922 = vmatprep.mubr.bf16.mxu0 0
    %9923 = vmatmul.mubr.bf16.gmra.mrb[0].mxu0 %v9635
    %v9924 = vpop.f32.mrb[0].mxu0
    %v9925 = vadd.f32 0.0, %v9924
    %v9926 = vpop.f32.mrb[0].mxu0
    %v9927 = vadd.f32 0.0, %v9926
    %v9928 = vpop.f32.mrb[0].mxu0
    %v9929 = vpop.f32.mrb[0].mxu0
    %9930 = vdwg.mxu0
    %9931 = vmatprep.subr.bf16.mxu0 %v9677
    %9932 = vmatpush1.bf16.msra.mxu0 %v9674
    %9933 = vmatprep.subr.bf16.mxu0 0
    %9934 = vmatpush1.bf16.msra.mxu0 0
    %9935 = vmatprep.subr.bf16.mxu0 0
    %9936 = vmatpush1.bf16.msra.mxu0 0
    %9937 = vmatprep.subr.bf16.mxu0 0
    %9938 = vmatpush1.bf16.msra.mxu0 0
    %9939 = vmatprep.subr.bf16.mxu0 0
    %9940 = vmatpush1.bf16.msra.mxu0 0
    %9941 = vmatprep.subr.bf16.mxu0 0
    %9942 = vmatpush1.bf16.msra.mxu0 0
    %9943 = vmatprep.subr.bf16.mxu0 0
    %9944 = vmatpush1.bf16.msra.mxu0 0
    %9945 = vmatprep.subr.bf16.mxu0 0
    %9946 = vmatpush1.bf16.msra.mxu0 0
    %9947 = vmatprep.subr.bf16.mxu0 0
    %9948 = vmatpush1.bf16.msra.mxu0 0
    %9949 = vmatprep.subr.bf16.mxu0 0
    %9950 = vmatpush1.bf16.msra.mxu0 0
    %9951 = vmatprep.subr.bf16.mxu0 0
    %9952 = vmatpush1.bf16.msra.mxu0 0
    %9953 = vmatprep.subr.bf16.mxu0 0
    %9954 = vmatpush1.bf16.msra.mxu0 0
    %9955 = vmatprep.subr.bf16.mxu0 0
    %9956 = vmatpush1.bf16.msra.mxu0 0
    %9957 = vmatprep.subr.bf16.mxu0 0
    %9958 = vmatpush1.bf16.msra.mxu0 0
    %9959 = vmatprep.subr.bf16.mxu0 0
    %9960 = vmatpush1.bf16.msra.mxu0 0
    %9961 = vmatprep.subr.bf16.mxu0 0
    %9962 = vmatpush1.bf16.msra.mxu0 0
    %9963 = vmatprep.mubr.bf16.mxu0 0
    %9964 = vmatmul.mubr.bf16.gmra.mrb[0].mxu0 %v9635
    %v9965 = vpop.f32.mrb[0].mxu0
    %v9966 = vadd.f32 0.0, %v9965
    %v9967 = vpop.f32.mrb[0].mxu0
    %v9968 = vadd.f32 0.0, %v9967
    %v9969 = vpop.f32.mrb[0].mxu0
    %v9970 = vpop.f32.mrb[0].mxu0
    %9971 = vdwg.mxu0
    %9972 = vmatprep.subr.bf16.mxu0 %v9683
    %9973 = vmatpush1.bf16.msra.mxu0 %v9680
    %9974 = vmatprep.subr.bf16.mxu0 0
    %9975 = vmatpush1.bf16.msra.mxu0 0
    %9976 = vmatprep.subr.bf16.mxu0 0
    %9977 = vmatpush1.bf16.msra.mxu0 0
    %9978 = vmatprep.subr.bf16.mxu0 0
    %9979 = vmatpush1.bf16.msra.mxu0 0
    %9980 = vmatprep.subr.bf16.mxu0 0
    %9981 = vmatpush1.bf16.msra.mxu0 0
    %9982 = vmatprep.subr.bf16.mxu0 0
    %9983 = vmatpush1.bf16.msra.mxu0 0
    %9984 = vmatprep.subr.bf16.mxu0 0
    %9985 = vmatpush1.bf16.msra.mxu0 0
    %9986 = vmatprep.subr.bf16.mxu0 0
    %9987 = vmatpush1.bf16.msra.mxu0 0
    %9988 = vmatprep.subr.bf16.mxu0 0
    %9989 = vmatpush1.bf16.msra.mxu0 0
    %9990 = vmatprep.subr.bf16.mxu0 0
    %9991 = vmatpush1.bf16.msra.mxu0 0
    %9992 = vmatprep.subr.bf16.mxu0 0
    %9993 = vmatpush1.bf16.msra.mxu0 0
    %9994 = vmatprep.subr.bf16.mxu0 0
    %9995 = vmatpush1.bf16.msra.mxu0 0
    %9996 = vmatprep.subr.bf16.mxu0 0
    %9997 = vmatpush1.bf16.msra.mxu0 0
    %9998 = vmatprep.subr.bf16.mxu0 0
    %9999 = vmatpush1.bf16.msra.mxu0 0
    %10000 = vmatprep.subr.bf16.mxu0 0
    %10001 = vmatpush1.bf16.msra.mxu0 0
    %10002 = vmatprep.subr.bf16.mxu0 0
    %10003 = vmatpush1.bf16.msra.mxu0 0
    %10004 = vmatprep.mubr.bf16.mxu0 0
    %10005 = vmatmul.mubr.bf16.gmra.mrb[0].mxu0 %v9635
    %v10006 = vpop.f32.mrb[0].mxu0
    %v10007 = vadd.f32 0.0, %v10006
    %v10008 = vpop.f32.mrb[0].mxu0
    %v10009 = vadd.f32 0.0, %v10008
    %v10010 = vpop.f32.mrb[0].mxu0
    %v10011 = vpop.f32.mrb[0].mxu0
    %10012 = vdwg.mxu0
    %v10013 = vmul.f32 %v9720, %v5360
    %v10014 = vmul.f32 %v9722, %v5364
    %v10015 = vmul.f32 %v9761, %v5368
    %v10016 = vmul.f32 %v9763, %v5372
    %v10017 = vmul.f32 %v9802, %v5376
    %v10018 = vmul.f32 %v9804, %v5380
    %v10019 = vmul.f32 %v9843, %v5384
    %v10020 = vmul.f32 %v9845, %v5388
    %v10021 = vmul.f32 %v9884, %v5392
    %v10022 = vmul.f32 %v9886, %v5396
    %v10023 = vmul.f32 %v9925, %v5400
    %v10024 = vmul.f32 %v9927, %v5404
    %v10025 = vmul.f32 %v9966, %v5408
    %v10026 = vmul.f32 %v9968, %v5412
    %v10027 = vmul.f32 %v10007, %v5416
    %v10028 = vmul.f32 %v10009, %v5420
    %v10029 = vadd.f32 %v9566, %v10013
    %v10030 = vadd.f32 %v9567, %v10014
    %v10031 = vadd.f32 %v9568, %v10015
    %v10032 = vadd.f32 %v9569, %v10016
    %v10033 = vadd.f32 %v9570, %v10017
    %v10034 = vadd.f32 %v9571, %v10018
    %v10035 = vadd.f32 %v9572, %v10019
    %v10036 = vadd.f32 %v9573, %v10020
    %v10037 = vadd.f32 %v9574, %v10021
    %v10038 = vadd.f32 %v9575, %v10022
    %v10039 = vadd.f32 %v9576, %v10023
    %v10040 = vadd.f32 %v9577, %v10024
    %v10041 = vadd.f32 %v9578, %v10025
    %v10042 = vadd.f32 %v9579, %v10026
    %v10043 = vadd.f32 %v9580, %v10027
    %v10044 = vadd.f32 %v9581, %v10028
    %10045 = vst [vmem:[#allocation2 + $0x80] sm:$0xf] %v10029
    %10046 = vst [vmem:[#allocation2 + $0x88] sm:$0xf] %v10030
    %10047 = vst [vmem:[#allocation2 + $0x90] sm:$0xf] %v10031
    %10048 = vst [vmem:[#allocation2 + $0x98] sm:$0xf] %v10032
    %10049 = vst [vmem:[#allocation2 + $0xa0] sm:$0xf] %v10033
    %10050 = vst [vmem:[#allocation2 + $0xa8] sm:$0xf] %v10034
    %10051 = vst [vmem:[#allocation2 + $0xb0] sm:$0xf] %v10035
    %10052 = vst [vmem:[#allocation2 + $0xb8] sm:$0xf] %v10036
    %10053 = vst [vmem:[#allocation2 + $0xc0] sm:$0xf] %v10037
    %10054 = vst [vmem:[#allocation2 + $0xc8] sm:$0xf] %v10038
    %10055 = vst [vmem:[#allocation2 + $0xd0] sm:$0xf] %v10039
    %10056 = vst [vmem:[#allocation2 + $0xd8] sm:$0xf] %v10040
    %10057 = vst [vmem:[#allocation2 + $0xe0] sm:$0xf] %v10041
    %10058 = vst [vmem:[#allocation2 + $0xe8] sm:$0xf] %v10042
    %10059 = vst [vmem:[#allocation2 + $0xf0] sm:$0xf] %v10043
    %10060 = vst [vmem:[#allocation2 + $0xf8] sm:$0xf] %v10044
    %v10061 = vsel %vm208, %v10029, 0.0
    %v10062 = vsel %vm208, %v10030, 0.0
    %v10063 = vadd.f32 %v10061, %v10062
    %v10064 = vsel %vm208, %v10031, 0.0
    %v10065 = vadd.f32 %v10063, %v10064
    %v10066 = vsel %vm208, %v10032, 0.0
    %v10067 = vadd.f32 %v10065, %v10066
    %v10068 = vsel %vm208, %v10033, 0.0
    %v10069 = vadd.f32 %v10067, %v10068
    %v10070 = vsel %vm208, %v10034, 0.0
    %v10071 = vadd.f32 %v10069, %v10070
    %v10072 = vsel %vm208, %v10035, 0.0
    %v10073 = vadd.f32 %v10071, %v10072
    %v10074 = vsel %vm208, %v10036, 0.0
    %v10075 = vadd.f32 %v10073, %v10074
    %v10076 = vsel %vm208, %v10037, 0.0
    %v10077 = vadd.f32 %v10075, %v10076
    %v10078 = vsel %vm208, %v10038, 0.0
    %v10079 = vadd.f32 %v10077, %v10078
    %v10080 = vsel %vm208, %v10039, 0.0
    %v10081 = vadd.f32 %v10079, %v10080
    %v10082 = vsel %vm208, %v10040, 0.0
    %v10083 = vadd.f32 %v10081, %v10082
    %v10084 = vsel %vm208, %v10041, 0.0
    %v10085 = vadd.f32 %v10083, %v10084
    %v10086 = vsel %vm208, %v10042, 0.0
    %v10087 = vadd.f32 %v10085, %v10086
    %v10088 = vsel %vm208, %v10043, 0.0
    %v10089 = vadd.f32 %v10087, %v10088
    %v10090 = vsel %vm208, %v10044, 0.0
    %v10091 = vadd.f32 %v10089, %v10090
    %10092 = vadd.xlane.f32.xlu0 %v10091
    %v10093 = vpop.xlane.xlu0 %10092
    %10094 = vst.msk [vmem:[#allocation4 + $0x8] sm:$0xf] %vm242, %v10093
    %v10095 = vmul.f32 %v10029, %v10029
    %v10096 = vmul.f32 %v10030, %v10030
    %v10097 = vmul.f32 %v10031, %v10031
    %v10098 = vmul.f32 %v10032, %v10032
    %v10099 = vmul.f32 %v10033, %v10033
    %v10100 = vmul.f32 %v10034, %v10034
    %v10101 = vmul.f32 %v10035, %v10035
    %v10102 = vmul.f32 %v10036, %v10036
    %v10103 = vmul.f32 %v10037, %v10037
    %v10104 = vmul.f32 %v10038, %v10038
    %v10105 = vmul.f32 %v10039, %v10039
    %v10106 = vmul.f32 %v10040, %v10040
    %v10107 = vmul.f32 %v10041, %v10041
    %v10108 = vmul.f32 %v10042, %v10042
    %v10109 = vmul.f32 %v10043, %v10043
    %v10110 = vmul.f32 %v10044, %v10044
    %v10111 = vsel %vm208, %v10095, 0.0
    %v10112 = vsel %vm208, %v10096, 0.0
    %v10113 = vadd.f32 %v10111, %v10112
    %v10114 = vsel %vm208, %v10097, 0.0
    %v10115 = vadd.f32 %v10113, %v10114
    %v10116 = vsel %vm208, %v10098, 0.0
    %v10117 = vadd.f32 %v10115, %v10116
    %v10118 = vsel %vm208, %v10099, 0.0
    %v10119 = vadd.f32 %v10117, %v10118
    %v10120 = vsel %vm208, %v10100, 0.0
    %v10121 = vadd.f32 %v10119, %v10120
    %v10122 = vsel %vm208, %v10101, 0.0
    %v10123 = vadd.f32 %v10121, %v10122
    %v10124 = vsel %vm208, %v10102, 0.0
    %v10125 = vadd.f32 %v10123, %v10124
    %v10126 = vsel %vm208, %v10103, 0.0
    %v10127 = vadd.f32 %v10125, %v10126
    %v10128 = vsel %vm208, %v10104, 0.0
    %v10129 = vadd.f32 %v10127, %v10128
    %v10130 = vsel %vm208, %v10105, 0.0
    %v10131 = vadd.f32 %v10129, %v10130
    %v10132 = vsel %vm208, %v10106, 0.0
    %v10133 = vadd.f32 %v10131, %v10132
    %v10134 = vsel %vm208, %v10107, 0.0
    %v10135 = vadd.f32 %v10133, %v10134
    %v10136 = vsel %vm208, %v10108, 0.0
    %v10137 = vadd.f32 %v10135, %v10136
    %v10138 = vsel %vm208, %v10109, 0.0
    %v10139 = vadd.f32 %v10137, %v10138
    %v10140 = vsel %vm208, %v10110, 0.0
    %v10141 = vadd.f32 %v10139, %v10140
    %10142 = vadd.xlane.f32.xlu0 %v10141
    %v10143 = vpop.xlane.xlu0 %10142
    %10144 = vst.msk [vmem:[#allocation5 + $0x8] sm:$0xf] %vm242, %v10143
    %v10145 = vld [vmem:[#allocation4] sm:$0xff]
    %v10146 = vld [vmem:[#allocation4 + $0x8] sm:$0xf]
    %v10147 = vld [vmem:[#allocation5] sm:$0xff]
    %v10148 = vld [vmem:[#allocation5 + $0x8] sm:$0xf]
    %v10149 = vld [vmem:[%s8] sm:$0xff]
    %v10150 = vld [vmem:[%s8 + $0x8] sm:$0xf]
    %v10151 = vld [vmem:[%s9] sm:$0xff]
    %v10152 = vld [vmem:[%s9 + $0x8] sm:$0xf]
    %v10153 = vmul.f32 %v10145, 0.00048828125
    %v10154 = vmul.f32 %v10146, 0.00048828125
    %v10155 = vmul.f32 %v10147, 0.00048828125
    %v10156 = vmul.f32 %v10148, 0.00048828125
    %v10157 = vmul.f32 %v10153, %v10153
    %v10158 = vmul.f32 %v10154, %v10154
    %v10159 = vsub.f32 %v10155, %v10157
    %v10160 = vsub.f32 %v10156, %v10158
    %v10161 = vadd.f32 %v10159, 1e-05
    %v10162 = vadd.f32 %v10160, 1e-05
    %v10163 = vrsqrt.pop %v10161
    %v10164 = vrsqrt.pop %v10162
    %v10165 = vmul.f32 %v10149, %v10163
    %v10166 = vmul.f32 %v10150, %v10164
    %v10167 = vmul.f32 %v10153, %v10165
    %v10168 = vmul.f32 %v10154, %v10166
    %v10169 = vsub.f32 %v10151, %v10167
    %v10170 = vsub.f32 %v10152, %v10168
    %v10171 = vld [vmem:[#allocation2] sm:$0xff]
    %v10172 = vld [vmem:[#allocation2 + $0x8] sm:$0xff]
    %v10173 = vld [vmem:[#allocation2 + $0x10] sm:$0xff]
    %v10174 = vld [vmem:[#allocation2 + $0x18] sm:$0xff]
    %v10175 = vld [vmem:[#allocation2 + $0x20] sm:$0xff]
    %v10176 = vld [vmem:[#allocation2 + $0x28] sm:$0xff]
    %v10177 = vld [vmem:[#allocation2 + $0x30] sm:$0xff]
    %v10178 = vld [vmem:[#allocation2 + $0x38] sm:$0xff]
    %v10179 = vld [vmem:[#allocation2 + $0x40] sm:$0xff]
    %v10180 = vld [vmem:[#allocation2 + $0x48] sm:$0xff]
    %v10181 = vld [vmem:[#allocation2 + $0x50] sm:$0xff]
    %v10182 = vld [vmem:[#allocation2 + $0x58] sm:$0xff]
    %v10183 = vld [vmem:[#allocation2 + $0x60] sm:$0xff]
    %v10184 = vld [vmem:[#allocation2 + $0x68] sm:$0xff]
    %v10185 = vld [vmem:[#allocation2 + $0x70] sm:$0xff]
    %v10186 = vld [vmem:[#allocation2 + $0x78] sm:$0xff]
    %v10187 = vld [vmem:[#allocation2 + $0x80] sm:$0xf]
    %v10188 = vld [vmem:[#allocation2 + $0x88] sm:$0xf]
    %v10189 = vld [vmem:[#allocation2 + $0x90] sm:$0xf]
    %v10190 = vld [vmem:[#allocation2 + $0x98] sm:$0xf]
    %v10191 = vld [vmem:[#allocation2 + $0xa0] sm:$0xf]
    %v10192 = vld [vmem:[#allocation2 + $0xa8] sm:$0xf]
    %v10193 = vld [vmem:[#allocation2 + $0xb0] sm:$0xf]
    %v10194 = vld [vmem:[#allocation2 + $0xb8] sm:$0xf]
    %v10195 = vld [vmem:[#allocation2 + $0xc0] sm:$0xf]
    %v10196 = vld [vmem:[#allocation2 + $0xc8] sm:$0xf]
    %v10197 = vld [vmem:[#allocation2 + $0xd0] sm:$0xf]
    %v10198 = vld [vmem:[#allocation2 + $0xd8] sm:$0xf]
    %v10199 = vld [vmem:[#allocation2 + $0xe0] sm:$0xf]
    %v10200 = vld [vmem:[#allocation2 + $0xe8] sm:$0xf]
    %v10201 = vld [vmem:[#allocation2 + $0xf0] sm:$0xf]
    %v10202 = vld [vmem:[#allocation2 + $0xf8] sm:$0xf]
    %10204 = vset.pattern.permute.xlu0 0
    %10205 = vperm.xlu0 %10204, %v10165
    %v10206 = vpop.permute.xlu0 %10205
    %10209 = vset.pattern.permute.xlu0 0
    %10210 = vperm.xlu0 %10209, %v10166
    %v10211 = vpop.permute.xlu0 %10210
    %v10213 = vmul.f32 %v10171, %v10206
    %v10214 = vmul.f32 %v10172, %v10206
    %v10215 = vmul.f32 %v10173, %v10206
    %v10216 = vmul.f32 %v10174, %v10206
    %v10217 = vmul.f32 %v10175, %v10206
    %v10218 = vmul.f32 %v10176, %v10206
    %v10219 = vmul.f32 %v10177, %v10206
    %v10220 = vmul.f32 %v10178, %v10206
    %v10221 = vmul.f32 %v10179, %v10206
    %v10222 = vmul.f32 %v10180, %v10206
    %v10223 = vmul.f32 %v10181, %v10206
    %v10224 = vmul.f32 %v10182, %v10206
    %v10225 = vmul.f32 %v10183, %v10206
    %v10226 = vmul.f32 %v10184, %v10206
    %v10227 = vmul.f32 %v10185, %v10206
    %v10228 = vmul.f32 %v10186, %v10206
    %v10229 = vmul.f32 %v10187, %v10211
    %v10230 = vmul.f32 %v10188, %v10211
    %v10231 = vmul.f32 %v10189, %v10211
    %v10232 = vmul.f32 %v10190, %v10211
    %v10233 = vmul.f32 %v10191, %v10211
    %v10234 = vmul.f32 %v10192, %v10211
    %v10235 = vmul.f32 %v10193, %v10211
    %v10236 = vmul.f32 %v10194, %v10211
    %v10237 = vmul.f32 %v10195, %v10211
    %v10238 = vmul.f32 %v10196, %v10211
    %v10239 = vmul.f32 %v10197, %v10211
    %v10240 = vmul.f32 %v10198, %v10211
    %v10241 = vmul.f32 %v10199, %v10211
    %v10242 = vmul.f32 %v10200, %v10211
    %v10243 = vmul.f32 %v10201, %v10211
    %v10244 = vmul.f32 %v10202, %v10211
    %10246 = vset.pattern.permute.xlu0 0
    %10247 = vperm.xlu0 %10246, %v10169
    %v10248 = vpop.permute.xlu0 %10247
    %10251 = vset.pattern.permute.xlu0 0
    %10252 = vperm.xlu0 %10251, %v10170
    %v10253 = vpop.permute.xlu0 %10252
    %v10255 = vadd.f32 %v10213, %v10248
    %v10256 = vadd.f32 %v10214, %v10248
    %v10257 = vadd.f32 %v10215, %v10248
    %v10258 = vadd.f32 %v10216, %v10248
    %v10259 = vadd.f32 %v10217, %v10248
    %v10260 = vadd.f32 %v10218, %v10248
    %v10261 = vadd.f32 %v10219, %v10248
    %v10262 = vadd.f32 %v10220, %v10248
    %v10263 = vadd.f32 %v10221, %v10248
    %v10264 = vadd.f32 %v10222, %v10248
    %v10265 = vadd.f32 %v10223, %v10248
    %v10266 = vadd.f32 %v10224, %v10248
    %v10267 = vadd.f32 %v10225, %v10248
    %v10268 = vadd.f32 %v10226, %v10248
    %v10269 = vadd.f32 %v10227, %v10248
    %v10270 = vadd.f32 %v10228, %v10248
    %v10271 = vadd.f32 %v10229, %v10253
    %v10272 = vadd.f32 %v10230, %v10253
    %v10273 = vadd.f32 %v10231, %v10253
    %v10274 = vadd.f32 %v10232, %v10253
    %v10275 = vadd.f32 %v10233, %v10253
    %v10276 = vadd.f32 %v10234, %v10253
    %v10277 = vadd.f32 %v10235, %v10253
    %v10278 = vadd.f32 %v10236, %v10253
    %v10279 = vadd.f32 %v10237, %v10253
    %v10280 = vadd.f32 %v10238, %v10253
    %v10281 = vadd.f32 %v10239, %v10253
    %v10282 = vadd.f32 %v10240, %v10253
    %v10283 = vadd.f32 %v10241, %v10253
    %v10284 = vadd.f32 %v10242, %v10253
    %v10285 = vadd.f32 %v10243, %v10253
    %v10286 = vadd.f32 %v10244, %v10253
    %v10287 = vmax.f32 %v10255, 0.0
    %v10288 = vmax.f32 %v10256, 0.0
    %v10289 = vmax.f32 %v10257, 0.0
    %v10290 = vmax.f32 %v10258, 0.0
    %v10291 = vmax.f32 %v10259, 0.0
    %v10292 = vmax.f32 %v10260, 0.0
    %v10293 = vmax.f32 %v10261, 0.0
    %v10294 = vmax.f32 %v10262, 0.0
    %v10295 = vmax.f32 %v10263, 0.0
    %v10296 = vmax.f32 %v10264, 0.0
    %v10297 = vmax.f32 %v10265, 0.0
    %v10298 = vmax.f32 %v10266, 0.0
    %v10299 = vmax.f32 %v10267, 0.0
    %v10300 = vmax.f32 %v10268, 0.0
    %v10301 = vmax.f32 %v10269, 0.0
    %v10302 = vmax.f32 %v10270, 0.0
    %v10303 = vmax.f32 %v10271, 0.0
    %v10304 = vmax.f32 %v10272, 0.0
    %v10305 = vmax.f32 %v10273, 0.0
    %v10306 = vmax.f32 %v10274, 0.0
    %v10307 = vmax.f32 %v10275, 0.0
    %v10308 = vmax.f32 %v10276, 0.0
    %v10309 = vmax.f32 %v10277, 0.0
    %v10310 = vmax.f32 %v10278, 0.0
    %v10311 = vmax.f32 %v10279, 0.0
    %v10312 = vmax.f32 %v10280, 0.0
    %v10313 = vmax.f32 %v10281, 0.0
    %v10314 = vmax.f32 %v10282, 0.0
    %v10315 = vmax.f32 %v10283, 0.0
    %v10316 = vmax.f32 %v10284, 0.0
    %v10317 = vmax.f32 %v10285, 0.0
    %v10318 = vmax.f32 %v10286, 0.0
    %v10319 = vpack.c.bf16 %v10303, %v10287
    %v10320 = vpack.c.bf16 %v10304, %v10288
    %v10321 = vpack.c.bf16 %v10305, %v10289
    %v10322 = vpack.c.bf16 %v10306, %v10290
    %v10323 = vpack.c.bf16 %v10307, %v10291
    %v10324 = vpack.c.bf16 %v10308, %v10292
    %v10325 = vpack.c.bf16 %v10309, %v10293
    %v10326 = vpack.c.bf16 %v10310, %v10294
    %v10327 = vpack.c.bf16 %v10311, %v10295
    %v10328 = vpack.c.bf16 %v10312, %v10296
    %v10329 = vpack.c.bf16 %v10313, %v10297
    %v10330 = vpack.c.bf16 %v10314, %v10298
    %v10331 = vpack.c.bf16 %v10315, %v10299
    %v10332 = vpack.c.bf16 %v10316, %v10300
    %v10333 = vpack.c.bf16 %v10317, %v10301
    %v10334 = vpack.c.bf16 %v10318, %v10302
    %v10335 = vld [vmem:[%s10] sm:$0x7]
    %vm10336 = vcmask 97280
    %v10338 = vsel %vm10336, %v10335, 0
    %vm10340 = vcmask 1045504
    %v10342 = vsel %vm10340, %v10319, 0
    %v10345 = vsel %vm10340, %v10320, 0
    %v10348 = vsel %vm10340, %v10321, 0
    %v10351 = vsel %vm10340, %v10322, 0
    %v10354 = vsel %vm10340, %v10323, 0
    %v10357 = vsel %vm10340, %v10324, 0
    %v10360 = vsel %vm10340, %v10325, 0
    %v10363 = vsel %vm10340, %v10326, 0
    %v10366 = vsel %vm10340, %v10327, 0
    %v10369 = vsel %vm10340, %v10328, 0
    %v10372 = vsel %vm10340, %v10329, 0
    %v10375 = vsel %vm10340, %v10330, 0
    %v10378 = vsel %vm10340, %v10331, 0
    %v10381 = vsel %vm10340, %v10332, 0
    %v10384 = vsel %vm10340, %v10333, 0
    %v10387 = vsel %vm10340, %v10334, 0
    %10389 = vmatprep.subr.bf16.mxu0 %v10345
    %10390 = vmatpush1.bf16.msra.mxu0 %v10342
    %10391 = vmatprep.subr.bf16.mxu0 0
    %10392 = vmatpush1.bf16.msra.mxu0 0
    %10393 = vmatprep.subr.bf16.mxu0 0
    %10394 = vmatpush1.bf16.msra.mxu0 0
    %10395 = vmatprep.subr.bf16.mxu0 0
    %10396 = vmatpush1.bf16.msra.mxu0 0
    %10397 = vmatprep.subr.bf16.mxu0 0
    %10398 = vmatpush1.bf16.msra.mxu0 0
    %10399 = vmatprep.subr.bf16.mxu0 0
    %10400 = vmatpush1.bf16.msra.mxu0 0
    %10401 = vmatprep.subr.bf16.mxu0 0
    %10402 = vmatpush1.bf16.msra.mxu0 0
    %10403 = vmatprep.subr.bf16.mxu0 0
    %10404 = vmatpush1.bf16.msra.mxu0 0
    %10405 = vmatprep.subr.bf16.mxu0 0
    %10406 = vmatpush1.bf16.msra.mxu0 0
    %10407 = vmatprep.subr.bf16.mxu0 0
    %10408 = vmatpush1.bf16.msra.mxu0 0
    %10409 = vmatprep.subr.bf16.mxu0 0
    %10410 = vmatpush1.bf16.msra.mxu0 0
    %10411 = vmatprep.subr.bf16.mxu0 0
    %10412 = vmatpush1.bf16.msra.mxu0 0
    %10413 = vmatprep.subr.bf16.mxu0 0
    %10414 = vmatpush1.bf16.msra.mxu0 0
    %10415 = vmatprep.subr.bf16.mxu0 0
    %10416 = vmatpush1.bf16.msra.mxu0 0
    %10417 = vmatprep.subr.bf16.mxu0 0
    %10418 = vmatpush1.bf16.msra.mxu0 0
    %10419 = vmatprep.subr.bf16.mxu0 0
    %10420 = vmatpush1.bf16.msra.mxu0 0
    %10421 = vmatprep.mubr.bf16.mxu0 0
    %10422 = vmatmul.mubr.bf16.gmra.mrb[0].mxu0 %v10338
    %v10423 = vpop.f32.mrb[0].mxu0
    %v10424 = vadd.f32 0.0, %v10423
    %v10425 = vpop.f32.mrb[0].mxu0
    %v10426 = vadd.f32 0.0, %v10425
    %v10427 = vpop.f32.mrb[0].mxu0
    %v10428 = vpop.f32.mrb[0].mxu0
    %10429 = vdwg.mxu0
    %10430 = vmatprep.subr.bf16.mxu0 %v10351
    %10431 = vmatpush1.bf16.msra.mxu0 %v10348
    %10432 = vmatprep.subr.bf16.mxu0 0
    %10433 = vmatpush1.bf16.msra.mxu0 0
    %10434 = vmatprep.subr.bf16.mxu0 0
    %10435 = vmatpush1.bf16.msra.mxu0 0
    %10436 = vmatprep.subr.bf16.mxu0 0
    %10437 = vmatpush1.bf16.msra.mxu0 0
    %10438 = vmatprep.subr.bf16.mxu0 0
    %10439 = vmatpush1.bf16.msra.mxu0 0
    %10440 = vmatprep.subr.bf16.mxu0 0
    %10441 = vmatpush1.bf16.msra.mxu0 0
    %10442 = vmatprep.subr.bf16.mxu0 0
    %10443 = vmatpush1.bf16.msra.mxu0 0
    %10444 = vmatprep.subr.bf16.mxu0 0
    %10445 = vmatpush1.bf16.msra.mxu0 0
    %10446 = vmatprep.subr.bf16.mxu0 0
    %10447 = vmatpush1.bf16.msra.mxu0 0
    %10448 = vmatprep.subr.bf16.mxu0 0
    %10449 = vmatpush1.bf16.msra.mxu0 0
    %10450 = vmatprep.subr.bf16.mxu0 0
    %10451 = vmatpush1.bf16.msra.mxu0 0
    %10452 = vmatprep.subr.bf16.mxu0 0
    %10453 = vmatpush1.bf16.msra.mxu0 0
    %10454 = vmatprep.subr.bf16.mxu0 0
    %10455 = vmatpush1.bf16.msra.mxu0 0
    %10456 = vmatprep.subr.bf16.mxu0 0
    %10457 = vmatpush1.bf16.msra.mxu0 0
    %10458 = vmatprep.subr.bf16.mxu0 0
    %10459 = vmatpush1.bf16.msra.mxu0 0
    %10460 = vmatprep.subr.bf16.mxu0 0
    %10461 = vmatpush1.bf16.msra.mxu0 0
    %10462 = vmatprep.mubr.bf16.mxu0 0
    %10463 = vmatmul.mubr.bf16.gmra.mrb[0].mxu0 %v10338
    %v10464 = vpop.f32.mrb[0].mxu0
    %v10465 = vadd.f32 0.0, %v10464
    %v10466 = vpop.f32.mrb[0].mxu0
    %v10467 = vadd.f32 0.0, %v10466
    %v10468 = vpop.f32.mrb[0].mxu0
    %v10469 = vpop.f32.mrb[0].mxu0
    %10470 = vdwg.mxu0
    %10471 = vmatprep.subr.bf16.mxu0 %v10357
    %10472 = vmatpush1.bf16.msra.mxu0 %v10354
    %10473 = vmatprep.subr.bf16.mxu0 0
    %10474 = vmatpush1.bf16.msra.mxu0 0
    %10475 = vmatprep.subr.bf16.mxu0 0
    %10476 = vmatpush1.bf16.msra.mxu0 0
    %10477 = vmatprep.subr.bf16.mxu0 0
    %10478 = vmatpush1.bf16.msra.mxu0 0
    %10479 = vmatprep.subr.bf16.mxu0 0
    %10480 = vmatpush1.bf16.msra.mxu0 0
    %10481 = vmatprep.subr.bf16.mxu0 0
    %10482 = vmatpush1.bf16.msra.mxu0 0
    %10483 = vmatprep.subr.bf16.mxu0 0
    %10484 = vmatpush1.bf16.msra.mxu0 0
    %10485 = vmatprep.subr.bf16.mxu0 0
    %10486 = vmatpush1.bf16.msra.mxu0 0
    %10487 = vmatprep.subr.bf16.mxu0 0
    %10488 = vmatpush1.bf16.msra.mxu0 0
    %10489 = vmatprep.subr.bf16.mxu0 0
    %10490 = vmatpush1.bf16.msra.mxu0 0
    %10491 = vmatprep.subr.bf16.mxu0 0
    %10492 = vmatpush1.bf16.msra.mxu0 0
    %10493 = vmatprep.subr.bf16.mxu0 0
    %10494 = vmatpush1.bf16.msra.mxu0 0
    %10495 = vmatprep.subr.bf16.mxu0 0
    %10496 = vmatpush1.bf16.msra.mxu0 0
    %10497 = vmatprep.subr.bf16.mxu0 0
    %10498 = vmatpush1.bf16.msra.mxu0 0
    %10499 = vmatprep.subr.bf16.mxu0 0
    %10500 = vmatpush1.bf16.msra.mxu0 0
    %10501 = vmatprep.subr.bf16.mxu0 0
    %10502 = vmatpush1.bf16.msra.mxu0 0
    %10503 = vmatprep.mubr.bf16.mxu0 0
    %10504 = vmatmul.mubr.bf16.gmra.mrb[0].mxu0 %v10338
    %v10505 = vpop.f32.mrb[0].mxu0
    %v10506 = vadd.f32 0.0, %v10505
    %v10507 = vpop.f32.mrb[0].mxu0
    %v10508 = vadd.f32 0.0, %v10507
    %v10509 = vpop.f32.mrb[0].mxu0
    %v10510 = vpop.f32.mrb[0].mxu0
    %10511 = vdwg.mxu0
    %10512 = vmatprep.subr.bf16.mxu0 %v10363
    %10513 = vmatpush1.bf16.msra.mxu0 %v10360
    %10514 = vmatprep.subr.bf16.mxu0 0
    %10515 = vmatpush1.bf16.msra.mxu0 0
    %10516 = vmatprep.subr.bf16.mxu0 0
    %10517 = vmatpush1.bf16.msra.mxu0 0
    %10518 = vmatprep.subr.bf16.mxu0 0
    %10519 = vmatpush1.bf16.msra.mxu0 0
    %10520 = vmatprep.subr.bf16.mxu0 0
    %10521 = vmatpush1.bf16.msra.mxu0 0
    %10522 = vmatprep.subr.bf16.mxu0 0
    %10523 = vmatpush1.bf16.msra.mxu0 0
    %10524 = vmatprep.subr.bf16.mxu0 0
    %10525 = vmatpush1.bf16.msra.mxu0 0
    %10526 = vmatprep.subr.bf16.mxu0 0
    %10527 = vmatpush1.bf16.msra.mxu0 0
    %10528 = vmatprep.subr.bf16.mxu0 0
    %10529 = vmatpush1.bf16.msra.mxu0 0
    %10530 = vmatprep.subr.bf16.mxu0 0
    %10531 = vmatpush1.bf16.msra.mxu0 0
    %10532 = vmatprep.subr.bf16.mxu0 0
    %10533 = vmatpush1.bf16.msra.mxu0 0
    %10534 = vmatprep.subr.bf16.mxu0 0
    %10535 = vmatpush1.bf16.msra.mxu0 0
    %10536 = vmatprep.subr.bf16.mxu0 0
    %10537 = vmatpush1.bf16.msra.mxu0 0
    %10538 = vmatprep.subr.bf16.mxu0 0
    %10539 = vmatpush1.bf16.msra.mxu0 0
    %10540 = vmatprep.subr.bf16.mxu0 0
    %10541 = vmatpush1.bf16.msra.mxu0 0
    %10542 = vmatprep.subr.bf16.mxu0 0
    %10543 = vmatpush1.bf16.msra.mxu0 0
    %10544 = vmatprep.mubr.bf16.mxu0 0
    %10545 = vmatmul.mubr.bf16.gmra.mrb[0].mxu0 %v10338
    %v10546 = vpop.f32.mrb[0].mxu0
    %v10547 = vadd.f32 0.0, %v10546
    %v10548 = vpop.f32.mrb[0].mxu0
    %v10549 = vadd.f32 0.0, %v10548
    %v10550 = vpop.f32.mrb[0].mxu0
    %v10551 = vpop.f32.mrb[0].mxu0
    %10552 = vdwg.mxu0
    %10553 = vmatprep.subr.bf16.mxu0 %v10369
    %10554 = vmatpush1.bf16.msra.mxu0 %v10366
    %10555 = vmatprep.subr.bf16.mxu0 0
    %10556 = vmatpush1.bf16.msra.mxu0 0
    %10557 = vmatprep.subr.bf16.mxu0 0
    %10558 = vmatpush1.bf16.msra.mxu0 0
    %10559 = vmatprep.subr.bf16.mxu0 0
    %10560 = vmatpush1.bf16.msra.mxu0 0
    %10561 = vmatprep.subr.bf16.mxu0 0
    %10562 = vmatpush1.bf16.msra.mxu0 0
    %10563 = vmatprep.subr.bf16.mxu0 0
    %10564 = vmatpush1.bf16.msra.mxu0 0
    %10565 = vmatprep.subr.bf16.mxu0 0
    %10566 = vmatpush1.bf16.msra.mxu0 0
    %10567 = vmatprep.subr.bf16.mxu0 0
    %10568 = vmatpush1.bf16.msra.mxu0 0
    %10569 = vmatprep.subr.bf16.mxu0 0
    %10570 = vmatpush1.bf16.msra.mxu0 0
    %10571 = vmatprep.subr.bf16.mxu0 0
    %10572 = vmatpush1.bf16.msra.mxu0 0
    %10573 = vmatprep.subr.bf16.mxu0 0
    %10574 = vmatpush1.bf16.msra.mxu0 0
    %10575 = vmatprep.subr.bf16.mxu0 0
    %10576 = vmatpush1.bf16.msra.mxu0 0
    %10577 = vmatprep.subr.bf16.mxu0 0
    %10578 = vmatpush1.bf16.msra.mxu0 0
    %10579 = vmatprep.subr.bf16.mxu0 0
    %10580 = vmatpush1.bf16.msra.mxu0 0
    %10581 = vmatprep.subr.bf16.mxu0 0
    %10582 = vmatpush1.bf16.msra.mxu0 0
    %10583 = vmatprep.subr.bf16.mxu0 0
    %10584 = vmatpush1.bf16.msra.mxu0 0
    %10585 = vmatprep.mubr.bf16.mxu0 0
    %10586 = vmatmul.mubr.bf16.gmra.mrb[0].mxu0 %v10338
    %v10587 = vpop.f32.mrb[0].mxu0
    %v10588 = vadd.f32 0.0, %v10587
    %v10589 = vpop.f32.mrb[0].mxu0
    %v10590 = vadd.f32 0.0, %v10589
    %v10591 = vpop.f32.mrb[0].mxu0
    %v10592 = vpop.f32.mrb[0].mxu0
    %10593 = vdwg.mxu0
    %10594 = vmatprep.subr.bf16.mxu0 %v10375
    %10595 = vmatpush1.bf16.msra.mxu0 %v10372
    %10596 = vmatprep.subr.bf16.mxu0 0
    %10597 = vmatpush1.bf16.msra.mxu0 0
    %10598 = vmatprep.subr.bf16.mxu0 0
    %10599 = vmatpush1.bf16.msra.mxu0 0
    %10600 = vmatprep.subr.bf16.mxu0 0
    %10601 = vmatpush1.bf16.msra.mxu0 0
    %10602 = vmatprep.subr.bf16.mxu0 0
    %10603 = vmatpush1.bf16.msra.mxu0 0
    %10604 = vmatprep.subr.bf16.mxu0 0
    %10605 = vmatpush1.bf16.msra.mxu0 0
    %10606 = vmatprep.subr.bf16.mxu0 0
    %10607 = vmatpush1.bf16.msra.mxu0 0
    %10608 = vmatprep.subr.bf16.mxu0 0
    %10609 = vmatpush1.bf16.msra.mxu0 0
    %10610 = vmatprep.subr.bf16.mxu0 0
    %10611 = vmatpush1.bf16.msra.mxu0 0
    %10612 = vmatprep.subr.bf16.mxu0 0
    %10613 = vmatpush1.bf16.msra.mxu0 0
    %10614 = vmatprep.subr.bf16.mxu0 0
    %10615 = vmatpush1.bf16.msra.mxu0 0
    %10616 = vmatprep.subr.bf16.mxu0 0
    %10617 = vmatpush1.bf16.msra.mxu0 0
    %10618 = vmatprep.subr.bf16.mxu0 0
    %10619 = vmatpush1.bf16.msra.mxu0 0
    %10620 = vmatprep.subr.bf16.mxu0 0
    %10621 = vmatpush1.bf16.msra.mxu0 0
    %10622 = vmatprep.subr.bf16.mxu0 0
    %10623 = vmatpush1.bf16.msra.mxu0 0
    %10624 = vmatprep.subr.bf16.mxu0 0
    %10625 = vmatpush1.bf16.msra.mxu0 0
    %10626 = vmatprep.mubr.bf16.mxu0 0
    %10627 = vmatmul.mubr.bf16.gmra.mrb[0].mxu0 %v10338
    %v10628 = vpop.f32.mrb[0].mxu0
    %v10629 = vadd.f32 0.0, %v10628
    %v10630 = vpop.f32.mrb[0].mxu0
    %v10631 = vadd.f32 0.0, %v10630
    %v10632 = vpop.f32.mrb[0].mxu0
    %v10633 = vpop.f32.mrb[0].mxu0
    %10634 = vdwg.mxu0
    %10635 = vmatprep.subr.bf16.mxu0 %v10381
    %10636 = vmatpush1.bf16.msra.mxu0 %v10378
    %10637 = vmatprep.subr.bf16.mxu0 0
    %10638 = vmatpush1.bf16.msra.mxu0 0
    %10639 = vmatprep.subr.bf16.mxu0 0
    %10640 = vmatpush1.bf16.msra.mxu0 0
    %10641 = vmatprep.subr.bf16.mxu0 0
    %10642 = vmatpush1.bf16.msra.mxu0 0
    %10643 = vmatprep.subr.bf16.mxu0 0
    %10644 = vmatpush1.bf16.msra.mxu0 0
    %10645 = vmatprep.subr.bf16.mxu0 0
    %10646 = vmatpush1.bf16.msra.mxu0 0
    %10647 = vmatprep.subr.bf16.mxu0 0
    %10648 = vmatpush1.bf16.msra.mxu0 0
    %10649 = vmatprep.subr.bf16.mxu0 0
    %10650 = vmatpush1.bf16.msra.mxu0 0
    %10651 = vmatprep.subr.bf16.mxu0 0
    %10652 = vmatpush1.bf16.msra.mxu0 0
    %10653 = vmatprep.subr.bf16.mxu0 0
    %10654 = vmatpush1.bf16.msra.mxu0 0
    %10655 = vmatprep.subr.bf16.mxu0 0
    %10656 = vmatpush1.bf16.msra.mxu0 0
    %10657 = vmatprep.subr.bf16.mxu0 0
    %10658 = vmatpush1.bf16.msra.mxu0 0
    %10659 = vmatprep.subr.bf16.mxu0 0
    %10660 = vmatpush1.bf16.msra.mxu0 0
    %10661 = vmatprep.subr.bf16.mxu0 0
    %10662 = vmatpush1.bf16.msra.mxu0 0
    %10663 = vmatprep.subr.bf16.mxu0 0
    %10664 = vmatpush1.bf16.msra.mxu0 0
    %10665 = vmatprep.subr.bf16.mxu0 0
    %10666 = vmatpush1.bf16.msra.mxu0 0
    %10667 = vmatprep.mubr.bf16.mxu0 0
    %10668 = vmatmul.mubr.bf16.gmra.mrb[0].mxu0 %v10338
    %v10669 = vpop.f32.mrb[0].mxu0
    %v10670 = vadd.f32 0.0, %v10669
    %v10671 = vpop.f32.mrb[0].mxu0
    %v10672 = vadd.f32 0.0, %v10671
    %v10673 = vpop.f32.mrb[0].mxu0
    %v10674 = vpop.f32.mrb[0].mxu0
    %10675 = vdwg.mxu0
    %10676 = vmatprep.subr.bf16.mxu0 %v10387
    %10677 = vmatpush1.bf16.msra.mxu0 %v10384
    %10678 = vmatprep.subr.bf16.mxu0 0
    %10679 = vmatpush1.bf16.msra.mxu0 0
    %10680 = vmatprep.subr.bf16.mxu0 0
    %10681 = vmatpush1.bf16.msra.mxu0 0
    %10682 = vmatprep.subr.bf16.mxu0 0
    %10683 = vmatpush1.bf16.msra.mxu0 0
    %10684 = vmatprep.subr.bf16.mxu0 0
    %10685 = vmatpush1.bf16.msra.mxu0 0
    %10686 = vmatprep.subr.bf16.mxu0 0
    %10687 = vmatpush1.bf16.msra.mxu0 0
    %10688 = vmatprep.subr.bf16.mxu0 0
    %10689 = vmatpush1.bf16.msra.mxu0 0
    %10690 = vmatprep.subr.bf16.mxu0 0
    %10691 = vmatpush1.bf16.msra.mxu0 0
    %10692 = vmatprep.subr.bf16.mxu0 0
    %10693 = vmatpush1.bf16.msra.mxu0 0
    %10694 = vmatprep.subr.bf16.mxu0 0
    %10695 = vmatpush1.bf16.msra.mxu0 0
    %10696 = vmatprep.subr.bf16.mxu0 0
    %10697 = vmatpush1.bf16.msra.mxu0 0
    %10698 = vmatprep.subr.bf16.mxu0 0
    %10699 = vmatpush1.bf16.msra.mxu0 0
    %10700 = vmatprep.subr.bf16.mxu0 0
    %10701 = vmatpush1.bf16.msra.mxu0 0
    %10702 = vmatprep.subr.bf16.mxu0 0
    %10703 = vmatpush1.bf16.msra.mxu0 0
    %10704 = vmatprep.subr.bf16.mxu0 0
    %10705 = vmatpush1.bf16.msra.mxu0 0
    %10706 = vmatprep.subr.bf16.mxu0 0
    %10707 = vmatpush1.bf16.msra.mxu0 0
    %10708 = vmatprep.mubr.bf16.mxu0 0
    %10709 = vmatmul.mubr.bf16.gmra.mrb[0].mxu0 %v10338
    %v10710 = vpop.f32.mrb[0].mxu0
    %v10711 = vadd.f32 0.0, %v10710
    %v10712 = vpop.f32.mrb[0].mxu0
    %v10713 = vadd.f32 0.0, %v10712
    %v10714 = vpop.f32.mrb[0].mxu0
    %v10715 = vpop.f32.mrb[0].mxu0
    %10716 = vdwg.mxu0
    %v10717 = vld [vmem:[#allocation9] sm:$0xff]
    %v10718 = vld [vmem:[#allocation9 + $0x8] sm:$0xff]
    %v10719 = vld [vmem:[#allocation9 + $0x10] sm:$0xff]
    %v10720 = vld [vmem:[#allocation9 + $0x18] sm:$0xff]
    %v10721 = vld [vmem:[#allocation9 + $0x20] sm:$0xff]
    %v10722 = vld [vmem:[#allocation9 + $0x28] sm:$0xff]
    %v10723 = vld [vmem:[#allocation9 + $0x30] sm:$0xff]
    %v10724 = vld [vmem:[#allocation9 + $0x38] sm:$0xff]
    %v10725 = vld [vmem:[#allocation9 + $0x40] sm:$0xff]
    %v10726 = vld [vmem:[#allocation9 + $0x48] sm:$0xff]
    %v10727 = vld [vmem:[#allocation9 + $0x50] sm:$0xff]
    %v10728 = vld [vmem:[#allocation9 + $0x58] sm:$0xff]
    %v10729 = vld [vmem:[#allocation9 + $0x60] sm:$0xff]
    %v10730 = vld [vmem:[#allocation9 + $0x68] sm:$0xff]
    %v10731 = vld [vmem:[#allocation9 + $0x70] sm:$0xff]
    %v10732 = vld [vmem:[#allocation9 + $0x78] sm:$0xff]
    %v10733 = vld [vmem:[#allocation9 + $0x80] sm:$0xff]
    %v10734 = vld [vmem:[#allocation9 + $0x88] sm:$0xff]
    %v10735 = vld [vmem:[#allocation9 + $0x90] sm:$0xff]
    %v10736 = vld [vmem:[#allocation9 + $0x98] sm:$0xff]
    %v10737 = vld [vmem:[#allocation9 + $0xa0] sm:$0xff]
    %v10738 = vld [vmem:[#allocation9 + $0xa8] sm:$0xff]
    %v10739 = vld [vmem:[#allocation9 + $0xb0] sm:$0xff]
    %v10740 = vld [vmem:[#allocation9 + $0xb8] sm:$0xff]
    %v10741 = vld [vmem:[#allocation9 + $0xc0] sm:$0xff]
    %v10742 = vld [vmem:[#allocation9 + $0xc8] sm:$0xff]
    %v10743 = vld [vmem:[#allocation9 + $0xd0] sm:$0xff]
    %v10744 = vld [vmem:[#allocation9 + $0xd8] sm:$0xff]
    %v10745 = vld [vmem:[#allocation9 + $0xe0] sm:$0xff]
    %v10746 = vld [vmem:[#allocation9 + $0xe8] sm:$0xff]
    %v10747 = vld [vmem:[#allocation9 + $0xf0] sm:$0xff]
    %v10748 = vld [vmem:[#allocation9 + $0xf8] sm:$0xff]
    %v10749 = vld [vmem:[#allocation9 + $0x100] sm:$0xff]
    %v10750 = vld [vmem:[#allocation9 + $0x108] sm:$0xff]
    %v10751 = vld [vmem:[#allocation9 + $0x110] sm:$0xff]
    %v10752 = vld [vmem:[#allocation9 + $0x118] sm:$0xff]
    %v10753 = vld [vmem:[#allocation9 + $0x120] sm:$0xff]
    %v10754 = vld [vmem:[#allocation9 + $0x128] sm:$0xff]
    %v10755 = vld [vmem:[#allocation9 + $0x130] sm:$0xff]
    %v10756 = vld [vmem:[#allocation9 + $0x138] sm:$0xff]
    %v10757 = vld [vmem:[#allocation9 + $0x140] sm:$0xff]
    %v10758 = vld [vmem:[#allocation9 + $0x148] sm:$0xff]
    %v10759 = vld [vmem:[#allocation9 + $0x150] sm:$0xff]
    %v10760 = vld [vmem:[#allocation9 + $0x158] sm:$0xff]
    %v10761 = vld [vmem:[#allocation9 + $0x160] sm:$0xff]
    %v10762 = vld [vmem:[#allocation9 + $0x168] sm:$0xff]
    %v10763 = vld [vmem:[#allocation9 + $0x170] sm:$0xff]
    %v10764 = vld [vmem:[#allocation9 + $0x178] sm:$0xff]
    %v10765 = vld [vmem:[#allocation9 + $0x180] sm:$0xff]
    %v10766 = vld [vmem:[#allocation9 + $0x188] sm:$0xff]
    %v10767 = vld [vmem:[#allocation9 + $0x190] sm:$0xff]
    %v10768 = vld [vmem:[#allocation9 + $0x198] sm:$0xff]
    %v10769 = vld [vmem:[#allocation9 + $0x1a0] sm:$0xff]
    %v10770 = vld [vmem:[#allocation9 + $0x1a8] sm:$0xff]
    %v10771 = vld [vmem:[#allocation9 + $0x1b0] sm:$0xff]
    %v10772 = vld [vmem:[#allocation9 + $0x1b8] sm:$0xff]
    %v10773 = vld [vmem:[#allocation9 + $0x1c0] sm:$0xff]
    %v10774 = vld [vmem:[#allocation9 + $0x1c8] sm:$0xff]
    %v10775 = vld [vmem:[#allocation9 + $0x1d0] sm:$0xff]
    %v10776 = vld [vmem:[#allocation9 + $0x1d8] sm:$0xff]
    %v10777 = vld [vmem:[#allocation9 + $0x1e0] sm:$0xff]
    %v10778 = vld [vmem:[#allocation9 + $0x1e8] sm:$0xff]
    %v10779 = vld [vmem:[#allocation9 + $0x1f0] sm:$0xff]
    %v10780 = vld [vmem:[#allocation9 + $0x1f8] sm:$0xff]
    %v10781 = vld [vmem:[#allocation9 + $0x200] sm:$0xff]
    %v10782 = vld [vmem:[#allocation9 + $0x208] sm:$0xff]
    %v10783 = vld [vmem:[#allocation9 + $0x210] sm:$0xff]
    %v10784 = vld [vmem:[#allocation9 + $0x218] sm:$0xff]
    %v10785 = vld [vmem:[#allocation9 + $0x220] sm:$0xff]
    %v10786 = vld [vmem:[#allocation9 + $0x228] sm:$0xff]
    %v10787 = vld [vmem:[#allocation9 + $0x230] sm:$0xff]
    %v10788 = vld [vmem:[#allocation9 + $0x238] sm:$0xff]
    %v10789 = vld [vmem:[#allocation9 + $0x240] sm:$0xff]
    %v10790 = vld [vmem:[#allocation9 + $0x248] sm:$0xff]
    %v10791 = vld [vmem:[#allocation9 + $0x250] sm:$0xff]
    %v10792 = vld [vmem:[#allocation9 + $0x258] sm:$0xff]
    %v10793 = vld [vmem:[#allocation9 + $0x260] sm:$0xff]
    %v10794 = vld [vmem:[#allocation9 + $0x268] sm:$0xff]
    %v10795 = vld [vmem:[#allocation9 + $0x270] sm:$0xff]
    %v10796 = vld [vmem:[#allocation9 + $0x278] sm:$0xff]
    %v10797 = vld [vmem:[#allocation9 + $0x280] sm:$0xff]
    %v10798 = vld [vmem:[#allocation9 + $0x288] sm:$0xff]
    %v10799 = vld [vmem:[#allocation9 + $0x290] sm:$0xff]
    %v10800 = vld [vmem:[#allocation9 + $0x298] sm:$0xff]
    %v10801 = vld [vmem:[#allocation9 + $0x2a0] sm:$0xff]
    %v10802 = vld [vmem:[#allocation9 + $0x2a8] sm:$0xff]
    %v10803 = vld [vmem:[#allocation9 + $0x2b0] sm:$0xff]
    %v10804 = vld [vmem:[#allocation9 + $0x2b8] sm:$0xff]
    %v10805 = vld [vmem:[#allocation9 + $0x2c0] sm:$0xff]
    %v10806 = vld [vmem:[#allocation9 + $0x2c8] sm:$0xff]
    %v10807 = vld [vmem:[#allocation9 + $0x2d0] sm:$0xff]
    %v10808 = vld [vmem:[#allocation9 + $0x2d8] sm:$0xff]
    %v10809 = vld [vmem:[#allocation9 + $0x2e0] sm:$0xff]
    %v10810 = vld [vmem:[#allocation9 + $0x2e8] sm:$0xff]
    %v10811 = vld [vmem:[#allocation9 + $0x2f0] sm:$0xff]
    %v10812 = vld [vmem:[#allocation9 + $0x2f8] sm:$0xff]
    %v10813 = vld [vmem:[#allocation9 + $0x300] sm:$0xff]
    %v10814 = vld [vmem:[#allocation9 + $0x308] sm:$0xff]
    %v10815 = vld [vmem:[#allocation9 + $0x310] sm:$0xff]
    %v10816 = vld [vmem:[#allocation9 + $0x318] sm:$0xff]
    %v10817 = vld [vmem:[#allocation9 + $0x320] sm:$0xff]
    %v10818 = vld [vmem:[#allocation9 + $0x328] sm:$0xff]
    %v10819 = vld [vmem:[#allocation9 + $0x330] sm:$0xff]
    %v10820 = vld [vmem:[#allocation9 + $0x338] sm:$0xff]
    %v10821 = vld [vmem:[#allocation9 + $0x340] sm:$0xff]
    %v10822 = vld [vmem:[#allocation9 + $0x348] sm:$0xff]
    %v10823 = vld [vmem:[#allocation9 + $0x350] sm:$0xff]
    %v10824 = vld [vmem:[#allocation9 + $0x358] sm:$0xff]
    %v10825 = vld [vmem:[#allocation9 + $0x360] sm:$0xff]
    %v10826 = vld [vmem:[#allocation9 + $0x368] sm:$0xff]
    %v10827 = vld [vmem:[#allocation9 + $0x370] sm:$0xff]
    %v10828 = vld [vmem:[#allocation9 + $0x378] sm:$0xff]
    %v10829 = vld [vmem:[#allocation9 + $0x380] sm:$0xff]
    %v10830 = vld [vmem:[#allocation9 + $0x388] sm:$0xff]
    %v10831 = vld [vmem:[#allocation9 + $0x390] sm:$0xff]
    %v10832 = vld [vmem:[#allocation9 + $0x398] sm:$0xff]
    %v10833 = vld [vmem:[#allocation9 + $0x3a0] sm:$0xff]
    %v10834 = vld [vmem:[#allocation9 + $0x3a8] sm:$0xff]
    %v10835 = vld [vmem:[#allocation9 + $0x3b0] sm:$0xff]
    %v10836 = vld [vmem:[#allocation9 + $0x3b8] sm:$0xff]
    %v10837 = vld [vmem:[#allocation9 + $0x3c0] sm:$0xff]
    %v10838 = vld [vmem:[#allocation9 + $0x3c8] sm:$0xff]
    %v10839 = vld [vmem:[#allocation9 + $0x3d0] sm:$0xff]
    %v10840 = vld [vmem:[#allocation9 + $0x3d8] sm:$0xff]
    %v10841 = vld [vmem:[#allocation9 + $0x3e0] sm:$0xff]
    %v10842 = vld [vmem:[#allocation9 + $0x3e8] sm:$0xff]
    %v10843 = vld [vmem:[#allocation9 + $0x3f0] sm:$0xff]
    %v10844 = vld [vmem:[#allocation9 + $0x3f8] sm:$0xff]
    %v10845 = vpack.c.bf16 %v10424, %v10424
    %v10846 = vpack.c.bf16 %v10426, %v10426
    %v10847 = vpack.c.bf16 %v10465, %v10465
    %v10848 = vpack.c.bf16 %v10467, %v10467
    %v10849 = vpack.c.bf16 %v10506, %v10506
    %v10850 = vpack.c.bf16 %v10508, %v10508
    %v10851 = vpack.c.bf16 %v10547, %v10547
    %v10852 = vpack.c.bf16 %v10549, %v10549
    %v10981 = vunpack.c.l.b16 %v10717
    %v10982 = vunpack.c.h.b16 %v10717
    %v10983 = vunpack.c.l.b16 %v10718
    %v10984 = vunpack.c.h.b16 %v10718
    %v10985 = vunpack.c.l.b16 %v10719
    %v10986 = vunpack.c.h.b16 %v10719
    %v10987 = vunpack.c.l.b16 %v10720
    %v10988 = vunpack.c.h.b16 %v10720
    %v10989 = vunpack.c.l.b16 %v10721
    %v10990 = vunpack.c.h.b16 %v10721
    %v10991 = vunpack.c.l.b16 %v10722
    %v10992 = vunpack.c.h.b16 %v10722
    %v10993 = vunpack.c.l.b16 %v10723
    %v10994 = vunpack.c.h.b16 %v10723
    %v10995 = vunpack.c.l.b16 %v10724
    %v10996 = vunpack.c.h.b16 %v10724
    %v10997 = vunpack.c.l.b16 %v10725
    %v10998 = vunpack.c.h.b16 %v10725
    %v10999 = vunpack.c.l.b16 %v10726
    %v11000 = vunpack.c.h.b16 %v10726
    %v11001 = vunpack.c.l.b16 %v10727
    %v11002 = vunpack.c.h.b16 %v10727
    %v11003 = vunpack.c.l.b16 %v10728
    %v11004 = vunpack.c.h.b16 %v10728
    %v11005 = vunpack.c.l.b16 %v10729
    %v11006 = vunpack.c.h.b16 %v10729
    %v11007 = vunpack.c.l.b16 %v10730
    %v11008 = vunpack.c.h.b16 %v10730
    %v11009 = vunpack.c.l.b16 %v10731
    %v11010 = vunpack.c.h.b16 %v10731
    %v11011 = vunpack.c.l.b16 %v10732
    %v11012 = vunpack.c.h.b16 %v10732
    %v11013 = vunpack.c.l.b16 %v10733
    %v11014 = vunpack.c.h.b16 %v10733
    %v11015 = vunpack.c.l.b16 %v10734
    %v11016 = vunpack.c.h.b16 %v10734
    %v11017 = vunpack.c.l.b16 %v10735
    %v11018 = vunpack.c.h.b16 %v10735
    %v11019 = vunpack.c.l.b16 %v10736
    %v11020 = vunpack.c.h.b16 %v10736
    %v11021 = vunpack.c.l.b16 %v10737
    %v11022 = vunpack.c.h.b16 %v10737
    %v11023 = vunpack.c.l.b16 %v10738
    %v11024 = vunpack.c.h.b16 %v10738
    %v11025 = vunpack.c.l.b16 %v10739
    %v11026 = vunpack.c.h.b16 %v10739
    %v11027 = vunpack.c.l.b16 %v10740
    %v11028 = vunpack.c.h.b16 %v10740
    %v11029 = vunpack.c.l.b16 %v10741
    %v11030 = vunpack.c.h.b16 %v10741
    %v11031 = vunpack.c.l.b16 %v10742
    %v11032 = vunpack.c.h.b16 %v10742
    %v11033 = vunpack.c.l.b16 %v10743
    %v11034 = vunpack.c.h.b16 %v10743
    %v11035 = vunpack.c.l.b16 %v10744
    %v11036 = vunpack.c.h.b16 %v10744
    %v11037 = vunpack.c.l.b16 %v10745
    %v11038 = vunpack.c.h.b16 %v10745
    %v11039 = vunpack.c.l.b16 %v10746
    %v11040 = vunpack.c.h.b16 %v10746
    %v11041 = vunpack.c.l.b16 %v10747
    %v11042 = vunpack.c.h.b16 %v10747
    %v11043 = vunpack.c.l.b16 %v10748
    %v11044 = vunpack.c.h.b16 %v10748
    %v11045 = vunpack.c.l.b16 %v10749
    %v11046 = vunpack.c.h.b16 %v10749
    %v11047 = vunpack.c.l.b16 %v10750
    %v11048 = vunpack.c.h.b16 %v10750
    %v11049 = vunpack.c.l.b16 %v10751
    %v11050 = vunpack.c.h.b16 %v10751
    %v11051 = vunpack.c.l.b16 %v10752
    %v11052 = vunpack.c.h.b16 %v10752
    %v11053 = vunpack.c.l.b16 %v10753
    %v11054 = vunpack.c.h.b16 %v10753
    %v11055 = vunpack.c.l.b16 %v10754
    %v11056 = vunpack.c.h.b16 %v10754
    %v11057 = vunpack.c.l.b16 %v10755
    %v11058 = vunpack.c.h.b16 %v10755
    %v11059 = vunpack.c.l.b16 %v10756
    %v11060 = vunpack.c.h.b16 %v10756
    %v11061 = vunpack.c.l.b16 %v10757
    %v11062 = vunpack.c.h.b16 %v10757
    %v11063 = vunpack.c.l.b16 %v10758
    %v11064 = vunpack.c.h.b16 %v10758
    %v11065 = vunpack.c.l.b16 %v10759
    %v11066 = vunpack.c.h.b16 %v10759
    %v11067 = vunpack.c.l.b16 %v10760
    %v11068 = vunpack.c.h.b16 %v10760
    %v11069 = vunpack.c.l.b16 %v10761
    %v11070 = vunpack.c.h.b16 %v10761
    %v11071 = vunpack.c.l.b16 %v10762
    %v11072 = vunpack.c.h.b16 %v10762
    %v11073 = vunpack.c.l.b16 %v10763
    %v11074 = vunpack.c.h.b16 %v10763
    %v11075 = vunpack.c.l.b16 %v10764
    %v11076 = vunpack.c.h.b16 %v10764
    %v11077 = vunpack.c.l.b16 %v10765
    %v11078 = vunpack.c.h.b16 %v10765
    %v11079 = vunpack.c.l.b16 %v10766
    %v11080 = vunpack.c.h.b16 %v10766
    %v11081 = vunpack.c.l.b16 %v10767
    %v11082 = vunpack.c.h.b16 %v10767
    %v11083 = vunpack.c.l.b16 %v10768
    %v11084 = vunpack.c.h.b16 %v10768
    %v11085 = vunpack.c.l.b16 %v10769
    %v11086 = vunpack.c.h.b16 %v10769
    %v11087 = vunpack.c.l.b16 %v10770
    %v11088 = vunpack.c.h.b16 %v10770
    %v11089 = vunpack.c.l.b16 %v10771
    %v11090 = vunpack.c.h.b16 %v10771
    %v11091 = vunpack.c.l.b16 %v10772
    %v11092 = vunpack.c.h.b16 %v10772
    %v11093 = vunpack.c.l.b16 %v10773
    %v11094 = vunpack.c.h.b16 %v10773
    %v11095 = vunpack.c.l.b16 %v10774
    %v11096 = vunpack.c.h.b16 %v10774
    %v11097 = vunpack.c.l.b16 %v10775
    %v11098 = vunpack.c.h.b16 %v10775
    %v11099 = vunpack.c.l.b16 %v10776
    %v11100 = vunpack.c.h.b16 %v10776
    %v11101 = vunpack.c.l.b16 %v10777
    %v11102 = vunpack.c.h.b16 %v10777
    %v11103 = vunpack.c.l.b16 %v10778
    %v11104 = vunpack.c.h.b16 %v10778
    %v11105 = vunpack.c.l.b16 %v10779
    %v11106 = vunpack.c.h.b16 %v10779
    %v11107 = vunpack.c.l.b16 %v10780
    %v11108 = vunpack.c.h.b16 %v10780
    %v11109 = vunpack.c.l.b16 %v10781
    %v11110 = vunpack.c.h.b16 %v10781
    %v11111 = vunpack.c.l.b16 %v10782
    %v11112 = vunpack.c.h.b16 %v10782
    %v11113 = vunpack.c.l.b16 %v10783
    %v11114 = vunpack.c.h.b16 %v10783
    %v11115 = vunpack.c.l.b16 %v10784
    %v11116 = vunpack.c.h.b16 %v10784
    %v11117 = vunpack.c.l.b16 %v10785
    %v11118 = vunpack.c.h.b16 %v10785
    %v11119 = vunpack.c.l.b16 %v10786
    %v11120 = vunpack.c.h.b16 %v10786
    %v11121 = vunpack.c.l.b16 %v10787
    %v11122 = vunpack.c.h.b16 %v10787
    %v11123 = vunpack.c.l.b16 %v10788
    %v11124 = vunpack.c.h.b16 %v10788
    %v11125 = vunpack.c.l.b16 %v10789
    %v11126 = vunpack.c.h.b16 %v10789
    %v11127 = vunpack.c.l.b16 %v10790
    %v11128 = vunpack.c.h.b16 %v10790
    %v11129 = vunpack.c.l.b16 %v10791
    %v11130 = vunpack.c.h.b16 %v10791
    %v11131 = vunpack.c.l.b16 %v10792
    %v11132 = vunpack.c.h.b16 %v10792
    %v11133 = vunpack.c.l.b16 %v10793
    %v11134 = vunpack.c.h.b16 %v10793
    %v11135 = vunpack.c.l.b16 %v10794
    %v11136 = vunpack.c.h.b16 %v10794
    %v11137 = vunpack.c.l.b16 %v10795
    %v11138 = vunpack.c.h.b16 %v10795
    %v11139 = vunpack.c.l.b16 %v10796
    %v11140 = vunpack.c.h.b16 %v10796
    %v11141 = vunpack.c.l.b16 %v10797
    %v11142 = vunpack.c.h.b16 %v10797
    %v11143 = vunpack.c.l.b16 %v10798
    %v11144 = vunpack.c.h.b16 %v10798
    %v11145 = vunpack.c.l.b16 %v10799
    %v11146 = vunpack.c.h.b16 %v10799
    %v11147 = vunpack.c.l.b16 %v10800
    %v11148 = vunpack.c.h.b16 %v10800
    %v11149 = vunpack.c.l.b16 %v10801
    %v11150 = vunpack.c.h.b16 %v10801
    %v11151 = vunpack.c.l.b16 %v10802
    %v11152 = vunpack.c.h.b16 %v10802
    %v11153 = vunpack.c.l.b16 %v10803
    %v11154 = vunpack.c.h.b16 %v10803
    %v11155 = vunpack.c.l.b16 %v10804
    %v11156 = vunpack.c.h.b16 %v10804
    %v11157 = vunpack.c.l.b16 %v10805
    %v11158 = vunpack.c.h.b16 %v10805
    %v11159 = vunpack.c.l.b16 %v10806
    %v11160 = vunpack.c.h.b16 %v10806
    %v11161 = vunpack.c.l.b16 %v10807
    %v11162 = vunpack.c.h.b16 %v10807
    %v11163 = vunpack.c.l.b16 %v10808
    %v11164 = vunpack.c.h.b16 %v10808
    %v11165 = vunpack.c.l.b16 %v10809
    %v11166 = vunpack.c.h.b16 %v10809
    %v11167 = vunpack.c.l.b16 %v10810
    %v11168 = vunpack.c.h.b16 %v10810
    %v11169 = vunpack.c.l.b16 %v10811
    %v11170 = vunpack.c.h.b16 %v10811
    %v11171 = vunpack.c.l.b16 %v10812
    %v11172 = vunpack.c.h.b16 %v10812
    %v11173 = vunpack.c.l.b16 %v10813
    %v11174 = vunpack.c.h.b16 %v10813
    %v11175 = vunpack.c.l.b16 %v10814
    %v11176 = vunpack.c.h.b16 %v10814
    %v11177 = vunpack.c.l.b16 %v10815
    %v11178 = vunpack.c.h.b16 %v10815
    %v11179 = vunpack.c.l.b16 %v10816
    %v11180 = vunpack.c.h.b16 %v10816
    %v11181 = vunpack.c.l.b16 %v10817
    %v11182 = vunpack.c.h.b16 %v10817
    %v11183 = vunpack.c.l.b16 %v10818
    %v11184 = vunpack.c.h.b16 %v10818
    %v11185 = vunpack.c.l.b16 %v10819
    %v11186 = vunpack.c.h.b16 %v10819
    %v11187 = vunpack.c.l.b16 %v10820
    %v11188 = vunpack.c.h.b16 %v10820
    %v11189 = vunpack.c.l.b16 %v10821
    %v11190 = vunpack.c.h.b16 %v10821
    %v11191 = vunpack.c.l.b16 %v10822
    %v11192 = vunpack.c.h.b16 %v10822
    %v11193 = vunpack.c.l.b16 %v10823
    %v11194 = vunpack.c.h.b16 %v10823
    %v11195 = vunpack.c.l.b16 %v10824
    %v11196 = vunpack.c.h.b16 %v10824
    %v11197 = vunpack.c.l.b16 %v10825
    %v11198 = vunpack.c.h.b16 %v10825
    %v11199 = vunpack.c.l.b16 %v10826
    %v11200 = vunpack.c.h.b16 %v10826
    %v11201 = vunpack.c.l.b16 %v10827
    %v11202 = vunpack.c.h.b16 %v10827
    %v11203 = vunpack.c.l.b16 %v10828
    %v11204 = vunpack.c.h.b16 %v10828
    %v11205 = vunpack.c.l.b16 %v10829
    %v11206 = vunpack.c.h.b16 %v10829
    %v11207 = vunpack.c.l.b16 %v10830
    %v11208 = vunpack.c.h.b16 %v10830
    %v11209 = vunpack.c.l.b16 %v10831
    %v11210 = vunpack.c.h.b16 %v10831
    %v11211 = vunpack.c.l.b16 %v10832
    %v11212 = vunpack.c.h.b16 %v10832
    %v11213 = vunpack.c.l.b16 %v10833
    %v11214 = vunpack.c.h.b16 %v10833
    %v11215 = vunpack.c.l.b16 %v10834
    %v11216 = vunpack.c.h.b16 %v10834
    %v11217 = vunpack.c.l.b16 %v10835
    %v11218 = vunpack.c.h.b16 %v10835
    %v11219 = vunpack.c.l.b16 %v10836
    %v11220 = vunpack.c.h.b16 %v10836
    %v11221 = vunpack.c.l.b16 %v10837
    %v11222 = vunpack.c.h.b16 %v10837
    %v11223 = vunpack.c.l.b16 %v10838
    %v11224 = vunpack.c.h.b16 %v10838
    %v11225 = vunpack.c.l.b16 %v10839
    %v11226 = vunpack.c.h.b16 %v10839
    %v11227 = vunpack.c.l.b16 %v10840
    %v11228 = vunpack.c.h.b16 %v10840
    %v11229 = vunpack.c.l.b16 %v10841
    %v11230 = vunpack.c.h.b16 %v10841
    %v11231 = vunpack.c.l.b16 %v10842
    %v11232 = vunpack.c.h.b16 %v10842
    %v11233 = vunpack.c.l.b16 %v10843
    %v11234 = vunpack.c.h.b16 %v10843
    %v11235 = vunpack.c.l.b16 %v10844
    %v11236 = vunpack.c.h.b16 %v10844
    %v11237 = vpack.c.b16 %v10983, %v10981
    %v11238 = vpack.c.b16 %v10984, %v10982
    %v11239 = vpack.c.b16 %v10987, %v10985
    %v11240 = vpack.c.b16 %v10988, %v10986
    %v11241 = vpack.c.b16 %v10991, %v10989
    %v11242 = vpack.c.b16 %v10992, %v10990
    %v11243 = vpack.c.b16 %v10995, %v10993
    %v11244 = vpack.c.b16 %v10996, %v10994
    %v11245 = vpack.c.b16 %v10999, %v10997
    %v11246 = vpack.c.b16 %v11000, %v10998
    %v11247 = vpack.c.b16 %v11003, %v11001
    %v11248 = vpack.c.b16 %v11004, %v11002
    %v11249 = vpack.c.b16 %v11007, %v11005
    %v11250 = vpack.c.b16 %v11008, %v11006
    %v11251 = vpack.c.b16 %v11011, %v11009
    %v11252 = vpack.c.b16 %v11012, %v11010
    %v11253 = vpack.c.b16 %v11015, %v11013
    %v11254 = vpack.c.b16 %v11016, %v11014
    %v11255 = vpack.c.b16 %v11019, %v11017
    %v11256 = vpack.c.b16 %v11020, %v11018
    %v11257 = vpack.c.b16 %v11023, %v11021
    %v11258 = vpack.c.b16 %v11024, %v11022
    %v11259 = vpack.c.b16 %v11027, %v11025
    %v11260 = vpack.c.b16 %v11028, %v11026
    %v11261 = vpack.c.b16 %v11031, %v11029
    %v11262 = vpack.c.b16 %v11032, %v11030
    %v11263 = vpack.c.b16 %v11035, %v11033
    %v11264 = vpack.c.b16 %v11036, %v11034
    %v11265 = vpack.c.b16 %v11039, %v11037
    %v11266 = vpack.c.b16 %v11040, %v11038
    %v11267 = vpack.c.b16 %v11043, %v11041
    %v11268 = vpack.c.b16 %v11044, %v11042
    %v11269 = vpack.c.b16 %v11047, %v11045
    %v11270 = vpack.c.b16 %v11048, %v11046
    %v11271 = vpack.c.b16 %v11051, %v11049
    %v11272 = vpack.c.b16 %v11052, %v11050
    %v11273 = vpack.c.b16 %v11055, %v11053
    %v11274 = vpack.c.b16 %v11056, %v11054
    %v11275 = vpack.c.b16 %v11059, %v11057
    %v11276 = vpack.c.b16 %v11060, %v11058
    %v11277 = vpack.c.b16 %v11063, %v11061
    %v11278 = vpack.c.b16 %v11064, %v11062
    %v11279 = vpack.c.b16 %v11067, %v11065
    %v11280 = vpack.c.b16 %v11068, %v11066
    %v11281 = vpack.c.b16 %v11071, %v11069
    %v11282 = vpack.c.b16 %v11072, %v11070
    %v11283 = vpack.c.b16 %v11075, %v11073
    %v11284 = vpack.c.b16 %v11076, %v11074
    %v11285 = vpack.c.b16 %v11079, %v11077
    %v11286 = vpack.c.b16 %v11080, %v11078
    %v11287 = vpack.c.b16 %v11083, %v11081
    %v11288 = vpack.c.b16 %v11084, %v11082
    %v11289 = vpack.c.b16 %v11087, %v11085
    %v11290 = vpack.c.b16 %v11088, %v11086
    %v11291 = vpack.c.b16 %v11091, %v11089
    %v11292 = vpack.c.b16 %v11092, %v11090
    %v11293 = vpack.c.b16 %v11095, %v11093
    %v11294 = vpack.c.b16 %v11096, %v11094
    %v11295 = vpack.c.b16 %v11099, %v11097
    %v11296 = vpack.c.b16 %v11100, %v11098
    %v11297 = vpack.c.b16 %v11103, %v11101
    %v11298 = vpack.c.b16 %v11104, %v11102
    %v11299 = vpack.c.b16 %v11107, %v11105
    %v11300 = vpack.c.b16 %v11108, %v11106
    %v11301 = vpack.c.b16 %v11111, %v11109
    %v11302 = vpack.c.b16 %v11112, %v11110
    %v11303 = vpack.c.b16 %v11115, %v11113
    %v11304 = vpack.c.b16 %v11116, %v11114
    %v11305 = vpack.c.b16 %v11119, %v11117
    %v11306 = vpack.c.b16 %v11120, %v11118
    %v11307 = vpack.c.b16 %v11123, %v11121
    %v11308 = vpack.c.b16 %v11124, %v11122
    %v11309 = vpack.c.b16 %v11127, %v11125
    %v11310 = vpack.c.b16 %v11128, %v11126
    %v11311 = vpack.c.b16 %v11131, %v11129
    %v11312 = vpack.c.b16 %v11132, %v11130
    %v11313 = vpack.c.b16 %v11135, %v11133
    %v11314 = vpack.c.b16 %v11136, %v11134
    %v11315 = vpack.c.b16 %v11139, %v11137
    %v11316 = vpack.c.b16 %v11140, %v11138
    %v11317 = vpack.c.b16 %v11143, %v11141
    %v11318 = vpack.c.b16 %v11144, %v11142
    %v11319 = vpack.c.b16 %v11147, %v11145
    %v11320 = vpack.c.b16 %v11148, %v11146
    %v11321 = vpack.c.b16 %v11151, %v11149
    %v11322 = vpack.c.b16 %v11152, %v11150
    %v11323 = vpack.c.b16 %v11155, %v11153
    %v11324 = vpack.c.b16 %v11156, %v11154
    %v11325 = vpack.c.b16 %v11159, %v11157
    %v11326 = vpack.c.b16 %v11160, %v11158
    %v11327 = vpack.c.b16 %v11163, %v11161
    %v11328 = vpack.c.b16 %v11164, %v11162
    %v11329 = vpack.c.b16 %v11167, %v11165
    %v11330 = vpack.c.b16 %v11168, %v11166
    %v11331 = vpack.c.b16 %v11171, %v11169
    %v11332 = vpack.c.b16 %v11172, %v11170
    %v11333 = vpack.c.b16 %v11175, %v11173
    %v11334 = vpack.c.b16 %v11176, %v11174
    %v11335 = vpack.c.b16 %v11179, %v11177
    %v11336 = vpack.c.b16 %v11180, %v11178
    %v11337 = vpack.c.b16 %v11183, %v11181
    %v11338 = vpack.c.b16 %v11184, %v11182
    %v11339 = vpack.c.b16 %v11187, %v11185
    %v11340 = vpack.c.b16 %v11188, %v11186
    %v11341 = vpack.c.b16 %v11191, %v11189
    %v11342 = vpack.c.b16 %v11192, %v11190
    %v11343 = vpack.c.b16 %v11195, %v11193
    %v11344 = vpack.c.b16 %v11196, %v11194
    %v11345 = vpack.c.b16 %v11199, %v11197
    %v11346 = vpack.c.b16 %v11200, %v11198
    %v11347 = vpack.c.b16 %v11203, %v11201
    %v11348 = vpack.c.b16 %v11204, %v11202
    %v11349 = vpack.c.b16 %v11207, %v11205
    %v11350 = vpack.c.b16 %v11208, %v11206
    %v11351 = vpack.c.b16 %v11211, %v11209
    %v11352 = vpack.c.b16 %v11212, %v11210
    %v11353 = vpack.c.b16 %v11215, %v11213
    %v11354 = vpack.c.b16 %v11216, %v11214
    %v11355 = vpack.c.b16 %v11219, %v11217
    %v11356 = vpack.c.b16 %v11220, %v11218
    %v11357 = vpack.c.b16 %v11223, %v11221
    %v11358 = vpack.c.b16 %v11224, %v11222
    %v11359 = vpack.c.b16 %v11227, %v11225
    %v11360 = vpack.c.b16 %v11228, %v11226
    %v11361 = vpack.c.b16 %v11231, %v11229
    %v11362 = vpack.c.b16 %v11232, %v11230
    %v11363 = vpack.c.b16 %v11235, %v11233
    %v11364 = vpack.c.b16 %v11236, %v11234
    %11493 = vmatprep.subr.bf16.mxu0 %v11238
    %11494 = vmatpush1.bf16.msra.mxu0 %v11237
    %11495 = vmatprep.subr.bf16.mxu0 %v11240
    %11496 = vmatpush1.bf16.msra.mxu0 %v11239
    %11497 = vmatprep.subr.bf16.mxu0 %v11242
    %11498 = vmatpush1.bf16.msra.mxu0 %v11241
    %11499 = vmatprep.subr.bf16.mxu0 %v11244
    %11500 = vmatpush1.bf16.msra.mxu0 %v11243
    %11501 = vmatprep.subr.bf16.mxu0 %v11246
    %11502 = vmatpush1.bf16.msra.mxu0 %v11245
    %11503 = vmatprep.subr.bf16.mxu0 %v11248
    %11504 = vmatpush1.bf16.msra.mxu0 %v11247
    %11505 = vmatprep.subr.bf16.mxu0 %v11250
    %11506 = vmatpush1.bf16.msra.mxu0 %v11249
    %11507 = vmatprep.subr.bf16.mxu0 %v11252
    %11508 = vmatpush1.bf16.msra.mxu0 %v11251
    %11509 = vmatprep.subr.bf16.mxu0 %v11254
    %11510 = vmatpush1.bf16.msra.mxu0 %v11253
    %11511 = vmatprep.subr.bf16.mxu0 %v11256
    %11512 = vmatpush1.bf16.msra.mxu0 %v11255
    %11513 = vmatprep.subr.bf16.mxu0 %v11258
    %11514 = vmatpush1.bf16.msra.mxu0 %v11257
    %11515 = vmatprep.subr.bf16.mxu0 %v11260
    %11516 = vmatpush1.bf16.msra.mxu0 %v11259
    %11517 = vmatprep.subr.bf16.mxu0 %v11262
    %11518 = vmatpush1.bf16.msra.mxu0 %v11261
    %11519 = vmatprep.subr.bf16.mxu0 %v11264
    %11520 = vmatpush1.bf16.msra.mxu0 %v11263
    %11521 = vmatprep.subr.bf16.mxu0 %v11266
    %11522 = vmatpush1.bf16.msra.mxu0 %v11265
    %11523 = vmatprep.subr.bf16.mxu0 %v11268
    %11524 = vmatpush1.bf16.msra.mxu0 %v11267
    %11525 = vmatprep.mubr.bf16.mxu0 %v10846
    %11526 = vmatmul.mubr.bf16.gmra.mrb[0].mxu0 %v10845
    %v11527 = vpop.f32.mrb[0].mxu0
    %v11528 = vadd.f32 0.0, %v11527
    %v11529 = vpop.f32.mrb[0].mxu0
    %v11530 = vadd.f32 0.0, %v11529
    %v11531 = vpop.f32.mrb[0].mxu0
    %v11532 = vpop.f32.mrb[0].mxu0
    %11533 = vdwg.mxu0
    %11534 = vmatprep.subr.bf16.mxu0 %v11270
    %11535 = vmatpush1.bf16.msra.mxu0 %v11269
    %11536 = vmatprep.subr.bf16.mxu0 %v11272
    %11537 = vmatpush1.bf16.msra.mxu0 %v11271
    %11538 = vmatprep.subr.bf16.mxu0 %v11274
    %11539 = vmatpush1.bf16.msra.mxu0 %v11273
    %11540 = vmatprep.subr.bf16.mxu0 %v11276
    %11541 = vmatpush1.bf16.msra.mxu0 %v11275
    %11542 = vmatprep.subr.bf16.mxu0 %v11278
    %11543 = vmatpush1.bf16.msra.mxu0 %v11277
    %11544 = vmatprep.subr.bf16.mxu0 %v11280
    %11545 = vmatpush1.bf16.msra.mxu0 %v11279
    %11546 = vmatprep.subr.bf16.mxu0 %v11282
    %11547 = vmatpush1.bf16.msra.mxu0 %v11281
    %11548 = vmatprep.subr.bf16.mxu0 %v11284
    %11549 = vmatpush1.bf16.msra.mxu0 %v11283
    %11550 = vmatprep.subr.bf16.mxu0 %v11286
    %11551 = vmatpush1.bf16.msra.mxu0 %v11285
    %11552 = vmatprep.subr.bf16.mxu0 %v11288
    %11553 = vmatpush1.bf16.msra.mxu0 %v11287
    %11554 = vmatprep.subr.bf16.mxu0 %v11290
    %11555 = vmatpush1.bf16.msra.mxu0 %v11289
    %11556 = vmatprep.subr.bf16.mxu0 %v11292
    %11557 = vmatpush1.bf16.msra.mxu0 %v11291
    %11558 = vmatprep.subr.bf16.mxu0 %v11294
    %11559 = vmatpush1.bf16.msra.mxu0 %v11293
    %11560 = vmatprep.subr.bf16.mxu0 %v11296
    %11561 = vmatpush1.bf16.msra.mxu0 %v11295
    %11562 = vmatprep.subr.bf16.mxu0 %v11298
    %11563 = vmatpush1.bf16.msra.mxu0 %v11297
    %11564 = vmatprep.subr.bf16.mxu0 %v11300
    %11565 = vmatpush1.bf16.msra.mxu0 %v11299
    %11566 = vmatprep.mubr.bf16.mxu0 %v10848
    %11567 = vmatmul.mubr.bf16.gmra.mrb[0].mxu0 %v10847
    %v11568 = vpop.f32.mrb[0].mxu0
    %v11569 = vadd.f32 %v11528, %v11568
    %v11570 = vpop.f32.mrb[0].mxu0
    %v11571 = vadd.f32 %v11530, %v11570
    %v11572 = vpop.f32.mrb[0].mxu0
    %v11573 = vpop.f32.mrb[0].mxu0
    %11574 = vdwg.mxu0
    %11575 = vmatprep.subr.bf16.mxu0 %v11302
    %11576 = vmatpush1.bf16.msra.mxu0 %v11301
    %11577 = vmatprep.subr.bf16.mxu0 %v11304
    %11578 = vmatpush1.bf16.msra.mxu0 %v11303
    %11579 = vmatprep.subr.bf16.mxu0 %v11306
    %11580 = vmatpush1.bf16.msra.mxu0 %v11305
    %11581 = vmatprep.subr.bf16.mxu0 %v11308
    %11582 = vmatpush1.bf16.msra.mxu0 %v11307
    %11583 = vmatprep.subr.bf16.mxu0 %v11310
    %11584 = vmatpush1.bf16.msra.mxu0 %v11309
    %11585 = vmatprep.subr.bf16.mxu0 %v11312
    %11586 = vmatpush1.bf16.msra.mxu0 %v11311
    %11587 = vmatprep.subr.bf16.mxu0 %v11314
    %11588 = vmatpush1.bf16.msra.mxu0 %v11313
    %11589 = vmatprep.subr.bf16.mxu0 %v11316
    %11590 = vmatpush1.bf16.msra.mxu0 %v11315
    %11591 = vmatprep.subr.bf16.mxu0 %v11318
    %11592 = vmatpush1.bf16.msra.mxu0 %v11317
    %11593 = vmatprep.subr.bf16.mxu0 %v11320
    %11594 = vmatpush1.bf16.msra.mxu0 %v11319
    %11595 = vmatprep.subr.bf16.mxu0 %v11322
    %11596 = vmatpush1.bf16.msra.mxu0 %v11321
    %11597 = vmatprep.subr.bf16.mxu0 %v11324
    %11598 = vmatpush1.bf16.msra.mxu0 %v11323
    %11599 = vmatprep.subr.bf16.mxu0 %v11326
    %11600 = vmatpush1.bf16.msra.mxu0 %v11325
    %11601 = vmatprep.subr.bf16.mxu0 %v11328
    %11602 = vmatpush1.bf16.msra.mxu0 %v11327
    %11603 = vmatprep.subr.bf16.mxu0 %v11330
    %11604 = vmatpush1.bf16.msra.mxu0 %v11329
    %11605 = vmatprep.subr.bf16.mxu0 %v11332
    %11606 = vmatpush1.bf16.msra.mxu0 %v11331
    %11607 = vmatprep.mubr.bf16.mxu0 %v10850
    %11608 = vmatmul.mubr.bf16.gmra.mrb[0].mxu0 %v10849
    %v11609 = vpop.f32.mrb[0].mxu0
    %v11610 = vadd.f32 %v11569, %v11609
    %v11611 = vpop.f32.mrb[0].mxu0
    %v11612 = vadd.f32 %v11571, %v11611
    %v11613 = vpop.f32.mrb[0].mxu0
    %v11614 = vpop.f32.mrb[0].mxu0
    %11615 = vdwg.mxu0
    %11616 = vmatprep.subr.bf16.mxu0 %v11334
    %11617 = vmatpush1.bf16.msra.mxu0 %v11333
    %11618 = vmatprep.subr.bf16.mxu0 %v11336
    %11619 = vmatpush1.bf16.msra.mxu0 %v11335
    %11620 = vmatprep.subr.bf16.mxu0 %v11338
    %11621 = vmatpush1.bf16.msra.mxu0 %v11337
    %11622 = vmatprep.subr.bf16.mxu0 %v11340
    %11623 = vmatpush1.bf16.msra.mxu0 %v11339
    %11624 = vmatprep.subr.bf16.mxu0 %v11342
    %11625 = vmatpush1.bf16.msra.mxu0 %v11341
    %11626 = vmatprep.subr.bf16.mxu0 %v11344
    %11627 = vmatpush1.bf16.msra.mxu0 %v11343
    %11628 = vmatprep.subr.bf16.mxu0 %v11346
    %11629 = vmatpush1.bf16.msra.mxu0 %v11345
    %11630 = vmatprep.subr.bf16.mxu0 %v11348
    %11631 = vmatpush1.bf16.msra.mxu0 %v11347
    %11632 = vmatprep.subr.bf16.mxu0 %v11350
    %11633 = vmatpush1.bf16.msra.mxu0 %v11349
    %11634 = vmatprep.subr.bf16.mxu0 %v11352
    %11635 = vmatpush1.bf16.msra.mxu0 %v11351
    %11636 = vmatprep.subr.bf16.mxu0 %v11354
    %11637 = vmatpush1.bf16.msra.mxu0 %v11353
    %11638 = vmatprep.subr.bf16.mxu0 %v11356
    %11639 = vmatpush1.bf16.msra.mxu0 %v11355
    %11640 = vmatprep.subr.bf16.mxu0 %v11358
    %11641 = vmatpush1.bf16.msra.mxu0 %v11357
    %11642 = vmatprep.subr.bf16.mxu0 %v11360
    %11643 = vmatpush1.bf16.msra.mxu0 %v11359
    %11644 = vmatprep.subr.bf16.mxu0 %v11362
    %11645 = vmatpush1.bf16.msra.mxu0 %v11361
    %11646 = vmatprep.subr.bf16.mxu0 %v11364
    %11647 = vmatpush1.bf16.msra.mxu0 %v11363
    %11648 = vmatprep.mubr.bf16.mxu0 %v10852
    %11649 = vmatmul.mubr.bf16.gmra.mrb[0].mxu0 %v10851
    %v11650 = vpop.f32.mrb[0].mxu0
    %v11651 = vadd.f32 %v11610, %v11650
    %v11652 = vpop.f32.mrb[0].mxu0
    %v11653 = vadd.f32 %v11612, %v11652
    %v11654 = vpop.f32.mrb[0].mxu0
    %v11655 = vpop.f32.mrb[0].mxu0
    %11656 = vdwg.mxu0
    %11657 = vst [vmem:[#allocation11] sm:$0x3f] %v11651
    %11658 = vst [vmem:[#allocation11 + $0x8] sm:$0x3f] %v11653
    %v11659 = vpack.c.bf16 %v10588, %v10588
    %v11660 = vpack.c.bf16 %v10590, %v10590
    %v11661 = vpack.c.bf16 %v10629, %v10629
    %v11662 = vpack.c.bf16 %v10631, %v10631
    %v11663 = vpack.c.bf16 %v10670, %v10670
    %v11664 = vpack.c.bf16 %v10672, %v10672
    %v11665 = vpack.c.bf16 %v10711, %v10711
    %v11666 = vpack.c.bf16 %v10713, %v10713
    %11667 = vmatprep.subr.bf16.mxu0 %v11238
    %11668 = vmatpush1.bf16.msra.mxu0 %v11237
    %11669 = vmatprep.subr.bf16.mxu0 %v11240
    %11670 = vmatpush1.bf16.msra.mxu0 %v11239
    %11671 = vmatprep.subr.bf16.mxu0 %v11242
    %11672 = vmatpush1.bf16.msra.mxu0 %v11241
    %11673 = vmatprep.subr.bf16.mxu0 %v11244
    %11674 = vmatpush1.bf16.msra.mxu0 %v11243
    %11675 = vmatprep.subr.bf16.mxu0 %v11246
    %11676 = vmatpush1.bf16.msra.mxu0 %v11245
    %11677 = vmatprep.subr.bf16.mxu0 %v11248
    %11678 = vmatpush1.bf16.msra.mxu0 %v11247
    %11679 = vmatprep.subr.bf16.mxu0 %v11250
    %11680 = vmatpush1.bf16.msra.mxu0 %v11249
    %11681 = vmatprep.subr.bf16.mxu0 %v11252
    %11682 = vmatpush1.bf16.msra.mxu0 %v11251
    %11683 = vmatprep.subr.bf16.mxu0 %v11254
    %11684 = vmatpush1.bf16.msra.mxu0 %v11253
    %11685 = vmatprep.subr.bf16.mxu0 %v11256
    %11686 = vmatpush1.bf16.msra.mxu0 %v11255
    %11687 = vmatprep.subr.bf16.mxu0 %v11258
    %11688 = vmatpush1.bf16.msra.mxu0 %v11257
    %11689 = vmatprep.subr.bf16.mxu0 %v11260
    %11690 = vmatpush1.bf16.msra.mxu0 %v11259
    %11691 = vmatprep.subr.bf16.mxu0 %v11262
    %11692 = vmatpush1.bf16.msra.mxu0 %v11261
    %11693 = vmatprep.subr.bf16.mxu0 %v11264
    %11694 = vmatpush1.bf16.msra.mxu0 %v11263
    %11695 = vmatprep.subr.bf16.mxu0 %v11266
    %11696 = vmatpush1.bf16.msra.mxu0 %v11265
    %11697 = vmatprep.subr.bf16.mxu0 %v11268
    %11698 = vmatpush1.bf16.msra.mxu0 %v11267
    %11699 = vmatprep.mubr.bf16.mxu0 %v11660
    %11700 = vmatmul.mubr.bf16.gmra.mrb[0].mxu0 %v11659
    %v11701 = vpop.f32.mrb[0].mxu0
    %v11702 = vadd.f32 0.0, %v11701
    %v11703 = vpop.f32.mrb[0].mxu0
    %v11704 = vadd.f32 0.0, %v11703
    %v11705 = vpop.f32.mrb[0].mxu0
    %v11706 = vpop.f32.mrb[0].mxu0
    %11707 = vdwg.mxu0
    %11708 = vmatprep.subr.bf16.mxu0 %v11270
    %11709 = vmatpush1.bf16.msra.mxu0 %v11269
    %11710 = vmatprep.subr.bf16.mxu0 %v11272
    %11711 = vmatpush1.bf16.msra.mxu0 %v11271
    %11712 = vmatprep.subr.bf16.mxu0 %v11274
    %11713 = vmatpush1.bf16.msra.mxu0 %v11273
    %11714 = vmatprep.subr.bf16.mxu0 %v11276
    %11715 = vmatpush1.bf16.msra.mxu0 %v11275
    %11716 = vmatprep.subr.bf16.mxu0 %v11278
    %11717 = vmatpush1.bf16.msra.mxu0 %v11277
    %11718 = vmatprep.subr.bf16.mxu0 %v11280
    %11719 = vmatpush1.bf16.msra.mxu0 %v11279
    %11720 = vmatprep.subr.bf16.mxu0 %v11282
    %11721 = vmatpush1.bf16.msra.mxu0 %v11281
    %11722 = vmatprep.subr.bf16.mxu0 %v11284
    %11723 = vmatpush1.bf16.msra.mxu0 %v11283
    %11724 = vmatprep.subr.bf16.mxu0 %v11286
    %11725 = vmatpush1.bf16.msra.mxu0 %v11285
    %11726 = vmatprep.subr.bf16.mxu0 %v11288
    %11727 = vmatpush1.bf16.msra.mxu0 %v11287
    %11728 = vmatprep.subr.bf16.mxu0 %v11290
    %11729 = vmatpush1.bf16.msra.mxu0 %v11289
    %11730 = vmatprep.subr.bf16.mxu0 %v11292
    %11731 = vmatpush1.bf16.msra.mxu0 %v11291
    %11732 = vmatprep.subr.bf16.mxu0 %v11294
    %11733 = vmatpush1.bf16.msra.mxu0 %v11293
    %11734 = vmatprep.subr.bf16.mxu0 %v11296
    %11735 = vmatpush1.bf16.msra.mxu0 %v11295
    %11736 = vmatprep.subr.bf16.mxu0 %v11298
    %11737 = vmatpush1.bf16.msra.mxu0 %v11297
    %11738 = vmatprep.subr.bf16.mxu0 %v11300
    %11739 = vmatpush1.bf16.msra.mxu0 %v11299
    %11740 = vmatprep.mubr.bf16.mxu0 %v11662
    %11741 = vmatmul.mubr.bf16.gmra.mrb[0].mxu0 %v11661
    %v11742 = vpop.f32.mrb[0].mxu0
    %v11743 = vadd.f32 %v11702, %v11742
    %v11744 = vpop.f32.mrb[0].mxu0
    %v11745 = vadd.f32 %v11704, %v11744
    %v11746 = vpop.f32.mrb[0].mxu0
    %v11747 = vpop.f32.mrb[0].mxu0
    %11748 = vdwg.mxu0
    %11749 = vmatprep.subr.bf16.mxu0 %v11302
    %11750 = vmatpush1.bf16.msra.mxu0 %v11301
    %11751 = vmatprep.subr.bf16.mxu0 %v11304
    %11752 = vmatpush1.bf16.msra.mxu0 %v11303
    %11753 = vmatprep.subr.bf16.mxu0 %v11306
    %11754 = vmatpush1.bf16.msra.mxu0 %v11305
    %11755 = vmatprep.subr.bf16.mxu0 %v11308
    %11756 = vmatpush1.bf16.msra.mxu0 %v11307
    %11757 = vmatprep.subr.bf16.mxu0 %v11310
    %11758 = vmatpush1.bf16.msra.mxu0 %v11309
    %11759 = vmatprep.subr.bf16.mxu0 %v11312
    %11760 = vmatpush1.bf16.msra.mxu0 %v11311
    %11761 = vmatprep.subr.bf16.mxu0 %v11314
    %11762 = vmatpush1.bf16.msra.mxu0 %v11313
    %11763 = vmatprep.subr.bf16.mxu0 %v11316
    %11764 = vmatpush1.bf16.msra.mxu0 %v11315
    %11765 = vmatprep.subr.bf16.mxu0 %v11318
    %11766 = vmatpush1.bf16.msra.mxu0 %v11317
    %11767 = vmatprep.subr.bf16.mxu0 %v11320
    %11768 = vmatpush1.bf16.msra.mxu0 %v11319
    %11769 = vmatprep.subr.bf16.mxu0 %v11322
    %11770 = vmatpush1.bf16.msra.mxu0 %v11321
    %11771 = vmatprep.subr.bf16.mxu0 %v11324
    %11772 = vmatpush1.bf16.msra.mxu0 %v11323
    %11773 = vmatprep.subr.bf16.mxu0 %v11326
    %11774 = vmatpush1.bf16.msra.mxu0 %v11325
    %11775 = vmatprep.subr.bf16.mxu0 %v11328
    %11776 = vmatpush1.bf16.msra.mxu0 %v11327
    %11777 = vmatprep.subr.bf16.mxu0 %v11330
    %11778 = vmatpush1.bf16.msra.mxu0 %v11329
    %11779 = vmatprep.subr.bf16.mxu0 %v11332
    %11780 = vmatpush1.bf16.msra.mxu0 %v11331
    %11781 = vmatprep.mubr.bf16.mxu0 %v11664
    %11782 = vmatmul.mubr.bf16.gmra.mrb[0].mxu0 %v11663
    %v11783 = vpop.f32.mrb[0].mxu0
    %v11784 = vadd.f32 %v11743, %v11783
    %v11785 = vpop.f32.mrb[0].mxu0
    %v11786 = vadd.f32 %v11745, %v11785
    %v11787 = vpop.f32.mrb[0].mxu0
    %v11788 = vpop.f32.mrb[0].mxu0
    %11789 = vdwg.mxu0
    %11790 = vmatprep.subr.bf16.mxu0 %v11334
    %11791 = vmatpush1.bf16.msra.mxu0 %v11333
    %11792 = vmatprep.subr.bf16.mxu0 %v11336
    %11793 = vmatpush1.bf16.msra.mxu0 %v11335
    %11794 = vmatprep.subr.bf16.mxu0 %v11338
    %11795 = vmatpush1.bf16.msra.mxu0 %v11337
    %11796 = vmatprep.subr.bf16.mxu0 %v11340
    %11797 = vmatpush1.bf16.msra.mxu0 %v11339
    %11798 = vmatprep.subr.bf16.mxu0 %v11342
    %11799 = vmatpush1.bf16.msra.mxu0 %v11341
    %11800 = vmatprep.subr.bf16.mxu0 %v11344
    %11801 = vmatpush1.bf16.msra.mxu0 %v11343
    %11802 = vmatprep.subr.bf16.mxu0 %v11346
    %11803 = vmatpush1.bf16.msra.mxu0 %v11345
    %11804 = vmatprep.subr.bf16.mxu0 %v11348
    %11805 = vmatpush1.bf16.msra.mxu0 %v11347
    %11806 = vmatprep.subr.bf16.mxu0 %v11350
    %11807 = vmatpush1.bf16.msra.mxu0 %v11349
    %11808 = vmatprep.subr.bf16.mxu0 %v11352
    %11809 = vmatpush1.bf16.msra.mxu0 %v11351
    %11810 = vmatprep.subr.bf16.mxu0 %v11354
    %11811 = vmatpush1.bf16.msra.mxu0 %v11353
    %11812 = vmatprep.subr.bf16.mxu0 %v11356
    %11813 = vmatpush1.bf16.msra.mxu0 %v11355
    %11814 = vmatprep.subr.bf16.mxu0 %v11358
    %11815 = vmatpush1.bf16.msra.mxu0 %v11357
    %11816 = vmatprep.subr.bf16.mxu0 %v11360
    %11817 = vmatpush1.bf16.msra.mxu0 %v11359
    %11818 = vmatprep.subr.bf16.mxu0 %v11362
    %11819 = vmatpush1.bf16.msra.mxu0 %v11361
    %11820 = vmatprep.subr.bf16.mxu0 %v11364
    %11821 = vmatpush1.bf16.msra.mxu0 %v11363
    %11822 = vmatprep.mubr.bf16.mxu0 %v11666
    %11823 = vmatmul.mubr.bf16.gmra.mrb[0].mxu0 %v11665
    %v11824 = vpop.f32.mrb[0].mxu0
    %v11825 = vadd.f32 %v11784, %v11824
    %v11826 = vpop.f32.mrb[0].mxu0
    %v11827 = vadd.f32 %v11786, %v11826
    %v11828 = vpop.f32.mrb[0].mxu0
    %v11829 = vpop.f32.mrb[0].mxu0
    %11830 = vdwg.mxu0
    %11831 = vst [vmem:[#allocation11 + $0x10] sm:$0x3f] %v11825
    %11832 = vst [vmem:[#allocation11 + $0x18] sm:$0x3f] %v11827
    // Predicated region
    $region58: #{tpu_custom_call.1} parent=1 // pred_check
      _
    $region59: #{tpu_custom_call.1} parent=1 // pred_check_branch
      %11834 = sbr.rel (0) target = $region61
    $region60: #{tpu_custom_call.1} parent=1 // pred_region
      %s11836 = ssub.s32 512, 512
      %11837 = vsyncadd [#allocation8], %s11836
      %s11839 = sshll.u32 [#allocation11], 4
      %s11840 = int_to_ptr.vmem [resolvable:$true] %s11839
      %11842 = dma.vmem_to_hbm [thread:$0]  %s11840, 512, %s12, [#allocation8]
    $region61: #{tpu_custom_call.1} parent=1 // pred_fallthru
      _
    // Predicated region
    $region62: #{tpu_custom_call.1} parent=1 // pred_check
      _
    $region63: #{tpu_custom_call.1} parent=1 // pred_check_branch
      %11844 = sbr.rel (0) target = $region65
    $region64: #{tpu_custom_call.1} parent=1 // pred_region
      %11845 = dma.done [#allocation8], 512
    $region65: #{tpu_custom_call.1} parent=1 // pred_fallthru
      _
    %11846 = vsyncpa [#allocation7], 1
    %11847 = vsyncpa [#allocation10], 1
    %11848 = vsyncpa [#allocation8], 1

</llo_original>
